<compile_context>
chip_gen: v6e
topology: v6e:2x2x1
jax: 0.10.0
libtpu: 0.0.40
codegen_flags: <defaults>
</compile_context>

<pallas_src>
import jax
import jax.numpy as jnp
from jax import lax
from jax.experimental import pallas as pl
from jax.experimental.pallas import tpu as pltpu

EPS = 1e-5
LANE = 128
# Matmul operand dtype.  f32 = exact PyTorch semantics; jnp.bfloat16 = native
# MXU throughput at real channel counts (accumulation stays f32 either way).
MATMUL_DTYPE = jnp.float32


def _round_up(c, m=LANE):
    return ((c + m - 1) // m) * m


def conv_block_kernel(x_ref, w1_ref, b1_ref, g1_ref, be1_ref,
                      w2_ref, b2_ref, g2_ref, be2_ref,
                      o_ref, pad1_ref, pad2_ref, patch_ref):
    # x_ref:   (N, H, W, Cin)            real-channel NHWC input
    # w*_ref:  (Kp, Cp)                   K-packed (dy,dx,cin)->K weights,
    #                                     K and Cout zero-padded to 128
    # b*/g*/be*_ref: (1, C)               real-channel per-channel vectors
    # o_ref:   (N, H, W, Cout)            real-channel NHWC output
    # pad1/2_ref: (N, H+2, W+2, C)        halo buffers (padding=1)
    # patch_ref:  (M, Kp_max)             shared K-packed im2col patch
    N, H, W, Cin = x_ref.shape
    M = N * H * W
    Cmid = b1_ref.shape[1]
    Cout = b2_ref.shape[1]
    Kp1 = w1_ref.shape[0]
    Kp2 = w2_ref.shape[0]

    # Zero the patch once.  Tap stores only touch the "real" K columns; the
    # padded weight rows are zero, so the pad columns contribute exactly 0
    # (zeroing avoids uninitialised-VMEM NaN * 0 hazards).
    patch_ref[...] = jnp.zeros(patch_ref.shape, jnp.float32)

    def stage_halo(dst_ref, interior):
        # padding=1 halo buffer.  Buffers hold only real channels now
        # (<=20 KiB of data), so a full zero is cheaper than halo bookkeeping.
        dst_ref[...] = jnp.zeros(dst_ref.shape, jnp.float32)
        dst_ref[:, 1:H + 1, 1:W + 1, :] = interior

    def conv3x3_packed(src_ref, w_ref, b_ref, cin, cout, kp):
        # Scatter the 9 taps into the K (lane) axis of the patch, then run a
        # single MXU matmul.  Tap accumulation stays inside the MXU; each tap
        # slice is only (M, cin) real channels, not a 128-padded slab.
        for dy in range(3):
            for dx in range(3):
                t = dy * 3 + dx
                tap = src_ref[:, dy:dy + H, dx:dx + W, :].reshape(M, cin)
                patch_ref[:, t * cin:(t + 1) * cin] = tap
        y = jnp.dot(patch_ref[:, :kp].astype(MATMUL_DTYPE),
                    w_ref[...].astype(MATMUL_DTYPE),
                    preferred_element_type=jnp.float32)
        return y[:, :cout] + b_ref[...]          # drop padded out-channels

    def bn_relu(y, g_ref, be_ref):
        # Training-mode BatchNorm over the flattened N*H*W axis, biased var.
        mean = jnp.mean(y, axis=0, keepdims=True)
        var = jnp.mean(jnp.square(y - mean), axis=0, keepdims=True)
        yhat = (y - mean) * lax.rsqrt(var + EPS) * g_ref[...] + be_ref[...]
        return jnp.maximum(yhat, 0.0)

    # ---- conv1 -> BN -> ReLU ------------------------------------------------
    stage_halo(pad1_ref, x_ref[...])
    a1 = bn_relu(conv3x3_packed(pad1_ref, w1_ref, b1_ref, Cin, Cmid, Kp1),
                 g1_ref, be1_ref)

    # ---- conv2 -> BN -> ReLU ------------------------------------------------
    stage_halo(pad2_ref, a1.reshape(N, H, W, Cmid))
    a2 = bn_relu(conv3x3_packed(pad2_ref, w2_ref, b2_ref, Cmid, Cout, Kp2),
                 g2_ref, be2_ref)

    o_ref[...] = a2.reshape(N, H, W, Cout)


def conv_block_forward_nhwc(x_nhwc, params):
    """NHWC entry point (no transposes). x_nhwc: (N, H, W, Cin) float32."""
    w1, b1, g1, be1, w2, b2, g2, be2 = params
    N, H, W, Cin = x_nhwc.shape
    Cmid, Cout = w1.shape[-1], w2.shape[-1]
    K1, K2 = 9 * Cin, 9 * Cmid
    Kp1, Kp2 = _round_up(K1), _round_up(K2)
    Kp = max(Kp1, Kp2)
    Cmid_p, Cout_p = _round_up(Cmid), _round_up(Cout)

    def pack_w(w, kp, cp):
        # HWIO (3,3,ci,co) -> K-packed (kp, cp); row k = (dy*3+dx)*ci + c
        # matches the in-kernel tap ordering.  Pad rows/cols are zero.
        kh, kw, ci, co = w.shape
        wk = w.astype(jnp.float32).reshape(kh * kw * ci, co)
        return jnp.pad(wk, ((0, kp - kh * kw * ci), (0, cp - co)))

    def row(v):
        return v.astype(jnp.float32).reshape(1, -1)

    vmem = pl.BlockSpec(memory_space=pltpu.MemorySpace.VMEM)
    return pl.pallas_call(
        conv_block_kernel,
        out_shape=jax.ShapeDtypeStruct((N, H, W, Cout), jnp.float32),
        in_specs=[vmem] * 9,
        out_specs=vmem,
        scratch_shapes=[
            pltpu.VMEM((N, H + 2, W + 2, Cin), jnp.float32),
            pltpu.VMEM((N, H + 2, W + 2, Cmid), jnp.float32),
            pltpu.VMEM((N * H * W, Kp), jnp.float32),
        ],
    )(x_nhwc.astype(jnp.float32),
      pack_w(w1, Kp1, Cmid_p), row(b1), row(g1), row(be1),
      pack_w(w2, Kp2, Cout_p), row(b2), row(g2), row(be2))


def conv_block_forward(x_nchw, params):
    """NCHW interface matching the PyTorch module. (N,Cin,H,W) -> (N,Cout,H,W).

    In an NHWC end-to-end model call conv_block_forward_nhwc directly and
    these two HBM transposes disappear.
    """
    x = jnp.transpose(x_nchw, (0, 2, 3, 1)).astype(jnp.float32)
    out = conv_block_forward_nhwc(x, params)
    return jnp.transpose(out, (0, 3, 1, 2))


def ref_forward(x_nchw, params):
    """Pure-JAX reference for validation (f32, training-mode BN)."""
    w1, b1, g1, be1, w2, b2, g2, be2 = params

    def conv(x, w, b):
        y = lax.conv_general_dilated(
            x, w, window_strides=(1, 1), padding='SAME',
            dimension_numbers=('NHWC', 'HWIO', 'NHWC'))
        return y + b.reshape(1, 1, 1, -1)

    def bn_relu(y, g, be):
        mean = jnp.mean(y, axis=(0, 1, 2), keepdims=True)
        var = jnp.mean((y - mean) ** 2, axis=(0, 1, 2), keepdims=True)
        yhat = (y - mean) * lax.rsqrt(var + EPS)
        yhat = yhat * g.reshape(1, 1, 1, -1) + be.reshape(1, 1, 1, -1)
        return jnp.maximum(yhat, 0.0)

    x = jnp.transpose(x_nchw, (0, 2, 3, 1))
    y = bn_relu(conv(x, w1, b1), g1, be1)
    y = bn_relu(conv(y, w2, b2), g2, be2)
    return jnp.transpose(y, (0, 3, 1, 2))


if __name__ == "__main__":
    key = jax.random.PRNGKey(0)
    N, Cin, H, W = 2, 4, 16, 16
    Cmid, Cout = 8, 4

    ks = jax.random.split(key, 5)
    x = jax.random.normal(ks[0], (N, Cin, H, W), jnp.float32)

    # Deterministic PyTorch-like init: U(-1/sqrt(fan_in), 1/sqrt(fan_in))
    fan1 = Cin * 9
    w1 = jax.random.uniform(ks[1], (3, 3, Cin, Cmid), jnp.float32, -1.0, 1.0) / jnp.sqrt(fan1)
    b1 = jax.random.uniform(ks[2], (Cmid,), jnp.float32, -1.0, 1.0) / jnp.sqrt(fan1)
    fan2 = Cmid * 9
    w2 = jax.random.uniform(ks[3], (3, 3, Cmid, Cout), jnp.float32, -1.0, 1.0) / jnp.sqrt(fan2)
    b2 = jax.random.uniform(ks[4], (Cout,), jnp.float32, -1.0, 1.0) / jnp.sqrt(fan2)
    # BatchNorm affine params: PyTorch default gamma=1, beta=0
    g1, be1 = jnp.ones((Cmid,), jnp.float32), jnp.zeros((Cmid,), jnp.float32)
    g2, be2 = jnp.ones((Cout,), jnp.float32), jnp.zeros((Cout,), jnp.float32)

    params = (w1, b1, g1, be1, w2, b2, g2, be2)

    out = conv_block_forward(x, params)
    out = jax.block_until_ready(out)

    ref = ref_forward(x, params)
    assert out.shape == (N, Cout, H, W)
    assert jnp.allclose(out, ref, atol=1e-3, rtol=1e-3), "mismatch vs JAX reference"

    print("KERNEL_OK")
</pallas_src>

<mosaic_0001>
module attributes {stable_mosaic.version = 11 : i64} {
  func.func @conv_block_kernel(%arg0: memref<2x16x16x4xf32, #tpu.memory_space<vmem>>, %arg1: memref<128x128xf32, #tpu.memory_space<vmem>>, %arg2: memref<1x8xf32, #tpu.memory_space<vmem>>, %arg3: memref<1x8xf32, #tpu.memory_space<vmem>>, %arg4: memref<1x8xf32, #tpu.memory_space<vmem>>, %arg5: memref<128x128xf32, #tpu.memory_space<vmem>>, %arg6: memref<1x4xf32, #tpu.memory_space<vmem>>, %arg7: memref<1x4xf32, #tpu.memory_space<vmem>>, %arg8: memref<1x4xf32, #tpu.memory_space<vmem>>, %arg9: memref<2x16x16x4xf32, #tpu.memory_space<vmem>>, %arg10: memref<2x18x18x4xf32, #tpu.memory_space<vmem>>, %arg11: memref<2x18x18x8xf32, #tpu.memory_space<vmem>>, %arg12: memref<512x128xf32, #tpu.memory_space<vmem>>) attributes {dimension_semantics = [], scalar_prefetch = 0 : i64, scratch_operands = 3 : i64, tpu.core_type = #tpu.core_type<tc>} {
    %cst = arith.constant 0.000000e+00 : f32
    %0 = vector.broadcast %cst : f32 to vector<512x128xf32>
    %c0 = arith.constant 0 : index
    %c0_0 = arith.constant 0 : index
    %1 = vector.load %arg12[%c0, %c0_0] : memref<512x128xf32, #tpu.memory_space<vmem>>, vector<512x128xf32>
    tpu.vector_store %arg12[%c0, %c0_0], %0 {strides = array<i32>} : memref<512x128xf32, #tpu.memory_space<vmem>>, vector<512x128xf32>,
    %c0_1 = arith.constant 0 : index
    %c0_2 = arith.constant 0 : index
    %c0_3 = arith.constant 0 : index
    %c0_4 = arith.constant 0 : index
    %2 = vector.load %arg0[%c0_1, %c0_2, %c0_3, %c0_4] : memref<2x16x16x4xf32, #tpu.memory_space<vmem>>, vector<2x16x16x4xf32>
    %cst_5 = arith.constant 0.000000e+00 : f32
    %3 = vector.broadcast %cst_5 : f32 to vector<2x18x18x4xf32>
    %c0_6 = arith.constant 0 : index
    %c0_7 = arith.constant 0 : index
    %c0_8 = arith.constant 0 : index
    %c0_9 = arith.constant 0 : index
    %4 = vector.load %arg10[%c0_6, %c0_7, %c0_8, %c0_9] : memref<2x18x18x4xf32, #tpu.memory_space<vmem>>, vector<2x18x18x4xf32>
    tpu.vector_store %arg10[%c0_6, %c0_7, %c0_8, %c0_9], %3 {strides = array<i32>} : memref<2x18x18x4xf32, #tpu.memory_space<vmem>>, vector<2x18x18x4xf32>,
    %c0_10 = arith.constant 0 : index
    %c1 = arith.constant 1 : index
    %c1_11 = arith.constant 1 : index
    %c0_12 = arith.constant 0 : index
    %5 = vector.load %arg10[%c0_10, %c1, %c1_11, %c0_12] : memref<2x18x18x4xf32, #tpu.memory_space<vmem>>, vector<2x16x16x4xf32>
    tpu.vector_store %arg10[%c0_10, %c1, %c1_11, %c0_12], %2 {strides = array<i32>} : memref<2x18x18x4xf32, #tpu.memory_space<vmem>>, vector<2x16x16x4xf32>,
    %c0_13 = arith.constant 0 : index
    %c0_14 = arith.constant 0 : index
    %c0_15 = arith.constant 0 : index
    %c0_16 = arith.constant 0 : index
    %6 = vector.load %arg10[%c0_13, %c0_14, %c0_15, %c0_16] : memref<2x18x18x4xf32, #tpu.memory_space<vmem>>, vector<2x16x16x4xf32>
    %7 = vector.shape_cast %6 : vector<2x16x16x4xf32> to vector<512x4xf32>
    %c0_17 = arith.constant 0 : index
    %c0_18 = arith.constant 0 : index
    %8 = vector.load %arg12[%c0_17, %c0_18] : memref<512x128xf32, #tpu.memory_space<vmem>>, vector<512x4xf32>
    tpu.vector_store %arg12[%c0_17, %c0_18], %7 {strides = array<i32>} : memref<512x128xf32, #tpu.memory_space<vmem>>, vector<512x4xf32>,
    %c0_19 = arith.constant 0 : index
    %c0_20 = arith.constant 0 : index
    %c1_21 = arith.constant 1 : index
    %c0_22 = arith.constant 0 : index
    %9 = vector.load %arg10[%c0_19, %c0_20, %c1_21, %c0_22] : memref<2x18x18x4xf32, #tpu.memory_space<vmem>>, vector<2x16x16x4xf32>
    %10 = vector.shape_cast %9 : vector<2x16x16x4xf32> to vector<512x4xf32>
    %c0_23 = arith.constant 0 : index
    %c4 = arith.constant 4 : index
    %11 = vector.load %arg12[%c0_23, %c4] : memref<512x128xf32, #tpu.memory_space<vmem>>, vector<512x4xf32>
    tpu.vector_store %arg12[%c0_23, %c4], %10 {strides = array<i32>} : memref<512x128xf32, #tpu.memory_space<vmem>>, vector<512x4xf32>,
    %c0_24 = arith.constant 0 : index
    %c0_25 = arith.constant 0 : index
    %c2 = arith.constant 2 : index
    %c0_26 = arith.constant 0 : index
    %12 = vector.load %arg10[%c0_24, %c0_25, %c2, %c0_26] : memref<2x18x18x4xf32, #tpu.memory_space<vmem>>, vector<2x16x16x4xf32>
    %13 = vector.shape_cast %12 : vector<2x16x16x4xf32> to vector<512x4xf32>
    %c0_27 = arith.constant 0 : index
    %c8 = arith.constant 8 : index
    %14 = vector.load %arg12[%c0_27, %c8] : memref<512x128xf32, #tpu.memory_space<vmem>>, vector<512x4xf32>
    tpu.vector_store %arg12[%c0_27, %c8], %13 {strides = array<i32>} : memref<512x128xf32, #tpu.memory_space<vmem>>, vector<512x4xf32>,
    %c0_28 = arith.constant 0 : index
    %c1_29 = arith.constant 1 : index
    %c0_30 = arith.constant 0 : index
    %c0_31 = arith.constant 0 : index
    %15 = vector.load %arg10[%c0_28, %c1_29, %c0_30, %c0_31] : memref<2x18x18x4xf32, #tpu.memory_space<vmem>>, vector<2x16x16x4xf32>
    %16 = vector.shape_cast %15 : vector<2x16x16x4xf32> to vector<512x4xf32>
    %c0_32 = arith.constant 0 : index
    %c12 = arith.constant 12 : index
    %17 = vector.load %arg12[%c0_32, %c12] : memref<512x128xf32, #tpu.memory_space<vmem>>, vector<512x4xf32>
    tpu.vector_store %arg12[%c0_32, %c12], %16 {strides = array<i32>} : memref<512x128xf32, #tpu.memory_space<vmem>>, vector<512x4xf32>,
    %c0_33 = arith.constant 0 : index
    %c1_34 = arith.constant 1 : index
    %c1_35 = arith.constant 1 : index
    %c0_36 = arith.constant 0 : index
    %18 = vector.load %arg10[%c0_33, %c1_34, %c1_35, %c0_36] : memref<2x18x18x4xf32, #tpu.memory_space<vmem>>, vector<2x16x16x4xf32>
    %19 = vector.shape_cast %18 : vector<2x16x16x4xf32> to vector<512x4xf32>
    %c0_37 = arith.constant 0 : index
    %c16 = arith.constant 16 : index
    %20 = vector.load %arg12[%c0_37, %c16] : memref<512x128xf32, #tpu.memory_space<vmem>>, vector<512x4xf32>
    tpu.vector_store %arg12[%c0_37, %c16], %19 {strides = array<i32>} : memref<512x128xf32, #tpu.memory_space<vmem>>, vector<512x4xf32>,
    %c0_38 = arith.constant 0 : index
    %c1_39 = arith.constant 1 : index
    %c2_40 = arith.constant 2 : index
    %c0_41 = arith.constant 0 : index
    %21 = vector.load %arg10[%c0_38, %c1_39, %c2_40, %c0_41] : memref<2x18x18x4xf32, #tpu.memory_space<vmem>>, vector<2x16x16x4xf32>
    %22 = vector.shape_cast %21 : vector<2x16x16x4xf32> to vector<512x4xf32>
    %c0_42 = arith.constant 0 : index
    %c20 = arith.constant 20 : index
    %23 = vector.load %arg12[%c0_42, %c20] : memref<512x128xf32, #tpu.memory_space<vmem>>, vector<512x4xf32>
    tpu.vector_store %arg12[%c0_42, %c20], %22 {strides = array<i32>} : memref<512x128xf32, #tpu.memory_space<vmem>>, vector<512x4xf32>,
    %c0_43 = arith.constant 0 : index
    %c2_44 = arith.constant 2 : index
    %c0_45 = arith.constant 0 : index
    %c0_46 = arith.constant 0 : index
    %24 = vector.load %arg10[%c0_43, %c2_44, %c0_45, %c0_46] : memref<2x18x18x4xf32, #tpu.memory_space<vmem>>, vector<2x16x16x4xf32>
    %25 = vector.shape_cast %24 : vector<2x16x16x4xf32> to vector<512x4xf32>
    %c0_47 = arith.constant 0 : index
    %c24 = arith.constant 24 : index
    %26 = vector.load %arg12[%c0_47, %c24] : memref<512x128xf32, #tpu.memory_space<vmem>>, vector<512x4xf32>
    tpu.vector_store %arg12[%c0_47, %c24], %25 {strides = array<i32>} : memref<512x128xf32, #tpu.memory_space<vmem>>, vector<512x4xf32>,
    %c0_48 = arith.constant 0 : index
    %c2_49 = arith.constant 2 : index
    %c1_50 = arith.constant 1 : index
    %c0_51 = arith.constant 0 : index
    %27 = vector.load %arg10[%c0_48, %c2_49, %c1_50, %c0_51] : memref<2x18x18x4xf32, #tpu.memory_space<vmem>>, vector<2x16x16x4xf32>
    %28 = vector.shape_cast %27 : vector<2x16x16x4xf32> to vector<512x4xf32>
    %c0_52 = arith.constant 0 : index
    %c28 = arith.constant 28 : index
    %29 = vector.load %arg12[%c0_52, %c28] : memref<512x128xf32, #tpu.memory_space<vmem>>, vector<512x4xf32>
    tpu.vector_store %arg12[%c0_52, %c28], %28 {strides = array<i32>} : memref<512x128xf32, #tpu.memory_space<vmem>>, vector<512x4xf32>,
    %c0_53 = arith.constant 0 : index
    %c2_54 = arith.constant 2 : index
    %c2_55 = arith.constant 2 : index
    %c0_56 = arith.constant 0 : index
    %30 = vector.load %arg10[%c0_53, %c2_54, %c2_55, %c0_56] : memref<2x18x18x4xf32, #tpu.memory_space<vmem>>, vector<2x16x16x4xf32>
    %31 = vector.shape_cast %30 : vector<2x16x16x4xf32> to vector<512x4xf32>
    %c0_57 = arith.constant 0 : index
    %c32 = arith.constant 32 : index
    %32 = vector.load %arg12[%c0_57, %c32] : memref<512x128xf32, #tpu.memory_space<vmem>>, vector<512x4xf32>
    tpu.vector_store %arg12[%c0_57, %c32], %31 {strides = array<i32>} : memref<512x128xf32, #tpu.memory_space<vmem>>, vector<512x4xf32>,
    %c0_58 = arith.constant 0 : index
    %c0_59 = arith.constant 0 : index
    %33 = vector.load %arg12[%c0_58, %c0_59] : memref<512x128xf32, #tpu.memory_space<vmem>>, vector<512x128xf32>
    %c0_60 = arith.constant 0 : index
    %c0_61 = arith.constant 0 : index
    %34 = vector.load %arg1[%c0_60, %c0_61] : memref<128x128xf32, #tpu.memory_space<vmem>>, vector<128x128xf32>
    %cst_62 = arith.constant dense<0.000000e+00> : vector<512x128xf32>
    %35 = tpu.matmul %33, %34, %cst_62 {dimension_numbers = #tpu.dot_dimension_numbers<[1], [0], [0], [1], [0, 0, 1, 1], [], []>} : vector<512x128xf32>, vector<128x128xf32>, vector<512x128xf32> -> vector<512x128xf32>
    %36 = vector.extract_strided_slice %35 {offsets = [0, 0], sizes = [512, 8], strides = [1, 1]} : vector<512x128xf32> to vector<512x8xf32>
    %c0_63 = arith.constant 0 : index
    %c0_64 = arith.constant 0 : index
    %37 = vector.load %arg2[%c0_63, %c0_64] : memref<1x8xf32, #tpu.memory_space<vmem>>, vector<1x8xf32>
    %38 = vector.broadcast %37 : vector<1x8xf32> to vector<512x8xf32>
    %39 = arith.addf %36, %38 : vector<512x8xf32>
    %cst_65 = arith.constant dense<0.000000e+00> : vector<8xf32>
    %40 = vector.multi_reduction <add>, %39, %cst_65 [0] : vector<512x8xf32> to vector<8xf32>
    %41 = vector.shape_cast %40 : vector<8xf32> to vector<1x8xf32>
    %cst_66 = arith.constant 5.120000e+02 : f32
    %42 = vector.broadcast %cst_66 : f32 to vector<1x8xf32>
    %43 = arith.divf %41, %42 : vector<1x8xf32>
    %44 = vector.broadcast %43 : vector<1x8xf32> to vector<512x8xf32>
    %45 = arith.subf %39, %44 : vector<512x8xf32>
    %46 = arith.mulf %45, %45 : vector<512x8xf32>
    %cst_67 = arith.constant dense<0.000000e+00> : vector<8xf32>
    %47 = vector.multi_reduction <add>, %46, %cst_67 [0] : vector<512x8xf32> to vector<8xf32>
    %48 = vector.shape_cast %47 : vector<8xf32> to vector<1x8xf32>
    %cst_68 = arith.constant 5.120000e+02 : f32
    %49 = vector.broadcast %cst_68 : f32 to vector<1x8xf32>
    %50 = arith.divf %48, %49 : vector<1x8xf32>
    %51 = vector.broadcast %43 : vector<1x8xf32> to vector<512x8xf32>
    %52 = arith.subf %39, %51 : vector<512x8xf32>
    %cst_69 = arith.constant 9.99999974E-6 : f32
    %53 = vector.broadcast %cst_69 : f32 to vector<1x8xf32>
    %54 = arith.addf %50, %53 : vector<1x8xf32>
    %55 = math.rsqrt %54 : vector<1x8xf32>
    %56 = vector.broadcast %55 : vector<1x8xf32> to vector<512x8xf32>
    %57 = arith.mulf %52, %56 : vector<512x8xf32>
    %c0_70 = arith.constant 0 : index
    %c0_71 = arith.constant 0 : index
    %58 = vector.load %arg3[%c0_70, %c0_71] : memref<1x8xf32, #tpu.memory_space<vmem>>, vector<1x8xf32>
    %59 = vector.broadcast %58 : vector<1x8xf32> to vector<512x8xf32>
    %60 = arith.mulf %57, %59 : vector<512x8xf32>
    %c0_72 = arith.constant 0 : index
    %c0_73 = arith.constant 0 : index
    %61 = vector.load %arg4[%c0_72, %c0_73] : memref<1x8xf32, #tpu.memory_space<vmem>>, vector<1x8xf32>
    %62 = vector.broadcast %61 : vector<1x8xf32> to vector<512x8xf32>
    %63 = arith.addf %60, %62 : vector<512x8xf32>
    %cst_74 = arith.constant 0.000000e+00 : f32
    %64 = vector.broadcast %cst_74 : f32 to vector<512x8xf32>
    %65 = arith.maximumf %63, %64 : vector<512x8xf32>
    %66 = vector.shape_cast %65 : vector<512x8xf32> to vector<2x16x16x8xf32>
    %cst_75 = arith.constant 0.000000e+00 : f32
    %67 = vector.broadcast %cst_75 : f32 to vector<2x18x18x8xf32>
    %c0_76 = arith.constant 0 : index
    %c0_77 = arith.constant 0 : index
    %c0_78 = arith.constant 0 : index
    %c0_79 = arith.constant 0 : index
    %68 = vector.load %arg11[%c0_76, %c0_77, %c0_78, %c0_79] : memref<2x18x18x8xf32, #tpu.memory_space<vmem>>, vector<2x18x18x8xf32>
    tpu.vector_store %arg11[%c0_76, %c0_77, %c0_78, %c0_79], %67 {strides = array<i32>} : memref<2x18x18x8xf32, #tpu.memory_space<vmem>>, vector<2x18x18x8xf32>,
    %c0_80 = arith.constant 0 : index
    %c1_81 = arith.constant 1 : index
    %c1_82 = arith.constant 1 : index
    %c0_83 = arith.constant 0 : index
    %69 = vector.load %arg11[%c0_80, %c1_81, %c1_82, %c0_83] : memref<2x18x18x8xf32, #tpu.memory_space<vmem>>, vector<2x16x16x8xf32>
    tpu.vector_store %arg11[%c0_80, %c1_81, %c1_82, %c0_83], %66 {strides = array<i32>} : memref<2x18x18x8xf32, #tpu.memory_space<vmem>>, vector<2x16x16x8xf32>,
    %c0_84 = arith.constant 0 : index
    %c0_85 = arith.constant 0 : index
    %c0_86 = arith.constant 0 : index
    %c0_87 = arith.constant 0 : index
    %70 = vector.load %arg11[%c0_84, %c0_85, %c0_86, %c0_87] : memref<2x18x18x8xf32, #tpu.memory_space<vmem>>, vector<2x16x16x8xf32>
    %71 = vector.shape_cast %70 : vector<2x16x16x8xf32> to vector<512x8xf32>
    %c0_88 = arith.constant 0 : index
    %c0_89 = arith.constant 0 : index
    %72 = vector.load %arg12[%c0_88, %c0_89] : memref<512x128xf32, #tpu.memory_space<vmem>>, vector<512x8xf32>
    tpu.vector_store %arg12[%c0_88, %c0_89], %71 {strides = array<i32>} : memref<512x128xf32, #tpu.memory_space<vmem>>, vector<512x8xf32>,
    %c0_90 = arith.constant 0 : index
    %c0_91 = arith.constant 0 : index
    %c1_92 = arith.constant 1 : index
    %c0_93 = arith.constant 0 : index
    %73 = vector.load %arg11[%c0_90, %c0_91, %c1_92, %c0_93] : memref<2x18x18x8xf32, #tpu.memory_space<vmem>>, vector<2x16x16x8xf32>
    %74 = vector.shape_cast %73 : vector<2x16x16x8xf32> to vector<512x8xf32>
    %c0_94 = arith.constant 0 : index
    %c8_95 = arith.constant 8 : index
    %75 = vector.load %arg12[%c0_94, %c8_95] : memref<512x128xf32, #tpu.memory_space<vmem>>, vector<512x8xf32>
    tpu.vector_store %arg12[%c0_94, %c8_95], %74 {strides = array<i32>} : memref<512x128xf32, #tpu.memory_space<vmem>>, vector<512x8xf32>,
    %c0_96 = arith.constant 0 : index
    %c0_97 = arith.constant 0 : index
    %c2_98 = arith.constant 2 : index
    %c0_99 = arith.constant 0 : index
    %76 = vector.load %arg11[%c0_96, %c0_97, %c2_98, %c0_99] : memref<2x18x18x8xf32, #tpu.memory_space<vmem>>, vector<2x16x16x8xf32>
    %77 = vector.shape_cast %76 : vector<2x16x16x8xf32> to vector<512x8xf32>
    %c0_100 = arith.constant 0 : index
    %c16_101 = arith.constant 16 : index
    %78 = vector.load %arg12[%c0_100, %c16_101] : memref<512x128xf32, #tpu.memory_space<vmem>>, vector<512x8xf32>
    tpu.vector_store %arg12[%c0_100, %c16_101], %77 {strides = array<i32>} : memref<512x128xf32, #tpu.memory_space<vmem>>, vector<512x8xf32>,
    %c0_102 = arith.constant 0 : index
    %c1_103 = arith.constant 1 : index
    %c0_104 = arith.constant 0 : index
    %c0_105 = arith.constant 0 : index
    %79 = vector.load %arg11[%c0_102, %c1_103, %c0_104, %c0_105] : memref<2x18x18x8xf32, #tpu.memory_space<vmem>>, vector<2x16x16x8xf32>
    %80 = vector.shape_cast %79 : vector<2x16x16x8xf32> to vector<512x8xf32>
    %c0_106 = arith.constant 0 : index
    %c24_107 = arith.constant 24 : index
    %81 = vector.load %arg12[%c0_106, %c24_107] : memref<512x128xf32, #tpu.memory_space<vmem>>, vector<512x8xf32>
    tpu.vector_store %arg12[%c0_106, %c24_107], %80 {strides = array<i32>} : memref<512x128xf32, #tpu.memory_space<vmem>>, vector<512x8xf32>,
    %c0_108 = arith.constant 0 : index
    %c1_109 = arith.constant 1 : index
    %c1_110 = arith.constant 1 : index
    %c0_111 = arith.constant 0 : index
    %82 = vector.load %arg11[%c0_108, %c1_109, %c1_110, %c0_111] : memref<2x18x18x8xf32, #tpu.memory_space<vmem>>, vector<2x16x16x8xf32>
    %83 = vector.shape_cast %82 : vector<2x16x16x8xf32> to vector<512x8xf32>
    %c0_112 = arith.constant 0 : index
    %c32_113 = arith.constant 32 : index
    %84 = vector.load %arg12[%c0_112, %c32_113] : memref<512x128xf32, #tpu.memory_space<vmem>>, vector<512x8xf32>
    tpu.vector_store %arg12[%c0_112, %c32_113], %83 {strides = array<i32>} : memref<512x128xf32, #tpu.memory_space<vmem>>, vector<512x8xf32>,
    %c0_114 = arith.constant 0 : index
    %c1_115 = arith.constant 1 : index
    %c2_116 = arith.constant 2 : index
    %c0_117 = arith.constant 0 : index
    %85 = vector.load %arg11[%c0_114, %c1_115, %c2_116, %c0_117] : memref<2x18x18x8xf32, #tpu.memory_space<vmem>>, vector<2x16x16x8xf32>
    %86 = vector.shape_cast %85 : vector<2x16x16x8xf32> to vector<512x8xf32>
    %c0_118 = arith.constant 0 : index
    %c40 = arith.constant 40 : index
    %87 = vector.load %arg12[%c0_118, %c40] : memref<512x128xf32, #tpu.memory_space<vmem>>, vector<512x8xf32>
    tpu.vector_store %arg12[%c0_118, %c40], %86 {strides = array<i32>} : memref<512x128xf32, #tpu.memory_space<vmem>>, vector<512x8xf32>,
    %c0_119 = arith.constant 0 : index
    %c2_120 = arith.constant 2 : index
    %c0_121 = arith.constant 0 : index
    %c0_122 = arith.constant 0 : index
    %88 = vector.load %arg11[%c0_119, %c2_120, %c0_121, %c0_122] : memref<2x18x18x8xf32, #tpu.memory_space<vmem>>, vector<2x16x16x8xf32>
    %89 = vector.shape_cast %88 : vector<2x16x16x8xf32> to vector<512x8xf32>
    %c0_123 = arith.constant 0 : index
    %c48 = arith.constant 48 : index
    %90 = vector.load %arg12[%c0_123, %c48] : memref<512x128xf32, #tpu.memory_space<vmem>>, vector<512x8xf32>
    tpu.vector_store %arg12[%c0_123, %c48], %89 {strides = array<i32>} : memref<512x128xf32, #tpu.memory_space<vmem>>, vector<512x8xf32>,
    %c0_124 = arith.constant 0 : index
    %c2_125 = arith.constant 2 : index
    %c1_126 = arith.constant 1 : index
    %c0_127 = arith.constant 0 : index
    %91 = vector.load %arg11[%c0_124, %c2_125, %c1_126, %c0_127] : memref<2x18x18x8xf32, #tpu.memory_space<vmem>>, vector<2x16x16x8xf32>
    %92 = vector.shape_cast %91 : vector<2x16x16x8xf32> to vector<512x8xf32>
    %c0_128 = arith.constant 0 : index
    %c56 = arith.constant 56 : index
    %93 = vector.load %arg12[%c0_128, %c56] : memref<512x128xf32, #tpu.memory_space<vmem>>, vector<512x8xf32>
    tpu.vector_store %arg12[%c0_128, %c56], %92 {strides = array<i32>} : memref<512x128xf32, #tpu.memory_space<vmem>>, vector<512x8xf32>,
    %c0_129 = arith.constant 0 : index
    %c2_130 = arith.constant 2 : index
    %c2_131 = arith.constant 2 : index
    %c0_132 = arith.constant 0 : index
    %94 = vector.load %arg11[%c0_129, %c2_130, %c2_131, %c0_132] : memref<2x18x18x8xf32, #tpu.memory_space<vmem>>, vector<2x16x16x8xf32>
    %95 = vector.shape_cast %94 : vector<2x16x16x8xf32> to vector<512x8xf32>
    %c0_133 = arith.constant 0 : index
    %c64 = arith.constant 64 : index
    %96 = vector.load %arg12[%c0_133, %c64] : memref<512x128xf32, #tpu.memory_space<vmem>>, vector<512x8xf32>
    tpu.vector_store %arg12[%c0_133, %c64], %95 {strides = array<i32>} : memref<512x128xf32, #tpu.memory_space<vmem>>, vector<512x8xf32>,
    %c0_134 = arith.constant 0 : index
    %c0_135 = arith.constant 0 : index
    %97 = vector.load %arg12[%c0_134, %c0_135] : memref<512x128xf32, #tpu.memory_space<vmem>>, vector<512x128xf32>
    %c0_136 = arith.constant 0 : index
    %c0_137 = arith.constant 0 : index
    %98 = vector.load %arg5[%c0_136, %c0_137] : memref<128x128xf32, #tpu.memory_space<vmem>>, vector<128x128xf32>
    %cst_138 = arith.constant dense<0.000000e+00> : vector<512x128xf32>
    %99 = tpu.matmul %97, %98, %cst_138 {dimension_numbers = #tpu.dot_dimension_numbers<[1], [0], [0], [1], [0, 0, 1, 1], [], []>} : vector<512x128xf32>, vector<128x128xf32>, vector<512x128xf32> -> vector<512x128xf32>
    %100 = vector.extract_strided_slice %99 {offsets = [0, 0], sizes = [512, 4], strides = [1, 1]} : vector<512x128xf32> to vector<512x4xf32>
    %c0_139 = arith.constant 0 : index
    %c0_140 = arith.constant 0 : index
    %101 = vector.load %arg6[%c0_139, %c0_140] : memref<1x4xf32, #tpu.memory_space<vmem>>, vector<1x4xf32>
    %102 = vector.broadcast %101 : vector<1x4xf32> to vector<512x4xf32>
    %103 = arith.addf %100, %102 : vector<512x4xf32>
    %cst_141 = arith.constant dense<0.000000e+00> : vector<4xf32>
    %104 = vector.multi_reduction <add>, %103, %cst_141 [0] : vector<512x4xf32> to vector<4xf32>
    %105 = vector.shape_cast %104 : vector<4xf32> to vector<1x4xf32>
    %cst_142 = arith.constant 5.120000e+02 : f32
    %106 = vector.broadcast %cst_142 : f32 to vector<1x4xf32>
    %107 = arith.divf %105, %106 : vector<1x4xf32>
    %108 = vector.broadcast %107 : vector<1x4xf32> to vector<512x4xf32>
    %109 = arith.subf %103, %108 : vector<512x4xf32>
    %110 = arith.mulf %109, %109 : vector<512x4xf32>
    %cst_143 = arith.constant dense<0.000000e+00> : vector<4xf32>
    %111 = vector.multi_reduction <add>, %110, %cst_143 [0] : vector<512x4xf32> to vector<4xf32>
    %112 = vector.shape_cast %111 : vector<4xf32> to vector<1x4xf32>
    %cst_144 = arith.constant 5.120000e+02 : f32
    %113 = vector.broadcast %cst_144 : f32 to vector<1x4xf32>
    %114 = arith.divf %112, %113 : vector<1x4xf32>
    %115 = vector.broadcast %107 : vector<1x4xf32> to vector<512x4xf32>
    %116 = arith.subf %103, %115 : vector<512x4xf32>
    %cst_145 = arith.constant 9.99999974E-6 : f32
    %117 = vector.broadcast %cst_145 : f32 to vector<1x4xf32>
    %118 = arith.addf %114, %117 : vector<1x4xf32>
    %119 = math.rsqrt %118 : vector<1x4xf32>
    %120 = vector.broadcast %119 : vector<1x4xf32> to vector<512x4xf32>
    %121 = arith.mulf %116, %120 : vector<512x4xf32>
    %c0_146 = arith.constant 0 : index
    %c0_147 = arith.constant 0 : index
    %122 = vector.load %arg7[%c0_146, %c0_147] : memref<1x4xf32, #tpu.memory_space<vmem>>, vector<1x4xf32>
    %123 = vector.broadcast %122 : vector<1x4xf32> to vector<512x4xf32>
    %124 = arith.mulf %121, %123 : vector<512x4xf32>
    %c0_148 = arith.constant 0 : index
    %c0_149 = arith.constant 0 : index
    %125 = vector.load %arg8[%c0_148, %c0_149] : memref<1x4xf32, #tpu.memory_space<vmem>>, vector<1x4xf32>
    %126 = vector.broadcast %125 : vector<1x4xf32> to vector<512x4xf32>
    %127 = arith.addf %124, %126 : vector<512x4xf32>
    %cst_150 = arith.constant 0.000000e+00 : f32
    %128 = vector.broadcast %cst_150 : f32 to vector<512x4xf32>
    %129 = arith.maximumf %127, %128 : vector<512x4xf32>
    %130 = vector.shape_cast %129 : vector<512x4xf32> to vector<2x16x16x4xf32>
    %c0_151 = arith.constant 0 : index
    %c0_152 = arith.constant 0 : index
    %c0_153 = arith.constant 0 : index
    %c0_154 = arith.constant 0 : index
    %131 = vector.load %arg9[%c0_151, %c0_152, %c0_153, %c0_154] : memref<2x16x16x4xf32, #tpu.memory_space<vmem>>, vector<2x16x16x4xf32>
    tpu.vector_store %arg9[%c0_151, %c0_152, %c0_153, %c0_154], %130 {strides = array<i32>} : memref<2x16x16x4xf32, #tpu.memory_space<vmem>>, vector<2x16x16x4xf32>,
    return
  }
}

</mosaic_0001>

<llo_original>
// kernel: tpu_custom_call.1
$region0: #{tpu_custom_call.1}
  #allocation0 [shape = 'u32[]', space=smem, size = 0x4, offset = 0x4, fixed_abs, tag = 'smem constant byte address 0x4 - core index']
  #allocation1 [shape = 'u32[144,128]{1,0:T(1,128)}', space=vmem, size = 0x12000, scoped, tag = 'internal scratch']
  #allocation2 [shape = 'f32[2,18,18,4]{3,2,1,0:T(8,128)}', space=vmem, size = 0x6c000, scoped, tag = 'scratch operand']
  #allocation3 [shape = 'f32[2,18,18,8]{3,2,1,0:T(8,128)}', space=vmem, size = 0x6c000, scoped, tag = 'scratch operand']
  #allocation4 [shape = 'f32[512,128]{1,0:T(8,128)}', space=vmem, size = 0x40000, scoped, tag = 'scratch operand']
  %s0 = inlined_call_operand.vmem [shape: f32[2,16,16,4], index: 0, kind: input, shape index: {}]
  %s1 = inlined_call_operand.vmem [shape: f32[128,128], index: 1, kind: input, shape index: {}]
  %s2 = inlined_call_operand.vmem [shape: f32[1,8], index: 2, kind: input, shape index: {}]
  %s3 = inlined_call_operand.vmem [shape: f32[1,8], index: 3, kind: input, shape index: {}]
  %s4 = inlined_call_operand.vmem [shape: f32[1,8], index: 4, kind: input, shape index: {}]
  %s5 = inlined_call_operand.vmem [shape: f32[128,128], index: 5, kind: input, shape index: {}]
  %s6 = inlined_call_operand.vmem [shape: f32[1,4], index: 6, kind: input, shape index: {}]
  %s7 = inlined_call_operand.vmem [shape: f32[1,4], index: 7, kind: input, shape index: {}]
  %s8 = inlined_call_operand.vmem [shape: f32[1,4], index: 8, kind: input, shape index: {}]
  %s9 = inlined_call_operand.vmem [shape: f32[2,16,16,4], index: 9, kind: output, shape index: {}]
  %s10 = sld [smem:[#allocation0]]
  $region46: #{tpu_custom_call.1} parent=0
    _
  %s12 = ssub.s32 1, %s10
  %s13 = scalar_select 0, %s12, %s10
  // Predicated region
  $region2: #{tpu_custom_call.1} parent=0 // pred_check
    _
  $region3: #{tpu_custom_call.1} parent=0 // pred_check_branch
    %15 = sbr.rel (0) target = $region5
  $region4: #{tpu_custom_call.1} parent=0 // pred_region
    _
  $region5: #{tpu_custom_call.1} parent=0 // pred_fallthru
    _
  // Predicated region
  $region6: #{tpu_custom_call.1} parent=0 // pred_check
    _
  $region7: #{tpu_custom_call.1} parent=0 // pred_check_branch
    %17 = sbr.rel (0) target = $region9
  $region8: #{tpu_custom_call.1} parent=0 // pred_region
    _
  $region9: #{tpu_custom_call.1} parent=0 // pred_fallthru
    _
  // Predicated region
  $region10: #{tpu_custom_call.1} parent=0 // pred_check
    _
  $region11: #{tpu_custom_call.1} parent=0 // pred_check_branch
    %19 = sbr.rel (0) target = $region13
  $region12: #{tpu_custom_call.1} parent=0 // pred_region
    _
  $region13: #{tpu_custom_call.1} parent=0 // pred_fallthru
    _
  // Predicated region
  $region14: #{tpu_custom_call.1} parent=0 // pred_check
    _
  $region15: #{tpu_custom_call.1} parent=0 // pred_check_branch
    %21 = sbr.rel (0) target = $region17
  $region16: #{tpu_custom_call.1} parent=0 // pred_region
    _
  $region17: #{tpu_custom_call.1} parent=0 // pred_fallthru
    _
  // Predicated region
  $region18: #{tpu_custom_call.1} parent=0 // pred_check
    _
  $region19: #{tpu_custom_call.1} parent=0 // pred_check_branch
    %23 = sbr.rel (0) target = $region21
  $region20: #{tpu_custom_call.1} parent=0 // pred_region
    _
  $region21: #{tpu_custom_call.1} parent=0 // pred_fallthru
    _
  // Predicated region
  $region22: #{tpu_custom_call.1} parent=0 // pred_check
    _
  $region23: #{tpu_custom_call.1} parent=0 // pred_check_branch
    %25 = sbr.rel (0) target = $region25
  $region24: #{tpu_custom_call.1} parent=0 // pred_region
    _
  $region25: #{tpu_custom_call.1} parent=0 // pred_fallthru
    _
  // Predicated region
  $region26: #{tpu_custom_call.1} parent=0 // pred_check
    _
  $region27: #{tpu_custom_call.1} parent=0 // pred_check_branch
    %27 = sbr.rel (0) target = $region29
  $region28: #{tpu_custom_call.1} parent=0 // pred_region
    _
  $region29: #{tpu_custom_call.1} parent=0 // pred_fallthru
    _
  // Predicated region
  $region30: #{tpu_custom_call.1} parent=0 // pred_check
    _
  $region31: #{tpu_custom_call.1} parent=0 // pred_check_branch
    %29 = sbr.rel (0) target = $region33
  $region32: #{tpu_custom_call.1} parent=0 // pred_region
    _
  $region33: #{tpu_custom_call.1} parent=0 // pred_fallthru
    _
  // Predicated region
  $region34: #{tpu_custom_call.1} parent=0 // pred_check
    _
  $region35: #{tpu_custom_call.1} parent=0 // pred_check_branch
    %31 = sbr.rel (0) target = $region37
  $region36: #{tpu_custom_call.1} parent=0 // pred_region
    _
  $region37: #{tpu_custom_call.1} parent=0 // pred_fallthru
    _
  %32 = vst [vmem:[#allocation4] sm:$0xff] 0.0
  %33 = vst [vmem:[#allocation4 + $0x8] sm:$0xff] 0.0
  %34 = vst [vmem:[#allocation4 + $0x10] sm:$0xff] 0.0
  %35 = vst [vmem:[#allocation4 + $0x18] sm:$0xff] 0.0
  %36 = vst [vmem:[#allocation4 + $0x20] sm:$0xff] 0.0
  %37 = vst [vmem:[#allocation4 + $0x28] sm:$0xff] 0.0
  %38 = vst [vmem:[#allocation4 + $0x30] sm:$0xff] 0.0
  %39 = vst [vmem:[#allocation4 + $0x38] sm:$0xff] 0.0
  %40 = vst [vmem:[#allocation4 + $0x40] sm:$0xff] 0.0
  %41 = vst [vmem:[#allocation4 + $0x48] sm:$0xff] 0.0
  %42 = vst [vmem:[#allocation4 + $0x50] sm:$0xff] 0.0
  %43 = vst [vmem:[#allocation4 + $0x58] sm:$0xff] 0.0
  %44 = vst [vmem:[#allocation4 + $0x60] sm:$0xff] 0.0
  %45 = vst [vmem:[#allocation4 + $0x68] sm:$0xff] 0.0
  %46 = vst [vmem:[#allocation4 + $0x70] sm:$0xff] 0.0
  %47 = vst [vmem:[#allocation4 + $0x78] sm:$0xff] 0.0
  %48 = vst [vmem:[#allocation4 + $0x80] sm:$0xff] 0.0
  %49 = vst [vmem:[#allocation4 + $0x88] sm:$0xff] 0.0
  %50 = vst [vmem:[#allocation4 + $0x90] sm:$0xff] 0.0
  %51 = vst [vmem:[#allocation4 + $0x98] sm:$0xff] 0.0
  %52 = vst [vmem:[#allocation4 + $0xa0] sm:$0xff] 0.0
  %53 = vst [vmem:[#allocation4 + $0xa8] sm:$0xff] 0.0
  %54 = vst [vmem:[#allocation4 + $0xb0] sm:$0xff] 0.0
  %55 = vst [vmem:[#allocation4 + $0xb8] sm:$0xff] 0.0
  %56 = vst [vmem:[#allocation4 + $0xc0] sm:$0xff] 0.0
  %57 = vst [vmem:[#allocation4 + $0xc8] sm:$0xff] 0.0
  %58 = vst [vmem:[#allocation4 + $0xd0] sm:$0xff] 0.0
  %59 = vst [vmem:[#allocation4 + $0xd8] sm:$0xff] 0.0
  %60 = vst [vmem:[#allocation4 + $0xe0] sm:$0xff] 0.0
  %61 = vst [vmem:[#allocation4 + $0xe8] sm:$0xff] 0.0
  %62 = vst [vmem:[#allocation4 + $0xf0] sm:$0xff] 0.0
  %63 = vst [vmem:[#allocation4 + $0xf8] sm:$0xff] 0.0
  %64 = vst [vmem:[#allocation4 + $0x100] sm:$0xff] 0.0
  %65 = vst [vmem:[#allocation4 + $0x108] sm:$0xff] 0.0
  %66 = vst [vmem:[#allocation4 + $0x110] sm:$0xff] 0.0
  %67 = vst [vmem:[#allocation4 + $0x118] sm:$0xff] 0.0
  %68 = vst [vmem:[#allocation4 + $0x120] sm:$0xff] 0.0
  %69 = vst [vmem:[#allocation4 + $0x128] sm:$0xff] 0.0
  %70 = vst [vmem:[#allocation4 + $0x130] sm:$0xff] 0.0
  %71 = vst [vmem:[#allocation4 + $0x138] sm:$0xff] 0.0
  %72 = vst [vmem:[#allocation4 + $0x140] sm:$0xff] 0.0
  %73 = vst [vmem:[#allocation4 + $0x148] sm:$0xff] 0.0
  %74 = vst [vmem:[#allocation4 + $0x150] sm:$0xff] 0.0
  %75 = vst [vmem:[#allocation4 + $0x158] sm:$0xff] 0.0
  %76 = vst [vmem:[#allocation4 + $0x160] sm:$0xff] 0.0
  %77 = vst [vmem:[#allocation4 + $0x168] sm:$0xff] 0.0
  %78 = vst [vmem:[#allocation4 + $0x170] sm:$0xff] 0.0
  %79 = vst [vmem:[#allocation4 + $0x178] sm:$0xff] 0.0
  %80 = vst [vmem:[#allocation4 + $0x180] sm:$0xff] 0.0
  %81 = vst [vmem:[#allocation4 + $0x188] sm:$0xff] 0.0
  %82 = vst [vmem:[#allocation4 + $0x190] sm:$0xff] 0.0
  %83 = vst [vmem:[#allocation4 + $0x198] sm:$0xff] 0.0
  %84 = vst [vmem:[#allocation4 + $0x1a0] sm:$0xff] 0.0
  %85 = vst [vmem:[#allocation4 + $0x1a8] sm:$0xff] 0.0
  %86 = vst [vmem:[#allocation4 + $0x1b0] sm:$0xff] 0.0
  %87 = vst [vmem:[#allocation4 + $0x1b8] sm:$0xff] 0.0
  %88 = vst [vmem:[#allocation4 + $0x1c0] sm:$0xff] 0.0
  %89 = vst [vmem:[#allocation4 + $0x1c8] sm:$0xff] 0.0
  %90 = vst [vmem:[#allocation4 + $0x1d0] sm:$0xff] 0.0
  %91 = vst [vmem:[#allocation4 + $0x1d8] sm:$0xff] 0.0
  %92 = vst [vmem:[#allocation4 + $0x1e0] sm:$0xff] 0.0
  %93 = vst [vmem:[#allocation4 + $0x1e8] sm:$0xff] 0.0
  %94 = vst [vmem:[#allocation4 + $0x1f0] sm:$0xff] 0.0
  %95 = vst [vmem:[#allocation4 + $0x1f8] sm:$0xff] 0.0
  %v96 = vld [vmem:[%s0] sm:$0xff]
  %v97 = vld [vmem:[%s0 + $0x8] sm:$0xff]
  %v98 = vld [vmem:[%s0 + $0x10] sm:$0xff]
  %v99 = vld [vmem:[%s0 + $0x18] sm:$0xff]
  %v100 = vld [vmem:[%s0 + $0x20] sm:$0xff]
  %v101 = vld [vmem:[%s0 + $0x28] sm:$0xff]
  %v102 = vld [vmem:[%s0 + $0x30] sm:$0xff]
  %v103 = vld [vmem:[%s0 + $0x38] sm:$0xff]
  %v104 = vld [vmem:[%s0 + $0x40] sm:$0xff]
  %v105 = vld [vmem:[%s0 + $0x48] sm:$0xff]
  %v106 = vld [vmem:[%s0 + $0x50] sm:$0xff]
  %v107 = vld [vmem:[%s0 + $0x58] sm:$0xff]
  %v108 = vld [vmem:[%s0 + $0x60] sm:$0xff]
  %v109 = vld [vmem:[%s0 + $0x68] sm:$0xff]
  %v110 = vld [vmem:[%s0 + $0x70] sm:$0xff]
  %v111 = vld [vmem:[%s0 + $0x78] sm:$0xff]
  %v112 = vld [vmem:[%s0 + $0x80] sm:$0xff]
  %v113 = vld [vmem:[%s0 + $0x88] sm:$0xff]
  %v114 = vld [vmem:[%s0 + $0x90] sm:$0xff]
  %v115 = vld [vmem:[%s0 + $0x98] sm:$0xff]
  %v116 = vld [vmem:[%s0 + $0xa0] sm:$0xff]
  %v117 = vld [vmem:[%s0 + $0xa8] sm:$0xff]
  %v118 = vld [vmem:[%s0 + $0xb0] sm:$0xff]
  %v119 = vld [vmem:[%s0 + $0xb8] sm:$0xff]
  %v120 = vld [vmem:[%s0 + $0xc0] sm:$0xff]
  %v121 = vld [vmem:[%s0 + $0xc8] sm:$0xff]
  %v122 = vld [vmem:[%s0 + $0xd0] sm:$0xff]
  %v123 = vld [vmem:[%s0 + $0xd8] sm:$0xff]
  %v124 = vld [vmem:[%s0 + $0xe0] sm:$0xff]
  %v125 = vld [vmem:[%s0 + $0xe8] sm:$0xff]
  %v126 = vld [vmem:[%s0 + $0xf0] sm:$0xff]
  %v127 = vld [vmem:[%s0 + $0xf8] sm:$0xff]
  %v128 = vld [vmem:[%s0 + $0x100] sm:$0xff]
  %v129 = vld [vmem:[%s0 + $0x108] sm:$0xff]
  %v130 = vld [vmem:[%s0 + $0x110] sm:$0xff]
  %v131 = vld [vmem:[%s0 + $0x118] sm:$0xff]
  %v132 = vld [vmem:[%s0 + $0x120] sm:$0xff]
  %v133 = vld [vmem:[%s0 + $0x128] sm:$0xff]
  %v134 = vld [vmem:[%s0 + $0x130] sm:$0xff]
  %v135 = vld [vmem:[%s0 + $0x138] sm:$0xff]
  %v136 = vld [vmem:[%s0 + $0x140] sm:$0xff]
  %v137 = vld [vmem:[%s0 + $0x148] sm:$0xff]
  %v138 = vld [vmem:[%s0 + $0x150] sm:$0xff]
  %v139 = vld [vmem:[%s0 + $0x158] sm:$0xff]
  %v140 = vld [vmem:[%s0 + $0x160] sm:$0xff]
  %v141 = vld [vmem:[%s0 + $0x168] sm:$0xff]
  %v142 = vld [vmem:[%s0 + $0x170] sm:$0xff]
  %v143 = vld [vmem:[%s0 + $0x178] sm:$0xff]
  %v144 = vld [vmem:[%s0 + $0x180] sm:$0xff]
  %v145 = vld [vmem:[%s0 + $0x188] sm:$0xff]
  %v146 = vld [vmem:[%s0 + $0x190] sm:$0xff]
  %v147 = vld [vmem:[%s0 + $0x198] sm:$0xff]
  %v148 = vld [vmem:[%s0 + $0x1a0] sm:$0xff]
  %v149 = vld [vmem:[%s0 + $0x1a8] sm:$0xff]
  %v150 = vld [vmem:[%s0 + $0x1b0] sm:$0xff]
  %v151 = vld [vmem:[%s0 + $0x1b8] sm:$0xff]
  %v152 = vld [vmem:[%s0 + $0x1c0] sm:$0xff]
  %v153 = vld [vmem:[%s0 + $0x1c8] sm:$0xff]
  %v154 = vld [vmem:[%s0 + $0x1d0] sm:$0xff]
  %v155 = vld [vmem:[%s0 + $0x1d8] sm:$0xff]
  %v156 = vld [vmem:[%s0 + $0x1e0] sm:$0xff]
  %v157 = vld [vmem:[%s0 + $0x1e8] sm:$0xff]
  %v158 = vld [vmem:[%s0 + $0x1f0] sm:$0xff]
  %v159 = vld [vmem:[%s0 + $0x1f8] sm:$0xff]
  %vm160 = vcmask 31744
  %161 = vst.msk [vmem:[#allocation2] sm:$0xff] %vm160, 0.0
  %162 = vst.msk [vmem:[#allocation2 + $0x8] sm:$0xff] %vm160, 0.0
  %vm163 = vcmask 25600
  %164 = vst.msk [vmem:[#allocation2 + $0x10] sm:$0x3] %vm163, 0.0
  %165 = vst.msk [vmem:[#allocation2 + $0x18] sm:$0xff] %vm160, 0.0
  %166 = vst.msk [vmem:[#allocation2 + $0x20] sm:$0xff] %vm160, 0.0
  %167 = vst.msk [vmem:[#allocation2 + $0x28] sm:$0x3] %vm163, 0.0
  %168 = vst.msk [vmem:[#allocation2 + $0x30] sm:$0xff] %vm160, 0.0
  %169 = vst.msk [vmem:[#allocation2 + $0x38] sm:$0xff] %vm160, 0.0
  %170 = vst.msk [vmem:[#allocation2 + $0x40] sm:$0x3] %vm163, 0.0
  %171 = vst.msk [vmem:[#allocation2 + $0x48] sm:$0xff] %vm160, 0.0
  %172 = vst.msk [vmem:[#allocation2 + $0x50] sm:$0xff] %vm160, 0.0
  %173 = vst.msk [vmem:[#allocation2 + $0x58] sm:$0x3] %vm163, 0.0
  %174 = vst.msk [vmem:[#allocation2 + $0x60] sm:$0xff] %vm160, 0.0
  %175 = vst.msk [vmem:[#allocation2 + $0x68] sm:$0xff] %vm160, 0.0
  %176 = vst.msk [vmem:[#allocation2 + $0x70] sm:$0x3] %vm163, 0.0
  %177 = vst.msk [vmem:[#allocation2 + $0x78] sm:$0xff] %vm160, 0.0
  %178 = vst.msk [vmem:[#allocation2 + $0x80] sm:$0xff] %vm160, 0.0
  %179 = vst.msk [vmem:[#allocation2 + $0x88] sm:$0x3] %vm163, 0.0
  %180 = vst.msk [vmem:[#allocation2 + $0x90] sm:$0xff] %vm160, 0.0
  %181 = vst.msk [vmem:[#allocation2 + $0x98] sm:$0xff] %vm160, 0.0
  %182 = vst.msk [vmem:[#allocation2 + $0xa0] sm:$0x3] %vm163, 0.0
  %183 = vst.msk [vmem:[#allocation2 + $0xa8] sm:$0xff] %vm160, 0.0
  %184 = vst.msk [vmem:[#allocation2 + $0xb0] sm:$0xff] %vm160, 0.0
  %185 = vst.msk [vmem:[#allocation2 + $0xb8] sm:$0x3] %vm163, 0.0
  %186 = vst.msk [vmem:[#allocation2 + $0xc0] sm:$0xff] %vm160, 0.0
  %187 = vst.msk [vmem:[#allocation2 + $0xc8] sm:$0xff] %vm160, 0.0
  %188 = vst.msk [vmem:[#allocation2 + $0xd0] sm:$0x3] %vm163, 0.0
  %189 = vst.msk [vmem:[#allocation2 + $0xd8] sm:$0xff] %vm160, 0.0
  %190 = vst.msk [vmem:[#allocation2 + $0xe0] sm:$0xff] %vm160, 0.0
  %191 = vst.msk [vmem:[#allocation2 + $0xe8] sm:$0x3] %vm163, 0.0
  %192 = vst.msk [vmem:[#allocation2 + $0xf0] sm:$0xff] %vm160, 0.0
  %193 = vst.msk [vmem:[#allocation2 + $0xf8] sm:$0xff] %vm160, 0.0
  %194 = vst.msk [vmem:[#allocation2 + $0x100] sm:$0x3] %vm163, 0.0
  %195 = vst.msk [vmem:[#allocation2 + $0x108] sm:$0xff] %vm160, 0.0
  %196 = vst.msk [vmem:[#allocation2 + $0x110] sm:$0xff] %vm160, 0.0
  %197 = vst.msk [vmem:[#allocation2 + $0x118] sm:$0x3] %vm163, 0.0
  %198 = vst.msk [vmem:[#allocation2 + $0x120] sm:$0xff] %vm160, 0.0
  %199 = vst.msk [vmem:[#allocation2 + $0x128] sm:$0xff] %vm160, 0.0
  %200 = vst.msk [vmem:[#allocation2 + $0x130] sm:$0x3] %vm163, 0.0
  %201 = vst.msk [vmem:[#allocation2 + $0x138] sm:$0xff] %vm160, 0.0
  %202 = vst.msk [vmem:[#allocation2 + $0x140] sm:$0xff] %vm160, 0.0
  %203 = vst.msk [vmem:[#allocation2 + $0x148] sm:$0x3] %vm163, 0.0
  %204 = vst.msk [vmem:[#allocation2 + $0x150] sm:$0xff] %vm160, 0.0
  %205 = vst.msk [vmem:[#allocation2 + $0x158] sm:$0xff] %vm160, 0.0
  %206 = vst.msk [vmem:[#allocation2 + $0x160] sm:$0x3] %vm163, 0.0
  %207 = vst.msk [vmem:[#allocation2 + $0x168] sm:$0xff] %vm160, 0.0
  %208 = vst.msk [vmem:[#allocation2 + $0x170] sm:$0xff] %vm160, 0.0
  %209 = vst.msk [vmem:[#allocation2 + $0x178] sm:$0x3] %vm163, 0.0
  %210 = vst.msk [vmem:[#allocation2 + $0x180] sm:$0xff] %vm160, 0.0
  %211 = vst.msk [vmem:[#allocation2 + $0x188] sm:$0xff] %vm160, 0.0
  %212 = vst.msk [vmem:[#allocation2 + $0x190] sm:$0x3] %vm163, 0.0
  %213 = vst.msk [vmem:[#allocation2 + $0x198] sm:$0xff] %vm160, 0.0
  %214 = vst.msk [vmem:[#allocation2 + $0x1a0] sm:$0xff] %vm160, 0.0
  %215 = vst.msk [vmem:[#allocation2 + $0x1a8] sm:$0x3] %vm163, 0.0
  %216 = vst.msk [vmem:[#allocation2 + $0x1b0] sm:$0xff] %vm160, 0.0
  %217 = vst.msk [vmem:[#allocation2 + $0x1b8] sm:$0xff] %vm160, 0.0
  %218 = vst.msk [vmem:[#allocation2 + $0x1c0] sm:$0x3] %vm163, 0.0
  %219 = vst.msk [vmem:[#allocation2 + $0x1c8] sm:$0xff] %vm160, 0.0
  %220 = vst.msk [vmem:[#allocation2 + $0x1d0] sm:$0xff] %vm160, 0.0
  %221 = vst.msk [vmem:[#allocation2 + $0x1d8] sm:$0x3] %vm163, 0.0
  %222 = vst.msk [vmem:[#allocation2 + $0x1e0] sm:$0xff] %vm160, 0.0
  %223 = vst.msk [vmem:[#allocation2 + $0x1e8] sm:$0xff] %vm160, 0.0
  %224 = vst.msk [vmem:[#allocation2 + $0x1f0] sm:$0x3] %vm163, 0.0
  %225 = vst.msk [vmem:[#allocation2 + $0x1f8] sm:$0xff] %vm160, 0.0
  %226 = vst.msk [vmem:[#allocation2 + $0x200] sm:$0xff] %vm160, 0.0
  %227 = vst.msk [vmem:[#allocation2 + $0x208] sm:$0x3] %vm163, 0.0
  %228 = vst.msk [vmem:[#allocation2 + $0x210] sm:$0xff] %vm160, 0.0
  %229 = vst.msk [vmem:[#allocation2 + $0x218] sm:$0xff] %vm160, 0.0
  %230 = vst.msk [vmem:[#allocation2 + $0x220] sm:$0x3] %vm163, 0.0
  %231 = vst.msk [vmem:[#allocation2 + $0x228] sm:$0xff] %vm160, 0.0
  %232 = vst.msk [vmem:[#allocation2 + $0x230] sm:$0xff] %vm160, 0.0
  %233 = vst.msk [vmem:[#allocation2 + $0x238] sm:$0x3] %vm163, 0.0
  %234 = vst.msk [vmem:[#allocation2 + $0x240] sm:$0xff] %vm160, 0.0
  %235 = vst.msk [vmem:[#allocation2 + $0x248] sm:$0xff] %vm160, 0.0
  %236 = vst.msk [vmem:[#allocation2 + $0x250] sm:$0x3] %vm163, 0.0
  %237 = vst.msk [vmem:[#allocation2 + $0x258] sm:$0xff] %vm160, 0.0
  %238 = vst.msk [vmem:[#allocation2 + $0x260] sm:$0xff] %vm160, 0.0
  %239 = vst.msk [vmem:[#allocation2 + $0x268] sm:$0x3] %vm163, 0.0
  %240 = vst.msk [vmem:[#allocation2 + $0x270] sm:$0xff] %vm160, 0.0
  %241 = vst.msk [vmem:[#allocation2 + $0x278] sm:$0xff] %vm160, 0.0
  %242 = vst.msk [vmem:[#allocation2 + $0x280] sm:$0x3] %vm163, 0.0
  %243 = vst.msk [vmem:[#allocation2 + $0x288] sm:$0xff] %vm160, 0.0
  %244 = vst.msk [vmem:[#allocation2 + $0x290] sm:$0xff] %vm160, 0.0
  %245 = vst.msk [vmem:[#allocation2 + $0x298] sm:$0x3] %vm163, 0.0
  %246 = vst.msk [vmem:[#allocation2 + $0x2a0] sm:$0xff] %vm160, 0.0
  %247 = vst.msk [vmem:[#allocation2 + $0x2a8] sm:$0xff] %vm160, 0.0
  %248 = vst.msk [vmem:[#allocation2 + $0x2b0] sm:$0x3] %vm163, 0.0
  %249 = vst.msk [vmem:[#allocation2 + $0x2b8] sm:$0xff] %vm160, 0.0
  %250 = vst.msk [vmem:[#allocation2 + $0x2c0] sm:$0xff] %vm160, 0.0
  %251 = vst.msk [vmem:[#allocation2 + $0x2c8] sm:$0x3] %vm163, 0.0
  %252 = vst.msk [vmem:[#allocation2 + $0x2d0] sm:$0xff] %vm160, 0.0
  %253 = vst.msk [vmem:[#allocation2 + $0x2d8] sm:$0xff] %vm160, 0.0
  %254 = vst.msk [vmem:[#allocation2 + $0x2e0] sm:$0x3] %vm163, 0.0
  %255 = vst.msk [vmem:[#allocation2 + $0x2e8] sm:$0xff] %vm160, 0.0
  %256 = vst.msk [vmem:[#allocation2 + $0x2f0] sm:$0xff] %vm160, 0.0
  %257 = vst.msk [vmem:[#allocation2 + $0x2f8] sm:$0x3] %vm163, 0.0
  %258 = vst.msk [vmem:[#allocation2 + $0x300] sm:$0xff] %vm160, 0.0
  %259 = vst.msk [vmem:[#allocation2 + $0x308] sm:$0xff] %vm160, 0.0
  %260 = vst.msk [vmem:[#allocation2 + $0x310] sm:$0x3] %vm163, 0.0
  %261 = vst.msk [vmem:[#allocation2 + $0x318] sm:$0xff] %vm160, 0.0
  %262 = vst.msk [vmem:[#allocation2 + $0x320] sm:$0xff] %vm160, 0.0
  %263 = vst.msk [vmem:[#allocation2 + $0x328] sm:$0x3] %vm163, 0.0
  %264 = vst.msk [vmem:[#allocation2 + $0x330] sm:$0xff] %vm160, 0.0
  %265 = vst.msk [vmem:[#allocation2 + $0x338] sm:$0xff] %vm160, 0.0
  %266 = vst.msk [vmem:[#allocation2 + $0x340] sm:$0x3] %vm163, 0.0
  %267 = vst.msk [vmem:[#allocation2 + $0x348] sm:$0xff] %vm160, 0.0
  %268 = vst.msk [vmem:[#allocation2 + $0x350] sm:$0xff] %vm160, 0.0
  %269 = vst.msk [vmem:[#allocation2 + $0x358] sm:$0x3] %vm163, 0.0
  %s270 = scalar_lea.vmem [#allocation2], 24
  %271 = vst.msk [vmem:[%s270 + $0x1] sm:$0xff] %vm160, %v96
  %272 = vst.msk [vmem:[%s270 + $0x9] sm:$0xff] %vm160, %v97
  %273 = vst.msk [vmem:[%s270 + $0x19] sm:$0xff] %vm160, %v98
  %274 = vst.msk [vmem:[%s270 + $0x21] sm:$0xff] %vm160, %v99
  %275 = vst.msk [vmem:[%s270 + $0x31] sm:$0xff] %vm160, %v100
  %276 = vst.msk [vmem:[%s270 + $0x39] sm:$0xff] %vm160, %v101
  %277 = vst.msk [vmem:[%s270 + $0x49] sm:$0xff] %vm160, %v102
  %278 = vst.msk [vmem:[%s270 + $0x51] sm:$0xff] %vm160, %v103
  %279 = vst.msk [vmem:[%s270 + $0x61] sm:$0xff] %vm160, %v104
  %280 = vst.msk [vmem:[%s270 + $0x69] sm:$0xff] %vm160, %v105
  %281 = vst.msk [vmem:[%s270 + $0x79] sm:$0xff] %vm160, %v106
  %282 = vst.msk [vmem:[%s270 + $0x81] sm:$0xff] %vm160, %v107
  %283 = vst.msk [vmem:[%s270 + $0x91] sm:$0xff] %vm160, %v108
  %284 = vst.msk [vmem:[%s270 + $0x99] sm:$0xff] %vm160, %v109
  %285 = vst.msk [vmem:[%s270 + $0xa9] sm:$0xff] %vm160, %v110
  %286 = vst.msk [vmem:[%s270 + $0xb1] sm:$0xff] %vm160, %v111
  %287 = vst.msk [vmem:[%s270 + $0xc1] sm:$0xff] %vm160, %v112
  %288 = vst.msk [vmem:[%s270 + $0xc9] sm:$0xff] %vm160, %v113
  %289 = vst.msk [vmem:[%s270 + $0xd9] sm:$0xff] %vm160, %v114
  %290 = vst.msk [vmem:[%s270 + $0xe1] sm:$0xff] %vm160, %v115
  %291 = vst.msk [vmem:[%s270 + $0xf1] sm:$0xff] %vm160, %v116
  %292 = vst.msk [vmem:[%s270 + $0xf9] sm:$0xff] %vm160, %v117
  %293 = vst.msk [vmem:[%s270 + $0x109] sm:$0xff] %vm160, %v118
  %294 = vst.msk [vmem:[%s270 + $0x111] sm:$0xff] %vm160, %v119
  %295 = vst.msk [vmem:[%s270 + $0x121] sm:$0xff] %vm160, %v120
  %296 = vst.msk [vmem:[%s270 + $0x129] sm:$0xff] %vm160, %v121
  %297 = vst.msk [vmem:[%s270 + $0x139] sm:$0xff] %vm160, %v122
  %298 = vst.msk [vmem:[%s270 + $0x141] sm:$0xff] %vm160, %v123
  %299 = vst.msk [vmem:[%s270 + $0x151] sm:$0xff] %vm160, %v124
  %300 = vst.msk [vmem:[%s270 + $0x159] sm:$0xff] %vm160, %v125
  %301 = vst.msk [vmem:[%s270 + $0x169] sm:$0xff] %vm160, %v126
  %302 = vst.msk [vmem:[%s270 + $0x171] sm:$0xff] %vm160, %v127
  %303 = vst.msk [vmem:[%s270 + $0x1b1] sm:$0xff] %vm160, %v128
  %304 = vst.msk [vmem:[%s270 + $0x1b9] sm:$0xff] %vm160, %v129
  %305 = vst.msk [vmem:[%s270 + $0x1c9] sm:$0xff] %vm160, %v130
  %306 = vst.msk [vmem:[%s270 + $0x1d1] sm:$0xff] %vm160, %v131
  %307 = vst.msk [vmem:[%s270 + $0x1e1] sm:$0xff] %vm160, %v132
  %308 = vst.msk [vmem:[%s270 + $0x1e9] sm:$0xff] %vm160, %v133
  %309 = vst.msk [vmem:[%s270 + $0x1f9] sm:$0xff] %vm160, %v134
  %310 = vst.msk [vmem:[%s270 + $0x201] sm:$0xff] %vm160, %v135
  %311 = vst.msk [vmem:[%s270 + $0x211] sm:$0xff] %vm160, %v136
  %312 = vst.msk [vmem:[%s270 + $0x219] sm:$0xff] %vm160, %v137
  %313 = vst.msk [vmem:[%s270 + $0x229] sm:$0xff] %vm160, %v138
  %314 = vst.msk [vmem:[%s270 + $0x231] sm:$0xff] %vm160, %v139
  %315 = vst.msk [vmem:[%s270 + $0x241] sm:$0xff] %vm160, %v140
  %316 = vst.msk [vmem:[%s270 + $0x249] sm:$0xff] %vm160, %v141
  %317 = vst.msk [vmem:[%s270 + $0x259] sm:$0xff] %vm160, %v142
  %318 = vst.msk [vmem:[%s270 + $0x261] sm:$0xff] %vm160, %v143
  %319 = vst.msk [vmem:[%s270 + $0x271] sm:$0xff] %vm160, %v144
  %320 = vst.msk [vmem:[%s270 + $0x279] sm:$0xff] %vm160, %v145
  %321 = vst.msk [vmem:[%s270 + $0x289] sm:$0xff] %vm160, %v146
  %322 = vst.msk [vmem:[%s270 + $0x291] sm:$0xff] %vm160, %v147
  %323 = vst.msk [vmem:[%s270 + $0x2a1] sm:$0xff] %vm160, %v148
  %324 = vst.msk [vmem:[%s270 + $0x2a9] sm:$0xff] %vm160, %v149
  %325 = vst.msk [vmem:[%s270 + $0x2b9] sm:$0xff] %vm160, %v150
  %326 = vst.msk [vmem:[%s270 + $0x2c1] sm:$0xff] %vm160, %v151
  %327 = vst.msk [vmem:[%s270 + $0x2d1] sm:$0xff] %vm160, %v152
  %328 = vst.msk [vmem:[%s270 + $0x2d9] sm:$0xff] %vm160, %v153
  %329 = vst.msk [vmem:[%s270 + $0x2e9] sm:$0xff] %vm160, %v154
  %330 = vst.msk [vmem:[%s270 + $0x2f1] sm:$0xff] %vm160, %v155
  %331 = vst.msk [vmem:[%s270 + $0x301] sm:$0xff] %vm160, %v156
  %332 = vst.msk [vmem:[%s270 + $0x309] sm:$0xff] %vm160, %v157
  %333 = vst.msk [vmem:[%s270 + $0x319] sm:$0xff] %vm160, %v158
  %334 = vst.msk [vmem:[%s270 + $0x321] sm:$0xff] %vm160, %v159
  %v335 = vld [vmem:[#allocation2] sm:$0xff]
  %v336 = vld [vmem:[#allocation2 + $0x8] sm:$0xff]
  %v337 = vld [vmem:[#allocation2 + $0x18] sm:$0xff]
  %v338 = vld [vmem:[#allocation2 + $0x20] sm:$0xff]
  %v339 = vld [vmem:[#allocation2 + $0x30] sm:$0xff]
  %v340 = vld [vmem:[#allocation2 + $0x38] sm:$0xff]
  %v341 = vld [vmem:[#allocation2 + $0x48] sm:$0xff]
  %v342 = vld [vmem:[#allocation2 + $0x50] sm:$0xff]
  %v343 = vld [vmem:[#allocation2 + $0x60] sm:$0xff]
  %v344 = vld [vmem:[#allocation2 + $0x68] sm:$0xff]
  %v345 = vld [vmem:[#allocation2 + $0x78] sm:$0xff]
  %v346 = vld [vmem:[#allocation2 + $0x80] sm:$0xff]
  %v347 = vld [vmem:[#allocation2 + $0x90] sm:$0xff]
  %v348 = vld [vmem:[#allocation2 + $0x98] sm:$0xff]
  %v349 = vld [vmem:[#allocation2 + $0xa8] sm:$0xff]
  %v350 = vld [vmem:[#allocation2 + $0xb0] sm:$0xff]
  %v351 = vld [vmem:[#allocation2 + $0xc0] sm:$0xff]
  %v352 = vld [vmem:[#allocation2 + $0xc8] sm:$0xff]
  %v353 = vld [vmem:[#allocation2 + $0xd8] sm:$0xff]
  %v354 = vld [vmem:[#allocation2 + $0xe0] sm:$0xff]
  %v355 = vld [vmem:[#allocation2 + $0xf0] sm:$0xff]
  %v356 = vld [vmem:[#allocation2 + $0xf8] sm:$0xff]
  %v357 = vld [vmem:[#allocation2 + $0x108] sm:$0xff]
  %v358 = vld [vmem:[#allocation2 + $0x110] sm:$0xff]
  %v359 = vld [vmem:[#allocation2 + $0x120] sm:$0xff]
  %v360 = vld [vmem:[#allocation2 + $0x128] sm:$0xff]
  %v361 = vld [vmem:[#allocation2 + $0x138] sm:$0xff]
  %v362 = vld [vmem:[#allocation2 + $0x140] sm:$0xff]
  %v363 = vld [vmem:[#allocation2 + $0x150] sm:$0xff]
  %v364 = vld [vmem:[#allocation2 + $0x158] sm:$0xff]
  %v365 = vld [vmem:[#allocation2 + $0x168] sm:$0xff]
  %v366 = vld [vmem:[#allocation2 + $0x170] sm:$0xff]
  %v367 = vld [vmem:[#allocation2 + $0x1b0] sm:$0xff]
  %v368 = vld [vmem:[#allocation2 + $0x1b8] sm:$0xff]
  %v369 = vld [vmem:[#allocation2 + $0x1c8] sm:$0xff]
  %v370 = vld [vmem:[#allocation2 + $0x1d0] sm:$0xff]
  %v371 = vld [vmem:[#allocation2 + $0x1e0] sm:$0xff]
  %v372 = vld [vmem:[#allocation2 + $0x1e8] sm:$0xff]
  %v373 = vld [vmem:[#allocation2 + $0x1f8] sm:$0xff]
  %v374 = vld [vmem:[#allocation2 + $0x200] sm:$0xff]
  %v375 = vld [vmem:[#allocation2 + $0x210] sm:$0xff]
  %v376 = vld [vmem:[#allocation2 + $0x218] sm:$0xff]
  %v377 = vld [vmem:[#allocation2 + $0x228] sm:$0xff]
  %v378 = vld [vmem:[#allocation2 + $0x230] sm:$0xff]
  %v379 = vld [vmem:[#allocation2 + $0x240] sm:$0xff]
  %v380 = vld [vmem:[#allocation2 + $0x248] sm:$0xff]
  %v381 = vld [vmem:[#allocation2 + $0x258] sm:$0xff]
  %v382 = vld [vmem:[#allocation2 + $0x260] sm:$0xff]
  %v383 = vld [vmem:[#allocation2 + $0x270] sm:$0xff]
  %v384 = vld [vmem:[#allocation2 + $0x278] sm:$0xff]
  %v385 = vld [vmem:[#allocation2 + $0x288] sm:$0xff]
  %v386 = vld [vmem:[#allocation2 + $0x290] sm:$0xff]
  %v387 = vld [vmem:[#allocation2 + $0x2a0] sm:$0xff]
  %v388 = vld [vmem:[#allocation2 + $0x2a8] sm:$0xff]
  %v389 = vld [vmem:[#allocation2 + $0x2b8] sm:$0xff]
  %v390 = vld [vmem:[#allocation2 + $0x2c0] sm:$0xff]
  %v391 = vld [vmem:[#allocation2 + $0x2d0] sm:$0xff]
  %v392 = vld [vmem:[#allocation2 + $0x2d8] sm:$0xff]
  %v393 = vld [vmem:[#allocation2 + $0x2e8] sm:$0xff]
  %v394 = vld [vmem:[#allocation2 + $0x2f0] sm:$0xff]
  %v395 = vld [vmem:[#allocation2 + $0x300] sm:$0xff]
  %v396 = vld [vmem:[#allocation2 + $0x308] sm:$0xff]
  %v397 = vld [vmem:[#allocation2 + $0x318] sm:$0xff]
  %v398 = vld [vmem:[#allocation2 + $0x320] sm:$0xff]
  %399 = vst.msk [vmem:[#allocation4] sm:$0xff] %vm160, %v335
  %400 = vst.msk [vmem:[#allocation4 + $0x8] sm:$0xff] %vm160, %v336
  %401 = vst.msk [vmem:[#allocation4 + $0x10] sm:$0xff] %vm160, %v337
  %402 = vst.msk [vmem:[#allocation4 + $0x18] sm:$0xff] %vm160, %v338
  %403 = vst.msk [vmem:[#allocation4 + $0x20] sm:$0xff] %vm160, %v339
  %404 = vst.msk [vmem:[#allocation4 + $0x28] sm:$0xff] %vm160, %v340
  %405 = vst.msk [vmem:[#allocation4 + $0x30] sm:$0xff] %vm160, %v341
  %406 = vst.msk [vmem:[#allocation4 + $0x38] sm:$0xff] %vm160, %v342
  %407 = vst.msk [vmem:[#allocation4 + $0x40] sm:$0xff] %vm160, %v343
  %408 = vst.msk [vmem:[#allocation4 + $0x48] sm:$0xff] %vm160, %v344
  %409 = vst.msk [vmem:[#allocation4 + $0x50] sm:$0xff] %vm160, %v345
  %410 = vst.msk [vmem:[#allocation4 + $0x58] sm:$0xff] %vm160, %v346
  %411 = vst.msk [vmem:[#allocation4 + $0x60] sm:$0xff] %vm160, %v347
  %412 = vst.msk [vmem:[#allocation4 + $0x68] sm:$0xff] %vm160, %v348
  %413 = vst.msk [vmem:[#allocation4 + $0x70] sm:$0xff] %vm160, %v349
  %414 = vst.msk [vmem:[#allocation4 + $0x78] sm:$0xff] %vm160, %v350
  %415 = vst.msk [vmem:[#allocation4 + $0x80] sm:$0xff] %vm160, %v351
  %416 = vst.msk [vmem:[#allocation4 + $0x88] sm:$0xff] %vm160, %v352
  %417 = vst.msk [vmem:[#allocation4 + $0x90] sm:$0xff] %vm160, %v353
  %418 = vst.msk [vmem:[#allocation4 + $0x98] sm:$0xff] %vm160, %v354
  %419 = vst.msk [vmem:[#allocation4 + $0xa0] sm:$0xff] %vm160, %v355
  %420 = vst.msk [vmem:[#allocation4 + $0xa8] sm:$0xff] %vm160, %v356
  %421 = vst.msk [vmem:[#allocation4 + $0xb0] sm:$0xff] %vm160, %v357
  %422 = vst.msk [vmem:[#allocation4 + $0xb8] sm:$0xff] %vm160, %v358
  %423 = vst.msk [vmem:[#allocation4 + $0xc0] sm:$0xff] %vm160, %v359
  %424 = vst.msk [vmem:[#allocation4 + $0xc8] sm:$0xff] %vm160, %v360
  %425 = vst.msk [vmem:[#allocation4 + $0xd0] sm:$0xff] %vm160, %v361
  %426 = vst.msk [vmem:[#allocation4 + $0xd8] sm:$0xff] %vm160, %v362
  %427 = vst.msk [vmem:[#allocation4 + $0xe0] sm:$0xff] %vm160, %v363
  %428 = vst.msk [vmem:[#allocation4 + $0xe8] sm:$0xff] %vm160, %v364
  %429 = vst.msk [vmem:[#allocation4 + $0xf0] sm:$0xff] %vm160, %v365
  %430 = vst.msk [vmem:[#allocation4 + $0xf8] sm:$0xff] %vm160, %v366
  %431 = vst.msk [vmem:[#allocation4 + $0x100] sm:$0xff] %vm160, %v367
  %432 = vst.msk [vmem:[#allocation4 + $0x108] sm:$0xff] %vm160, %v368
  %433 = vst.msk [vmem:[#allocation4 + $0x110] sm:$0xff] %vm160, %v369
  %434 = vst.msk [vmem:[#allocation4 + $0x118] sm:$0xff] %vm160, %v370
  %435 = vst.msk [vmem:[#allocation4 + $0x120] sm:$0xff] %vm160, %v371
  %436 = vst.msk [vmem:[#allocation4 + $0x128] sm:$0xff] %vm160, %v372
  %437 = vst.msk [vmem:[#allocation4 + $0x130] sm:$0xff] %vm160, %v373
  %438 = vst.msk [vmem:[#allocation4 + $0x138] sm:$0xff] %vm160, %v374
  %439 = vst.msk [vmem:[#allocation4 + $0x140] sm:$0xff] %vm160, %v375
  %440 = vst.msk [vmem:[#allocation4 + $0x148] sm:$0xff] %vm160, %v376
  %441 = vst.msk [vmem:[#allocation4 + $0x150] sm:$0xff] %vm160, %v377
  %442 = vst.msk [vmem:[#allocation4 + $0x158] sm:$0xff] %vm160, %v378
  %443 = vst.msk [vmem:[#allocation4 + $0x160] sm:$0xff] %vm160, %v379
  %444 = vst.msk [vmem:[#allocation4 + $0x168] sm:$0xff] %vm160, %v380
  %445 = vst.msk [vmem:[#allocation4 + $0x170] sm:$0xff] %vm160, %v381
  %446 = vst.msk [vmem:[#allocation4 + $0x178] sm:$0xff] %vm160, %v382
  %447 = vst.msk [vmem:[#allocation4 + $0x180] sm:$0xff] %vm160, %v383
  %448 = vst.msk [vmem:[#allocation4 + $0x188] sm:$0xff] %vm160, %v384
  %449 = vst.msk [vmem:[#allocation4 + $0x190] sm:$0xff] %vm160, %v385
  %450 = vst.msk [vmem:[#allocation4 + $0x198] sm:$0xff] %vm160, %v386
  %451 = vst.msk [vmem:[#allocation4 + $0x1a0] sm:$0xff] %vm160, %v387
  %452 = vst.msk [vmem:[#allocation4 + $0x1a8] sm:$0xff] %vm160, %v388
  %453 = vst.msk [vmem:[#allocation4 + $0x1b0] sm:$0xff] %vm160, %v389
  %454 = vst.msk [vmem:[#allocation4 + $0x1b8] sm:$0xff] %vm160, %v390
  %455 = vst.msk [vmem:[#allocation4 + $0x1c0] sm:$0xff] %vm160, %v391
  %456 = vst.msk [vmem:[#allocation4 + $0x1c8] sm:$0xff] %vm160, %v392
  %457 = vst.msk [vmem:[#allocation4 + $0x1d0] sm:$0xff] %vm160, %v393
  %458 = vst.msk [vmem:[#allocation4 + $0x1d8] sm:$0xff] %vm160, %v394
  %459 = vst.msk [vmem:[#allocation4 + $0x1e0] sm:$0xff] %vm160, %v395
  %460 = vst.msk [vmem:[#allocation4 + $0x1e8] sm:$0xff] %vm160, %v396
  %461 = vst.msk [vmem:[#allocation4 + $0x1f0] sm:$0xff] %vm160, %v397
  %462 = vst.msk [vmem:[#allocation4 + $0x1f8] sm:$0xff] %vm160, %v398
  %v463 = vld [vmem:[#allocation2 + $0x1] sm:$0xff]
  %v464 = vld [vmem:[#allocation2 + $0x9] sm:$0xff]
  %v465 = vld [vmem:[#allocation2 + $0x19] sm:$0xff]
  %v466 = vld [vmem:[#allocation2 + $0x21] sm:$0xff]
  %v467 = vld [vmem:[#allocation2 + $0x31] sm:$0xff]
  %v468 = vld [vmem:[#allocation2 + $0x39] sm:$0xff]
  %v469 = vld [vmem:[#allocation2 + $0x49] sm:$0xff]
  %v470 = vld [vmem:[#allocation2 + $0x51] sm:$0xff]
  %v471 = vld [vmem:[#allocation2 + $0x61] sm:$0xff]
  %v472 = vld [vmem:[#allocation2 + $0x69] sm:$0xff]
  %v473 = vld [vmem:[#allocation2 + $0x79] sm:$0xff]
  %v474 = vld [vmem:[#allocation2 + $0x81] sm:$0xff]
  %v475 = vld [vmem:[#allocation2 + $0x91] sm:$0xff]
  %v476 = vld [vmem:[#allocation2 + $0x99] sm:$0xff]
  %v477 = vld [vmem:[#allocation2 + $0xa9] sm:$0xff]
  %v478 = vld [vmem:[#allocation2 + $0xb1] sm:$0xff]
  %v479 = vld [vmem:[#allocation2 + $0xc1] sm:$0xff]
  %v480 = vld [vmem:[#allocation2 + $0xc9] sm:$0xff]
  %v481 = vld [vmem:[#allocation2 + $0xd9] sm:$0xff]
  %v482 = vld [vmem:[#allocation2 + $0xe1] sm:$0xff]
  %v483 = vld [vmem:[#allocation2 + $0xf1] sm:$0xff]
  %v484 = vld [vmem:[#allocation2 + $0xf9] sm:$0xff]
  %v485 = vld [vmem:[#allocation2 + $0x109] sm:$0xff]
  %v486 = vld [vmem:[#allocation2 + $0x111] sm:$0xff]
  %v487 = vld [vmem:[#allocation2 + $0x121] sm:$0xff]
  %v488 = vld [vmem:[#allocation2 + $0x129] sm:$0xff]
  %v489 = vld [vmem:[#allocation2 + $0x139] sm:$0xff]
  %v490 = vld [vmem:[#allocation2 + $0x141] sm:$0xff]
  %v491 = vld [vmem:[#allocation2 + $0x151] sm:$0xff]
  %v492 = vld [vmem:[#allocation2 + $0x159] sm:$0xff]
  %v493 = vld [vmem:[#allocation2 + $0x169] sm:$0xff]
  %v494 = vld [vmem:[#allocation2 + $0x171] sm:$0xff]
  %v495 = vld [vmem:[#allocation2 + $0x1b1] sm:$0xff]
  %v496 = vld [vmem:[#allocation2 + $0x1b9] sm:$0xff]
  %v497 = vld [vmem:[#allocation2 + $0x1c9] sm:$0xff]
  %v498 = vld [vmem:[#allocation2 + $0x1d1] sm:$0xff]
  %v499 = vld [vmem:[#allocation2 + $0x1e1] sm:$0xff]
  %v500 = vld [vmem:[#allocation2 + $0x1e9] sm:$0xff]
  %v501 = vld [vmem:[#allocation2 + $0x1f9] sm:$0xff]
  %v502 = vld [vmem:[#allocation2 + $0x201] sm:$0xff]
  %v503 = vld [vmem:[#allocation2 + $0x211] sm:$0xff]
  %v504 = vld [vmem:[#allocation2 + $0x219] sm:$0xff]
  %v505 = vld [vmem:[#allocation2 + $0x229] sm:$0xff]
  %v506 = vld [vmem:[#allocation2 + $0x231] sm:$0xff]
  %v507 = vld [vmem:[#allocation2 + $0x241] sm:$0xff]
  %v508 = vld [vmem:[#allocation2 + $0x249] sm:$0xff]
  %v509 = vld [vmem:[#allocation2 + $0x259] sm:$0xff]
  %v510 = vld [vmem:[#allocation2 + $0x261] sm:$0xff]
  %v511 = vld [vmem:[#allocation2 + $0x271] sm:$0xff]
  %v512 = vld [vmem:[#allocation2 + $0x279] sm:$0xff]
  %v513 = vld [vmem:[#allocation2 + $0x289] sm:$0xff]
  %v514 = vld [vmem:[#allocation2 + $0x291] sm:$0xff]
  %v515 = vld [vmem:[#allocation2 + $0x2a1] sm:$0xff]
  %v516 = vld [vmem:[#allocation2 + $0x2a9] sm:$0xff]
  %v517 = vld [vmem:[#allocation2 + $0x2b9] sm:$0xff]
  %v518 = vld [vmem:[#allocation2 + $0x2c1] sm:$0xff]
  %v519 = vld [vmem:[#allocation2 + $0x2d1] sm:$0xff]
  %v520 = vld [vmem:[#allocation2 + $0x2d9] sm:$0xff]
  %v521 = vld [vmem:[#allocation2 + $0x2e9] sm:$0xff]
  %v522 = vld [vmem:[#allocation2 + $0x2f1] sm:$0xff]
  %v523 = vld [vmem:[#allocation2 + $0x301] sm:$0xff]
  %v524 = vld [vmem:[#allocation2 + $0x309] sm:$0xff]
  %v525 = vld [vmem:[#allocation2 + $0x319] sm:$0xff]
  %v526 = vld [vmem:[#allocation2 + $0x321] sm:$0xff]
  %591 = vrot.lane.b32.xlu0 %v463, 4
  %v592 = vpop.permute.xlu0 %591
  %593 = vrot.lane.b32.xlu0 %v464, 4
  %v594 = vpop.permute.xlu0 %593
  %595 = vrot.lane.b32.xlu0 %v465, 4
  %v596 = vpop.permute.xlu0 %595
  %597 = vrot.lane.b32.xlu0 %v466, 4
  %v598 = vpop.permute.xlu0 %597
  %599 = vrot.lane.b32.xlu0 %v467, 4
  %v600 = vpop.permute.xlu0 %599
  %601 = vrot.lane.b32.xlu0 %v468, 4
  %v602 = vpop.permute.xlu0 %601
  %603 = vrot.lane.b32.xlu0 %v469, 4
  %v604 = vpop.permute.xlu0 %603
  %605 = vrot.lane.b32.xlu0 %v470, 4
  %v606 = vpop.permute.xlu0 %605
  %607 = vrot.lane.b32.xlu0 %v471, 4
  %v608 = vpop.permute.xlu0 %607
  %609 = vrot.lane.b32.xlu0 %v472, 4
  %v610 = vpop.permute.xlu0 %609
  %611 = vrot.lane.b32.xlu0 %v473, 4
  %v612 = vpop.permute.xlu0 %611
  %613 = vrot.lane.b32.xlu0 %v474, 4
  %v614 = vpop.permute.xlu0 %613
  %615 = vrot.lane.b32.xlu0 %v475, 4
  %v616 = vpop.permute.xlu0 %615
  %617 = vrot.lane.b32.xlu0 %v476, 4
  %v618 = vpop.permute.xlu0 %617
  %619 = vrot.lane.b32.xlu0 %v477, 4
  %v620 = vpop.permute.xlu0 %619
  %621 = vrot.lane.b32.xlu0 %v478, 4
  %v622 = vpop.permute.xlu0 %621
  %623 = vrot.lane.b32.xlu0 %v479, 4
  %v624 = vpop.permute.xlu0 %623
  %625 = vrot.lane.b32.xlu0 %v480, 4
  %v626 = vpop.permute.xlu0 %625
  %627 = vrot.lane.b32.xlu0 %v481, 4
  %v628 = vpop.permute.xlu0 %627
  %629 = vrot.lane.b32.xlu0 %v482, 4
  %v630 = vpop.permute.xlu0 %629
  %631 = vrot.lane.b32.xlu0 %v483, 4
  %v632 = vpop.permute.xlu0 %631
  %633 = vrot.lane.b32.xlu0 %v484, 4
  %v634 = vpop.permute.xlu0 %633
  %635 = vrot.lane.b32.xlu0 %v485, 4
  %v636 = vpop.permute.xlu0 %635
  %637 = vrot.lane.b32.xlu0 %v486, 4
  %v638 = vpop.permute.xlu0 %637
  %639 = vrot.lane.b32.xlu0 %v487, 4
  %v640 = vpop.permute.xlu0 %639
  %641 = vrot.lane.b32.xlu0 %v488, 4
  %v642 = vpop.permute.xlu0 %641
  %643 = vrot.lane.b32.xlu0 %v489, 4
  %v644 = vpop.permute.xlu0 %643
  %645 = vrot.lane.b32.xlu0 %v490, 4
  %v646 = vpop.permute.xlu0 %645
  %647 = vrot.lane.b32.xlu0 %v491, 4
  %v648 = vpop.permute.xlu0 %647
  %649 = vrot.lane.b32.xlu0 %v492, 4
  %v650 = vpop.permute.xlu0 %649
  %651 = vrot.lane.b32.xlu0 %v493, 4
  %v652 = vpop.permute.xlu0 %651
  %653 = vrot.lane.b32.xlu0 %v494, 4
  %v654 = vpop.permute.xlu0 %653
  %655 = vrot.lane.b32.xlu0 %v495, 4
  %v656 = vpop.permute.xlu0 %655
  %657 = vrot.lane.b32.xlu0 %v496, 4
  %v658 = vpop.permute.xlu0 %657
  %659 = vrot.lane.b32.xlu0 %v497, 4
  %v660 = vpop.permute.xlu0 %659
  %661 = vrot.lane.b32.xlu0 %v498, 4
  %v662 = vpop.permute.xlu0 %661
  %663 = vrot.lane.b32.xlu0 %v499, 4
  %v664 = vpop.permute.xlu0 %663
  %665 = vrot.lane.b32.xlu0 %v500, 4
  %v666 = vpop.permute.xlu0 %665
  %667 = vrot.lane.b32.xlu0 %v501, 4
  %v668 = vpop.permute.xlu0 %667
  %669 = vrot.lane.b32.xlu0 %v502, 4
  %v670 = vpop.permute.xlu0 %669
  %671 = vrot.lane.b32.xlu0 %v503, 4
  %v672 = vpop.permute.xlu0 %671
  %673 = vrot.lane.b32.xlu0 %v504, 4
  %v674 = vpop.permute.xlu0 %673
  %675 = vrot.lane.b32.xlu0 %v505, 4
  %v676 = vpop.permute.xlu0 %675
  %677 = vrot.lane.b32.xlu0 %v506, 4
  %v678 = vpop.permute.xlu0 %677
  %679 = vrot.lane.b32.xlu0 %v507, 4
  %v680 = vpop.permute.xlu0 %679
  %681 = vrot.lane.b32.xlu0 %v508, 4
  %v682 = vpop.permute.xlu0 %681
  %683 = vrot.lane.b32.xlu0 %v509, 4
  %v684 = vpop.permute.xlu0 %683
  %685 = vrot.lane.b32.xlu0 %v510, 4
  %v686 = vpop.permute.xlu0 %685
  %687 = vrot.lane.b32.xlu0 %v511, 4
  %v688 = vpop.permute.xlu0 %687
  %689 = vrot.lane.b32.xlu0 %v512, 4
  %v690 = vpop.permute.xlu0 %689
  %691 = vrot.lane.b32.xlu0 %v513, 4
  %v692 = vpop.permute.xlu0 %691
  %693 = vrot.lane.b32.xlu0 %v514, 4
  %v694 = vpop.permute.xlu0 %693
  %695 = vrot.lane.b32.xlu0 %v515, 4
  %v696 = vpop.permute.xlu0 %695
  %697 = vrot.lane.b32.xlu0 %v516, 4
  %v698 = vpop.permute.xlu0 %697
  %699 = vrot.lane.b32.xlu0 %v517, 4
  %v700 = vpop.permute.xlu0 %699
  %701 = vrot.lane.b32.xlu0 %v518, 4
  %v702 = vpop.permute.xlu0 %701
  %703 = vrot.lane.b32.xlu0 %v519, 4
  %v704 = vpop.permute.xlu0 %703
  %705 = vrot.lane.b32.xlu0 %v520, 4
  %v706 = vpop.permute.xlu0 %705
  %707 = vrot.lane.b32.xlu0 %v521, 4
  %v708 = vpop.permute.xlu0 %707
  %709 = vrot.lane.b32.xlu0 %v522, 4
  %v710 = vpop.permute.xlu0 %709
  %711 = vrot.lane.b32.xlu0 %v523, 4
  %v712 = vpop.permute.xlu0 %711
  %713 = vrot.lane.b32.xlu0 %v524, 4
  %v714 = vpop.permute.xlu0 %713
  %715 = vrot.lane.b32.xlu0 %v525, 4
  %v716 = vpop.permute.xlu0 %715
  %717 = vrot.lane.b32.xlu0 %v526, 4
  %v718 = vpop.permute.xlu0 %717
  %vm783 = vcmask 64544
  %784 = vst.msk [vmem:[#allocation4] sm:$0xff] %vm783, %v592
  %785 = vst.msk [vmem:[#allocation4 + $0x8] sm:$0xff] %vm783, %v594
  %786 = vst.msk [vmem:[#allocation4 + $0x10] sm:$0xff] %vm783, %v596
  %787 = vst.msk [vmem:[#allocation4 + $0x18] sm:$0xff] %vm783, %v598
  %788 = vst.msk [vmem:[#allocation4 + $0x20] sm:$0xff] %vm783, %v600
  %789 = vst.msk [vmem:[#allocation4 + $0x28] sm:$0xff] %vm783, %v602
  %790 = vst.msk [vmem:[#allocation4 + $0x30] sm:$0xff] %vm783, %v604
  %791 = vst.msk [vmem:[#allocation4 + $0x38] sm:$0xff] %vm783, %v606
  %792 = vst.msk [vmem:[#allocation4 + $0x40] sm:$0xff] %vm783, %v608
  %793 = vst.msk [vmem:[#allocation4 + $0x48] sm:$0xff] %vm783, %v610
  %794 = vst.msk [vmem:[#allocation4 + $0x50] sm:$0xff] %vm783, %v612
  %795 = vst.msk [vmem:[#allocation4 + $0x58] sm:$0xff] %vm783, %v614
  %796 = vst.msk [vmem:[#allocation4 + $0x60] sm:$0xff] %vm783, %v616
  %797 = vst.msk [vmem:[#allocation4 + $0x68] sm:$0xff] %vm783, %v618
  %798 = vst.msk [vmem:[#allocation4 + $0x70] sm:$0xff] %vm783, %v620
  %799 = vst.msk [vmem:[#allocation4 + $0x78] sm:$0xff] %vm783, %v622
  %800 = vst.msk [vmem:[#allocation4 + $0x80] sm:$0xff] %vm783, %v624
  %801 = vst.msk [vmem:[#allocation4 + $0x88] sm:$0xff] %vm783, %v626
  %802 = vst.msk [vmem:[#allocation4 + $0x90] sm:$0xff] %vm783, %v628
  %803 = vst.msk [vmem:[#allocation4 + $0x98] sm:$0xff] %vm783, %v630
  %804 = vst.msk [vmem:[#allocation4 + $0xa0] sm:$0xff] %vm783, %v632
  %805 = vst.msk [vmem:[#allocation4 + $0xa8] sm:$0xff] %vm783, %v634
  %806 = vst.msk [vmem:[#allocation4 + $0xb0] sm:$0xff] %vm783, %v636
  %807 = vst.msk [vmem:[#allocation4 + $0xb8] sm:$0xff] %vm783, %v638
  %808 = vst.msk [vmem:[#allocation4 + $0xc0] sm:$0xff] %vm783, %v640
  %809 = vst.msk [vmem:[#allocation4 + $0xc8] sm:$0xff] %vm783, %v642
  %810 = vst.msk [vmem:[#allocation4 + $0xd0] sm:$0xff] %vm783, %v644
  %811 = vst.msk [vmem:[#allocation4 + $0xd8] sm:$0xff] %vm783, %v646
  %812 = vst.msk [vmem:[#allocation4 + $0xe0] sm:$0xff] %vm783, %v648
  %813 = vst.msk [vmem:[#allocation4 + $0xe8] sm:$0xff] %vm783, %v650
  %814 = vst.msk [vmem:[#allocation4 + $0xf0] sm:$0xff] %vm783, %v652
  %815 = vst.msk [vmem:[#allocation4 + $0xf8] sm:$0xff] %vm783, %v654
  %816 = vst.msk [vmem:[#allocation4 + $0x100] sm:$0xff] %vm783, %v656
  %817 = vst.msk [vmem:[#allocation4 + $0x108] sm:$0xff] %vm783, %v658
  %818 = vst.msk [vmem:[#allocation4 + $0x110] sm:$0xff] %vm783, %v660
  %819 = vst.msk [vmem:[#allocation4 + $0x118] sm:$0xff] %vm783, %v662
  %820 = vst.msk [vmem:[#allocation4 + $0x120] sm:$0xff] %vm783, %v664
  %821 = vst.msk [vmem:[#allocation4 + $0x128] sm:$0xff] %vm783, %v666
  %822 = vst.msk [vmem:[#allocation4 + $0x130] sm:$0xff] %vm783, %v668
  %823 = vst.msk [vmem:[#allocation4 + $0x138] sm:$0xff] %vm783, %v670
  %824 = vst.msk [vmem:[#allocation4 + $0x140] sm:$0xff] %vm783, %v672
  %825 = vst.msk [vmem:[#allocation4 + $0x148] sm:$0xff] %vm783, %v674
  %826 = vst.msk [vmem:[#allocation4 + $0x150] sm:$0xff] %vm783, %v676
  %827 = vst.msk [vmem:[#allocation4 + $0x158] sm:$0xff] %vm783, %v678
  %828 = vst.msk [vmem:[#allocation4 + $0x160] sm:$0xff] %vm783, %v680
  %829 = vst.msk [vmem:[#allocation4 + $0x168] sm:$0xff] %vm783, %v682
  %830 = vst.msk [vmem:[#allocation4 + $0x170] sm:$0xff] %vm783, %v684
  %831 = vst.msk [vmem:[#allocation4 + $0x178] sm:$0xff] %vm783, %v686
  %832 = vst.msk [vmem:[#allocation4 + $0x180] sm:$0xff] %vm783, %v688
  %833 = vst.msk [vmem:[#allocation4 + $0x188] sm:$0xff] %vm783, %v690
  %834 = vst.msk [vmem:[#allocation4 + $0x190] sm:$0xff] %vm783, %v692
  %835 = vst.msk [vmem:[#allocation4 + $0x198] sm:$0xff] %vm783, %v694
  %836 = vst.msk [vmem:[#allocation4 + $0x1a0] sm:$0xff] %vm783, %v696
  %837 = vst.msk [vmem:[#allocation4 + $0x1a8] sm:$0xff] %vm783, %v698
  %838 = vst.msk [vmem:[#allocation4 + $0x1b0] sm:$0xff] %vm783, %v700
  %839 = vst.msk [vmem:[#allocation4 + $0x1b8] sm:$0xff] %vm783, %v702
  %840 = vst.msk [vmem:[#allocation4 + $0x1c0] sm:$0xff] %vm783, %v704
  %841 = vst.msk [vmem:[#allocation4 + $0x1c8] sm:$0xff] %vm783, %v706
  %842 = vst.msk [vmem:[#allocation4 + $0x1d0] sm:$0xff] %vm783, %v708
  %843 = vst.msk [vmem:[#allocation4 + $0x1d8] sm:$0xff] %vm783, %v710
  %844 = vst.msk [vmem:[#allocation4 + $0x1e0] sm:$0xff] %vm783, %v712
  %845 = vst.msk [vmem:[#allocation4 + $0x1e8] sm:$0xff] %vm783, %v714
  %846 = vst.msk [vmem:[#allocation4 + $0x1f0] sm:$0xff] %vm783, %v716
  %847 = vst.msk [vmem:[#allocation4 + $0x1f8] sm:$0xff] %vm783, %v718
  %v848 = vld [vmem:[#allocation2 + $0x2] sm:$0xff]
  %v849 = vld [vmem:[#allocation2 + $0xa] sm:$0xff]
  %v850 = vld [vmem:[#allocation2 + $0x1a] sm:$0xff]
  %v851 = vld [vmem:[#allocation2 + $0x22] sm:$0xff]
  %v852 = vld [vmem:[#allocation2 + $0x32] sm:$0xff]
  %v853 = vld [vmem:[#allocation2 + $0x3a] sm:$0xff]
  %v854 = vld [vmem:[#allocation2 + $0x4a] sm:$0xff]
  %v855 = vld [vmem:[#allocation2 + $0x52] sm:$0xff]
  %v856 = vld [vmem:[#allocation2 + $0x62] sm:$0xff]
  %v857 = vld [vmem:[#allocation2 + $0x6a] sm:$0xff]
  %v858 = vld [vmem:[#allocation2 + $0x7a] sm:$0xff]
  %v859 = vld [vmem:[#allocation2 + $0x82] sm:$0xff]
  %v860 = vld [vmem:[#allocation2 + $0x92] sm:$0xff]
  %v861 = vld [vmem:[#allocation2 + $0x9a] sm:$0xff]
  %v862 = vld [vmem:[#allocation2 + $0xaa] sm:$0xff]
  %v863 = vld [vmem:[#allocation2 + $0xb2] sm:$0xff]
  %v864 = vld [vmem:[#allocation2 + $0xc2] sm:$0xff]
  %v865 = vld [vmem:[#allocation2 + $0xca] sm:$0xff]
  %v866 = vld [vmem:[#allocation2 + $0xda] sm:$0xff]
  %v867 = vld [vmem:[#allocation2 + $0xe2] sm:$0xff]
  %v868 = vld [vmem:[#allocation2 + $0xf2] sm:$0xff]
  %v869 = vld [vmem:[#allocation2 + $0xfa] sm:$0xff]
  %v870 = vld [vmem:[#allocation2 + $0x10a] sm:$0xff]
  %v871 = vld [vmem:[#allocation2 + $0x112] sm:$0xff]
  %v872 = vld [vmem:[#allocation2 + $0x122] sm:$0xff]
  %v873 = vld [vmem:[#allocation2 + $0x12a] sm:$0xff]
  %v874 = vld [vmem:[#allocation2 + $0x13a] sm:$0xff]
  %v875 = vld [vmem:[#allocation2 + $0x142] sm:$0xff]
  %v876 = vld [vmem:[#allocation2 + $0x152] sm:$0xff]
  %v877 = vld [vmem:[#allocation2 + $0x15a] sm:$0xff]
  %v878 = vld [vmem:[#allocation2 + $0x16a] sm:$0xff]
  %v879 = vld [vmem:[#allocation2 + $0x172] sm:$0xff]
  %v880 = vld [vmem:[#allocation2 + $0x1b2] sm:$0xff]
  %v881 = vld [vmem:[#allocation2 + $0x1ba] sm:$0xff]
  %v882 = vld [vmem:[#allocation2 + $0x1ca] sm:$0xff]
  %v883 = vld [vmem:[#allocation2 + $0x1d2] sm:$0xff]
  %v884 = vld [vmem:[#allocation2 + $0x1e2] sm:$0xff]
  %v885 = vld [vmem:[#allocation2 + $0x1ea] sm:$0xff]
  %v886 = vld [vmem:[#allocation2 + $0x1fa] sm:$0xff]
  %v887 = vld [vmem:[#allocation2 + $0x202] sm:$0xff]
  %v888 = vld [vmem:[#allocation2 + $0x212] sm:$0xff]
  %v889 = vld [vmem:[#allocation2 + $0x21a] sm:$0xff]
  %v890 = vld [vmem:[#allocation2 + $0x22a] sm:$0xff]
  %v891 = vld [vmem:[#allocation2 + $0x232] sm:$0xff]
  %v892 = vld [vmem:[#allocation2 + $0x242] sm:$0xff]
  %v893 = vld [vmem:[#allocation2 + $0x24a] sm:$0xff]
  %v894 = vld [vmem:[#allocation2 + $0x25a] sm:$0xff]
  %v895 = vld [vmem:[#allocation2 + $0x262] sm:$0xff]
  %v896 = vld [vmem:[#allocation2 + $0x272] sm:$0xff]
  %v897 = vld [vmem:[#allocation2 + $0x27a] sm:$0xff]
  %v898 = vld [vmem:[#allocation2 + $0x28a] sm:$0xff]
  %v899 = vld [vmem:[#allocation2 + $0x292] sm:$0xff]
  %v900 = vld [vmem:[#allocation2 + $0x2a2] sm:$0xff]
  %v901 = vld [vmem:[#allocation2 + $0x2aa] sm:$0xff]
  %v902 = vld [vmem:[#allocation2 + $0x2ba] sm:$0xff]
  %v903 = vld [vmem:[#allocation2 + $0x2c2] sm:$0xff]
  %v904 = vld [vmem:[#allocation2 + $0x2d2] sm:$0xff]
  %v905 = vld [vmem:[#allocation2 + $0x2da] sm:$0xff]
  %v906 = vld [vmem:[#allocation2 + $0x2ea] sm:$0xff]
  %v907 = vld [vmem:[#allocation2 + $0x2f2] sm:$0xff]
  %v908 = vld [vmem:[#allocation2 + $0x302] sm:$0xff]
  %v909 = vld [vmem:[#allocation2 + $0x30a] sm:$0xff]
  %v910 = vld [vmem:[#allocation2 + $0x31a] sm:$0xff]
  %v911 = vld [vmem:[#allocation2 + $0x322] sm:$0xff]
  %976 = vrot.lane.b32.xlu0 %v848, 8
  %v977 = vpop.permute.xlu0 %976
  %978 = vrot.lane.b32.xlu0 %v849, 8
  %v979 = vpop.permute.xlu0 %978
  %980 = vrot.lane.b32.xlu0 %v850, 8
  %v981 = vpop.permute.xlu0 %980
  %982 = vrot.lane.b32.xlu0 %v851, 8
  %v983 = vpop.permute.xlu0 %982
  %984 = vrot.lane.b32.xlu0 %v852, 8
  %v985 = vpop.permute.xlu0 %984
  %986 = vrot.lane.b32.xlu0 %v853, 8
  %v987 = vpop.permute.xlu0 %986
  %988 = vrot.lane.b32.xlu0 %v854, 8
  %v989 = vpop.permute.xlu0 %988
  %990 = vrot.lane.b32.xlu0 %v855, 8
  %v991 = vpop.permute.xlu0 %990
  %992 = vrot.lane.b32.xlu0 %v856, 8
  %v993 = vpop.permute.xlu0 %992
  %994 = vrot.lane.b32.xlu0 %v857, 8
  %v995 = vpop.permute.xlu0 %994
  %996 = vrot.lane.b32.xlu0 %v858, 8
  %v997 = vpop.permute.xlu0 %996
  %998 = vrot.lane.b32.xlu0 %v859, 8
  %v999 = vpop.permute.xlu0 %998
  %1000 = vrot.lane.b32.xlu0 %v860, 8
  %v1001 = vpop.permute.xlu0 %1000
  %1002 = vrot.lane.b32.xlu0 %v861, 8
  %v1003 = vpop.permute.xlu0 %1002
  %1004 = vrot.lane.b32.xlu0 %v862, 8
  %v1005 = vpop.permute.xlu0 %1004
  %1006 = vrot.lane.b32.xlu0 %v863, 8
  %v1007 = vpop.permute.xlu0 %1006
  %1008 = vrot.lane.b32.xlu0 %v864, 8
  %v1009 = vpop.permute.xlu0 %1008
  %1010 = vrot.lane.b32.xlu0 %v865, 8
  %v1011 = vpop.permute.xlu0 %1010
  %1012 = vrot.lane.b32.xlu0 %v866, 8
  %v1013 = vpop.permute.xlu0 %1012
  %1014 = vrot.lane.b32.xlu0 %v867, 8
  %v1015 = vpop.permute.xlu0 %1014
  %1016 = vrot.lane.b32.xlu0 %v868, 8
  %v1017 = vpop.permute.xlu0 %1016
  %1018 = vrot.lane.b32.xlu0 %v869, 8
  %v1019 = vpop.permute.xlu0 %1018
  %1020 = vrot.lane.b32.xlu0 %v870, 8
  %v1021 = vpop.permute.xlu0 %1020
  %1022 = vrot.lane.b32.xlu0 %v871, 8
  %v1023 = vpop.permute.xlu0 %1022
  %1024 = vrot.lane.b32.xlu0 %v872, 8
  %v1025 = vpop.permute.xlu0 %1024
  %1026 = vrot.lane.b32.xlu0 %v873, 8
  %v1027 = vpop.permute.xlu0 %1026
  %1028 = vrot.lane.b32.xlu0 %v874, 8
  %v1029 = vpop.permute.xlu0 %1028
  %1030 = vrot.lane.b32.xlu0 %v875, 8
  %v1031 = vpop.permute.xlu0 %1030
  %1032 = vrot.lane.b32.xlu0 %v876, 8
  %v1033 = vpop.permute.xlu0 %1032
  %1034 = vrot.lane.b32.xlu0 %v877, 8
  %v1035 = vpop.permute.xlu0 %1034
  %1036 = vrot.lane.b32.xlu0 %v878, 8
  %v1037 = vpop.permute.xlu0 %1036
  %1038 = vrot.lane.b32.xlu0 %v879, 8
  %v1039 = vpop.permute.xlu0 %1038
  %1040 = vrot.lane.b32.xlu0 %v880, 8
  %v1041 = vpop.permute.xlu0 %1040
  %1042 = vrot.lane.b32.xlu0 %v881, 8
  %v1043 = vpop.permute.xlu0 %1042
  %1044 = vrot.lane.b32.xlu0 %v882, 8
  %v1045 = vpop.permute.xlu0 %1044
  %1046 = vrot.lane.b32.xlu0 %v883, 8
  %v1047 = vpop.permute.xlu0 %1046
  %1048 = vrot.lane.b32.xlu0 %v884, 8
  %v1049 = vpop.permute.xlu0 %1048
  %1050 = vrot.lane.b32.xlu0 %v885, 8
  %v1051 = vpop.permute.xlu0 %1050
  %1052 = vrot.lane.b32.xlu0 %v886, 8
  %v1053 = vpop.permute.xlu0 %1052
  %1054 = vrot.lane.b32.xlu0 %v887, 8
  %v1055 = vpop.permute.xlu0 %1054
  %1056 = vrot.lane.b32.xlu0 %v888, 8
  %v1057 = vpop.permute.xlu0 %1056
  %1058 = vrot.lane.b32.xlu0 %v889, 8
  %v1059 = vpop.permute.xlu0 %1058
  %1060 = vrot.lane.b32.xlu0 %v890, 8
  %v1061 = vpop.permute.xlu0 %1060
  %1062 = vrot.lane.b32.xlu0 %v891, 8
  %v1063 = vpop.permute.xlu0 %1062
  %1064 = vrot.lane.b32.xlu0 %v892, 8
  %v1065 = vpop.permute.xlu0 %1064
  %1066 = vrot.lane.b32.xlu0 %v893, 8
  %v1067 = vpop.permute.xlu0 %1066
  %1068 = vrot.lane.b32.xlu0 %v894, 8
  %v1069 = vpop.permute.xlu0 %1068
  %1070 = vrot.lane.b32.xlu0 %v895, 8
  %v1071 = vpop.permute.xlu0 %1070
  %1072 = vrot.lane.b32.xlu0 %v896, 8
  %v1073 = vpop.permute.xlu0 %1072
  %1074 = vrot.lane.b32.xlu0 %v897, 8
  %v1075 = vpop.permute.xlu0 %1074
  %1076 = vrot.lane.b32.xlu0 %v898, 8
  %v1077 = vpop.permute.xlu0 %1076
  %1078 = vrot.lane.b32.xlu0 %v899, 8
  %v1079 = vpop.permute.xlu0 %1078
  %1080 = vrot.lane.b32.xlu0 %v900, 8
  %v1081 = vpop.permute.xlu0 %1080
  %1082 = vrot.lane.b32.xlu0 %v901, 8
  %v1083 = vpop.permute.xlu0 %1082
  %1084 = vrot.lane.b32.xlu0 %v902, 8
  %v1085 = vpop.permute.xlu0 %1084
  %1086 = vrot.lane.b32.xlu0 %v903, 8
  %v1087 = vpop.permute.xlu0 %1086
  %1088 = vrot.lane.b32.xlu0 %v904, 8
  %v1089 = vpop.permute.xlu0 %1088
  %1090 = vrot.lane.b32.xlu0 %v905, 8
  %v1091 = vpop.permute.xlu0 %1090
  %1092 = vrot.lane.b32.xlu0 %v906, 8
  %v1093 = vpop.permute.xlu0 %1092
  %1094 = vrot.lane.b32.xlu0 %v907, 8
  %v1095 = vpop.permute.xlu0 %1094
  %1096 = vrot.lane.b32.xlu0 %v908, 8
  %v1097 = vpop.permute.xlu0 %1096
  %1098 = vrot.lane.b32.xlu0 %v909, 8
  %v1099 = vpop.permute.xlu0 %1098
  %1100 = vrot.lane.b32.xlu0 %v910, 8
  %v1101 = vpop.permute.xlu0 %1100
  %1102 = vrot.lane.b32.xlu0 %v911, 8
  %v1103 = vpop.permute.xlu0 %1102
  %vm1168 = vcmask 97344
  %1169 = vst.msk [vmem:[#allocation4] sm:$0xff] %vm1168, %v977
  %1170 = vst.msk [vmem:[#allocation4 + $0x8] sm:$0xff] %vm1168, %v979
  %1171 = vst.msk [vmem:[#allocation4 + $0x10] sm:$0xff] %vm1168, %v981
  %1172 = vst.msk [vmem:[#allocation4 + $0x18] sm:$0xff] %vm1168, %v983
  %1173 = vst.msk [vmem:[#allocation4 + $0x20] sm:$0xff] %vm1168, %v985
  %1174 = vst.msk [vmem:[#allocation4 + $0x28] sm:$0xff] %vm1168, %v987
  %1175 = vst.msk [vmem:[#allocation4 + $0x30] sm:$0xff] %vm1168, %v989
  %1176 = vst.msk [vmem:[#allocation4 + $0x38] sm:$0xff] %vm1168, %v991
  %1177 = vst.msk [vmem:[#allocation4 + $0x40] sm:$0xff] %vm1168, %v993
  %1178 = vst.msk [vmem:[#allocation4 + $0x48] sm:$0xff] %vm1168, %v995
  %1179 = vst.msk [vmem:[#allocation4 + $0x50] sm:$0xff] %vm1168, %v997
  %1180 = vst.msk [vmem:[#allocation4 + $0x58] sm:$0xff] %vm1168, %v999
  %1181 = vst.msk [vmem:[#allocation4 + $0x60] sm:$0xff] %vm1168, %v1001
  %1182 = vst.msk [vmem:[#allocation4 + $0x68] sm:$0xff] %vm1168, %v1003
  %1183 = vst.msk [vmem:[#allocation4 + $0x70] sm:$0xff] %vm1168, %v1005
  %1184 = vst.msk [vmem:[#allocation4 + $0x78] sm:$0xff] %vm1168, %v1007
  %1185 = vst.msk [vmem:[#allocation4 + $0x80] sm:$0xff] %vm1168, %v1009
  %1186 = vst.msk [vmem:[#allocation4 + $0x88] sm:$0xff] %vm1168, %v1011
  %1187 = vst.msk [vmem:[#allocation4 + $0x90] sm:$0xff] %vm1168, %v1013
  %1188 = vst.msk [vmem:[#allocation4 + $0x98] sm:$0xff] %vm1168, %v1015
  %1189 = vst.msk [vmem:[#allocation4 + $0xa0] sm:$0xff] %vm1168, %v1017
  %1190 = vst.msk [vmem:[#allocation4 + $0xa8] sm:$0xff] %vm1168, %v1019
  %1191 = vst.msk [vmem:[#allocation4 + $0xb0] sm:$0xff] %vm1168, %v1021
  %1192 = vst.msk [vmem:[#allocation4 + $0xb8] sm:$0xff] %vm1168, %v1023
  %1193 = vst.msk [vmem:[#allocation4 + $0xc0] sm:$0xff] %vm1168, %v1025
  %1194 = vst.msk [vmem:[#allocation4 + $0xc8] sm:$0xff] %vm1168, %v1027
  %1195 = vst.msk [vmem:[#allocation4 + $0xd0] sm:$0xff] %vm1168, %v1029
  %1196 = vst.msk [vmem:[#allocation4 + $0xd8] sm:$0xff] %vm1168, %v1031
  %1197 = vst.msk [vmem:[#allocation4 + $0xe0] sm:$0xff] %vm1168, %v1033
  %1198 = vst.msk [vmem:[#allocation4 + $0xe8] sm:$0xff] %vm1168, %v1035
  %1199 = vst.msk [vmem:[#allocation4 + $0xf0] sm:$0xff] %vm1168, %v1037
  %1200 = vst.msk [vmem:[#allocation4 + $0xf8] sm:$0xff] %vm1168, %v1039
  %1201 = vst.msk [vmem:[#allocation4 + $0x100] sm:$0xff] %vm1168, %v1041
  %1202 = vst.msk [vmem:[#allocation4 + $0x108] sm:$0xff] %vm1168, %v1043
  %1203 = vst.msk [vmem:[#allocation4 + $0x110] sm:$0xff] %vm1168, %v1045
  %1204 = vst.msk [vmem:[#allocation4 + $0x118] sm:$0xff] %vm1168, %v1047
  %1205 = vst.msk [vmem:[#allocation4 + $0x120] sm:$0xff] %vm1168, %v1049
  %1206 = vst.msk [vmem:[#allocation4 + $0x128] sm:$0xff] %vm1168, %v1051
  %1207 = vst.msk [vmem:[#allocation4 + $0x130] sm:$0xff] %vm1168, %v1053
  %1208 = vst.msk [vmem:[#allocation4 + $0x138] sm:$0xff] %vm1168, %v1055
  %1209 = vst.msk [vmem:[#allocation4 + $0x140] sm:$0xff] %vm1168, %v1057
  %1210 = vst.msk [vmem:[#allocation4 + $0x148] sm:$0xff] %vm1168, %v1059
  %1211 = vst.msk [vmem:[#allocation4 + $0x150] sm:$0xff] %vm1168, %v1061
  %1212 = vst.msk [vmem:[#allocation4 + $0x158] sm:$0xff] %vm1168, %v1063
  %1213 = vst.msk [vmem:[#allocation4 + $0x160] sm:$0xff] %vm1168, %v1065
  %1214 = vst.msk [vmem:[#allocation4 + $0x168] sm:$0xff] %vm1168, %v1067
  %1215 = vst.msk [vmem:[#allocation4 + $0x170] sm:$0xff] %vm1168, %v1069
  %1216 = vst.msk [vmem:[#allocation4 + $0x178] sm:$0xff] %vm1168, %v1071
  %1217 = vst.msk [vmem:[#allocation4 + $0x180] sm:$0xff] %vm1168, %v1073
  %1218 = vst.msk [vmem:[#allocation4 + $0x188] sm:$0xff] %vm1168, %v1075
  %1219 = vst.msk [vmem:[#allocation4 + $0x190] sm:$0xff] %vm1168, %v1077
  %1220 = vst.msk [vmem:[#allocation4 + $0x198] sm:$0xff] %vm1168, %v1079
  %1221 = vst.msk [vmem:[#allocation4 + $0x1a0] sm:$0xff] %vm1168, %v1081
  %1222 = vst.msk [vmem:[#allocation4 + $0x1a8] sm:$0xff] %vm1168, %v1083
  %1223 = vst.msk [vmem:[#allocation4 + $0x1b0] sm:$0xff] %vm1168, %v1085
  %1224 = vst.msk [vmem:[#allocation4 + $0x1b8] sm:$0xff] %vm1168, %v1087
  %1225 = vst.msk [vmem:[#allocation4 + $0x1c0] sm:$0xff] %vm1168, %v1089
  %1226 = vst.msk [vmem:[#allocation4 + $0x1c8] sm:$0xff] %vm1168, %v1091
  %1227 = vst.msk [vmem:[#allocation4 + $0x1d0] sm:$0xff] %vm1168, %v1093
  %1228 = vst.msk [vmem:[#allocation4 + $0x1d8] sm:$0xff] %vm1168, %v1095
  %1229 = vst.msk [vmem:[#allocation4 + $0x1e0] sm:$0xff] %vm1168, %v1097
  %1230 = vst.msk [vmem:[#allocation4 + $0x1e8] sm:$0xff] %vm1168, %v1099
  %1231 = vst.msk [vmem:[#allocation4 + $0x1f0] sm:$0xff] %vm1168, %v1101
  %1232 = vst.msk [vmem:[#allocation4 + $0x1f8] sm:$0xff] %vm1168, %v1103
  %v1233 = vld [vmem:[%s270] sm:$0xff]
  %v1234 = vld [vmem:[%s270 + $0x8] sm:$0xff]
  %v1235 = vld [vmem:[%s270 + $0x18] sm:$0xff]
  %v1236 = vld [vmem:[%s270 + $0x20] sm:$0xff]
  %v1237 = vld [vmem:[%s270 + $0x30] sm:$0xff]
  %v1238 = vld [vmem:[%s270 + $0x38] sm:$0xff]
  %v1239 = vld [vmem:[%s270 + $0x48] sm:$0xff]
  %v1240 = vld [vmem:[%s270 + $0x50] sm:$0xff]
  %v1241 = vld [vmem:[%s270 + $0x60] sm:$0xff]
  %v1242 = vld [vmem:[%s270 + $0x68] sm:$0xff]
  %v1243 = vld [vmem:[%s270 + $0x78] sm:$0xff]
  %v1244 = vld [vmem:[%s270 + $0x80] sm:$0xff]
  %v1245 = vld [vmem:[%s270 + $0x90] sm:$0xff]
  %v1246 = vld [vmem:[%s270 + $0x98] sm:$0xff]
  %v1247 = vld [vmem:[%s270 + $0xa8] sm:$0xff]
  %v1248 = vld [vmem:[%s270 + $0xb0] sm:$0xff]
  %v1249 = vld [vmem:[%s270 + $0xc0] sm:$0xff]
  %v1250 = vld [vmem:[%s270 + $0xc8] sm:$0xff]
  %v1251 = vld [vmem:[%s270 + $0xd8] sm:$0xff]
  %v1252 = vld [vmem:[%s270 + $0xe0] sm:$0xff]
  %v1253 = vld [vmem:[%s270 + $0xf0] sm:$0xff]
  %v1254 = vld [vmem:[%s270 + $0xf8] sm:$0xff]
  %v1255 = vld [vmem:[%s270 + $0x108] sm:$0xff]
  %v1256 = vld [vmem:[%s270 + $0x110] sm:$0xff]
  %v1257 = vld [vmem:[%s270 + $0x120] sm:$0xff]
  %v1258 = vld [vmem:[%s270 + $0x128] sm:$0xff]
  %v1259 = vld [vmem:[%s270 + $0x138] sm:$0xff]
  %v1260 = vld [vmem:[%s270 + $0x140] sm:$0xff]
  %v1261 = vld [vmem:[%s270 + $0x150] sm:$0xff]
  %v1262 = vld [vmem:[%s270 + $0x158] sm:$0xff]
  %v1263 = vld [vmem:[%s270 + $0x168] sm:$0xff]
  %v1264 = vld [vmem:[%s270 + $0x170] sm:$0xff]
  %v1265 = vld [vmem:[%s270 + $0x1b0] sm:$0xff]
  %v1266 = vld [vmem:[%s270 + $0x1b8] sm:$0xff]
  %v1267 = vld [vmem:[%s270 + $0x1c8] sm:$0xff]
  %v1268 = vld [vmem:[%s270 + $0x1d0] sm:$0xff]
  %v1269 = vld [vmem:[%s270 + $0x1e0] sm:$0xff]
  %v1270 = vld [vmem:[%s270 + $0x1e8] sm:$0xff]
  %v1271 = vld [vmem:[%s270 + $0x1f8] sm:$0xff]
  %v1272 = vld [vmem:[%s270 + $0x200] sm:$0xff]
  %v1273 = vld [vmem:[%s270 + $0x210] sm:$0xff]
  %v1274 = vld [vmem:[%s270 + $0x218] sm:$0xff]
  %v1275 = vld [vmem:[%s270 + $0x228] sm:$0xff]
  %v1276 = vld [vmem:[%s270 + $0x230] sm:$0xff]
  %v1277 = vld [vmem:[%s270 + $0x240] sm:$0xff]
  %v1278 = vld [vmem:[%s270 + $0x248] sm:$0xff]
  %v1279 = vld [vmem:[%s270 + $0x258] sm:$0xff]
  %v1280 = vld [vmem:[%s270 + $0x260] sm:$0xff]
  %v1281 = vld [vmem:[%s270 + $0x270] sm:$0xff]
  %v1282 = vld [vmem:[%s270 + $0x278] sm:$0xff]
  %v1283 = vld [vmem:[%s270 + $0x288] sm:$0xff]
  %v1284 = vld [vmem:[%s270 + $0x290] sm:$0xff]
  %v1285 = vld [vmem:[%s270 + $0x2a0] sm:$0xff]
  %v1286 = vld [vmem:[%s270 + $0x2a8] sm:$0xff]
  %v1287 = vld [vmem:[%s270 + $0x2b8] sm:$0xff]
  %v1288 = vld [vmem:[%s270 + $0x2c0] sm:$0xff]
  %v1289 = vld [vmem:[%s270 + $0x2d0] sm:$0xff]
  %v1290 = vld [vmem:[%s270 + $0x2d8] sm:$0xff]
  %v1291 = vld [vmem:[%s270 + $0x2e8] sm:$0xff]
  %v1292 = vld [vmem:[%s270 + $0x2f0] sm:$0xff]
  %v1293 = vld [vmem:[%s270 + $0x300] sm:$0xff]
  %v1294 = vld [vmem:[%s270 + $0x308] sm:$0xff]
  %v1295 = vld [vmem:[%s270 + $0x318] sm:$0xff]
  %v1296 = vld [vmem:[%s270 + $0x320] sm:$0xff]
  %1361 = vrot.lane.b32.xlu0 %v1233, 12
  %v1362 = vpop.permute.xlu0 %1361
  %1363 = vrot.lane.b32.xlu0 %v1234, 12
  %v1364 = vpop.permute.xlu0 %1363
  %1365 = vrot.lane.b32.xlu0 %v1235, 12
  %v1366 = vpop.permute.xlu0 %1365
  %1367 = vrot.lane.b32.xlu0 %v1236, 12
  %v1368 = vpop.permute.xlu0 %1367
  %1369 = vrot.lane.b32.xlu0 %v1237, 12
  %v1370 = vpop.permute.xlu0 %1369
  %1371 = vrot.lane.b32.xlu0 %v1238, 12
  %v1372 = vpop.permute.xlu0 %1371
  %1373 = vrot.lane.b32.xlu0 %v1239, 12
  %v1374 = vpop.permute.xlu0 %1373
  %1375 = vrot.lane.b32.xlu0 %v1240, 12
  %v1376 = vpop.permute.xlu0 %1375
  %1377 = vrot.lane.b32.xlu0 %v1241, 12
  %v1378 = vpop.permute.xlu0 %1377
  %1379 = vrot.lane.b32.xlu0 %v1242, 12
  %v1380 = vpop.permute.xlu0 %1379
  %1381 = vrot.lane.b32.xlu0 %v1243, 12
  %v1382 = vpop.permute.xlu0 %1381
  %1383 = vrot.lane.b32.xlu0 %v1244, 12
  %v1384 = vpop.permute.xlu0 %1383
  %1385 = vrot.lane.b32.xlu0 %v1245, 12
  %v1386 = vpop.permute.xlu0 %1385
  %1387 = vrot.lane.b32.xlu0 %v1246, 12
  %v1388 = vpop.permute.xlu0 %1387
  %1389 = vrot.lane.b32.xlu0 %v1247, 12
  %v1390 = vpop.permute.xlu0 %1389
  %1391 = vrot.lane.b32.xlu0 %v1248, 12
  %v1392 = vpop.permute.xlu0 %1391
  %1393 = vrot.lane.b32.xlu0 %v1249, 12
  %v1394 = vpop.permute.xlu0 %1393
  %1395 = vrot.lane.b32.xlu0 %v1250, 12
  %v1396 = vpop.permute.xlu0 %1395
  %1397 = vrot.lane.b32.xlu0 %v1251, 12
  %v1398 = vpop.permute.xlu0 %1397
  %1399 = vrot.lane.b32.xlu0 %v1252, 12
  %v1400 = vpop.permute.xlu0 %1399
  %1401 = vrot.lane.b32.xlu0 %v1253, 12
  %v1402 = vpop.permute.xlu0 %1401
  %1403 = vrot.lane.b32.xlu0 %v1254, 12
  %v1404 = vpop.permute.xlu0 %1403
  %1405 = vrot.lane.b32.xlu0 %v1255, 12
  %v1406 = vpop.permute.xlu0 %1405
  %1407 = vrot.lane.b32.xlu0 %v1256, 12
  %v1408 = vpop.permute.xlu0 %1407
  %1409 = vrot.lane.b32.xlu0 %v1257, 12
  %v1410 = vpop.permute.xlu0 %1409
  %1411 = vrot.lane.b32.xlu0 %v1258, 12
  %v1412 = vpop.permute.xlu0 %1411
  %1413 = vrot.lane.b32.xlu0 %v1259, 12
  %v1414 = vpop.permute.xlu0 %1413
  %1415 = vrot.lane.b32.xlu0 %v1260, 12
  %v1416 = vpop.permute.xlu0 %1415
  %1417 = vrot.lane.b32.xlu0 %v1261, 12
  %v1418 = vpop.permute.xlu0 %1417
  %1419 = vrot.lane.b32.xlu0 %v1262, 12
  %v1420 = vpop.permute.xlu0 %1419
  %1421 = vrot.lane.b32.xlu0 %v1263, 12
  %v1422 = vpop.permute.xlu0 %1421
  %1423 = vrot.lane.b32.xlu0 %v1264, 12
  %v1424 = vpop.permute.xlu0 %1423
  %1425 = vrot.lane.b32.xlu0 %v1265, 12
  %v1426 = vpop.permute.xlu0 %1425
  %1427 = vrot.lane.b32.xlu0 %v1266, 12
  %v1428 = vpop.permute.xlu0 %1427
  %1429 = vrot.lane.b32.xlu0 %v1267, 12
  %v1430 = vpop.permute.xlu0 %1429
  %1431 = vrot.lane.b32.xlu0 %v1268, 12
  %v1432 = vpop.permute.xlu0 %1431
  %1433 = vrot.lane.b32.xlu0 %v1269, 12
  %v1434 = vpop.permute.xlu0 %1433
  %1435 = vrot.lane.b32.xlu0 %v1270, 12
  %v1436 = vpop.permute.xlu0 %1435
  %1437 = vrot.lane.b32.xlu0 %v1271, 12
  %v1438 = vpop.permute.xlu0 %1437
  %1439 = vrot.lane.b32.xlu0 %v1272, 12
  %v1440 = vpop.permute.xlu0 %1439
  %1441 = vrot.lane.b32.xlu0 %v1273, 12
  %v1442 = vpop.permute.xlu0 %1441
  %1443 = vrot.lane.b32.xlu0 %v1274, 12
  %v1444 = vpop.permute.xlu0 %1443
  %1445 = vrot.lane.b32.xlu0 %v1275, 12
  %v1446 = vpop.permute.xlu0 %1445
  %1447 = vrot.lane.b32.xlu0 %v1276, 12
  %v1448 = vpop.permute.xlu0 %1447
  %1449 = vrot.lane.b32.xlu0 %v1277, 12
  %v1450 = vpop.permute.xlu0 %1449
  %1451 = vrot.lane.b32.xlu0 %v1278, 12
  %v1452 = vpop.permute.xlu0 %1451
  %1453 = vrot.lane.b32.xlu0 %v1279, 12
  %v1454 = vpop.permute.xlu0 %1453
  %1455 = vrot.lane.b32.xlu0 %v1280, 12
  %v1456 = vpop.permute.xlu0 %1455
  %1457 = vrot.lane.b32.xlu0 %v1281, 12
  %v1458 = vpop.permute.xlu0 %1457
  %1459 = vrot.lane.b32.xlu0 %v1282, 12
  %v1460 = vpop.permute.xlu0 %1459
  %1461 = vrot.lane.b32.xlu0 %v1283, 12
  %v1462 = vpop.permute.xlu0 %1461
  %1463 = vrot.lane.b32.xlu0 %v1284, 12
  %v1464 = vpop.permute.xlu0 %1463
  %1465 = vrot.lane.b32.xlu0 %v1285, 12
  %v1466 = vpop.permute.xlu0 %1465
  %1467 = vrot.lane.b32.xlu0 %v1286, 12
  %v1468 = vpop.permute.xlu0 %1467
  %1469 = vrot.lane.b32.xlu0 %v1287, 12
  %v1470 = vpop.permute.xlu0 %1469
  %1471 = vrot.lane.b32.xlu0 %v1288, 12
  %v1472 = vpop.permute.xlu0 %1471
  %1473 = vrot.lane.b32.xlu0 %v1289, 12
  %v1474 = vpop.permute.xlu0 %1473
  %1475 = vrot.lane.b32.xlu0 %v1290, 12
  %v1476 = vpop.permute.xlu0 %1475
  %1477 = vrot.lane.b32.xlu0 %v1291, 12
  %v1478 = vpop.permute.xlu0 %1477
  %1479 = vrot.lane.b32.xlu0 %v1292, 12
  %v1480 = vpop.permute.xlu0 %1479
  %1481 = vrot.lane.b32.xlu0 %v1293, 12
  %v1482 = vpop.permute.xlu0 %1481
  %1483 = vrot.lane.b32.xlu0 %v1294, 12
  %v1484 = vpop.permute.xlu0 %1483
  %1485 = vrot.lane.b32.xlu0 %v1295, 12
  %v1486 = vpop.permute.xlu0 %1485
  %1487 = vrot.lane.b32.xlu0 %v1296, 12
  %v1488 = vpop.permute.xlu0 %1487
  %vm1553 = vcmask 130144
  %1554 = vst.msk [vmem:[#allocation4] sm:$0xff] %vm1553, %v1362
  %1555 = vst.msk [vmem:[#allocation4 + $0x8] sm:$0xff] %vm1553, %v1364
  %1556 = vst.msk [vmem:[#allocation4 + $0x10] sm:$0xff] %vm1553, %v1366
  %1557 = vst.msk [vmem:[#allocation4 + $0x18] sm:$0xff] %vm1553, %v1368
  %1558 = vst.msk [vmem:[#allocation4 + $0x20] sm:$0xff] %vm1553, %v1370
  %1559 = vst.msk [vmem:[#allocation4 + $0x28] sm:$0xff] %vm1553, %v1372
  %1560 = vst.msk [vmem:[#allocation4 + $0x30] sm:$0xff] %vm1553, %v1374
  %1561 = vst.msk [vmem:[#allocation4 + $0x38] sm:$0xff] %vm1553, %v1376
  %1562 = vst.msk [vmem:[#allocation4 + $0x40] sm:$0xff] %vm1553, %v1378
  %1563 = vst.msk [vmem:[#allocation4 + $0x48] sm:$0xff] %vm1553, %v1380
  %1564 = vst.msk [vmem:[#allocation4 + $0x50] sm:$0xff] %vm1553, %v1382
  %1565 = vst.msk [vmem:[#allocation4 + $0x58] sm:$0xff] %vm1553, %v1384
  %1566 = vst.msk [vmem:[#allocation4 + $0x60] sm:$0xff] %vm1553, %v1386
  %1567 = vst.msk [vmem:[#allocation4 + $0x68] sm:$0xff] %vm1553, %v1388
  %1568 = vst.msk [vmem:[#allocation4 + $0x70] sm:$0xff] %vm1553, %v1390
  %1569 = vst.msk [vmem:[#allocation4 + $0x78] sm:$0xff] %vm1553, %v1392
  %1570 = vst.msk [vmem:[#allocation4 + $0x80] sm:$0xff] %vm1553, %v1394
  %1571 = vst.msk [vmem:[#allocation4 + $0x88] sm:$0xff] %vm1553, %v1396
  %1572 = vst.msk [vmem:[#allocation4 + $0x90] sm:$0xff] %vm1553, %v1398
  %1573 = vst.msk [vmem:[#allocation4 + $0x98] sm:$0xff] %vm1553, %v1400
  %1574 = vst.msk [vmem:[#allocation4 + $0xa0] sm:$0xff] %vm1553, %v1402
  %1575 = vst.msk [vmem:[#allocation4 + $0xa8] sm:$0xff] %vm1553, %v1404
  %1576 = vst.msk [vmem:[#allocation4 + $0xb0] sm:$0xff] %vm1553, %v1406
  %1577 = vst.msk [vmem:[#allocation4 + $0xb8] sm:$0xff] %vm1553, %v1408
  %1578 = vst.msk [vmem:[#allocation4 + $0xc0] sm:$0xff] %vm1553, %v1410
  %1579 = vst.msk [vmem:[#allocation4 + $0xc8] sm:$0xff] %vm1553, %v1412
  %1580 = vst.msk [vmem:[#allocation4 + $0xd0] sm:$0xff] %vm1553, %v1414
  %1581 = vst.msk [vmem:[#allocation4 + $0xd8] sm:$0xff] %vm1553, %v1416
  %1582 = vst.msk [vmem:[#allocation4 + $0xe0] sm:$0xff] %vm1553, %v1418
  %1583 = vst.msk [vmem:[#allocation4 + $0xe8] sm:$0xff] %vm1553, %v1420
  %1584 = vst.msk [vmem:[#allocation4 + $0xf0] sm:$0xff] %vm1553, %v1422
  %1585 = vst.msk [vmem:[#allocation4 + $0xf8] sm:$0xff] %vm1553, %v1424
  %1586 = vst.msk [vmem:[#allocation4 + $0x100] sm:$0xff] %vm1553, %v1426
  %1587 = vst.msk [vmem:[#allocation4 + $0x108] sm:$0xff] %vm1553, %v1428
  %1588 = vst.msk [vmem:[#allocation4 + $0x110] sm:$0xff] %vm1553, %v1430
  %1589 = vst.msk [vmem:[#allocation4 + $0x118] sm:$0xff] %vm1553, %v1432
  %1590 = vst.msk [vmem:[#allocation4 + $0x120] sm:$0xff] %vm1553, %v1434
  %1591 = vst.msk [vmem:[#allocation4 + $0x128] sm:$0xff] %vm1553, %v1436
  %1592 = vst.msk [vmem:[#allocation4 + $0x130] sm:$0xff] %vm1553, %v1438
  %1593 = vst.msk [vmem:[#allocation4 + $0x138] sm:$0xff] %vm1553, %v1440
  %1594 = vst.msk [vmem:[#allocation4 + $0x140] sm:$0xff] %vm1553, %v1442
  %1595 = vst.msk [vmem:[#allocation4 + $0x148] sm:$0xff] %vm1553, %v1444
  %1596 = vst.msk [vmem:[#allocation4 + $0x150] sm:$0xff] %vm1553, %v1446
  %1597 = vst.msk [vmem:[#allocation4 + $0x158] sm:$0xff] %vm1553, %v1448
  %1598 = vst.msk [vmem:[#allocation4 + $0x160] sm:$0xff] %vm1553, %v1450
  %1599 = vst.msk [vmem:[#allocation4 + $0x168] sm:$0xff] %vm1553, %v1452
  %1600 = vst.msk [vmem:[#allocation4 + $0x170] sm:$0xff] %vm1553, %v1454
  %1601 = vst.msk [vmem:[#allocation4 + $0x178] sm:$0xff] %vm1553, %v1456
  %1602 = vst.msk [vmem:[#allocation4 + $0x180] sm:$0xff] %vm1553, %v1458
  %1603 = vst.msk [vmem:[#allocation4 + $0x188] sm:$0xff] %vm1553, %v1460
  %1604 = vst.msk [vmem:[#allocation4 + $0x190] sm:$0xff] %vm1553, %v1462
  %1605 = vst.msk [vmem:[#allocation4 + $0x198] sm:$0xff] %vm1553, %v1464
  %1606 = vst.msk [vmem:[#allocation4 + $0x1a0] sm:$0xff] %vm1553, %v1466
  %1607 = vst.msk [vmem:[#allocation4 + $0x1a8] sm:$0xff] %vm1553, %v1468
  %1608 = vst.msk [vmem:[#allocation4 + $0x1b0] sm:$0xff] %vm1553, %v1470
  %1609 = vst.msk [vmem:[#allocation4 + $0x1b8] sm:$0xff] %vm1553, %v1472
  %1610 = vst.msk [vmem:[#allocation4 + $0x1c0] sm:$0xff] %vm1553, %v1474
  %1611 = vst.msk [vmem:[#allocation4 + $0x1c8] sm:$0xff] %vm1553, %v1476
  %1612 = vst.msk [vmem:[#allocation4 + $0x1d0] sm:$0xff] %vm1553, %v1478
  %1613 = vst.msk [vmem:[#allocation4 + $0x1d8] sm:$0xff] %vm1553, %v1480
  %1614 = vst.msk [vmem:[#allocation4 + $0x1e0] sm:$0xff] %vm1553, %v1482
  %1615 = vst.msk [vmem:[#allocation4 + $0x1e8] sm:$0xff] %vm1553, %v1484
  %1616 = vst.msk [vmem:[#allocation4 + $0x1f0] sm:$0xff] %vm1553, %v1486
  %1617 = vst.msk [vmem:[#allocation4 + $0x1f8] sm:$0xff] %vm1553, %v1488
  %v1618 = vld [vmem:[%s270 + $0x1] sm:$0xff]
  %v1619 = vld [vmem:[%s270 + $0x9] sm:$0xff]
  %v1620 = vld [vmem:[%s270 + $0x19] sm:$0xff]
  %v1621 = vld [vmem:[%s270 + $0x21] sm:$0xff]
  %v1622 = vld [vmem:[%s270 + $0x31] sm:$0xff]
  %v1623 = vld [vmem:[%s270 + $0x39] sm:$0xff]
  %v1624 = vld [vmem:[%s270 + $0x49] sm:$0xff]
  %v1625 = vld [vmem:[%s270 + $0x51] sm:$0xff]
  %v1626 = vld [vmem:[%s270 + $0x61] sm:$0xff]
  %v1627 = vld [vmem:[%s270 + $0x69] sm:$0xff]
  %v1628 = vld [vmem:[%s270 + $0x79] sm:$0xff]
  %v1629 = vld [vmem:[%s270 + $0x81] sm:$0xff]
  %v1630 = vld [vmem:[%s270 + $0x91] sm:$0xff]
  %v1631 = vld [vmem:[%s270 + $0x99] sm:$0xff]
  %v1632 = vld [vmem:[%s270 + $0xa9] sm:$0xff]
  %v1633 = vld [vmem:[%s270 + $0xb1] sm:$0xff]
  %v1634 = vld [vmem:[%s270 + $0xc1] sm:$0xff]
  %v1635 = vld [vmem:[%s270 + $0xc9] sm:$0xff]
  %v1636 = vld [vmem:[%s270 + $0xd9] sm:$0xff]
  %v1637 = vld [vmem:[%s270 + $0xe1] sm:$0xff]
  %v1638 = vld [vmem:[%s270 + $0xf1] sm:$0xff]
  %v1639 = vld [vmem:[%s270 + $0xf9] sm:$0xff]
  %v1640 = vld [vmem:[%s270 + $0x109] sm:$0xff]
  %v1641 = vld [vmem:[%s270 + $0x111] sm:$0xff]
  %v1642 = vld [vmem:[%s270 + $0x121] sm:$0xff]
  %v1643 = vld [vmem:[%s270 + $0x129] sm:$0xff]
  %v1644 = vld [vmem:[%s270 + $0x139] sm:$0xff]
  %v1645 = vld [vmem:[%s270 + $0x141] sm:$0xff]
  %v1646 = vld [vmem:[%s270 + $0x151] sm:$0xff]
  %v1647 = vld [vmem:[%s270 + $0x159] sm:$0xff]
  %v1648 = vld [vmem:[%s270 + $0x169] sm:$0xff]
  %v1649 = vld [vmem:[%s270 + $0x171] sm:$0xff]
  %v1650 = vld [vmem:[%s270 + $0x1b1] sm:$0xff]
  %v1651 = vld [vmem:[%s270 + $0x1b9] sm:$0xff]
  %v1652 = vld [vmem:[%s270 + $0x1c9] sm:$0xff]
  %v1653 = vld [vmem:[%s270 + $0x1d1] sm:$0xff]
  %v1654 = vld [vmem:[%s270 + $0x1e1] sm:$0xff]
  %v1655 = vld [vmem:[%s270 + $0x1e9] sm:$0xff]
  %v1656 = vld [vmem:[%s270 + $0x1f9] sm:$0xff]
  %v1657 = vld [vmem:[%s270 + $0x201] sm:$0xff]
  %v1658 = vld [vmem:[%s270 + $0x211] sm:$0xff]
  %v1659 = vld [vmem:[%s270 + $0x219] sm:$0xff]
  %v1660 = vld [vmem:[%s270 + $0x229] sm:$0xff]
  %v1661 = vld [vmem:[%s270 + $0x231] sm:$0xff]
  %v1662 = vld [vmem:[%s270 + $0x241] sm:$0xff]
  %v1663 = vld [vmem:[%s270 + $0x249] sm:$0xff]
  %v1664 = vld [vmem:[%s270 + $0x259] sm:$0xff]
  %v1665 = vld [vmem:[%s270 + $0x261] sm:$0xff]
  %v1666 = vld [vmem:[%s270 + $0x271] sm:$0xff]
  %v1667 = vld [vmem:[%s270 + $0x279] sm:$0xff]
  %v1668 = vld [vmem:[%s270 + $0x289] sm:$0xff]
  %v1669 = vld [vmem:[%s270 + $0x291] sm:$0xff]
  %v1670 = vld [vmem:[%s270 + $0x2a1] sm:$0xff]
  %v1671 = vld [vmem:[%s270 + $0x2a9] sm:$0xff]
  %v1672 = vld [vmem:[%s270 + $0x2b9] sm:$0xff]
  %v1673 = vld [vmem:[%s270 + $0x2c1] sm:$0xff]
  %v1674 = vld [vmem:[%s270 + $0x2d1] sm:$0xff]
  %v1675 = vld [vmem:[%s270 + $0x2d9] sm:$0xff]
  %v1676 = vld [vmem:[%s270 + $0x2e9] sm:$0xff]
  %v1677 = vld [vmem:[%s270 + $0x2f1] sm:$0xff]
  %v1678 = vld [vmem:[%s270 + $0x301] sm:$0xff]
  %v1679 = vld [vmem:[%s270 + $0x309] sm:$0xff]
  %v1680 = vld [vmem:[%s270 + $0x319] sm:$0xff]
  %v1681 = vld [vmem:[%s270 + $0x321] sm:$0xff]
  %1746 = vrot.lane.b32.xlu0 %v1618, 16
  %v1747 = vpop.permute.xlu0 %1746
  %1748 = vrot.lane.b32.xlu0 %v1619, 16
  %v1749 = vpop.permute.xlu0 %1748
  %1750 = vrot.lane.b32.xlu0 %v1620, 16
  %v1751 = vpop.permute.xlu0 %1750
  %1752 = vrot.lane.b32.xlu0 %v1621, 16
  %v1753 = vpop.permute.xlu0 %1752
  %1754 = vrot.lane.b32.xlu0 %v1622, 16
  %v1755 = vpop.permute.xlu0 %1754
  %1756 = vrot.lane.b32.xlu0 %v1623, 16
  %v1757 = vpop.permute.xlu0 %1756
  %1758 = vrot.lane.b32.xlu0 %v1624, 16
  %v1759 = vpop.permute.xlu0 %1758
  %1760 = vrot.lane.b32.xlu0 %v1625, 16
  %v1761 = vpop.permute.xlu0 %1760
  %1762 = vrot.lane.b32.xlu0 %v1626, 16
  %v1763 = vpop.permute.xlu0 %1762
  %1764 = vrot.lane.b32.xlu0 %v1627, 16
  %v1765 = vpop.permute.xlu0 %1764
  %1766 = vrot.lane.b32.xlu0 %v1628, 16
  %v1767 = vpop.permute.xlu0 %1766
  %1768 = vrot.lane.b32.xlu0 %v1629, 16
  %v1769 = vpop.permute.xlu0 %1768
  %1770 = vrot.lane.b32.xlu0 %v1630, 16
  %v1771 = vpop.permute.xlu0 %1770
  %1772 = vrot.lane.b32.xlu0 %v1631, 16
  %v1773 = vpop.permute.xlu0 %1772
  %1774 = vrot.lane.b32.xlu0 %v1632, 16
  %v1775 = vpop.permute.xlu0 %1774
  %1776 = vrot.lane.b32.xlu0 %v1633, 16
  %v1777 = vpop.permute.xlu0 %1776
  %1778 = vrot.lane.b32.xlu0 %v1634, 16
  %v1779 = vpop.permute.xlu0 %1778
  %1780 = vrot.lane.b32.xlu0 %v1635, 16
  %v1781 = vpop.permute.xlu0 %1780
  %1782 = vrot.lane.b32.xlu0 %v1636, 16
  %v1783 = vpop.permute.xlu0 %1782
  %1784 = vrot.lane.b32.xlu0 %v1637, 16
  %v1785 = vpop.permute.xlu0 %1784
  %1786 = vrot.lane.b32.xlu0 %v1638, 16
  %v1787 = vpop.permute.xlu0 %1786
  %1788 = vrot.lane.b32.xlu0 %v1639, 16
  %v1789 = vpop.permute.xlu0 %1788
  %1790 = vrot.lane.b32.xlu0 %v1640, 16
  %v1791 = vpop.permute.xlu0 %1790
  %1792 = vrot.lane.b32.xlu0 %v1641, 16
  %v1793 = vpop.permute.xlu0 %1792
  %1794 = vrot.lane.b32.xlu0 %v1642, 16
  %v1795 = vpop.permute.xlu0 %1794
  %1796 = vrot.lane.b32.xlu0 %v1643, 16
  %v1797 = vpop.permute.xlu0 %1796
  %1798 = vrot.lane.b32.xlu0 %v1644, 16
  %v1799 = vpop.permute.xlu0 %1798
  %1800 = vrot.lane.b32.xlu0 %v1645, 16
  %v1801 = vpop.permute.xlu0 %1800
  %1802 = vrot.lane.b32.xlu0 %v1646, 16
  %v1803 = vpop.permute.xlu0 %1802
  %1804 = vrot.lane.b32.xlu0 %v1647, 16
  %v1805 = vpop.permute.xlu0 %1804
  %1806 = vrot.lane.b32.xlu0 %v1648, 16
  %v1807 = vpop.permute.xlu0 %1806
  %1808 = vrot.lane.b32.xlu0 %v1649, 16
  %v1809 = vpop.permute.xlu0 %1808
  %1810 = vrot.lane.b32.xlu0 %v1650, 16
  %v1811 = vpop.permute.xlu0 %1810
  %1812 = vrot.lane.b32.xlu0 %v1651, 16
  %v1813 = vpop.permute.xlu0 %1812
  %1814 = vrot.lane.b32.xlu0 %v1652, 16
  %v1815 = vpop.permute.xlu0 %1814
  %1816 = vrot.lane.b32.xlu0 %v1653, 16
  %v1817 = vpop.permute.xlu0 %1816
  %1818 = vrot.lane.b32.xlu0 %v1654, 16
  %v1819 = vpop.permute.xlu0 %1818
  %1820 = vrot.lane.b32.xlu0 %v1655, 16
  %v1821 = vpop.permute.xlu0 %1820
  %1822 = vrot.lane.b32.xlu0 %v1656, 16
  %v1823 = vpop.permute.xlu0 %1822
  %1824 = vrot.lane.b32.xlu0 %v1657, 16
  %v1825 = vpop.permute.xlu0 %1824
  %1826 = vrot.lane.b32.xlu0 %v1658, 16
  %v1827 = vpop.permute.xlu0 %1826
  %1828 = vrot.lane.b32.xlu0 %v1659, 16
  %v1829 = vpop.permute.xlu0 %1828
  %1830 = vrot.lane.b32.xlu0 %v1660, 16
  %v1831 = vpop.permute.xlu0 %1830
  %1832 = vrot.lane.b32.xlu0 %v1661, 16
  %v1833 = vpop.permute.xlu0 %1832
  %1834 = vrot.lane.b32.xlu0 %v1662, 16
  %v1835 = vpop.permute.xlu0 %1834
  %1836 = vrot.lane.b32.xlu0 %v1663, 16
  %v1837 = vpop.permute.xlu0 %1836
  %1838 = vrot.lane.b32.xlu0 %v1664, 16
  %v1839 = vpop.permute.xlu0 %1838
  %1840 = vrot.lane.b32.xlu0 %v1665, 16
  %v1841 = vpop.permute.xlu0 %1840
  %1842 = vrot.lane.b32.xlu0 %v1666, 16
  %v1843 = vpop.permute.xlu0 %1842
  %1844 = vrot.lane.b32.xlu0 %v1667, 16
  %v1845 = vpop.permute.xlu0 %1844
  %1846 = vrot.lane.b32.xlu0 %v1668, 16
  %v1847 = vpop.permute.xlu0 %1846
  %1848 = vrot.lane.b32.xlu0 %v1669, 16
  %v1849 = vpop.permute.xlu0 %1848
  %1850 = vrot.lane.b32.xlu0 %v1670, 16
  %v1851 = vpop.permute.xlu0 %1850
  %1852 = vrot.lane.b32.xlu0 %v1671, 16
  %v1853 = vpop.permute.xlu0 %1852
  %1854 = vrot.lane.b32.xlu0 %v1672, 16
  %v1855 = vpop.permute.xlu0 %1854
  %1856 = vrot.lane.b32.xlu0 %v1673, 16
  %v1857 = vpop.permute.xlu0 %1856
  %1858 = vrot.lane.b32.xlu0 %v1674, 16
  %v1859 = vpop.permute.xlu0 %1858
  %1860 = vrot.lane.b32.xlu0 %v1675, 16
  %v1861 = vpop.permute.xlu0 %1860
  %1862 = vrot.lane.b32.xlu0 %v1676, 16
  %v1863 = vpop.permute.xlu0 %1862
  %1864 = vrot.lane.b32.xlu0 %v1677, 16
  %v1865 = vpop.permute.xlu0 %1864
  %1866 = vrot.lane.b32.xlu0 %v1678, 16
  %v1867 = vpop.permute.xlu0 %1866
  %1868 = vrot.lane.b32.xlu0 %v1679, 16
  %v1869 = vpop.permute.xlu0 %1868
  %1870 = vrot.lane.b32.xlu0 %v1680, 16
  %v1871 = vpop.permute.xlu0 %1870
  %1872 = vrot.lane.b32.xlu0 %v1681, 16
  %v1873 = vpop.permute.xlu0 %1872
  %vm1938 = vcmask 162944
  %1939 = vst.msk [vmem:[#allocation4] sm:$0xff] %vm1938, %v1747
  %1940 = vst.msk [vmem:[#allocation4 + $0x8] sm:$0xff] %vm1938, %v1749
  %1941 = vst.msk [vmem:[#allocation4 + $0x10] sm:$0xff] %vm1938, %v1751
  %1942 = vst.msk [vmem:[#allocation4 + $0x18] sm:$0xff] %vm1938, %v1753
  %1943 = vst.msk [vmem:[#allocation4 + $0x20] sm:$0xff] %vm1938, %v1755
  %1944 = vst.msk [vmem:[#allocation4 + $0x28] sm:$0xff] %vm1938, %v1757
  %1945 = vst.msk [vmem:[#allocation4 + $0x30] sm:$0xff] %vm1938, %v1759
  %1946 = vst.msk [vmem:[#allocation4 + $0x38] sm:$0xff] %vm1938, %v1761
  %1947 = vst.msk [vmem:[#allocation4 + $0x40] sm:$0xff] %vm1938, %v1763
  %1948 = vst.msk [vmem:[#allocation4 + $0x48] sm:$0xff] %vm1938, %v1765
  %1949 = vst.msk [vmem:[#allocation4 + $0x50] sm:$0xff] %vm1938, %v1767
  %1950 = vst.msk [vmem:[#allocation4 + $0x58] sm:$0xff] %vm1938, %v1769
  %1951 = vst.msk [vmem:[#allocation4 + $0x60] sm:$0xff] %vm1938, %v1771
  %1952 = vst.msk [vmem:[#allocation4 + $0x68] sm:$0xff] %vm1938, %v1773
  %1953 = vst.msk [vmem:[#allocation4 + $0x70] sm:$0xff] %vm1938, %v1775
  %1954 = vst.msk [vmem:[#allocation4 + $0x78] sm:$0xff] %vm1938, %v1777
  %1955 = vst.msk [vmem:[#allocation4 + $0x80] sm:$0xff] %vm1938, %v1779
  %1956 = vst.msk [vmem:[#allocation4 + $0x88] sm:$0xff] %vm1938, %v1781
  %1957 = vst.msk [vmem:[#allocation4 + $0x90] sm:$0xff] %vm1938, %v1783
  %1958 = vst.msk [vmem:[#allocation4 + $0x98] sm:$0xff] %vm1938, %v1785
  %1959 = vst.msk [vmem:[#allocation4 + $0xa0] sm:$0xff] %vm1938, %v1787
  %1960 = vst.msk [vmem:[#allocation4 + $0xa8] sm:$0xff] %vm1938, %v1789
  %1961 = vst.msk [vmem:[#allocation4 + $0xb0] sm:$0xff] %vm1938, %v1791
  %1962 = vst.msk [vmem:[#allocation4 + $0xb8] sm:$0xff] %vm1938, %v1793
  %1963 = vst.msk [vmem:[#allocation4 + $0xc0] sm:$0xff] %vm1938, %v1795
  %1964 = vst.msk [vmem:[#allocation4 + $0xc8] sm:$0xff] %vm1938, %v1797
  %1965 = vst.msk [vmem:[#allocation4 + $0xd0] sm:$0xff] %vm1938, %v1799
  %1966 = vst.msk [vmem:[#allocation4 + $0xd8] sm:$0xff] %vm1938, %v1801
  %1967 = vst.msk [vmem:[#allocation4 + $0xe0] sm:$0xff] %vm1938, %v1803
  %1968 = vst.msk [vmem:[#allocation4 + $0xe8] sm:$0xff] %vm1938, %v1805
  %1969 = vst.msk [vmem:[#allocation4 + $0xf0] sm:$0xff] %vm1938, %v1807
  %1970 = vst.msk [vmem:[#allocation4 + $0xf8] sm:$0xff] %vm1938, %v1809
  %1971 = vst.msk [vmem:[#allocation4 + $0x100] sm:$0xff] %vm1938, %v1811
  %1972 = vst.msk [vmem:[#allocation4 + $0x108] sm:$0xff] %vm1938, %v1813
  %1973 = vst.msk [vmem:[#allocation4 + $0x110] sm:$0xff] %vm1938, %v1815
  %1974 = vst.msk [vmem:[#allocation4 + $0x118] sm:$0xff] %vm1938, %v1817
  %1975 = vst.msk [vmem:[#allocation4 + $0x120] sm:$0xff] %vm1938, %v1819
  %1976 = vst.msk [vmem:[#allocation4 + $0x128] sm:$0xff] %vm1938, %v1821
  %1977 = vst.msk [vmem:[#allocation4 + $0x130] sm:$0xff] %vm1938, %v1823
  %1978 = vst.msk [vmem:[#allocation4 + $0x138] sm:$0xff] %vm1938, %v1825
  %1979 = vst.msk [vmem:[#allocation4 + $0x140] sm:$0xff] %vm1938, %v1827
  %1980 = vst.msk [vmem:[#allocation4 + $0x148] sm:$0xff] %vm1938, %v1829
  %1981 = vst.msk [vmem:[#allocation4 + $0x150] sm:$0xff] %vm1938, %v1831
  %1982 = vst.msk [vmem:[#allocation4 + $0x158] sm:$0xff] %vm1938, %v1833
  %1983 = vst.msk [vmem:[#allocation4 + $0x160] sm:$0xff] %vm1938, %v1835
  %1984 = vst.msk [vmem:[#allocation4 + $0x168] sm:$0xff] %vm1938, %v1837
  %1985 = vst.msk [vmem:[#allocation4 + $0x170] sm:$0xff] %vm1938, %v1839
  %1986 = vst.msk [vmem:[#allocation4 + $0x178] sm:$0xff] %vm1938, %v1841
  %1987 = vst.msk [vmem:[#allocation4 + $0x180] sm:$0xff] %vm1938, %v1843
  %1988 = vst.msk [vmem:[#allocation4 + $0x188] sm:$0xff] %vm1938, %v1845
  %1989 = vst.msk [vmem:[#allocation4 + $0x190] sm:$0xff] %vm1938, %v1847
  %1990 = vst.msk [vmem:[#allocation4 + $0x198] sm:$0xff] %vm1938, %v1849
  %1991 = vst.msk [vmem:[#allocation4 + $0x1a0] sm:$0xff] %vm1938, %v1851
  %1992 = vst.msk [vmem:[#allocation4 + $0x1a8] sm:$0xff] %vm1938, %v1853
  %1993 = vst.msk [vmem:[#allocation4 + $0x1b0] sm:$0xff] %vm1938, %v1855
  %1994 = vst.msk [vmem:[#allocation4 + $0x1b8] sm:$0xff] %vm1938, %v1857
  %1995 = vst.msk [vmem:[#allocation4 + $0x1c0] sm:$0xff] %vm1938, %v1859
  %1996 = vst.msk [vmem:[#allocation4 + $0x1c8] sm:$0xff] %vm1938, %v1861
  %1997 = vst.msk [vmem:[#allocation4 + $0x1d0] sm:$0xff] %vm1938, %v1863
  %1998 = vst.msk [vmem:[#allocation4 + $0x1d8] sm:$0xff] %vm1938, %v1865
  %1999 = vst.msk [vmem:[#allocation4 + $0x1e0] sm:$0xff] %vm1938, %v1867
  %2000 = vst.msk [vmem:[#allocation4 + $0x1e8] sm:$0xff] %vm1938, %v1869
  %2001 = vst.msk [vmem:[#allocation4 + $0x1f0] sm:$0xff] %vm1938, %v1871
  %2002 = vst.msk [vmem:[#allocation4 + $0x1f8] sm:$0xff] %vm1938, %v1873
  %v2003 = vld [vmem:[%s270 + $0x2] sm:$0xff]
  %v2004 = vld [vmem:[%s270 + $0xa] sm:$0xff]
  %v2005 = vld [vmem:[%s270 + $0x1a] sm:$0xff]
  %v2006 = vld [vmem:[%s270 + $0x22] sm:$0xff]
  %v2007 = vld [vmem:[%s270 + $0x32] sm:$0xff]
  %v2008 = vld [vmem:[%s270 + $0x3a] sm:$0xff]
  %v2009 = vld [vmem:[%s270 + $0x4a] sm:$0xff]
  %v2010 = vld [vmem:[%s270 + $0x52] sm:$0xff]
  %v2011 = vld [vmem:[%s270 + $0x62] sm:$0xff]
  %v2012 = vld [vmem:[%s270 + $0x6a] sm:$0xff]
  %v2013 = vld [vmem:[%s270 + $0x7a] sm:$0xff]
  %v2014 = vld [vmem:[%s270 + $0x82] sm:$0xff]
  %v2015 = vld [vmem:[%s270 + $0x92] sm:$0xff]
  %v2016 = vld [vmem:[%s270 + $0x9a] sm:$0xff]
  %v2017 = vld [vmem:[%s270 + $0xaa] sm:$0xff]
  %v2018 = vld [vmem:[%s270 + $0xb2] sm:$0xff]
  %v2019 = vld [vmem:[%s270 + $0xc2] sm:$0xff]
  %v2020 = vld [vmem:[%s270 + $0xca] sm:$0xff]
  %v2021 = vld [vmem:[%s270 + $0xda] sm:$0xff]
  %v2022 = vld [vmem:[%s270 + $0xe2] sm:$0xff]
  %v2023 = vld [vmem:[%s270 + $0xf2] sm:$0xff]
  %v2024 = vld [vmem:[%s270 + $0xfa] sm:$0xff]
  %v2025 = vld [vmem:[%s270 + $0x10a] sm:$0xff]
  %v2026 = vld [vmem:[%s270 + $0x112] sm:$0xff]
  %v2027 = vld [vmem:[%s270 + $0x122] sm:$0xff]
  %v2028 = vld [vmem:[%s270 + $0x12a] sm:$0xff]
  %v2029 = vld [vmem:[%s270 + $0x13a] sm:$0xff]
  %v2030 = vld [vmem:[%s270 + $0x142] sm:$0xff]
  %v2031 = vld [vmem:[%s270 + $0x152] sm:$0xff]
  %v2032 = vld [vmem:[%s270 + $0x15a] sm:$0xff]
  %v2033 = vld [vmem:[%s270 + $0x16a] sm:$0xff]
  %v2034 = vld [vmem:[%s270 + $0x172] sm:$0xff]
  %v2035 = vld [vmem:[%s270 + $0x1b2] sm:$0xff]
  %v2036 = vld [vmem:[%s270 + $0x1ba] sm:$0xff]
  %v2037 = vld [vmem:[%s270 + $0x1ca] sm:$0xff]
  %v2038 = vld [vmem:[%s270 + $0x1d2] sm:$0xff]
  %v2039 = vld [vmem:[%s270 + $0x1e2] sm:$0xff]
  %v2040 = vld [vmem:[%s270 + $0x1ea] sm:$0xff]
  %v2041 = vld [vmem:[%s270 + $0x1fa] sm:$0xff]
  %v2042 = vld [vmem:[%s270 + $0x202] sm:$0xff]
  %v2043 = vld [vmem:[%s270 + $0x212] sm:$0xff]
  %v2044 = vld [vmem:[%s270 + $0x21a] sm:$0xff]
  %v2045 = vld [vmem:[%s270 + $0x22a] sm:$0xff]
  %v2046 = vld [vmem:[%s270 + $0x232] sm:$0xff]
  %v2047 = vld [vmem:[%s270 + $0x242] sm:$0xff]
  %v2048 = vld [vmem:[%s270 + $0x24a] sm:$0xff]
  %v2049 = vld [vmem:[%s270 + $0x25a] sm:$0xff]
  %v2050 = vld [vmem:[%s270 + $0x262] sm:$0xff]
  %v2051 = vld [vmem:[%s270 + $0x272] sm:$0xff]
  %v2052 = vld [vmem:[%s270 + $0x27a] sm:$0xff]
  %v2053 = vld [vmem:[%s270 + $0x28a] sm:$0xff]
  %v2054 = vld [vmem:[%s270 + $0x292] sm:$0xff]
  %v2055 = vld [vmem:[%s270 + $0x2a2] sm:$0xff]
  %v2056 = vld [vmem:[%s270 + $0x2aa] sm:$0xff]
  %v2057 = vld [vmem:[%s270 + $0x2ba] sm:$0xff]
  %v2058 = vld [vmem:[%s270 + $0x2c2] sm:$0xff]
  %v2059 = vld [vmem:[%s270 + $0x2d2] sm:$0xff]
  %v2060 = vld [vmem:[%s270 + $0x2da] sm:$0xff]
  %v2061 = vld [vmem:[%s270 + $0x2ea] sm:$0xff]
  %v2062 = vld [vmem:[%s270 + $0x2f2] sm:$0xff]
  %v2063 = vld [vmem:[%s270 + $0x302] sm:$0xff]
  %v2064 = vld [vmem:[%s270 + $0x30a] sm:$0xff]
  %v2065 = vld [vmem:[%s270 + $0x31a] sm:$0xff]
  %v2066 = vld [vmem:[%s270 + $0x322] sm:$0xff]
  %2131 = vrot.lane.b32.xlu0 %v2003, 20
  %v2132 = vpop.permute.xlu0 %2131
  %2133 = vrot.lane.b32.xlu0 %v2004, 20
  %v2134 = vpop.permute.xlu0 %2133
  %2135 = vrot.lane.b32.xlu0 %v2005, 20
  %v2136 = vpop.permute.xlu0 %2135
  %2137 = vrot.lane.b32.xlu0 %v2006, 20
  %v2138 = vpop.permute.xlu0 %2137
  %2139 = vrot.lane.b32.xlu0 %v2007, 20
  %v2140 = vpop.permute.xlu0 %2139
  %2141 = vrot.lane.b32.xlu0 %v2008, 20
  %v2142 = vpop.permute.xlu0 %2141
  %2143 = vrot.lane.b32.xlu0 %v2009, 20
  %v2144 = vpop.permute.xlu0 %2143
  %2145 = vrot.lane.b32.xlu0 %v2010, 20
  %v2146 = vpop.permute.xlu0 %2145
  %2147 = vrot.lane.b32.xlu0 %v2011, 20
  %v2148 = vpop.permute.xlu0 %2147
  %2149 = vrot.lane.b32.xlu0 %v2012, 20
  %v2150 = vpop.permute.xlu0 %2149
  %2151 = vrot.lane.b32.xlu0 %v2013, 20
  %v2152 = vpop.permute.xlu0 %2151
  %2153 = vrot.lane.b32.xlu0 %v2014, 20
  %v2154 = vpop.permute.xlu0 %2153
  %2155 = vrot.lane.b32.xlu0 %v2015, 20
  %v2156 = vpop.permute.xlu0 %2155
  %2157 = vrot.lane.b32.xlu0 %v2016, 20
  %v2158 = vpop.permute.xlu0 %2157
  %2159 = vrot.lane.b32.xlu0 %v2017, 20
  %v2160 = vpop.permute.xlu0 %2159
  %2161 = vrot.lane.b32.xlu0 %v2018, 20
  %v2162 = vpop.permute.xlu0 %2161
  %2163 = vrot.lane.b32.xlu0 %v2019, 20
  %v2164 = vpop.permute.xlu0 %2163
  %2165 = vrot.lane.b32.xlu0 %v2020, 20
  %v2166 = vpop.permute.xlu0 %2165
  %2167 = vrot.lane.b32.xlu0 %v2021, 20
  %v2168 = vpop.permute.xlu0 %2167
  %2169 = vrot.lane.b32.xlu0 %v2022, 20
  %v2170 = vpop.permute.xlu0 %2169
  %2171 = vrot.lane.b32.xlu0 %v2023, 20
  %v2172 = vpop.permute.xlu0 %2171
  %2173 = vrot.lane.b32.xlu0 %v2024, 20
  %v2174 = vpop.permute.xlu0 %2173
  %2175 = vrot.lane.b32.xlu0 %v2025, 20
  %v2176 = vpop.permute.xlu0 %2175
  %2177 = vrot.lane.b32.xlu0 %v2026, 20
  %v2178 = vpop.permute.xlu0 %2177
  %2179 = vrot.lane.b32.xlu0 %v2027, 20
  %v2180 = vpop.permute.xlu0 %2179
  %2181 = vrot.lane.b32.xlu0 %v2028, 20
  %v2182 = vpop.permute.xlu0 %2181
  %2183 = vrot.lane.b32.xlu0 %v2029, 20
  %v2184 = vpop.permute.xlu0 %2183
  %2185 = vrot.lane.b32.xlu0 %v2030, 20
  %v2186 = vpop.permute.xlu0 %2185
  %2187 = vrot.lane.b32.xlu0 %v2031, 20
  %v2188 = vpop.permute.xlu0 %2187
  %2189 = vrot.lane.b32.xlu0 %v2032, 20
  %v2190 = vpop.permute.xlu0 %2189
  %2191 = vrot.lane.b32.xlu0 %v2033, 20
  %v2192 = vpop.permute.xlu0 %2191
  %2193 = vrot.lane.b32.xlu0 %v2034, 20
  %v2194 = vpop.permute.xlu0 %2193
  %2195 = vrot.lane.b32.xlu0 %v2035, 20
  %v2196 = vpop.permute.xlu0 %2195
  %2197 = vrot.lane.b32.xlu0 %v2036, 20
  %v2198 = vpop.permute.xlu0 %2197
  %2199 = vrot.lane.b32.xlu0 %v2037, 20
  %v2200 = vpop.permute.xlu0 %2199
  %2201 = vrot.lane.b32.xlu0 %v2038, 20
  %v2202 = vpop.permute.xlu0 %2201
  %2203 = vrot.lane.b32.xlu0 %v2039, 20
  %v2204 = vpop.permute.xlu0 %2203
  %2205 = vrot.lane.b32.xlu0 %v2040, 20
  %v2206 = vpop.permute.xlu0 %2205
  %2207 = vrot.lane.b32.xlu0 %v2041, 20
  %v2208 = vpop.permute.xlu0 %2207
  %2209 = vrot.lane.b32.xlu0 %v2042, 20
  %v2210 = vpop.permute.xlu0 %2209
  %2211 = vrot.lane.b32.xlu0 %v2043, 20
  %v2212 = vpop.permute.xlu0 %2211
  %2213 = vrot.lane.b32.xlu0 %v2044, 20
  %v2214 = vpop.permute.xlu0 %2213
  %2215 = vrot.lane.b32.xlu0 %v2045, 20
  %v2216 = vpop.permute.xlu0 %2215
  %2217 = vrot.lane.b32.xlu0 %v2046, 20
  %v2218 = vpop.permute.xlu0 %2217
  %2219 = vrot.lane.b32.xlu0 %v2047, 20
  %v2220 = vpop.permute.xlu0 %2219
  %2221 = vrot.lane.b32.xlu0 %v2048, 20
  %v2222 = vpop.permute.xlu0 %2221
  %2223 = vrot.lane.b32.xlu0 %v2049, 20
  %v2224 = vpop.permute.xlu0 %2223
  %2225 = vrot.lane.b32.xlu0 %v2050, 20
  %v2226 = vpop.permute.xlu0 %2225
  %2227 = vrot.lane.b32.xlu0 %v2051, 20
  %v2228 = vpop.permute.xlu0 %2227
  %2229 = vrot.lane.b32.xlu0 %v2052, 20
  %v2230 = vpop.permute.xlu0 %2229
  %2231 = vrot.lane.b32.xlu0 %v2053, 20
  %v2232 = vpop.permute.xlu0 %2231
  %2233 = vrot.lane.b32.xlu0 %v2054, 20
  %v2234 = vpop.permute.xlu0 %2233
  %2235 = vrot.lane.b32.xlu0 %v2055, 20
  %v2236 = vpop.permute.xlu0 %2235
  %2237 = vrot.lane.b32.xlu0 %v2056, 20
  %v2238 = vpop.permute.xlu0 %2237
  %2239 = vrot.lane.b32.xlu0 %v2057, 20
  %v2240 = vpop.permute.xlu0 %2239
  %2241 = vrot.lane.b32.xlu0 %v2058, 20
  %v2242 = vpop.permute.xlu0 %2241
  %2243 = vrot.lane.b32.xlu0 %v2059, 20
  %v2244 = vpop.permute.xlu0 %2243
  %2245 = vrot.lane.b32.xlu0 %v2060, 20
  %v2246 = vpop.permute.xlu0 %2245
  %2247 = vrot.lane.b32.xlu0 %v2061, 20
  %v2248 = vpop.permute.xlu0 %2247
  %2249 = vrot.lane.b32.xlu0 %v2062, 20
  %v2250 = vpop.permute.xlu0 %2249
  %2251 = vrot.lane.b32.xlu0 %v2063, 20
  %v2252 = vpop.permute.xlu0 %2251
  %2253 = vrot.lane.b32.xlu0 %v2064, 20
  %v2254 = vpop.permute.xlu0 %2253
  %2255 = vrot.lane.b32.xlu0 %v2065, 20
  %v2256 = vpop.permute.xlu0 %2255
  %2257 = vrot.lane.b32.xlu0 %v2066, 20
  %v2258 = vpop.permute.xlu0 %2257
  %vm2323 = vcmask 195744
  %2324 = vst.msk [vmem:[#allocation4] sm:$0xff] %vm2323, %v2132
  %2325 = vst.msk [vmem:[#allocation4 + $0x8] sm:$0xff] %vm2323, %v2134
  %2326 = vst.msk [vmem:[#allocation4 + $0x10] sm:$0xff] %vm2323, %v2136
  %2327 = vst.msk [vmem:[#allocation4 + $0x18] sm:$0xff] %vm2323, %v2138
  %2328 = vst.msk [vmem:[#allocation4 + $0x20] sm:$0xff] %vm2323, %v2140
  %2329 = vst.msk [vmem:[#allocation4 + $0x28] sm:$0xff] %vm2323, %v2142
  %2330 = vst.msk [vmem:[#allocation4 + $0x30] sm:$0xff] %vm2323, %v2144
  %2331 = vst.msk [vmem:[#allocation4 + $0x38] sm:$0xff] %vm2323, %v2146
  %2332 = vst.msk [vmem:[#allocation4 + $0x40] sm:$0xff] %vm2323, %v2148
  %2333 = vst.msk [vmem:[#allocation4 + $0x48] sm:$0xff] %vm2323, %v2150
  %2334 = vst.msk [vmem:[#allocation4 + $0x50] sm:$0xff] %vm2323, %v2152
  %2335 = vst.msk [vmem:[#allocation4 + $0x58] sm:$0xff] %vm2323, %v2154
  %2336 = vst.msk [vmem:[#allocation4 + $0x60] sm:$0xff] %vm2323, %v2156
  %2337 = vst.msk [vmem:[#allocation4 + $0x68] sm:$0xff] %vm2323, %v2158
  %2338 = vst.msk [vmem:[#allocation4 + $0x70] sm:$0xff] %vm2323, %v2160
  %2339 = vst.msk [vmem:[#allocation4 + $0x78] sm:$0xff] %vm2323, %v2162
  %2340 = vst.msk [vmem:[#allocation4 + $0x80] sm:$0xff] %vm2323, %v2164
  %2341 = vst.msk [vmem:[#allocation4 + $0x88] sm:$0xff] %vm2323, %v2166
  %2342 = vst.msk [vmem:[#allocation4 + $0x90] sm:$0xff] %vm2323, %v2168
  %2343 = vst.msk [vmem:[#allocation4 + $0x98] sm:$0xff] %vm2323, %v2170
  %2344 = vst.msk [vmem:[#allocation4 + $0xa0] sm:$0xff] %vm2323, %v2172
  %2345 = vst.msk [vmem:[#allocation4 + $0xa8] sm:$0xff] %vm2323, %v2174
  %2346 = vst.msk [vmem:[#allocation4 + $0xb0] sm:$0xff] %vm2323, %v2176
  %2347 = vst.msk [vmem:[#allocation4 + $0xb8] sm:$0xff] %vm2323, %v2178
  %2348 = vst.msk [vmem:[#allocation4 + $0xc0] sm:$0xff] %vm2323, %v2180
  %2349 = vst.msk [vmem:[#allocation4 + $0xc8] sm:$0xff] %vm2323, %v2182
  %2350 = vst.msk [vmem:[#allocation4 + $0xd0] sm:$0xff] %vm2323, %v2184
  %2351 = vst.msk [vmem:[#allocation4 + $0xd8] sm:$0xff] %vm2323, %v2186
  %2352 = vst.msk [vmem:[#allocation4 + $0xe0] sm:$0xff] %vm2323, %v2188
  %2353 = vst.msk [vmem:[#allocation4 + $0xe8] sm:$0xff] %vm2323, %v2190
  %2354 = vst.msk [vmem:[#allocation4 + $0xf0] sm:$0xff] %vm2323, %v2192
  %2355 = vst.msk [vmem:[#allocation4 + $0xf8] sm:$0xff] %vm2323, %v2194
  %2356 = vst.msk [vmem:[#allocation4 + $0x100] sm:$0xff] %vm2323, %v2196
  %2357 = vst.msk [vmem:[#allocation4 + $0x108] sm:$0xff] %vm2323, %v2198
  %2358 = vst.msk [vmem:[#allocation4 + $0x110] sm:$0xff] %vm2323, %v2200
  %2359 = vst.msk [vmem:[#allocation4 + $0x118] sm:$0xff] %vm2323, %v2202
  %2360 = vst.msk [vmem:[#allocation4 + $0x120] sm:$0xff] %vm2323, %v2204
  %2361 = vst.msk [vmem:[#allocation4 + $0x128] sm:$0xff] %vm2323, %v2206
  %2362 = vst.msk [vmem:[#allocation4 + $0x130] sm:$0xff] %vm2323, %v2208
  %2363 = vst.msk [vmem:[#allocation4 + $0x138] sm:$0xff] %vm2323, %v2210
  %2364 = vst.msk [vmem:[#allocation4 + $0x140] sm:$0xff] %vm2323, %v2212
  %2365 = vst.msk [vmem:[#allocation4 + $0x148] sm:$0xff] %vm2323, %v2214
  %2366 = vst.msk [vmem:[#allocation4 + $0x150] sm:$0xff] %vm2323, %v2216
  %2367 = vst.msk [vmem:[#allocation4 + $0x158] sm:$0xff] %vm2323, %v2218
  %2368 = vst.msk [vmem:[#allocation4 + $0x160] sm:$0xff] %vm2323, %v2220
  %2369 = vst.msk [vmem:[#allocation4 + $0x168] sm:$0xff] %vm2323, %v2222
  %2370 = vst.msk [vmem:[#allocation4 + $0x170] sm:$0xff] %vm2323, %v2224
  %2371 = vst.msk [vmem:[#allocation4 + $0x178] sm:$0xff] %vm2323, %v2226
  %2372 = vst.msk [vmem:[#allocation4 + $0x180] sm:$0xff] %vm2323, %v2228
  %2373 = vst.msk [vmem:[#allocation4 + $0x188] sm:$0xff] %vm2323, %v2230
  %2374 = vst.msk [vmem:[#allocation4 + $0x190] sm:$0xff] %vm2323, %v2232
  %2375 = vst.msk [vmem:[#allocation4 + $0x198] sm:$0xff] %vm2323, %v2234
  %2376 = vst.msk [vmem:[#allocation4 + $0x1a0] sm:$0xff] %vm2323, %v2236
  %2377 = vst.msk [vmem:[#allocation4 + $0x1a8] sm:$0xff] %vm2323, %v2238
  %2378 = vst.msk [vmem:[#allocation4 + $0x1b0] sm:$0xff] %vm2323, %v2240
  %2379 = vst.msk [vmem:[#allocation4 + $0x1b8] sm:$0xff] %vm2323, %v2242
  %2380 = vst.msk [vmem:[#allocation4 + $0x1c0] sm:$0xff] %vm2323, %v2244
  %2381 = vst.msk [vmem:[#allocation4 + $0x1c8] sm:$0xff] %vm2323, %v2246
  %2382 = vst.msk [vmem:[#allocation4 + $0x1d0] sm:$0xff] %vm2323, %v2248
  %2383 = vst.msk [vmem:[#allocation4 + $0x1d8] sm:$0xff] %vm2323, %v2250
  %2384 = vst.msk [vmem:[#allocation4 + $0x1e0] sm:$0xff] %vm2323, %v2252
  %2385 = vst.msk [vmem:[#allocation4 + $0x1e8] sm:$0xff] %vm2323, %v2254
  %2386 = vst.msk [vmem:[#allocation4 + $0x1f0] sm:$0xff] %vm2323, %v2256
  %2387 = vst.msk [vmem:[#allocation4 + $0x1f8] sm:$0xff] %vm2323, %v2258
  %s2388 = scalar_lea.vmem [#allocation2], 48
  %v2389 = vld [vmem:[%s2388] sm:$0xff]
  %v2390 = vld [vmem:[%s2388 + $0x8] sm:$0xff]
  %v2391 = vld [vmem:[%s2388 + $0x18] sm:$0xff]
  %v2392 = vld [vmem:[%s2388 + $0x20] sm:$0xff]
  %v2393 = vld [vmem:[%s2388 + $0x30] sm:$0xff]
  %v2394 = vld [vmem:[%s2388 + $0x38] sm:$0xff]
  %v2395 = vld [vmem:[%s2388 + $0x48] sm:$0xff]
  %v2396 = vld [vmem:[%s2388 + $0x50] sm:$0xff]
  %v2397 = vld [vmem:[%s2388 + $0x60] sm:$0xff]
  %v2398 = vld [vmem:[%s2388 + $0x68] sm:$0xff]
  %v2399 = vld [vmem:[%s2388 + $0x78] sm:$0xff]
  %v2400 = vld [vmem:[%s2388 + $0x80] sm:$0xff]
  %v2401 = vld [vmem:[%s2388 + $0x90] sm:$0xff]
  %v2402 = vld [vmem:[%s2388 + $0x98] sm:$0xff]
  %v2403 = vld [vmem:[%s2388 + $0xa8] sm:$0xff]
  %v2404 = vld [vmem:[%s2388 + $0xb0] sm:$0xff]
  %v2405 = vld [vmem:[%s2388 + $0xc0] sm:$0xff]
  %v2406 = vld [vmem:[%s2388 + $0xc8] sm:$0xff]
  %v2407 = vld [vmem:[%s2388 + $0xd8] sm:$0xff]
  %v2408 = vld [vmem:[%s2388 + $0xe0] sm:$0xff]
  %v2409 = vld [vmem:[%s2388 + $0xf0] sm:$0xff]
  %v2410 = vld [vmem:[%s2388 + $0xf8] sm:$0xff]
  %v2411 = vld [vmem:[%s2388 + $0x108] sm:$0xff]
  %v2412 = vld [vmem:[%s2388 + $0x110] sm:$0xff]
  %v2413 = vld [vmem:[%s2388 + $0x120] sm:$0xff]
  %v2414 = vld [vmem:[%s2388 + $0x128] sm:$0xff]
  %v2415 = vld [vmem:[%s2388 + $0x138] sm:$0xff]
  %v2416 = vld [vmem:[%s2388 + $0x140] sm:$0xff]
  %v2417 = vld [vmem:[%s2388 + $0x150] sm:$0xff]
  %v2418 = vld [vmem:[%s2388 + $0x158] sm:$0xff]
  %v2419 = vld [vmem:[%s2388 + $0x168] sm:$0xff]
  %v2420 = vld [vmem:[%s2388 + $0x170] sm:$0xff]
  %v2421 = vld [vmem:[%s2388 + $0x1b0] sm:$0xff]
  %v2422 = vld [vmem:[%s2388 + $0x1b8] sm:$0xff]
  %v2423 = vld [vmem:[%s2388 + $0x1c8] sm:$0xff]
  %v2424 = vld [vmem:[%s2388 + $0x1d0] sm:$0xff]
  %v2425 = vld [vmem:[%s2388 + $0x1e0] sm:$0xff]
  %v2426 = vld [vmem:[%s2388 + $0x1e8] sm:$0xff]
  %v2427 = vld [vmem:[%s2388 + $0x1f8] sm:$0xff]
  %v2428 = vld [vmem:[%s2388 + $0x200] sm:$0xff]
  %v2429 = vld [vmem:[%s2388 + $0x210] sm:$0xff]
  %v2430 = vld [vmem:[%s2388 + $0x218] sm:$0xff]
  %v2431 = vld [vmem:[%s2388 + $0x228] sm:$0xff]
  %v2432 = vld [vmem:[%s2388 + $0x230] sm:$0xff]
  %v2433 = vld [vmem:[%s2388 + $0x240] sm:$0xff]
  %v2434 = vld [vmem:[%s2388 + $0x248] sm:$0xff]
  %v2435 = vld [vmem:[%s2388 + $0x258] sm:$0xff]
  %v2436 = vld [vmem:[%s2388 + $0x260] sm:$0xff]
  %v2437 = vld [vmem:[%s2388 + $0x270] sm:$0xff]
  %v2438 = vld [vmem:[%s2388 + $0x278] sm:$0xff]
  %v2439 = vld [vmem:[%s2388 + $0x288] sm:$0xff]
  %v2440 = vld [vmem:[%s2388 + $0x290] sm:$0xff]
  %v2441 = vld [vmem:[%s2388 + $0x2a0] sm:$0xff]
  %v2442 = vld [vmem:[%s2388 + $0x2a8] sm:$0xff]
  %v2443 = vld [vmem:[%s2388 + $0x2b8] sm:$0xff]
  %v2444 = vld [vmem:[%s2388 + $0x2c0] sm:$0xff]
  %v2445 = vld [vmem:[%s2388 + $0x2d0] sm:$0xff]
  %v2446 = vld [vmem:[%s2388 + $0x2d8] sm:$0xff]
  %v2447 = vld [vmem:[%s2388 + $0x2e8] sm:$0xff]
  %v2448 = vld [vmem:[%s2388 + $0x2f0] sm:$0xff]
  %v2449 = vld [vmem:[%s2388 + $0x300] sm:$0xff]
  %v2450 = vld [vmem:[%s2388 + $0x308] sm:$0xff]
  %v2451 = vld [vmem:[%s2388 + $0x318] sm:$0xff]
  %v2452 = vld [vmem:[%s2388 + $0x320] sm:$0xff]
  %2517 = vrot.lane.b32.xlu0 %v2389, 24
  %v2518 = vpop.permute.xlu0 %2517
  %2519 = vrot.lane.b32.xlu0 %v2390, 24
  %v2520 = vpop.permute.xlu0 %2519
  %2521 = vrot.lane.b32.xlu0 %v2391, 24
  %v2522 = vpop.permute.xlu0 %2521
  %2523 = vrot.lane.b32.xlu0 %v2392, 24
  %v2524 = vpop.permute.xlu0 %2523
  %2525 = vrot.lane.b32.xlu0 %v2393, 24
  %v2526 = vpop.permute.xlu0 %2525
  %2527 = vrot.lane.b32.xlu0 %v2394, 24
  %v2528 = vpop.permute.xlu0 %2527
  %2529 = vrot.lane.b32.xlu0 %v2395, 24
  %v2530 = vpop.permute.xlu0 %2529
  %2531 = vrot.lane.b32.xlu0 %v2396, 24
  %v2532 = vpop.permute.xlu0 %2531
  %2533 = vrot.lane.b32.xlu0 %v2397, 24
  %v2534 = vpop.permute.xlu0 %2533
  %2535 = vrot.lane.b32.xlu0 %v2398, 24
  %v2536 = vpop.permute.xlu0 %2535
  %2537 = vrot.lane.b32.xlu0 %v2399, 24
  %v2538 = vpop.permute.xlu0 %2537
  %2539 = vrot.lane.b32.xlu0 %v2400, 24
  %v2540 = vpop.permute.xlu0 %2539
  %2541 = vrot.lane.b32.xlu0 %v2401, 24
  %v2542 = vpop.permute.xlu0 %2541
  %2543 = vrot.lane.b32.xlu0 %v2402, 24
  %v2544 = vpop.permute.xlu0 %2543
  %2545 = vrot.lane.b32.xlu0 %v2403, 24
  %v2546 = vpop.permute.xlu0 %2545
  %2547 = vrot.lane.b32.xlu0 %v2404, 24
  %v2548 = vpop.permute.xlu0 %2547
  %2549 = vrot.lane.b32.xlu0 %v2405, 24
  %v2550 = vpop.permute.xlu0 %2549
  %2551 = vrot.lane.b32.xlu0 %v2406, 24
  %v2552 = vpop.permute.xlu0 %2551
  %2553 = vrot.lane.b32.xlu0 %v2407, 24
  %v2554 = vpop.permute.xlu0 %2553
  %2555 = vrot.lane.b32.xlu0 %v2408, 24
  %v2556 = vpop.permute.xlu0 %2555
  %2557 = vrot.lane.b32.xlu0 %v2409, 24
  %v2558 = vpop.permute.xlu0 %2557
  %2559 = vrot.lane.b32.xlu0 %v2410, 24
  %v2560 = vpop.permute.xlu0 %2559
  %2561 = vrot.lane.b32.xlu0 %v2411, 24
  %v2562 = vpop.permute.xlu0 %2561
  %2563 = vrot.lane.b32.xlu0 %v2412, 24
  %v2564 = vpop.permute.xlu0 %2563
  %2565 = vrot.lane.b32.xlu0 %v2413, 24
  %v2566 = vpop.permute.xlu0 %2565
  %2567 = vrot.lane.b32.xlu0 %v2414, 24
  %v2568 = vpop.permute.xlu0 %2567
  %2569 = vrot.lane.b32.xlu0 %v2415, 24
  %v2570 = vpop.permute.xlu0 %2569
  %2571 = vrot.lane.b32.xlu0 %v2416, 24
  %v2572 = vpop.permute.xlu0 %2571
  %2573 = vrot.lane.b32.xlu0 %v2417, 24
  %v2574 = vpop.permute.xlu0 %2573
  %2575 = vrot.lane.b32.xlu0 %v2418, 24
  %v2576 = vpop.permute.xlu0 %2575
  %2577 = vrot.lane.b32.xlu0 %v2419, 24
  %v2578 = vpop.permute.xlu0 %2577
  %2579 = vrot.lane.b32.xlu0 %v2420, 24
  %v2580 = vpop.permute.xlu0 %2579
  %2581 = vrot.lane.b32.xlu0 %v2421, 24
  %v2582 = vpop.permute.xlu0 %2581
  %2583 = vrot.lane.b32.xlu0 %v2422, 24
  %v2584 = vpop.permute.xlu0 %2583
  %2585 = vrot.lane.b32.xlu0 %v2423, 24
  %v2586 = vpop.permute.xlu0 %2585
  %2587 = vrot.lane.b32.xlu0 %v2424, 24
  %v2588 = vpop.permute.xlu0 %2587
  %2589 = vrot.lane.b32.xlu0 %v2425, 24
  %v2590 = vpop.permute.xlu0 %2589
  %2591 = vrot.lane.b32.xlu0 %v2426, 24
  %v2592 = vpop.permute.xlu0 %2591
  %2593 = vrot.lane.b32.xlu0 %v2427, 24
  %v2594 = vpop.permute.xlu0 %2593
  %2595 = vrot.lane.b32.xlu0 %v2428, 24
  %v2596 = vpop.permute.xlu0 %2595
  %2597 = vrot.lane.b32.xlu0 %v2429, 24
  %v2598 = vpop.permute.xlu0 %2597
  %2599 = vrot.lane.b32.xlu0 %v2430, 24
  %v2600 = vpop.permute.xlu0 %2599
  %2601 = vrot.lane.b32.xlu0 %v2431, 24
  %v2602 = vpop.permute.xlu0 %2601
  %2603 = vrot.lane.b32.xlu0 %v2432, 24
  %v2604 = vpop.permute.xlu0 %2603
  %2605 = vrot.lane.b32.xlu0 %v2433, 24
  %v2606 = vpop.permute.xlu0 %2605
  %2607 = vrot.lane.b32.xlu0 %v2434, 24
  %v2608 = vpop.permute.xlu0 %2607
  %2609 = vrot.lane.b32.xlu0 %v2435, 24
  %v2610 = vpop.permute.xlu0 %2609
  %2611 = vrot.lane.b32.xlu0 %v2436, 24
  %v2612 = vpop.permute.xlu0 %2611
  %2613 = vrot.lane.b32.xlu0 %v2437, 24
  %v2614 = vpop.permute.xlu0 %2613
  %2615 = vrot.lane.b32.xlu0 %v2438, 24
  %v2616 = vpop.permute.xlu0 %2615
  %2617 = vrot.lane.b32.xlu0 %v2439, 24
  %v2618 = vpop.permute.xlu0 %2617
  %2619 = vrot.lane.b32.xlu0 %v2440, 24
  %v2620 = vpop.permute.xlu0 %2619
  %2621 = vrot.lane.b32.xlu0 %v2441, 24
  %v2622 = vpop.permute.xlu0 %2621
  %2623 = vrot.lane.b32.xlu0 %v2442, 24
  %v2624 = vpop.permute.xlu0 %2623
  %2625 = vrot.lane.b32.xlu0 %v2443, 24
  %v2626 = vpop.permute.xlu0 %2625
  %2627 = vrot.lane.b32.xlu0 %v2444, 24
  %v2628 = vpop.permute.xlu0 %2627
  %2629 = vrot.lane.b32.xlu0 %v2445, 24
  %v2630 = vpop.permute.xlu0 %2629
  %2631 = vrot.lane.b32.xlu0 %v2446, 24
  %v2632 = vpop.permute.xlu0 %2631
  %2633 = vrot.lane.b32.xlu0 %v2447, 24
  %v2634 = vpop.permute.xlu0 %2633
  %2635 = vrot.lane.b32.xlu0 %v2448, 24
  %v2636 = vpop.permute.xlu0 %2635
  %2637 = vrot.lane.b32.xlu0 %v2449, 24
  %v2638 = vpop.permute.xlu0 %2637
  %2639 = vrot.lane.b32.xlu0 %v2450, 24
  %v2640 = vpop.permute.xlu0 %2639
  %2641 = vrot.lane.b32.xlu0 %v2451, 24
  %v2642 = vpop.permute.xlu0 %2641
  %2643 = vrot.lane.b32.xlu0 %v2452, 24
  %v2644 = vpop.permute.xlu0 %2643
  %vm2709 = vcmask 228544
  %2710 = vst.msk [vmem:[#allocation4] sm:$0xff] %vm2709, %v2518
  %2711 = vst.msk [vmem:[#allocation4 + $0x8] sm:$0xff] %vm2709, %v2520
  %2712 = vst.msk [vmem:[#allocation4 + $0x10] sm:$0xff] %vm2709, %v2522
  %2713 = vst.msk [vmem:[#allocation4 + $0x18] sm:$0xff] %vm2709, %v2524
  %2714 = vst.msk [vmem:[#allocation4 + $0x20] sm:$0xff] %vm2709, %v2526
  %2715 = vst.msk [vmem:[#allocation4 + $0x28] sm:$0xff] %vm2709, %v2528
  %2716 = vst.msk [vmem:[#allocation4 + $0x30] sm:$0xff] %vm2709, %v2530
  %2717 = vst.msk [vmem:[#allocation4 + $0x38] sm:$0xff] %vm2709, %v2532
  %2718 = vst.msk [vmem:[#allocation4 + $0x40] sm:$0xff] %vm2709, %v2534
  %2719 = vst.msk [vmem:[#allocation4 + $0x48] sm:$0xff] %vm2709, %v2536
  %2720 = vst.msk [vmem:[#allocation4 + $0x50] sm:$0xff] %vm2709, %v2538
  %2721 = vst.msk [vmem:[#allocation4 + $0x58] sm:$0xff] %vm2709, %v2540
  %2722 = vst.msk [vmem:[#allocation4 + $0x60] sm:$0xff] %vm2709, %v2542
  %2723 = vst.msk [vmem:[#allocation4 + $0x68] sm:$0xff] %vm2709, %v2544
  %2724 = vst.msk [vmem:[#allocation4 + $0x70] sm:$0xff] %vm2709, %v2546
  %2725 = vst.msk [vmem:[#allocation4 + $0x78] sm:$0xff] %vm2709, %v2548
  %2726 = vst.msk [vmem:[#allocation4 + $0x80] sm:$0xff] %vm2709, %v2550
  %2727 = vst.msk [vmem:[#allocation4 + $0x88] sm:$0xff] %vm2709, %v2552
  %2728 = vst.msk [vmem:[#allocation4 + $0x90] sm:$0xff] %vm2709, %v2554
  %2729 = vst.msk [vmem:[#allocation4 + $0x98] sm:$0xff] %vm2709, %v2556
  %2730 = vst.msk [vmem:[#allocation4 + $0xa0] sm:$0xff] %vm2709, %v2558
  %2731 = vst.msk [vmem:[#allocation4 + $0xa8] sm:$0xff] %vm2709, %v2560
  %2732 = vst.msk [vmem:[#allocation4 + $0xb0] sm:$0xff] %vm2709, %v2562
  %2733 = vst.msk [vmem:[#allocation4 + $0xb8] sm:$0xff] %vm2709, %v2564
  %2734 = vst.msk [vmem:[#allocation4 + $0xc0] sm:$0xff] %vm2709, %v2566
  %2735 = vst.msk [vmem:[#allocation4 + $0xc8] sm:$0xff] %vm2709, %v2568
  %2736 = vst.msk [vmem:[#allocation4 + $0xd0] sm:$0xff] %vm2709, %v2570
  %2737 = vst.msk [vmem:[#allocation4 + $0xd8] sm:$0xff] %vm2709, %v2572
  %2738 = vst.msk [vmem:[#allocation4 + $0xe0] sm:$0xff] %vm2709, %v2574
  %2739 = vst.msk [vmem:[#allocation4 + $0xe8] sm:$0xff] %vm2709, %v2576
  %2740 = vst.msk [vmem:[#allocation4 + $0xf0] sm:$0xff] %vm2709, %v2578
  %2741 = vst.msk [vmem:[#allocation4 + $0xf8] sm:$0xff] %vm2709, %v2580
  %2742 = vst.msk [vmem:[#allocation4 + $0x100] sm:$0xff] %vm2709, %v2582
  %2743 = vst.msk [vmem:[#allocation4 + $0x108] sm:$0xff] %vm2709, %v2584
  %2744 = vst.msk [vmem:[#allocation4 + $0x110] sm:$0xff] %vm2709, %v2586
  %2745 = vst.msk [vmem:[#allocation4 + $0x118] sm:$0xff] %vm2709, %v2588
  %2746 = vst.msk [vmem:[#allocation4 + $0x120] sm:$0xff] %vm2709, %v2590
  %2747 = vst.msk [vmem:[#allocation4 + $0x128] sm:$0xff] %vm2709, %v2592
  %2748 = vst.msk [vmem:[#allocation4 + $0x130] sm:$0xff] %vm2709, %v2594
  %2749 = vst.msk [vmem:[#allocation4 + $0x138] sm:$0xff] %vm2709, %v2596
  %2750 = vst.msk [vmem:[#allocation4 + $0x140] sm:$0xff] %vm2709, %v2598
  %2751 = vst.msk [vmem:[#allocation4 + $0x148] sm:$0xff] %vm2709, %v2600
  %2752 = vst.msk [vmem:[#allocation4 + $0x150] sm:$0xff] %vm2709, %v2602
  %2753 = vst.msk [vmem:[#allocation4 + $0x158] sm:$0xff] %vm2709, %v2604
  %2754 = vst.msk [vmem:[#allocation4 + $0x160] sm:$0xff] %vm2709, %v2606
  %2755 = vst.msk [vmem:[#allocation4 + $0x168] sm:$0xff] %vm2709, %v2608
  %2756 = vst.msk [vmem:[#allocation4 + $0x170] sm:$0xff] %vm2709, %v2610
  %2757 = vst.msk [vmem:[#allocation4 + $0x178] sm:$0xff] %vm2709, %v2612
  %2758 = vst.msk [vmem:[#allocation4 + $0x180] sm:$0xff] %vm2709, %v2614
  %2759 = vst.msk [vmem:[#allocation4 + $0x188] sm:$0xff] %vm2709, %v2616
  %2760 = vst.msk [vmem:[#allocation4 + $0x190] sm:$0xff] %vm2709, %v2618
  %2761 = vst.msk [vmem:[#allocation4 + $0x198] sm:$0xff] %vm2709, %v2620
  %2762 = vst.msk [vmem:[#allocation4 + $0x1a0] sm:$0xff] %vm2709, %v2622
  %2763 = vst.msk [vmem:[#allocation4 + $0x1a8] sm:$0xff] %vm2709, %v2624
  %2764 = vst.msk [vmem:[#allocation4 + $0x1b0] sm:$0xff] %vm2709, %v2626
  %2765 = vst.msk [vmem:[#allocation4 + $0x1b8] sm:$0xff] %vm2709, %v2628
  %2766 = vst.msk [vmem:[#allocation4 + $0x1c0] sm:$0xff] %vm2709, %v2630
  %2767 = vst.msk [vmem:[#allocation4 + $0x1c8] sm:$0xff] %vm2709, %v2632
  %2768 = vst.msk [vmem:[#allocation4 + $0x1d0] sm:$0xff] %vm2709, %v2634
  %2769 = vst.msk [vmem:[#allocation4 + $0x1d8] sm:$0xff] %vm2709, %v2636
  %2770 = vst.msk [vmem:[#allocation4 + $0x1e0] sm:$0xff] %vm2709, %v2638
  %2771 = vst.msk [vmem:[#allocation4 + $0x1e8] sm:$0xff] %vm2709, %v2640
  %2772 = vst.msk [vmem:[#allocation4 + $0x1f0] sm:$0xff] %vm2709, %v2642
  %2773 = vst.msk [vmem:[#allocation4 + $0x1f8] sm:$0xff] %vm2709, %v2644
  %v2774 = vld [vmem:[%s2388 + $0x1] sm:$0xff]
  %v2775 = vld [vmem:[%s2388 + $0x9] sm:$0xff]
  %v2776 = vld [vmem:[%s2388 + $0x19] sm:$0xff]
  %v2777 = vld [vmem:[%s2388 + $0x21] sm:$0xff]
  %v2778 = vld [vmem:[%s2388 + $0x31] sm:$0xff]
  %v2779 = vld [vmem:[%s2388 + $0x39] sm:$0xff]
  %v2780 = vld [vmem:[%s2388 + $0x49] sm:$0xff]
  %v2781 = vld [vmem:[%s2388 + $0x51] sm:$0xff]
  %v2782 = vld [vmem:[%s2388 + $0x61] sm:$0xff]
  %v2783 = vld [vmem:[%s2388 + $0x69] sm:$0xff]
  %v2784 = vld [vmem:[%s2388 + $0x79] sm:$0xff]
  %v2785 = vld [vmem:[%s2388 + $0x81] sm:$0xff]
  %v2786 = vld [vmem:[%s2388 + $0x91] sm:$0xff]
  %v2787 = vld [vmem:[%s2388 + $0x99] sm:$0xff]
  %v2788 = vld [vmem:[%s2388 + $0xa9] sm:$0xff]
  %v2789 = vld [vmem:[%s2388 + $0xb1] sm:$0xff]
  %v2790 = vld [vmem:[%s2388 + $0xc1] sm:$0xff]
  %v2791 = vld [vmem:[%s2388 + $0xc9] sm:$0xff]
  %v2792 = vld [vmem:[%s2388 + $0xd9] sm:$0xff]
  %v2793 = vld [vmem:[%s2388 + $0xe1] sm:$0xff]
  %v2794 = vld [vmem:[%s2388 + $0xf1] sm:$0xff]
  %v2795 = vld [vmem:[%s2388 + $0xf9] sm:$0xff]
  %v2796 = vld [vmem:[%s2388 + $0x109] sm:$0xff]
  %v2797 = vld [vmem:[%s2388 + $0x111] sm:$0xff]
  %v2798 = vld [vmem:[%s2388 + $0x121] sm:$0xff]
  %v2799 = vld [vmem:[%s2388 + $0x129] sm:$0xff]
  %v2800 = vld [vmem:[%s2388 + $0x139] sm:$0xff]
  %v2801 = vld [vmem:[%s2388 + $0x141] sm:$0xff]
  %v2802 = vld [vmem:[%s2388 + $0x151] sm:$0xff]
  %v2803 = vld [vmem:[%s2388 + $0x159] sm:$0xff]
  %v2804 = vld [vmem:[%s2388 + $0x169] sm:$0xff]
  %v2805 = vld [vmem:[%s2388 + $0x171] sm:$0xff]
  %v2806 = vld [vmem:[%s2388 + $0x1b1] sm:$0xff]
  %v2807 = vld [vmem:[%s2388 + $0x1b9] sm:$0xff]
  %v2808 = vld [vmem:[%s2388 + $0x1c9] sm:$0xff]
  %v2809 = vld [vmem:[%s2388 + $0x1d1] sm:$0xff]
  %v2810 = vld [vmem:[%s2388 + $0x1e1] sm:$0xff]
  %v2811 = vld [vmem:[%s2388 + $0x1e9] sm:$0xff]
  %v2812 = vld [vmem:[%s2388 + $0x1f9] sm:$0xff]
  %v2813 = vld [vmem:[%s2388 + $0x201] sm:$0xff]
  %v2814 = vld [vmem:[%s2388 + $0x211] sm:$0xff]
  %v2815 = vld [vmem:[%s2388 + $0x219] sm:$0xff]
  %v2816 = vld [vmem:[%s2388 + $0x229] sm:$0xff]
  %v2817 = vld [vmem:[%s2388 + $0x231] sm:$0xff]
  %v2818 = vld [vmem:[%s2388 + $0x241] sm:$0xff]
  %v2819 = vld [vmem:[%s2388 + $0x249] sm:$0xff]
  %v2820 = vld [vmem:[%s2388 + $0x259] sm:$0xff]
  %v2821 = vld [vmem:[%s2388 + $0x261] sm:$0xff]
  %v2822 = vld [vmem:[%s2388 + $0x271] sm:$0xff]
  %v2823 = vld [vmem:[%s2388 + $0x279] sm:$0xff]
  %v2824 = vld [vmem:[%s2388 + $0x289] sm:$0xff]
  %v2825 = vld [vmem:[%s2388 + $0x291] sm:$0xff]
  %v2826 = vld [vmem:[%s2388 + $0x2a1] sm:$0xff]
  %v2827 = vld [vmem:[%s2388 + $0x2a9] sm:$0xff]
  %v2828 = vld [vmem:[%s2388 + $0x2b9] sm:$0xff]
  %v2829 = vld [vmem:[%s2388 + $0x2c1] sm:$0xff]
  %v2830 = vld [vmem:[%s2388 + $0x2d1] sm:$0xff]
  %v2831 = vld [vmem:[%s2388 + $0x2d9] sm:$0xff]
  %v2832 = vld [vmem:[%s2388 + $0x2e9] sm:$0xff]
  %v2833 = vld [vmem:[%s2388 + $0x2f1] sm:$0xff]
  %v2834 = vld [vmem:[%s2388 + $0x301] sm:$0xff]
  %v2835 = vld [vmem:[%s2388 + $0x309] sm:$0xff]
  %v2836 = vld [vmem:[%s2388 + $0x319] sm:$0xff]
  %v2837 = vld [vmem:[%s2388 + $0x321] sm:$0xff]
  %2902 = vrot.lane.b32.xlu0 %v2774, 28
  %v2903 = vpop.permute.xlu0 %2902
  %2904 = vrot.lane.b32.xlu0 %v2775, 28
  %v2905 = vpop.permute.xlu0 %2904
  %2906 = vrot.lane.b32.xlu0 %v2776, 28
  %v2907 = vpop.permute.xlu0 %2906
  %2908 = vrot.lane.b32.xlu0 %v2777, 28
  %v2909 = vpop.permute.xlu0 %2908
  %2910 = vrot.lane.b32.xlu0 %v2778, 28
  %v2911 = vpop.permute.xlu0 %2910
  %2912 = vrot.lane.b32.xlu0 %v2779, 28
  %v2913 = vpop.permute.xlu0 %2912
  %2914 = vrot.lane.b32.xlu0 %v2780, 28
  %v2915 = vpop.permute.xlu0 %2914
  %2916 = vrot.lane.b32.xlu0 %v2781, 28
  %v2917 = vpop.permute.xlu0 %2916
  %2918 = vrot.lane.b32.xlu0 %v2782, 28
  %v2919 = vpop.permute.xlu0 %2918
  %2920 = vrot.lane.b32.xlu0 %v2783, 28
  %v2921 = vpop.permute.xlu0 %2920
  %2922 = vrot.lane.b32.xlu0 %v2784, 28
  %v2923 = vpop.permute.xlu0 %2922
  %2924 = vrot.lane.b32.xlu0 %v2785, 28
  %v2925 = vpop.permute.xlu0 %2924
  %2926 = vrot.lane.b32.xlu0 %v2786, 28
  %v2927 = vpop.permute.xlu0 %2926
  %2928 = vrot.lane.b32.xlu0 %v2787, 28
  %v2929 = vpop.permute.xlu0 %2928
  %2930 = vrot.lane.b32.xlu0 %v2788, 28
  %v2931 = vpop.permute.xlu0 %2930
  %2932 = vrot.lane.b32.xlu0 %v2789, 28
  %v2933 = vpop.permute.xlu0 %2932
  %2934 = vrot.lane.b32.xlu0 %v2790, 28
  %v2935 = vpop.permute.xlu0 %2934
  %2936 = vrot.lane.b32.xlu0 %v2791, 28
  %v2937 = vpop.permute.xlu0 %2936
  %2938 = vrot.lane.b32.xlu0 %v2792, 28
  %v2939 = vpop.permute.xlu0 %2938
  %2940 = vrot.lane.b32.xlu0 %v2793, 28
  %v2941 = vpop.permute.xlu0 %2940
  %2942 = vrot.lane.b32.xlu0 %v2794, 28
  %v2943 = vpop.permute.xlu0 %2942
  %2944 = vrot.lane.b32.xlu0 %v2795, 28
  %v2945 = vpop.permute.xlu0 %2944
  %2946 = vrot.lane.b32.xlu0 %v2796, 28
  %v2947 = vpop.permute.xlu0 %2946
  %2948 = vrot.lane.b32.xlu0 %v2797, 28
  %v2949 = vpop.permute.xlu0 %2948
  %2950 = vrot.lane.b32.xlu0 %v2798, 28
  %v2951 = vpop.permute.xlu0 %2950
  %2952 = vrot.lane.b32.xlu0 %v2799, 28
  %v2953 = vpop.permute.xlu0 %2952
  %2954 = vrot.lane.b32.xlu0 %v2800, 28
  %v2955 = vpop.permute.xlu0 %2954
  %2956 = vrot.lane.b32.xlu0 %v2801, 28
  %v2957 = vpop.permute.xlu0 %2956
  %2958 = vrot.lane.b32.xlu0 %v2802, 28
  %v2959 = vpop.permute.xlu0 %2958
  %2960 = vrot.lane.b32.xlu0 %v2803, 28
  %v2961 = vpop.permute.xlu0 %2960
  %2962 = vrot.lane.b32.xlu0 %v2804, 28
  %v2963 = vpop.permute.xlu0 %2962
  %2964 = vrot.lane.b32.xlu0 %v2805, 28
  %v2965 = vpop.permute.xlu0 %2964
  %2966 = vrot.lane.b32.xlu0 %v2806, 28
  %v2967 = vpop.permute.xlu0 %2966
  %2968 = vrot.lane.b32.xlu0 %v2807, 28
  %v2969 = vpop.permute.xlu0 %2968
  %2970 = vrot.lane.b32.xlu0 %v2808, 28
  %v2971 = vpop.permute.xlu0 %2970
  %2972 = vrot.lane.b32.xlu0 %v2809, 28
  %v2973 = vpop.permute.xlu0 %2972
  %2974 = vrot.lane.b32.xlu0 %v2810, 28
  %v2975 = vpop.permute.xlu0 %2974
  %2976 = vrot.lane.b32.xlu0 %v2811, 28
  %v2977 = vpop.permute.xlu0 %2976
  %2978 = vrot.lane.b32.xlu0 %v2812, 28
  %v2979 = vpop.permute.xlu0 %2978
  %2980 = vrot.lane.b32.xlu0 %v2813, 28
  %v2981 = vpop.permute.xlu0 %2980
  %2982 = vrot.lane.b32.xlu0 %v2814, 28
  %v2983 = vpop.permute.xlu0 %2982
  %2984 = vrot.lane.b32.xlu0 %v2815, 28
  %v2985 = vpop.permute.xlu0 %2984
  %2986 = vrot.lane.b32.xlu0 %v2816, 28
  %v2987 = vpop.permute.xlu0 %2986
  %2988 = vrot.lane.b32.xlu0 %v2817, 28
  %v2989 = vpop.permute.xlu0 %2988
  %2990 = vrot.lane.b32.xlu0 %v2818, 28
  %v2991 = vpop.permute.xlu0 %2990
  %2992 = vrot.lane.b32.xlu0 %v2819, 28
  %v2993 = vpop.permute.xlu0 %2992
  %2994 = vrot.lane.b32.xlu0 %v2820, 28
  %v2995 = vpop.permute.xlu0 %2994
  %2996 = vrot.lane.b32.xlu0 %v2821, 28
  %v2997 = vpop.permute.xlu0 %2996
  %2998 = vrot.lane.b32.xlu0 %v2822, 28
  %v2999 = vpop.permute.xlu0 %2998
  %3000 = vrot.lane.b32.xlu0 %v2823, 28
  %v3001 = vpop.permute.xlu0 %3000
  %3002 = vrot.lane.b32.xlu0 %v2824, 28
  %v3003 = vpop.permute.xlu0 %3002
  %3004 = vrot.lane.b32.xlu0 %v2825, 28
  %v3005 = vpop.permute.xlu0 %3004
  %3006 = vrot.lane.b32.xlu0 %v2826, 28
  %v3007 = vpop.permute.xlu0 %3006
  %3008 = vrot.lane.b32.xlu0 %v2827, 28
  %v3009 = vpop.permute.xlu0 %3008
  %3010 = vrot.lane.b32.xlu0 %v2828, 28
  %v3011 = vpop.permute.xlu0 %3010
  %3012 = vrot.lane.b32.xlu0 %v2829, 28
  %v3013 = vpop.permute.xlu0 %3012
  %3014 = vrot.lane.b32.xlu0 %v2830, 28
  %v3015 = vpop.permute.xlu0 %3014
  %3016 = vrot.lane.b32.xlu0 %v2831, 28
  %v3017 = vpop.permute.xlu0 %3016
  %3018 = vrot.lane.b32.xlu0 %v2832, 28
  %v3019 = vpop.permute.xlu0 %3018
  %3020 = vrot.lane.b32.xlu0 %v2833, 28
  %v3021 = vpop.permute.xlu0 %3020
  %3022 = vrot.lane.b32.xlu0 %v2834, 28
  %v3023 = vpop.permute.xlu0 %3022
  %3024 = vrot.lane.b32.xlu0 %v2835, 28
  %v3025 = vpop.permute.xlu0 %3024
  %3026 = vrot.lane.b32.xlu0 %v2836, 28
  %v3027 = vpop.permute.xlu0 %3026
  %3028 = vrot.lane.b32.xlu0 %v2837, 28
  %v3029 = vpop.permute.xlu0 %3028
  %vm3094 = vcmask 261344
  %3095 = vst.msk [vmem:[#allocation4] sm:$0xff] %vm3094, %v2903
  %3096 = vst.msk [vmem:[#allocation4 + $0x8] sm:$0xff] %vm3094, %v2905
  %3097 = vst.msk [vmem:[#allocation4 + $0x10] sm:$0xff] %vm3094, %v2907
  %3098 = vst.msk [vmem:[#allocation4 + $0x18] sm:$0xff] %vm3094, %v2909
  %3099 = vst.msk [vmem:[#allocation4 + $0x20] sm:$0xff] %vm3094, %v2911
  %3100 = vst.msk [vmem:[#allocation4 + $0x28] sm:$0xff] %vm3094, %v2913
  %3101 = vst.msk [vmem:[#allocation4 + $0x30] sm:$0xff] %vm3094, %v2915
  %3102 = vst.msk [vmem:[#allocation4 + $0x38] sm:$0xff] %vm3094, %v2917
  %3103 = vst.msk [vmem:[#allocation4 + $0x40] sm:$0xff] %vm3094, %v2919
  %3104 = vst.msk [vmem:[#allocation4 + $0x48] sm:$0xff] %vm3094, %v2921
  %3105 = vst.msk [vmem:[#allocation4 + $0x50] sm:$0xff] %vm3094, %v2923
  %3106 = vst.msk [vmem:[#allocation4 + $0x58] sm:$0xff] %vm3094, %v2925
  %3107 = vst.msk [vmem:[#allocation4 + $0x60] sm:$0xff] %vm3094, %v2927
  %3108 = vst.msk [vmem:[#allocation4 + $0x68] sm:$0xff] %vm3094, %v2929
  %3109 = vst.msk [vmem:[#allocation4 + $0x70] sm:$0xff] %vm3094, %v2931
  %3110 = vst.msk [vmem:[#allocation4 + $0x78] sm:$0xff] %vm3094, %v2933
  %3111 = vst.msk [vmem:[#allocation4 + $0x80] sm:$0xff] %vm3094, %v2935
  %3112 = vst.msk [vmem:[#allocation4 + $0x88] sm:$0xff] %vm3094, %v2937
  %3113 = vst.msk [vmem:[#allocation4 + $0x90] sm:$0xff] %vm3094, %v2939
  %3114 = vst.msk [vmem:[#allocation4 + $0x98] sm:$0xff] %vm3094, %v2941
  %3115 = vst.msk [vmem:[#allocation4 + $0xa0] sm:$0xff] %vm3094, %v2943
  %3116 = vst.msk [vmem:[#allocation4 + $0xa8] sm:$0xff] %vm3094, %v2945
  %3117 = vst.msk [vmem:[#allocation4 + $0xb0] sm:$0xff] %vm3094, %v2947
  %3118 = vst.msk [vmem:[#allocation4 + $0xb8] sm:$0xff] %vm3094, %v2949
  %3119 = vst.msk [vmem:[#allocation4 + $0xc0] sm:$0xff] %vm3094, %v2951
  %3120 = vst.msk [vmem:[#allocation4 + $0xc8] sm:$0xff] %vm3094, %v2953
  %3121 = vst.msk [vmem:[#allocation4 + $0xd0] sm:$0xff] %vm3094, %v2955
  %3122 = vst.msk [vmem:[#allocation4 + $0xd8] sm:$0xff] %vm3094, %v2957
  %3123 = vst.msk [vmem:[#allocation4 + $0xe0] sm:$0xff] %vm3094, %v2959
  %3124 = vst.msk [vmem:[#allocation4 + $0xe8] sm:$0xff] %vm3094, %v2961
  %3125 = vst.msk [vmem:[#allocation4 + $0xf0] sm:$0xff] %vm3094, %v2963
  %3126 = vst.msk [vmem:[#allocation4 + $0xf8] sm:$0xff] %vm3094, %v2965
  %3127 = vst.msk [vmem:[#allocation4 + $0x100] sm:$0xff] %vm3094, %v2967
  %3128 = vst.msk [vmem:[#allocation4 + $0x108] sm:$0xff] %vm3094, %v2969
  %3129 = vst.msk [vmem:[#allocation4 + $0x110] sm:$0xff] %vm3094, %v2971
  %3130 = vst.msk [vmem:[#allocation4 + $0x118] sm:$0xff] %vm3094, %v2973
  %3131 = vst.msk [vmem:[#allocation4 + $0x120] sm:$0xff] %vm3094, %v2975
  %3132 = vst.msk [vmem:[#allocation4 + $0x128] sm:$0xff] %vm3094, %v2977
  %3133 = vst.msk [vmem:[#allocation4 + $0x130] sm:$0xff] %vm3094, %v2979
  %3134 = vst.msk [vmem:[#allocation4 + $0x138] sm:$0xff] %vm3094, %v2981
  %3135 = vst.msk [vmem:[#allocation4 + $0x140] sm:$0xff] %vm3094, %v2983
  %3136 = vst.msk [vmem:[#allocation4 + $0x148] sm:$0xff] %vm3094, %v2985
  %3137 = vst.msk [vmem:[#allocation4 + $0x150] sm:$0xff] %vm3094, %v2987
  %3138 = vst.msk [vmem:[#allocation4 + $0x158] sm:$0xff] %vm3094, %v2989
  %3139 = vst.msk [vmem:[#allocation4 + $0x160] sm:$0xff] %vm3094, %v2991
  %3140 = vst.msk [vmem:[#allocation4 + $0x168] sm:$0xff] %vm3094, %v2993
  %3141 = vst.msk [vmem:[#allocation4 + $0x170] sm:$0xff] %vm3094, %v2995
  %3142 = vst.msk [vmem:[#allocation4 + $0x178] sm:$0xff] %vm3094, %v2997
  %3143 = vst.msk [vmem:[#allocation4 + $0x180] sm:$0xff] %vm3094, %v2999
  %3144 = vst.msk [vmem:[#allocation4 + $0x188] sm:$0xff] %vm3094, %v3001
  %3145 = vst.msk [vmem:[#allocation4 + $0x190] sm:$0xff] %vm3094, %v3003
  %3146 = vst.msk [vmem:[#allocation4 + $0x198] sm:$0xff] %vm3094, %v3005
  %3147 = vst.msk [vmem:[#allocation4 + $0x1a0] sm:$0xff] %vm3094, %v3007
  %3148 = vst.msk [vmem:[#allocation4 + $0x1a8] sm:$0xff] %vm3094, %v3009
  %3149 = vst.msk [vmem:[#allocation4 + $0x1b0] sm:$0xff] %vm3094, %v3011
  %3150 = vst.msk [vmem:[#allocation4 + $0x1b8] sm:$0xff] %vm3094, %v3013
  %3151 = vst.msk [vmem:[#allocation4 + $0x1c0] sm:$0xff] %vm3094, %v3015
  %3152 = vst.msk [vmem:[#allocation4 + $0x1c8] sm:$0xff] %vm3094, %v3017
  %3153 = vst.msk [vmem:[#allocation4 + $0x1d0] sm:$0xff] %vm3094, %v3019
  %3154 = vst.msk [vmem:[#allocation4 + $0x1d8] sm:$0xff] %vm3094, %v3021
  %3155 = vst.msk [vmem:[#allocation4 + $0x1e0] sm:$0xff] %vm3094, %v3023
  %3156 = vst.msk [vmem:[#allocation4 + $0x1e8] sm:$0xff] %vm3094, %v3025
  %3157 = vst.msk [vmem:[#allocation4 + $0x1f0] sm:$0xff] %vm3094, %v3027
  %3158 = vst.msk [vmem:[#allocation4 + $0x1f8] sm:$0xff] %vm3094, %v3029
  %v3159 = vld [vmem:[%s2388 + $0x2] sm:$0xff]
  %v3160 = vld [vmem:[%s2388 + $0xa] sm:$0xff]
  %v3161 = vld [vmem:[%s2388 + $0x1a] sm:$0xff]
  %v3162 = vld [vmem:[%s2388 + $0x22] sm:$0xff]
  %v3163 = vld [vmem:[%s2388 + $0x32] sm:$0xff]
  %v3164 = vld [vmem:[%s2388 + $0x3a] sm:$0xff]
  %v3165 = vld [vmem:[%s2388 + $0x4a] sm:$0xff]
  %v3166 = vld [vmem:[%s2388 + $0x52] sm:$0xff]
  %v3167 = vld [vmem:[%s2388 + $0x62] sm:$0xff]
  %v3168 = vld [vmem:[%s2388 + $0x6a] sm:$0xff]
  %v3169 = vld [vmem:[%s2388 + $0x7a] sm:$0xff]
  %v3170 = vld [vmem:[%s2388 + $0x82] sm:$0xff]
  %v3171 = vld [vmem:[%s2388 + $0x92] sm:$0xff]
  %v3172 = vld [vmem:[%s2388 + $0x9a] sm:$0xff]
  %v3173 = vld [vmem:[%s2388 + $0xaa] sm:$0xff]
  %v3174 = vld [vmem:[%s2388 + $0xb2] sm:$0xff]
  %v3175 = vld [vmem:[%s2388 + $0xc2] sm:$0xff]
  %v3176 = vld [vmem:[%s2388 + $0xca] sm:$0xff]
  %v3177 = vld [vmem:[%s2388 + $0xda] sm:$0xff]
  %v3178 = vld [vmem:[%s2388 + $0xe2] sm:$0xff]
  %v3179 = vld [vmem:[%s2388 + $0xf2] sm:$0xff]
  %v3180 = vld [vmem:[%s2388 + $0xfa] sm:$0xff]
  %v3181 = vld [vmem:[%s2388 + $0x10a] sm:$0xff]
  %v3182 = vld [vmem:[%s2388 + $0x112] sm:$0xff]
  %v3183 = vld [vmem:[%s2388 + $0x122] sm:$0xff]
  %v3184 = vld [vmem:[%s2388 + $0x12a] sm:$0xff]
  %v3185 = vld [vmem:[%s2388 + $0x13a] sm:$0xff]
  %v3186 = vld [vmem:[%s2388 + $0x142] sm:$0xff]
  %v3187 = vld [vmem:[%s2388 + $0x152] sm:$0xff]
  %v3188 = vld [vmem:[%s2388 + $0x15a] sm:$0xff]
  %v3189 = vld [vmem:[%s2388 + $0x16a] sm:$0xff]
  %v3190 = vld [vmem:[%s2388 + $0x172] sm:$0xff]
  %v3191 = vld [vmem:[%s2388 + $0x1b2] sm:$0xff]
  %v3192 = vld [vmem:[%s2388 + $0x1ba] sm:$0xff]
  %v3193 = vld [vmem:[%s2388 + $0x1ca] sm:$0xff]
  %v3194 = vld [vmem:[%s2388 + $0x1d2] sm:$0xff]
  %v3195 = vld [vmem:[%s2388 + $0x1e2] sm:$0xff]
  %v3196 = vld [vmem:[%s2388 + $0x1ea] sm:$0xff]
  %v3197 = vld [vmem:[%s2388 + $0x1fa] sm:$0xff]
  %v3198 = vld [vmem:[%s2388 + $0x202] sm:$0xff]
  %v3199 = vld [vmem:[%s2388 + $0x212] sm:$0xff]
  %v3200 = vld [vmem:[%s2388 + $0x21a] sm:$0xff]
  %v3201 = vld [vmem:[%s2388 + $0x22a] sm:$0xff]
  %v3202 = vld [vmem:[%s2388 + $0x232] sm:$0xff]
  %v3203 = vld [vmem:[%s2388 + $0x242] sm:$0xff]
  %v3204 = vld [vmem:[%s2388 + $0x24a] sm:$0xff]
  %v3205 = vld [vmem:[%s2388 + $0x25a] sm:$0xff]
  %v3206 = vld [vmem:[%s2388 + $0x262] sm:$0xff]
  %v3207 = vld [vmem:[%s2388 + $0x272] sm:$0xff]
  %v3208 = vld [vmem:[%s2388 + $0x27a] sm:$0xff]
  %v3209 = vld [vmem:[%s2388 + $0x28a] sm:$0xff]
  %v3210 = vld [vmem:[%s2388 + $0x292] sm:$0xff]
  %v3211 = vld [vmem:[%s2388 + $0x2a2] sm:$0xff]
  %v3212 = vld [vmem:[%s2388 + $0x2aa] sm:$0xff]
  %v3213 = vld [vmem:[%s2388 + $0x2ba] sm:$0xff]
  %v3214 = vld [vmem:[%s2388 + $0x2c2] sm:$0xff]
  %v3215 = vld [vmem:[%s2388 + $0x2d2] sm:$0xff]
  %v3216 = vld [vmem:[%s2388 + $0x2da] sm:$0xff]
  %v3217 = vld [vmem:[%s2388 + $0x2ea] sm:$0xff]
  %v3218 = vld [vmem:[%s2388 + $0x2f2] sm:$0xff]
  %v3219 = vld [vmem:[%s2388 + $0x302] sm:$0xff]
  %v3220 = vld [vmem:[%s2388 + $0x30a] sm:$0xff]
  %v3221 = vld [vmem:[%s2388 + $0x31a] sm:$0xff]
  %v3222 = vld [vmem:[%s2388 + $0x322] sm:$0xff]
  %3287 = vrot.lane.b32.xlu0 %v3159, 32
  %v3288 = vpop.permute.xlu0 %3287
  %3289 = vrot.lane.b32.xlu0 %v3160, 32
  %v3290 = vpop.permute.xlu0 %3289
  %3291 = vrot.lane.b32.xlu0 %v3161, 32
  %v3292 = vpop.permute.xlu0 %3291
  %3293 = vrot.lane.b32.xlu0 %v3162, 32
  %v3294 = vpop.permute.xlu0 %3293
  %3295 = vrot.lane.b32.xlu0 %v3163, 32
  %v3296 = vpop.permute.xlu0 %3295
  %3297 = vrot.lane.b32.xlu0 %v3164, 32
  %v3298 = vpop.permute.xlu0 %3297
  %3299 = vrot.lane.b32.xlu0 %v3165, 32
  %v3300 = vpop.permute.xlu0 %3299
  %3301 = vrot.lane.b32.xlu0 %v3166, 32
  %v3302 = vpop.permute.xlu0 %3301
  %3303 = vrot.lane.b32.xlu0 %v3167, 32
  %v3304 = vpop.permute.xlu0 %3303
  %3305 = vrot.lane.b32.xlu0 %v3168, 32
  %v3306 = vpop.permute.xlu0 %3305
  %3307 = vrot.lane.b32.xlu0 %v3169, 32
  %v3308 = vpop.permute.xlu0 %3307
  %3309 = vrot.lane.b32.xlu0 %v3170, 32
  %v3310 = vpop.permute.xlu0 %3309
  %3311 = vrot.lane.b32.xlu0 %v3171, 32
  %v3312 = vpop.permute.xlu0 %3311
  %3313 = vrot.lane.b32.xlu0 %v3172, 32
  %v3314 = vpop.permute.xlu0 %3313
  %3315 = vrot.lane.b32.xlu0 %v3173, 32
  %v3316 = vpop.permute.xlu0 %3315
  %3317 = vrot.lane.b32.xlu0 %v3174, 32
  %v3318 = vpop.permute.xlu0 %3317
  %3319 = vrot.lane.b32.xlu0 %v3175, 32
  %v3320 = vpop.permute.xlu0 %3319
  %3321 = vrot.lane.b32.xlu0 %v3176, 32
  %v3322 = vpop.permute.xlu0 %3321
  %3323 = vrot.lane.b32.xlu0 %v3177, 32
  %v3324 = vpop.permute.xlu0 %3323
  %3325 = vrot.lane.b32.xlu0 %v3178, 32
  %v3326 = vpop.permute.xlu0 %3325
  %3327 = vrot.lane.b32.xlu0 %v3179, 32
  %v3328 = vpop.permute.xlu0 %3327
  %3329 = vrot.lane.b32.xlu0 %v3180, 32
  %v3330 = vpop.permute.xlu0 %3329
  %3331 = vrot.lane.b32.xlu0 %v3181, 32
  %v3332 = vpop.permute.xlu0 %3331
  %3333 = vrot.lane.b32.xlu0 %v3182, 32
  %v3334 = vpop.permute.xlu0 %3333
  %3335 = vrot.lane.b32.xlu0 %v3183, 32
  %v3336 = vpop.permute.xlu0 %3335
  %3337 = vrot.lane.b32.xlu0 %v3184, 32
  %v3338 = vpop.permute.xlu0 %3337
  %3339 = vrot.lane.b32.xlu0 %v3185, 32
  %v3340 = vpop.permute.xlu0 %3339
  %3341 = vrot.lane.b32.xlu0 %v3186, 32
  %v3342 = vpop.permute.xlu0 %3341
  %3343 = vrot.lane.b32.xlu0 %v3187, 32
  %v3344 = vpop.permute.xlu0 %3343
  %3345 = vrot.lane.b32.xlu0 %v3188, 32
  %v3346 = vpop.permute.xlu0 %3345
  %3347 = vrot.lane.b32.xlu0 %v3189, 32
  %v3348 = vpop.permute.xlu0 %3347
  %3349 = vrot.lane.b32.xlu0 %v3190, 32
  %v3350 = vpop.permute.xlu0 %3349
  %3351 = vrot.lane.b32.xlu0 %v3191, 32
  %v3352 = vpop.permute.xlu0 %3351
  %3353 = vrot.lane.b32.xlu0 %v3192, 32
  %v3354 = vpop.permute.xlu0 %3353
  %3355 = vrot.lane.b32.xlu0 %v3193, 32
  %v3356 = vpop.permute.xlu0 %3355
  %3357 = vrot.lane.b32.xlu0 %v3194, 32
  %v3358 = vpop.permute.xlu0 %3357
  %3359 = vrot.lane.b32.xlu0 %v3195, 32
  %v3360 = vpop.permute.xlu0 %3359
  %3361 = vrot.lane.b32.xlu0 %v3196, 32
  %v3362 = vpop.permute.xlu0 %3361
  %3363 = vrot.lane.b32.xlu0 %v3197, 32
  %v3364 = vpop.permute.xlu0 %3363
  %3365 = vrot.lane.b32.xlu0 %v3198, 32
  %v3366 = vpop.permute.xlu0 %3365
  %3367 = vrot.lane.b32.xlu0 %v3199, 32
  %v3368 = vpop.permute.xlu0 %3367
  %3369 = vrot.lane.b32.xlu0 %v3200, 32
  %v3370 = vpop.permute.xlu0 %3369
  %3371 = vrot.lane.b32.xlu0 %v3201, 32
  %v3372 = vpop.permute.xlu0 %3371
  %3373 = vrot.lane.b32.xlu0 %v3202, 32
  %v3374 = vpop.permute.xlu0 %3373
  %3375 = vrot.lane.b32.xlu0 %v3203, 32
  %v3376 = vpop.permute.xlu0 %3375
  %3377 = vrot.lane.b32.xlu0 %v3204, 32
  %v3378 = vpop.permute.xlu0 %3377
  %3379 = vrot.lane.b32.xlu0 %v3205, 32
  %v3380 = vpop.permute.xlu0 %3379
  %3381 = vrot.lane.b32.xlu0 %v3206, 32
  %v3382 = vpop.permute.xlu0 %3381
  %3383 = vrot.lane.b32.xlu0 %v3207, 32
  %v3384 = vpop.permute.xlu0 %3383
  %3385 = vrot.lane.b32.xlu0 %v3208, 32
  %v3386 = vpop.permute.xlu0 %3385
  %3387 = vrot.lane.b32.xlu0 %v3209, 32
  %v3388 = vpop.permute.xlu0 %3387
  %3389 = vrot.lane.b32.xlu0 %v3210, 32
  %v3390 = vpop.permute.xlu0 %3389
  %3391 = vrot.lane.b32.xlu0 %v3211, 32
  %v3392 = vpop.permute.xlu0 %3391
  %3393 = vrot.lane.b32.xlu0 %v3212, 32
  %v3394 = vpop.permute.xlu0 %3393
  %3395 = vrot.lane.b32.xlu0 %v3213, 32
  %v3396 = vpop.permute.xlu0 %3395
  %3397 = vrot.lane.b32.xlu0 %v3214, 32
  %v3398 = vpop.permute.xlu0 %3397
  %3399 = vrot.lane.b32.xlu0 %v3215, 32
  %v3400 = vpop.permute.xlu0 %3399
  %3401 = vrot.lane.b32.xlu0 %v3216, 32
  %v3402 = vpop.permute.xlu0 %3401
  %3403 = vrot.lane.b32.xlu0 %v3217, 32
  %v3404 = vpop.permute.xlu0 %3403
  %3405 = vrot.lane.b32.xlu0 %v3218, 32
  %v3406 = vpop.permute.xlu0 %3405
  %3407 = vrot.lane.b32.xlu0 %v3219, 32
  %v3408 = vpop.permute.xlu0 %3407
  %3409 = vrot.lane.b32.xlu0 %v3220, 32
  %v3410 = vpop.permute.xlu0 %3409
  %3411 = vrot.lane.b32.xlu0 %v3221, 32
  %v3412 = vpop.permute.xlu0 %3411
  %3413 = vrot.lane.b32.xlu0 %v3222, 32
  %v3414 = vpop.permute.xlu0 %3413
  %vm3479 = vcmask 294144
  %3480 = vst.msk [vmem:[#allocation4] sm:$0xff] %vm3479, %v3288
  %3481 = vst.msk [vmem:[#allocation4 + $0x8] sm:$0xff] %vm3479, %v3290
  %3482 = vst.msk [vmem:[#allocation4 + $0x10] sm:$0xff] %vm3479, %v3292
  %3483 = vst.msk [vmem:[#allocation4 + $0x18] sm:$0xff] %vm3479, %v3294
  %3484 = vst.msk [vmem:[#allocation4 + $0x20] sm:$0xff] %vm3479, %v3296
  %3485 = vst.msk [vmem:[#allocation4 + $0x28] sm:$0xff] %vm3479, %v3298
  %3486 = vst.msk [vmem:[#allocation4 + $0x30] sm:$0xff] %vm3479, %v3300
  %3487 = vst.msk [vmem:[#allocation4 + $0x38] sm:$0xff] %vm3479, %v3302
  %3488 = vst.msk [vmem:[#allocation4 + $0x40] sm:$0xff] %vm3479, %v3304
  %3489 = vst.msk [vmem:[#allocation4 + $0x48] sm:$0xff] %vm3479, %v3306
  %3490 = vst.msk [vmem:[#allocation4 + $0x50] sm:$0xff] %vm3479, %v3308
  %3491 = vst.msk [vmem:[#allocation4 + $0x58] sm:$0xff] %vm3479, %v3310
  %3492 = vst.msk [vmem:[#allocation4 + $0x60] sm:$0xff] %vm3479, %v3312
  %3493 = vst.msk [vmem:[#allocation4 + $0x68] sm:$0xff] %vm3479, %v3314
  %3494 = vst.msk [vmem:[#allocation4 + $0x70] sm:$0xff] %vm3479, %v3316
  %3495 = vst.msk [vmem:[#allocation4 + $0x78] sm:$0xff] %vm3479, %v3318
  %3496 = vst.msk [vmem:[#allocation4 + $0x80] sm:$0xff] %vm3479, %v3320
  %3497 = vst.msk [vmem:[#allocation4 + $0x88] sm:$0xff] %vm3479, %v3322
  %3498 = vst.msk [vmem:[#allocation4 + $0x90] sm:$0xff] %vm3479, %v3324
  %3499 = vst.msk [vmem:[#allocation4 + $0x98] sm:$0xff] %vm3479, %v3326
  %3500 = vst.msk [vmem:[#allocation4 + $0xa0] sm:$0xff] %vm3479, %v3328
  %3501 = vst.msk [vmem:[#allocation4 + $0xa8] sm:$0xff] %vm3479, %v3330
  %3502 = vst.msk [vmem:[#allocation4 + $0xb0] sm:$0xff] %vm3479, %v3332
  %3503 = vst.msk [vmem:[#allocation4 + $0xb8] sm:$0xff] %vm3479, %v3334
  %3504 = vst.msk [vmem:[#allocation4 + $0xc0] sm:$0xff] %vm3479, %v3336
  %3505 = vst.msk [vmem:[#allocation4 + $0xc8] sm:$0xff] %vm3479, %v3338
  %3506 = vst.msk [vmem:[#allocation4 + $0xd0] sm:$0xff] %vm3479, %v3340
  %3507 = vst.msk [vmem:[#allocation4 + $0xd8] sm:$0xff] %vm3479, %v3342
  %3508 = vst.msk [vmem:[#allocation4 + $0xe0] sm:$0xff] %vm3479, %v3344
  %3509 = vst.msk [vmem:[#allocation4 + $0xe8] sm:$0xff] %vm3479, %v3346
  %3510 = vst.msk [vmem:[#allocation4 + $0xf0] sm:$0xff] %vm3479, %v3348
  %3511 = vst.msk [vmem:[#allocation4 + $0xf8] sm:$0xff] %vm3479, %v3350
  %3512 = vst.msk [vmem:[#allocation4 + $0x100] sm:$0xff] %vm3479, %v3352
  %3513 = vst.msk [vmem:[#allocation4 + $0x108] sm:$0xff] %vm3479, %v3354
  %3514 = vst.msk [vmem:[#allocation4 + $0x110] sm:$0xff] %vm3479, %v3356
  %3515 = vst.msk [vmem:[#allocation4 + $0x118] sm:$0xff] %vm3479, %v3358
  %3516 = vst.msk [vmem:[#allocation4 + $0x120] sm:$0xff] %vm3479, %v3360
  %3517 = vst.msk [vmem:[#allocation4 + $0x128] sm:$0xff] %vm3479, %v3362
  %3518 = vst.msk [vmem:[#allocation4 + $0x130] sm:$0xff] %vm3479, %v3364
  %3519 = vst.msk [vmem:[#allocation4 + $0x138] sm:$0xff] %vm3479, %v3366
  %3520 = vst.msk [vmem:[#allocation4 + $0x140] sm:$0xff] %vm3479, %v3368
  %3521 = vst.msk [vmem:[#allocation4 + $0x148] sm:$0xff] %vm3479, %v3370
  %3522 = vst.msk [vmem:[#allocation4 + $0x150] sm:$0xff] %vm3479, %v3372
  %3523 = vst.msk [vmem:[#allocation4 + $0x158] sm:$0xff] %vm3479, %v3374
  %3524 = vst.msk [vmem:[#allocation4 + $0x160] sm:$0xff] %vm3479, %v3376
  %3525 = vst.msk [vmem:[#allocation4 + $0x168] sm:$0xff] %vm3479, %v3378
  %3526 = vst.msk [vmem:[#allocation4 + $0x170] sm:$0xff] %vm3479, %v3380
  %3527 = vst.msk [vmem:[#allocation4 + $0x178] sm:$0xff] %vm3479, %v3382
  %3528 = vst.msk [vmem:[#allocation4 + $0x180] sm:$0xff] %vm3479, %v3384
  %3529 = vst.msk [vmem:[#allocation4 + $0x188] sm:$0xff] %vm3479, %v3386
  %3530 = vst.msk [vmem:[#allocation4 + $0x190] sm:$0xff] %vm3479, %v3388
  %3531 = vst.msk [vmem:[#allocation4 + $0x198] sm:$0xff] %vm3479, %v3390
  %3532 = vst.msk [vmem:[#allocation4 + $0x1a0] sm:$0xff] %vm3479, %v3392
  %3533 = vst.msk [vmem:[#allocation4 + $0x1a8] sm:$0xff] %vm3479, %v3394
  %3534 = vst.msk [vmem:[#allocation4 + $0x1b0] sm:$0xff] %vm3479, %v3396
  %3535 = vst.msk [vmem:[#allocation4 + $0x1b8] sm:$0xff] %vm3479, %v3398
  %3536 = vst.msk [vmem:[#allocation4 + $0x1c0] sm:$0xff] %vm3479, %v3400
  %3537 = vst.msk [vmem:[#allocation4 + $0x1c8] sm:$0xff] %vm3479, %v3402
  %3538 = vst.msk [vmem:[#allocation4 + $0x1d0] sm:$0xff] %vm3479, %v3404
  %3539 = vst.msk [vmem:[#allocation4 + $0x1d8] sm:$0xff] %vm3479, %v3406
  %3540 = vst.msk [vmem:[#allocation4 + $0x1e0] sm:$0xff] %vm3479, %v3408
  %3541 = vst.msk [vmem:[#allocation4 + $0x1e8] sm:$0xff] %vm3479, %v3410
  %3542 = vst.msk [vmem:[#allocation4 + $0x1f0] sm:$0xff] %vm3479, %v3412
  %3543 = vst.msk [vmem:[#allocation4 + $0x1f8] sm:$0xff] %vm3479, %v3414
  %v3544 = vld [vmem:[#allocation4] sm:$0xff]
  %v3545 = vld [vmem:[#allocation4 + $0x8] sm:$0xff]
  %v3546 = vld [vmem:[#allocation4 + $0x10] sm:$0xff]
  %v3547 = vld [vmem:[#allocation4 + $0x18] sm:$0xff]
  %v3548 = vld [vmem:[#allocation4 + $0x20] sm:$0xff]
  %v3549 = vld [vmem:[#allocation4 + $0x28] sm:$0xff]
  %v3550 = vld [vmem:[#allocation4 + $0x30] sm:$0xff]
  %v3551 = vld [vmem:[#allocation4 + $0x38] sm:$0xff]
  %v3552 = vld [vmem:[#allocation4 + $0x40] sm:$0xff]
  %v3553 = vld [vmem:[#allocation4 + $0x48] sm:$0xff]
  %v3554 = vld [vmem:[#allocation4 + $0x50] sm:$0xff]
  %v3555 = vld [vmem:[#allocation4 + $0x58] sm:$0xff]
  %v3556 = vld [vmem:[#allocation4 + $0x60] sm:$0xff]
  %v3557 = vld [vmem:[#allocation4 + $0x68] sm:$0xff]
  %v3558 = vld [vmem:[#allocation4 + $0x70] sm:$0xff]
  %v3559 = vld [vmem:[#allocation4 + $0x78] sm:$0xff]
  %v3560 = vld [vmem:[#allocation4 + $0x80] sm:$0xff]
  %v3561 = vld [vmem:[#allocation4 + $0x88] sm:$0xff]
  %v3562 = vld [vmem:[#allocation4 + $0x90] sm:$0xff]
  %v3563 = vld [vmem:[#allocation4 + $0x98] sm:$0xff]
  %v3564 = vld [vmem:[#allocation4 + $0xa0] sm:$0xff]
  %v3565 = vld [vmem:[#allocation4 + $0xa8] sm:$0xff]
  %v3566 = vld [vmem:[#allocation4 + $0xb0] sm:$0xff]
  %v3567 = vld [vmem:[#allocation4 + $0xb8] sm:$0xff]
  %v3568 = vld [vmem:[#allocation4 + $0xc0] sm:$0xff]
  %v3569 = vld [vmem:[#allocation4 + $0xc8] sm:$0xff]
  %v3570 = vld [vmem:[#allocation4 + $0xd0] sm:$0xff]
  %v3571 = vld [vmem:[#allocation4 + $0xd8] sm:$0xff]
  %v3572 = vld [vmem:[#allocation4 + $0xe0] sm:$0xff]
  %v3573 = vld [vmem:[#allocation4 + $0xe8] sm:$0xff]
  %v3574 = vld [vmem:[#allocation4 + $0xf0] sm:$0xff]
  %v3575 = vld [vmem:[#allocation4 + $0xf8] sm:$0xff]
  %v3576 = vld [vmem:[#allocation4 + $0x100] sm:$0xff]
  %v3577 = vld [vmem:[#allocation4 + $0x108] sm:$0xff]
  %v3578 = vld [vmem:[#allocation4 + $0x110] sm:$0xff]
  %v3579 = vld [vmem:[#allocation4 + $0x118] sm:$0xff]
  %v3580 = vld [vmem:[#allocation4 + $0x120] sm:$0xff]
  %v3581 = vld [vmem:[#allocation4 + $0x128] sm:$0xff]
  %v3582 = vld [vmem:[#allocation4 + $0x130] sm:$0xff]
  %v3583 = vld [vmem:[#allocation4 + $0x138] sm:$0xff]
  %v3584 = vld [vmem:[#allocation4 + $0x140] sm:$0xff]
  %v3585 = vld [vmem:[#allocation4 + $0x148] sm:$0xff]
  %v3586 = vld [vmem:[#allocation4 + $0x150] sm:$0xff]
  %v3587 = vld [vmem:[#allocation4 + $0x158] sm:$0xff]
  %v3588 = vld [vmem:[#allocation4 + $0x160] sm:$0xff]
  %v3589 = vld [vmem:[#allocation4 + $0x168] sm:$0xff]
  %v3590 = vld [vmem:[#allocation4 + $0x170] sm:$0xff]
  %v3591 = vld [vmem:[#allocation4 + $0x178] sm:$0xff]
  %v3592 = vld [vmem:[#allocation4 + $0x180] sm:$0xff]
  %v3593 = vld [vmem:[#allocation4 + $0x188] sm:$0xff]
  %v3594 = vld [vmem:[#allocation4 + $0x190] sm:$0xff]
  %v3595 = vld [vmem:[#allocation4 + $0x198] sm:$0xff]
  %v3596 = vld [vmem:[#allocation4 + $0x1a0] sm:$0xff]
  %v3597 = vld [vmem:[#allocation4 + $0x1a8] sm:$0xff]
  %v3598 = vld [vmem:[#allocation4 + $0x1b0] sm:$0xff]
  %v3599 = vld [vmem:[#allocation4 + $0x1b8] sm:$0xff]
  %v3600 = vld [vmem:[#allocation4 + $0x1c0] sm:$0xff]
  %v3601 = vld [vmem:[#allocation4 + $0x1c8] sm:$0xff]
  %v3602 = vld [vmem:[#allocation4 + $0x1d0] sm:$0xff]
  %v3603 = vld [vmem:[#allocation4 + $0x1d8] sm:$0xff]
  %v3604 = vld [vmem:[#allocation4 + $0x1e0] sm:$0xff]
  %v3605 = vld [vmem:[#allocation4 + $0x1e8] sm:$0xff]
  %v3606 = vld [vmem:[#allocation4 + $0x1f0] sm:$0xff]
  %v3607 = vld [vmem:[#allocation4 + $0x1f8] sm:$0xff]
  %v3608 = vld [vmem:[%s1] sm:$0xff]
  %v3609 = vld [vmem:[%s1 + $0x8] sm:$0xff]
  %v3610 = vld [vmem:[%s1 + $0x10] sm:$0xff]
  %v3611 = vld [vmem:[%s1 + $0x18] sm:$0xff]
  %v3612 = vld [vmem:[%s1 + $0x20] sm:$0xff]
  %v3613 = vld [vmem:[%s1 + $0x28] sm:$0xff]
  %v3614 = vld [vmem:[%s1 + $0x30] sm:$0xff]
  %v3615 = vld [vmem:[%s1 + $0x38] sm:$0xff]
  %v3616 = vld [vmem:[%s1 + $0x40] sm:$0xff]
  %v3617 = vld [vmem:[%s1 + $0x48] sm:$0xff]
  %v3618 = vld [vmem:[%s1 + $0x50] sm:$0xff]
  %v3619 = vld [vmem:[%s1 + $0x58] sm:$0xff]
  %v3620 = vld [vmem:[%s1 + $0x60] sm:$0xff]
  %v3621 = vld [vmem:[%s1 + $0x68] sm:$0xff]
  %v3622 = vld [vmem:[%s1 + $0x70] sm:$0xff]
  %v3623 = vld [vmem:[%s1 + $0x78] sm:$0xff]
  %3624 = vmatprep.subr.mxu0 0.0
  %3625 = vmatpush1.msra.mxu0 %v3623
  %3626 = vmatprep.subr.mxu0 0.0
  %3627 = vmatpush1.msra.mxu0 %v3622
  %3628 = vmatprep.subr.mxu0 0.0
  %3629 = vmatpush1.msra.mxu0 %v3621
  %3630 = vmatprep.subr.mxu0 0.0
  %3631 = vmatpush1.msra.mxu0 %v3620
  %3632 = vmatprep.subr.mxu0 0.0
  %3633 = vmatpush1.msra.mxu0 %v3619
  %3634 = vmatprep.subr.mxu0 0.0
  %3635 = vmatpush1.msra.mxu0 %v3618
  %3636 = vmatprep.subr.mxu0 0.0
  %3637 = vmatpush1.msra.mxu0 %v3617
  %3638 = vmatprep.subr.mxu0 0.0
  %3639 = vmatpush1.msra.mxu0 %v3616
  %3640 = vmatprep.subr.mxu0 0.0
  %3641 = vmatpush1.msra.mxu0 %v3615
  %3642 = vmatprep.subr.mxu0 0.0
  %3643 = vmatpush1.msra.mxu0 %v3614
  %3644 = vmatprep.subr.mxu0 0.0
  %3645 = vmatpush1.msra.mxu0 %v3613
  %3646 = vmatprep.subr.mxu0 0.0
  %3647 = vmatpush1.msra.mxu0 %v3612
  %3648 = vmatprep.subr.mxu0 0.0
  %3649 = vmatpush1.msra.mxu0 %v3611
  %3650 = vmatprep.subr.mxu0 0.0
  %3651 = vmatpush1.msra.mxu0 %v3610
  %3652 = vmatprep.subr.mxu0 0.0
  %3653 = vmatpush1.msra.mxu0 %v3609
  %3654 = vmatprep.subr.mxu0 0.0
  %3655 = vmatpush1.msra.mxu0 %v3608
  %3656 = vmatprep.subr.mxu0 0.0
  %3657 = vmatpush2.msra.mxu0 0.0
  %3658 = vmatprep.subr.mxu0 0.0
  %3659 = vmatpush2.msra.mxu0 0.0
  %3660 = vmatprep.subr.mxu0 0.0
  %3661 = vmatpush2.msra.mxu0 0.0
  %3662 = vmatprep.subr.mxu0 0.0
  %3663 = vmatpush2.msra.mxu0 0.0
  %3664 = vmatprep.subr.mxu0 0.0
  %3665 = vmatpush2.msra.mxu0 0.0
  %3666 = vmatprep.subr.mxu0 0.0
  %3667 = vmatpush2.msra.mxu0 0.0
  %3668 = vmatprep.subr.mxu0 0.0
  %3669 = vmatpush2.msra.mxu0 0.0
  %3670 = vmatprep.subr.mxu0 0.0
  %3671 = vmatpush2.msra.mxu0 0.0
  %3672 = vmatprep.subr.mxu0 0.0
  %3673 = vmatpush2.msra.mxu0 0.0
  %3674 = vmatprep.subr.mxu0 0.0
  %3675 = vmatpush2.msra.mxu0 0.0
  %3676 = vmatprep.subr.mxu0 0.0
  %3677 = vmatpush2.msra.mxu0 0.0
  %3678 = vmatprep.subr.mxu0 0.0
  %3679 = vmatpush2.msra.mxu0 0.0
  %3680 = vmatprep.subr.mxu0 0.0
  %3681 = vmatpush2.msra.mxu0 0.0
  %3682 = vmatprep.subr.mxu0 0.0
  %3683 = vmatpush2.msra.mxu0 0.0
  %3684 = vmatprep.subr.mxu0 0.0
  %3685 = vmatpush2.msra.mxu0 0.0
  %3686 = vmatprep.subr.mxu0 0.0
  %3687 = vmatpush2.msra.mxu0 0.0
  %3688 = vmatprep.mubr.f32.mxu0 0.0
  %3689 = vmatmul.mubr.f32.gmra.mxu0 %v3544
  %v3690 = vpop.f32.mrf.mxu0
  %v3691 = vadd.f32 0.0, %v3690
  %v3692 = vpop.f32.mrf.mxu0
  %3693 = vmatprep.mubr.f32.mxu0 0.0
  %3694 = vmatmul.mubr.f32.gmra.mxu0 %v3545
  %v3695 = vpop.f32.mrf.mxu0
  %v3696 = vadd.f32 0.0, %v3695
  %v3697 = vpop.f32.mrf.mxu0
  %3698 = vmatprep.mubr.f32.mxu0 0.0
  %3699 = vmatmul.mubr.f32.gmra.mxu0 %v3546
  %v3700 = vpop.f32.mrf.mxu0
  %v3701 = vadd.f32 0.0, %v3700
  %v3702 = vpop.f32.mrf.mxu0
  %3703 = vmatprep.mubr.f32.mxu0 0.0
  %3704 = vmatmul.mubr.f32.gmra.mxu0 %v3547
  %v3705 = vpop.f32.mrf.mxu0
  %v3706 = vadd.f32 0.0, %v3705
  %v3707 = vpop.f32.mrf.mxu0
  %3708 = vmatprep.mubr.f32.mxu0 0.0
  %3709 = vmatmul.mubr.f32.gmra.mxu0 %v3548
  %v3710 = vpop.f32.mrf.mxu0
  %v3711 = vadd.f32 0.0, %v3710
  %v3712 = vpop.f32.mrf.mxu0
  %3713 = vmatprep.mubr.f32.mxu0 0.0
  %3714 = vmatmul.mubr.f32.gmra.mxu0 %v3549
  %v3715 = vpop.f32.mrf.mxu0
  %v3716 = vadd.f32 0.0, %v3715
  %v3717 = vpop.f32.mrf.mxu0
  %3718 = vmatprep.mubr.f32.mxu0 0.0
  %3719 = vmatmul.mubr.f32.gmra.mxu0 %v3550
  %v3720 = vpop.f32.mrf.mxu0
  %v3721 = vadd.f32 0.0, %v3720
  %v3722 = vpop.f32.mrf.mxu0
  %3723 = vmatprep.mubr.f32.mxu0 0.0
  %3724 = vmatmul.mubr.f32.gmra.mxu0 %v3551
  %v3725 = vpop.f32.mrf.mxu0
  %v3726 = vadd.f32 0.0, %v3725
  %v3727 = vpop.f32.mrf.mxu0
  %3728 = vmatprep.mubr.f32.mxu0 0.0
  %3729 = vmatmul.mubr.f32.gmra.mxu0 %v3552
  %v3730 = vpop.f32.mrf.mxu0
  %v3731 = vadd.f32 0.0, %v3730
  %v3732 = vpop.f32.mrf.mxu0
  %3733 = vmatprep.mubr.f32.mxu0 0.0
  %3734 = vmatmul.mubr.f32.gmra.mxu0 %v3553
  %v3735 = vpop.f32.mrf.mxu0
  %v3736 = vadd.f32 0.0, %v3735
  %v3737 = vpop.f32.mrf.mxu0
  %3738 = vmatprep.mubr.f32.mxu0 0.0
  %3739 = vmatmul.mubr.f32.gmra.mxu0 %v3554
  %v3740 = vpop.f32.mrf.mxu0
  %v3741 = vadd.f32 0.0, %v3740
  %v3742 = vpop.f32.mrf.mxu0
  %3743 = vmatprep.mubr.f32.mxu0 0.0
  %3744 = vmatmul.mubr.f32.gmra.mxu0 %v3555
  %v3745 = vpop.f32.mrf.mxu0
  %v3746 = vadd.f32 0.0, %v3745
  %v3747 = vpop.f32.mrf.mxu0
  %3748 = vmatprep.mubr.f32.mxu0 0.0
  %3749 = vmatmul.mubr.f32.gmra.mxu0 %v3556
  %v3750 = vpop.f32.mrf.mxu0
  %v3751 = vadd.f32 0.0, %v3750
  %v3752 = vpop.f32.mrf.mxu0
  %3753 = vmatprep.mubr.f32.mxu0 0.0
  %3754 = vmatmul.mubr.f32.gmra.mxu0 %v3557
  %v3755 = vpop.f32.mrf.mxu0
  %v3756 = vadd.f32 0.0, %v3755
  %v3757 = vpop.f32.mrf.mxu0
  %3758 = vmatprep.mubr.f32.mxu0 0.0
  %3759 = vmatmul.mubr.f32.gmra.mxu0 %v3558
  %v3760 = vpop.f32.mrf.mxu0
  %v3761 = vadd.f32 0.0, %v3760
  %v3762 = vpop.f32.mrf.mxu0
  %3763 = vmatprep.mubr.f32.mxu0 0.0
  %3764 = vmatmul.mubr.f32.gmra.mxu0 %v3559
  %v3765 = vpop.f32.mrf.mxu0
  %v3766 = vadd.f32 0.0, %v3765
  %v3767 = vpop.f32.mrf.mxu0
  %3768 = vmatprep.mubr.f32.mxu0 0.0
  %3769 = vmatmul.mubr.f32.gmra.mxu0 %v3560
  %v3770 = vpop.f32.mrf.mxu0
  %v3771 = vadd.f32 0.0, %v3770
  %v3772 = vpop.f32.mrf.mxu0
  %3773 = vmatprep.mubr.f32.mxu0 0.0
  %3774 = vmatmul.mubr.f32.gmra.mxu0 %v3561
  %v3775 = vpop.f32.mrf.mxu0
  %v3776 = vadd.f32 0.0, %v3775
  %v3777 = vpop.f32.mrf.mxu0
  %3778 = vmatprep.mubr.f32.mxu0 0.0
  %3779 = vmatmul.mubr.f32.gmra.mxu0 %v3562
  %v3780 = vpop.f32.mrf.mxu0
  %v3781 = vadd.f32 0.0, %v3780
  %v3782 = vpop.f32.mrf.mxu0
  %3783 = vmatprep.mubr.f32.mxu0 0.0
  %3784 = vmatmul.mubr.f32.gmra.mxu0 %v3563
  %v3785 = vpop.f32.mrf.mxu0
  %v3786 = vadd.f32 0.0, %v3785
  %v3787 = vpop.f32.mrf.mxu0
  %3788 = vmatprep.mubr.f32.mxu0 0.0
  %3789 = vmatmul.mubr.f32.gmra.mxu0 %v3564
  %v3790 = vpop.f32.mrf.mxu0
  %v3791 = vadd.f32 0.0, %v3790
  %v3792 = vpop.f32.mrf.mxu0
  %3793 = vmatprep.mubr.f32.mxu0 0.0
  %3794 = vmatmul.mubr.f32.gmra.mxu0 %v3565
  %v3795 = vpop.f32.mrf.mxu0
  %v3796 = vadd.f32 0.0, %v3795
  %v3797 = vpop.f32.mrf.mxu0
  %3798 = vmatprep.mubr.f32.mxu0 0.0
  %3799 = vmatmul.mubr.f32.gmra.mxu0 %v3566
  %v3800 = vpop.f32.mrf.mxu0
  %v3801 = vadd.f32 0.0, %v3800
  %v3802 = vpop.f32.mrf.mxu0
  %3803 = vmatprep.mubr.f32.mxu0 0.0
  %3804 = vmatmul.mubr.f32.gmra.mxu0 %v3567
  %v3805 = vpop.f32.mrf.mxu0
  %v3806 = vadd.f32 0.0, %v3805
  %v3807 = vpop.f32.mrf.mxu0
  %3808 = vmatprep.mubr.f32.mxu0 0.0
  %3809 = vmatmul.mubr.f32.gmra.mxu0 %v3568
  %v3810 = vpop.f32.mrf.mxu0
  %v3811 = vadd.f32 0.0, %v3810
  %v3812 = vpop.f32.mrf.mxu0
  %3813 = vmatprep.mubr.f32.mxu0 0.0
  %3814 = vmatmul.mubr.f32.gmra.mxu0 %v3569
  %v3815 = vpop.f32.mrf.mxu0
  %v3816 = vadd.f32 0.0, %v3815
  %v3817 = vpop.f32.mrf.mxu0
  %3818 = vmatprep.mubr.f32.mxu0 0.0
  %3819 = vmatmul.mubr.f32.gmra.mxu0 %v3570
  %v3820 = vpop.f32.mrf.mxu0
  %v3821 = vadd.f32 0.0, %v3820
  %v3822 = vpop.f32.mrf.mxu0
  %3823 = vmatprep.mubr.f32.mxu0 0.0
  %3824 = vmatmul.mubr.f32.gmra.mxu0 %v3571
  %v3825 = vpop.f32.mrf.mxu0
  %v3826 = vadd.f32 0.0, %v3825
  %v3827 = vpop.f32.mrf.mxu0
  %3828 = vmatprep.mubr.f32.mxu0 0.0
  %3829 = vmatmul.mubr.f32.gmra.mxu0 %v3572
  %v3830 = vpop.f32.mrf.mxu0
  %v3831 = vadd.f32 0.0, %v3830
  %v3832 = vpop.f32.mrf.mxu0
  %3833 = vmatprep.mubr.f32.mxu0 0.0
  %3834 = vmatmul.mubr.f32.gmra.mxu0 %v3573
  %v3835 = vpop.f32.mrf.mxu0
  %v3836 = vadd.f32 0.0, %v3835
  %v3837 = vpop.f32.mrf.mxu0
  %3838 = vmatprep.mubr.f32.mxu0 0.0
  %3839 = vmatmul.mubr.f32.gmra.mxu0 %v3574
  %v3840 = vpop.f32.mrf.mxu0
  %v3841 = vadd.f32 0.0, %v3840
  %v3842 = vpop.f32.mrf.mxu0
  %3843 = vmatprep.mubr.f32.mxu0 0.0
  %3844 = vmatmul.mubr.f32.gmra.mxu0 %v3575
  %v3845 = vpop.f32.mrf.mxu0
  %v3846 = vadd.f32 0.0, %v3845
  %v3847 = vpop.f32.mrf.mxu0
  %3848 = vmatprep.mubr.f32.mxu0 0.0
  %3849 = vmatmul.mubr.f32.gmra.mxu0 %v3576
  %v3850 = vpop.f32.mrf.mxu0
  %v3851 = vadd.f32 0.0, %v3850
  %v3852 = vpop.f32.mrf.mxu0
  %3853 = vmatprep.mubr.f32.mxu0 0.0
  %3854 = vmatmul.mubr.f32.gmra.mxu0 %v3577
  %v3855 = vpop.f32.mrf.mxu0
  %v3856 = vadd.f32 0.0, %v3855
  %v3857 = vpop.f32.mrf.mxu0
  %3858 = vmatprep.mubr.f32.mxu0 0.0
  %3859 = vmatmul.mubr.f32.gmra.mxu0 %v3578
  %v3860 = vpop.f32.mrf.mxu0
  %v3861 = vadd.f32 0.0, %v3860
  %v3862 = vpop.f32.mrf.mxu0
  %3863 = vmatprep.mubr.f32.mxu0 0.0
  %3864 = vmatmul.mubr.f32.gmra.mxu0 %v3579
  %v3865 = vpop.f32.mrf.mxu0
  %v3866 = vadd.f32 0.0, %v3865
  %v3867 = vpop.f32.mrf.mxu0
  %3868 = vmatprep.mubr.f32.mxu0 0.0
  %3869 = vmatmul.mubr.f32.gmra.mxu0 %v3580
  %v3870 = vpop.f32.mrf.mxu0
  %v3871 = vadd.f32 0.0, %v3870
  %v3872 = vpop.f32.mrf.mxu0
  %3873 = vmatprep.mubr.f32.mxu0 0.0
  %3874 = vmatmul.mubr.f32.gmra.mxu0 %v3581
  %v3875 = vpop.f32.mrf.mxu0
  %v3876 = vadd.f32 0.0, %v3875
  %v3877 = vpop.f32.mrf.mxu0
  %3878 = vmatprep.mubr.f32.mxu0 0.0
  %3879 = vmatmul.mubr.f32.gmra.mxu0 %v3582
  %v3880 = vpop.f32.mrf.mxu0
  %v3881 = vadd.f32 0.0, %v3880
  %v3882 = vpop.f32.mrf.mxu0
  %3883 = vmatprep.mubr.f32.mxu0 0.0
  %3884 = vmatmul.mubr.f32.gmra.mxu0 %v3583
  %v3885 = vpop.f32.mrf.mxu0
  %v3886 = vadd.f32 0.0, %v3885
  %v3887 = vpop.f32.mrf.mxu0
  %3888 = vmatprep.mubr.f32.mxu0 0.0
  %3889 = vmatmul.mubr.f32.gmra.mxu0 %v3584
  %v3890 = vpop.f32.mrf.mxu0
  %v3891 = vadd.f32 0.0, %v3890
  %v3892 = vpop.f32.mrf.mxu0
  %3893 = vmatprep.mubr.f32.mxu0 0.0
  %3894 = vmatmul.mubr.f32.gmra.mxu0 %v3585
  %v3895 = vpop.f32.mrf.mxu0
  %v3896 = vadd.f32 0.0, %v3895
  %v3897 = vpop.f32.mrf.mxu0
  %3898 = vmatprep.mubr.f32.mxu0 0.0
  %3899 = vmatmul.mubr.f32.gmra.mxu0 %v3586
  %v3900 = vpop.f32.mrf.mxu0
  %v3901 = vadd.f32 0.0, %v3900
  %v3902 = vpop.f32.mrf.mxu0
  %3903 = vmatprep.mubr.f32.mxu0 0.0
  %3904 = vmatmul.mubr.f32.gmra.mxu0 %v3587
  %v3905 = vpop.f32.mrf.mxu0
  %v3906 = vadd.f32 0.0, %v3905
  %v3907 = vpop.f32.mrf.mxu0
  %3908 = vmatprep.mubr.f32.mxu0 0.0
  %3909 = vmatmul.mubr.f32.gmra.mxu0 %v3588
  %v3910 = vpop.f32.mrf.mxu0
  %v3911 = vadd.f32 0.0, %v3910
  %v3912 = vpop.f32.mrf.mxu0
  %3913 = vmatprep.mubr.f32.mxu0 0.0
  %3914 = vmatmul.mubr.f32.gmra.mxu0 %v3589
  %v3915 = vpop.f32.mrf.mxu0
  %v3916 = vadd.f32 0.0, %v3915
  %v3917 = vpop.f32.mrf.mxu0
  %3918 = vmatprep.mubr.f32.mxu0 0.0
  %3919 = vmatmul.mubr.f32.gmra.mxu0 %v3590
  %v3920 = vpop.f32.mrf.mxu0
  %v3921 = vadd.f32 0.0, %v3920
  %v3922 = vpop.f32.mrf.mxu0
  %3923 = vmatprep.mubr.f32.mxu0 0.0
  %3924 = vmatmul.mubr.f32.gmra.mxu0 %v3591
  %v3925 = vpop.f32.mrf.mxu0
  %v3926 = vadd.f32 0.0, %v3925
  %v3927 = vpop.f32.mrf.mxu0
  %3928 = vmatprep.mubr.f32.mxu0 0.0
  %3929 = vmatmul.mubr.f32.gmra.mxu0 %v3592
  %v3930 = vpop.f32.mrf.mxu0
  %v3931 = vadd.f32 0.0, %v3930
  %v3932 = vpop.f32.mrf.mxu0
  %3933 = vmatprep.mubr.f32.mxu0 0.0
  %3934 = vmatmul.mubr.f32.gmra.mxu0 %v3593
  %v3935 = vpop.f32.mrf.mxu0
  %v3936 = vadd.f32 0.0, %v3935
  %v3937 = vpop.f32.mrf.mxu0
  %3938 = vmatprep.mubr.f32.mxu0 0.0
  %3939 = vmatmul.mubr.f32.gmra.mxu0 %v3594
  %v3940 = vpop.f32.mrf.mxu0
  %v3941 = vadd.f32 0.0, %v3940
  %v3942 = vpop.f32.mrf.mxu0
  %3943 = vmatprep.mubr.f32.mxu0 0.0
  %3944 = vmatmul.mubr.f32.gmra.mxu0 %v3595
  %v3945 = vpop.f32.mrf.mxu0
  %v3946 = vadd.f32 0.0, %v3945
  %v3947 = vpop.f32.mrf.mxu0
  %3948 = vmatprep.mubr.f32.mxu0 0.0
  %3949 = vmatmul.mubr.f32.gmra.mxu0 %v3596
  %v3950 = vpop.f32.mrf.mxu0
  %v3951 = vadd.f32 0.0, %v3950
  %v3952 = vpop.f32.mrf.mxu0
  %3953 = vmatprep.mubr.f32.mxu0 0.0
  %3954 = vmatmul.mubr.f32.gmra.mxu0 %v3597
  %v3955 = vpop.f32.mrf.mxu0
  %v3956 = vadd.f32 0.0, %v3955
  %v3957 = vpop.f32.mrf.mxu0
  %3958 = vmatprep.mubr.f32.mxu0 0.0
  %3959 = vmatmul.mubr.f32.gmra.mxu0 %v3598
  %v3960 = vpop.f32.mrf.mxu0
  %v3961 = vadd.f32 0.0, %v3960
  %v3962 = vpop.f32.mrf.mxu0
  %3963 = vmatprep.mubr.f32.mxu0 0.0
  %3964 = vmatmul.mubr.f32.gmra.mxu0 %v3599
  %v3965 = vpop.f32.mrf.mxu0
  %v3966 = vadd.f32 0.0, %v3965
  %v3967 = vpop.f32.mrf.mxu0
  %3968 = vmatprep.mubr.f32.mxu0 0.0
  %3969 = vmatmul.mubr.f32.gmra.mxu0 %v3600
  %v3970 = vpop.f32.mrf.mxu0
  %v3971 = vadd.f32 0.0, %v3970
  %v3972 = vpop.f32.mrf.mxu0
  %3973 = vmatprep.mubr.f32.mxu0 0.0
  %3974 = vmatmul.mubr.f32.gmra.mxu0 %v3601
  %v3975 = vpop.f32.mrf.mxu0
  %v3976 = vadd.f32 0.0, %v3975
  %v3977 = vpop.f32.mrf.mxu0
  %3978 = vmatprep.mubr.f32.mxu0 0.0
  %3979 = vmatmul.mubr.f32.gmra.mxu0 %v3602
  %v3980 = vpop.f32.mrf.mxu0
  %v3981 = vadd.f32 0.0, %v3980
  %v3982 = vpop.f32.mrf.mxu0
  %3983 = vmatprep.mubr.f32.mxu0 0.0
  %3984 = vmatmul.mubr.f32.gmra.mxu0 %v3603
  %v3985 = vpop.f32.mrf.mxu0
  %v3986 = vadd.f32 0.0, %v3985
  %v3987 = vpop.f32.mrf.mxu0
  %3988 = vmatprep.mubr.f32.mxu0 0.0
  %3989 = vmatmul.mubr.f32.gmra.mxu0 %v3604
  %v3990 = vpop.f32.mrf.mxu0
  %v3991 = vadd.f32 0.0, %v3990
  %v3992 = vpop.f32.mrf.mxu0
  %3993 = vmatprep.mubr.f32.mxu0 0.0
  %3994 = vmatmul.mubr.f32.gmra.mxu0 %v3605
  %v3995 = vpop.f32.mrf.mxu0
  %v3996 = vadd.f32 0.0, %v3995
  %v3997 = vpop.f32.mrf.mxu0
  %3998 = vmatprep.mubr.f32.mxu0 0.0
  %3999 = vmatmul.mubr.f32.gmra.mxu0 %v3606
  %v4000 = vpop.f32.mrf.mxu0
  %v4001 = vadd.f32 0.0, %v4000
  %v4002 = vpop.f32.mrf.mxu0
  %4003 = vmatprep.mubr.f32.mxu0 0.0
  %4004 = vmatmul.mubr.f32.gmra.mxu0 %v3607
  %v4005 = vpop.f32.mrf.mxu0
  %v4006 = vadd.f32 0.0, %v4005
  %v4007 = vpop.f32.mrf.mxu0
  %4008 = vdwg.mxu0
  %v4009 = vld [vmem:[%s2] sm:$0x1]
  %v4011 = vlaneseq
  %v4012 = vshrl.u32 %v4011, 7
  %v4013 = vsub.s32 0, %v4012
  %v4014 = vrot.slane %v4009, %v4013
  %v4016 = vadd.f32 %v3691, %v4014
  %v4017 = vadd.f32 %v3696, %v4014
  %v4018 = vadd.f32 %v3701, %v4014
  %v4019 = vadd.f32 %v3706, %v4014
  %v4020 = vadd.f32 %v3711, %v4014
  %v4021 = vadd.f32 %v3716, %v4014
  %v4022 = vadd.f32 %v3721, %v4014
  %v4023 = vadd.f32 %v3726, %v4014
  %v4024 = vadd.f32 %v3731, %v4014
  %v4025 = vadd.f32 %v3736, %v4014
  %v4026 = vadd.f32 %v3741, %v4014
  %v4027 = vadd.f32 %v3746, %v4014
  %v4028 = vadd.f32 %v3751, %v4014
  %v4029 = vadd.f32 %v3756, %v4014
  %v4030 = vadd.f32 %v3761, %v4014
  %v4031 = vadd.f32 %v3766, %v4014
  %v4032 = vadd.f32 %v3771, %v4014
  %v4033 = vadd.f32 %v3776, %v4014
  %v4034 = vadd.f32 %v3781, %v4014
  %v4035 = vadd.f32 %v3786, %v4014
  %v4036 = vadd.f32 %v3791, %v4014
  %v4037 = vadd.f32 %v3796, %v4014
  %v4038 = vadd.f32 %v3801, %v4014
  %v4039 = vadd.f32 %v3806, %v4014
  %v4040 = vadd.f32 %v3811, %v4014
  %v4041 = vadd.f32 %v3816, %v4014
  %v4042 = vadd.f32 %v3821, %v4014
  %v4043 = vadd.f32 %v3826, %v4014
  %v4044 = vadd.f32 %v3831, %v4014
  %v4045 = vadd.f32 %v3836, %v4014
  %v4046 = vadd.f32 %v3841, %v4014
  %v4047 = vadd.f32 %v3846, %v4014
  %v4048 = vadd.f32 %v3851, %v4014
  %v4049 = vadd.f32 %v3856, %v4014
  %v4050 = vadd.f32 %v3861, %v4014
  %v4051 = vadd.f32 %v3866, %v4014
  %v4052 = vadd.f32 %v3871, %v4014
  %v4053 = vadd.f32 %v3876, %v4014
  %v4054 = vadd.f32 %v3881, %v4014
  %v4055 = vadd.f32 %v3886, %v4014
  %v4056 = vadd.f32 %v3891, %v4014
  %v4057 = vadd.f32 %v3896, %v4014
  %v4058 = vadd.f32 %v3901, %v4014
  %v4059 = vadd.f32 %v3906, %v4014
  %v4060 = vadd.f32 %v3911, %v4014
  %v4061 = vadd.f32 %v3916, %v4014
  %v4062 = vadd.f32 %v3921, %v4014
  %v4063 = vadd.f32 %v3926, %v4014
  %v4064 = vadd.f32 %v3931, %v4014
  %v4065 = vadd.f32 %v3936, %v4014
  %v4066 = vadd.f32 %v3941, %v4014
  %v4067 = vadd.f32 %v3946, %v4014
  %v4068 = vadd.f32 %v3951, %v4014
  %v4069 = vadd.f32 %v3956, %v4014
  %v4070 = vadd.f32 %v3961, %v4014
  %v4071 = vadd.f32 %v3966, %v4014
  %v4072 = vadd.f32 %v3971, %v4014
  %v4073 = vadd.f32 %v3976, %v4014
  %v4074 = vadd.f32 %v3981, %v4014
  %v4075 = vadd.f32 %v3986, %v4014
  %v4076 = vadd.f32 %v3991, %v4014
  %v4077 = vadd.f32 %v3996, %v4014
  %v4078 = vadd.f32 %v4001, %v4014
  %v4079 = vadd.f32 %v4006, %v4014
  %vm4080 = vcmask 64512
  %v4081 = vsel %vm4080, %v4016, 0.0
  %v4082 = vsel %vm4080, %v4017, 0.0
  %v4083 = vadd.f32 %v4081, %v4082
  %v4084 = vsel %vm4080, %v4018, 0.0
  %v4085 = vadd.f32 %v4083, %v4084
  %v4086 = vsel %vm4080, %v4019, 0.0
  %v4087 = vadd.f32 %v4085, %v4086
  %v4088 = vsel %vm4080, %v4020, 0.0
  %v4089 = vadd.f32 %v4087, %v4088
  %v4090 = vsel %vm4080, %v4021, 0.0
  %v4091 = vadd.f32 %v4089, %v4090
  %v4092 = vsel %vm4080, %v4022, 0.0
  %v4093 = vadd.f32 %v4091, %v4092
  %v4094 = vsel %vm4080, %v4023, 0.0
  %v4095 = vadd.f32 %v4093, %v4094
  %v4096 = vsel %vm4080, %v4024, 0.0
  %v4097 = vadd.f32 %v4095, %v4096
  %v4098 = vsel %vm4080, %v4025, 0.0
  %v4099 = vadd.f32 %v4097, %v4098
  %v4100 = vsel %vm4080, %v4026, 0.0
  %v4101 = vadd.f32 %v4099, %v4100
  %v4102 = vsel %vm4080, %v4027, 0.0
  %v4103 = vadd.f32 %v4101, %v4102
  %v4104 = vsel %vm4080, %v4028, 0.0
  %v4105 = vadd.f32 %v4103, %v4104
  %v4106 = vsel %vm4080, %v4029, 0.0
  %v4107 = vadd.f32 %v4105, %v4106
  %v4108 = vsel %vm4080, %v4030, 0.0
  %v4109 = vadd.f32 %v4107, %v4108
  %v4110 = vsel %vm4080, %v4031, 0.0
  %v4111 = vadd.f32 %v4109, %v4110
  %v4112 = vsel %vm4080, %v4032, 0.0
  %v4113 = vadd.f32 %v4111, %v4112
  %v4114 = vsel %vm4080, %v4033, 0.0
  %v4115 = vadd.f32 %v4113, %v4114
  %v4116 = vsel %vm4080, %v4034, 0.0
  %v4117 = vadd.f32 %v4115, %v4116
  %v4118 = vsel %vm4080, %v4035, 0.0
  %v4119 = vadd.f32 %v4117, %v4118
  %v4120 = vsel %vm4080, %v4036, 0.0
  %v4121 = vadd.f32 %v4119, %v4120
  %v4122 = vsel %vm4080, %v4037, 0.0
  %v4123 = vadd.f32 %v4121, %v4122
  %v4124 = vsel %vm4080, %v4038, 0.0
  %v4125 = vadd.f32 %v4123, %v4124
  %v4126 = vsel %vm4080, %v4039, 0.0
  %v4127 = vadd.f32 %v4125, %v4126
  %v4128 = vsel %vm4080, %v4040, 0.0
  %v4129 = vadd.f32 %v4127, %v4128
  %v4130 = vsel %vm4080, %v4041, 0.0
  %v4131 = vadd.f32 %v4129, %v4130
  %v4132 = vsel %vm4080, %v4042, 0.0
  %v4133 = vadd.f32 %v4131, %v4132
  %v4134 = vsel %vm4080, %v4043, 0.0
  %v4135 = vadd.f32 %v4133, %v4134
  %v4136 = vsel %vm4080, %v4044, 0.0
  %v4137 = vadd.f32 %v4135, %v4136
  %v4138 = vsel %vm4080, %v4045, 0.0
  %v4139 = vadd.f32 %v4137, %v4138
  %v4140 = vsel %vm4080, %v4046, 0.0
  %v4141 = vadd.f32 %v4139, %v4140
  %v4142 = vsel %vm4080, %v4047, 0.0
  %v4143 = vadd.f32 %v4141, %v4142
  %v4144 = vsel %vm4080, %v4048, 0.0
  %v4145 = vadd.f32 %v4143, %v4144
  %v4146 = vsel %vm4080, %v4049, 0.0
  %v4147 = vadd.f32 %v4145, %v4146
  %v4148 = vsel %vm4080, %v4050, 0.0
  %v4149 = vadd.f32 %v4147, %v4148
  %v4150 = vsel %vm4080, %v4051, 0.0
  %v4151 = vadd.f32 %v4149, %v4150
  %v4152 = vsel %vm4080, %v4052, 0.0
  %v4153 = vadd.f32 %v4151, %v4152
  %v4154 = vsel %vm4080, %v4053, 0.0
  %v4155 = vadd.f32 %v4153, %v4154
  %v4156 = vsel %vm4080, %v4054, 0.0
  %v4157 = vadd.f32 %v4155, %v4156
  %v4158 = vsel %vm4080, %v4055, 0.0
  %v4159 = vadd.f32 %v4157, %v4158
  %v4160 = vsel %vm4080, %v4056, 0.0
  %v4161 = vadd.f32 %v4159, %v4160
  %v4162 = vsel %vm4080, %v4057, 0.0
  %v4163 = vadd.f32 %v4161, %v4162
  %v4164 = vsel %vm4080, %v4058, 0.0
  %v4165 = vadd.f32 %v4163, %v4164
  %v4166 = vsel %vm4080, %v4059, 0.0
  %v4167 = vadd.f32 %v4165, %v4166
  %v4168 = vsel %vm4080, %v4060, 0.0
  %v4169 = vadd.f32 %v4167, %v4168
  %v4170 = vsel %vm4080, %v4061, 0.0
  %v4171 = vadd.f32 %v4169, %v4170
  %v4172 = vsel %vm4080, %v4062, 0.0
  %v4173 = vadd.f32 %v4171, %v4172
  %v4174 = vsel %vm4080, %v4063, 0.0
  %v4175 = vadd.f32 %v4173, %v4174
  %v4176 = vsel %vm4080, %v4064, 0.0
  %v4177 = vadd.f32 %v4175, %v4176
  %v4178 = vsel %vm4080, %v4065, 0.0
  %v4179 = vadd.f32 %v4177, %v4178
  %v4180 = vsel %vm4080, %v4066, 0.0
  %v4181 = vadd.f32 %v4179, %v4180
  %v4182 = vsel %vm4080, %v4067, 0.0
  %v4183 = vadd.f32 %v4181, %v4182
  %v4184 = vsel %vm4080, %v4068, 0.0
  %v4185 = vadd.f32 %v4183, %v4184
  %v4186 = vsel %vm4080, %v4069, 0.0
  %v4187 = vadd.f32 %v4185, %v4186
  %v4188 = vsel %vm4080, %v4070, 0.0
  %v4189 = vadd.f32 %v4187, %v4188
  %v4190 = vsel %vm4080, %v4071, 0.0
  %v4191 = vadd.f32 %v4189, %v4190
  %v4192 = vsel %vm4080, %v4072, 0.0
  %v4193 = vadd.f32 %v4191, %v4192
  %v4194 = vsel %vm4080, %v4073, 0.0
  %v4195 = vadd.f32 %v4193, %v4194
  %v4196 = vsel %vm4080, %v4074, 0.0
  %v4197 = vadd.f32 %v4195, %v4196
  %v4198 = vsel %vm4080, %v4075, 0.0
  %v4199 = vadd.f32 %v4197, %v4198
  %v4200 = vsel %vm4080, %v4076, 0.0
  %v4201 = vadd.f32 %v4199, %v4200
  %v4202 = vsel %vm4080, %v4077, 0.0
  %v4203 = vadd.f32 %v4201, %v4202
  %v4204 = vsel %vm4080, %v4078, 0.0
  %v4205 = vadd.f32 %v4203, %v4204
  %v4206 = vsel %vm4080, %v4079, 0.0
  %v4207 = vadd.f32 %v4205, %v4206
  %v4208 = vrot.slane %v4207, 4
  %v4209 = vadd.f32 %v4207, %v4208
  %v4210 = vrot.slane %v4209, 2
  %v4211 = vadd.f32 %v4209, %v4210
  %v4212 = vrot.slane %v4211, 1
  %v4213 = vadd.f32 %v4211, %v4212
  %v4214 = vrcp.pop 512.0
  %v4215 = vmul.f32 %v4213, %v4214
  %v4216 = vsub.f32 %v4016, %v4215
  %v4217 = vsub.f32 %v4017, %v4215
  %v4218 = vsub.f32 %v4018, %v4215
  %v4219 = vsub.f32 %v4019, %v4215
  %v4220 = vsub.f32 %v4020, %v4215
  %v4221 = vsub.f32 %v4021, %v4215
  %v4222 = vsub.f32 %v4022, %v4215
  %v4223 = vsub.f32 %v4023, %v4215
  %v4224 = vsub.f32 %v4024, %v4215
  %v4225 = vsub.f32 %v4025, %v4215
  %v4226 = vsub.f32 %v4026, %v4215
  %v4227 = vsub.f32 %v4027, %v4215
  %v4228 = vsub.f32 %v4028, %v4215
  %v4229 = vsub.f32 %v4029, %v4215
  %v4230 = vsub.f32 %v4030, %v4215
  %v4231 = vsub.f32 %v4031, %v4215
  %v4232 = vsub.f32 %v4032, %v4215
  %v4233 = vsub.f32 %v4033, %v4215
  %v4234 = vsub.f32 %v4034, %v4215
  %v4235 = vsub.f32 %v4035, %v4215
  %v4236 = vsub.f32 %v4036, %v4215
  %v4237 = vsub.f32 %v4037, %v4215
  %v4238 = vsub.f32 %v4038, %v4215
  %v4239 = vsub.f32 %v4039, %v4215
  %v4240 = vsub.f32 %v4040, %v4215
  %v4241 = vsub.f32 %v4041, %v4215
  %v4242 = vsub.f32 %v4042, %v4215
  %v4243 = vsub.f32 %v4043, %v4215
  %v4244 = vsub.f32 %v4044, %v4215
  %v4245 = vsub.f32 %v4045, %v4215
  %v4246 = vsub.f32 %v4046, %v4215
  %v4247 = vsub.f32 %v4047, %v4215
  %v4248 = vsub.f32 %v4048, %v4215
  %v4249 = vsub.f32 %v4049, %v4215
  %v4250 = vsub.f32 %v4050, %v4215
  %v4251 = vsub.f32 %v4051, %v4215
  %v4252 = vsub.f32 %v4052, %v4215
  %v4253 = vsub.f32 %v4053, %v4215
  %v4254 = vsub.f32 %v4054, %v4215
  %v4255 = vsub.f32 %v4055, %v4215
  %v4256 = vsub.f32 %v4056, %v4215
  %v4257 = vsub.f32 %v4057, %v4215
  %v4258 = vsub.f32 %v4058, %v4215
  %v4259 = vsub.f32 %v4059, %v4215
  %v4260 = vsub.f32 %v4060, %v4215
  %v4261 = vsub.f32 %v4061, %v4215
  %v4262 = vsub.f32 %v4062, %v4215
  %v4263 = vsub.f32 %v4063, %v4215
  %v4264 = vsub.f32 %v4064, %v4215
  %v4265 = vsub.f32 %v4065, %v4215
  %v4266 = vsub.f32 %v4066, %v4215
  %v4267 = vsub.f32 %v4067, %v4215
  %v4268 = vsub.f32 %v4068, %v4215
  %v4269 = vsub.f32 %v4069, %v4215
  %v4270 = vsub.f32 %v4070, %v4215
  %v4271 = vsub.f32 %v4071, %v4215
  %v4272 = vsub.f32 %v4072, %v4215
  %v4273 = vsub.f32 %v4073, %v4215
  %v4274 = vsub.f32 %v4074, %v4215
  %v4275 = vsub.f32 %v4075, %v4215
  %v4276 = vsub.f32 %v4076, %v4215
  %v4277 = vsub.f32 %v4077, %v4215
  %v4278 = vsub.f32 %v4078, %v4215
  %v4279 = vsub.f32 %v4079, %v4215
  %v4280 = vmul.f32 %v4216, %v4216
  %v4281 = vmul.f32 %v4217, %v4217
  %v4282 = vmul.f32 %v4218, %v4218
  %v4283 = vmul.f32 %v4219, %v4219
  %v4284 = vmul.f32 %v4220, %v4220
  %v4285 = vmul.f32 %v4221, %v4221
  %v4286 = vmul.f32 %v4222, %v4222
  %v4287 = vmul.f32 %v4223, %v4223
  %v4288 = vmul.f32 %v4224, %v4224
  %v4289 = vmul.f32 %v4225, %v4225
  %v4290 = vmul.f32 %v4226, %v4226
  %v4291 = vmul.f32 %v4227, %v4227
  %v4292 = vmul.f32 %v4228, %v4228
  %v4293 = vmul.f32 %v4229, %v4229
  %v4294 = vmul.f32 %v4230, %v4230
  %v4295 = vmul.f32 %v4231, %v4231
  %v4296 = vmul.f32 %v4232, %v4232
  %v4297 = vmul.f32 %v4233, %v4233
  %v4298 = vmul.f32 %v4234, %v4234
  %v4299 = vmul.f32 %v4235, %v4235
  %v4300 = vmul.f32 %v4236, %v4236
  %v4301 = vmul.f32 %v4237, %v4237
  %v4302 = vmul.f32 %v4238, %v4238
  %v4303 = vmul.f32 %v4239, %v4239
  %v4304 = vmul.f32 %v4240, %v4240
  %v4305 = vmul.f32 %v4241, %v4241
  %v4306 = vmul.f32 %v4242, %v4242
  %v4307 = vmul.f32 %v4243, %v4243
  %v4308 = vmul.f32 %v4244, %v4244
  %v4309 = vmul.f32 %v4245, %v4245
  %v4310 = vmul.f32 %v4246, %v4246
  %v4311 = vmul.f32 %v4247, %v4247
  %v4312 = vmul.f32 %v4248, %v4248
  %v4313 = vmul.f32 %v4249, %v4249
  %v4314 = vmul.f32 %v4250, %v4250
  %v4315 = vmul.f32 %v4251, %v4251
  %v4316 = vmul.f32 %v4252, %v4252
  %v4317 = vmul.f32 %v4253, %v4253
  %v4318 = vmul.f32 %v4254, %v4254
  %v4319 = vmul.f32 %v4255, %v4255
  %v4320 = vmul.f32 %v4256, %v4256
  %v4321 = vmul.f32 %v4257, %v4257
  %v4322 = vmul.f32 %v4258, %v4258
  %v4323 = vmul.f32 %v4259, %v4259
  %v4324 = vmul.f32 %v4260, %v4260
  %v4325 = vmul.f32 %v4261, %v4261
  %v4326 = vmul.f32 %v4262, %v4262
  %v4327 = vmul.f32 %v4263, %v4263
  %v4328 = vmul.f32 %v4264, %v4264
  %v4329 = vmul.f32 %v4265, %v4265
  %v4330 = vmul.f32 %v4266, %v4266
  %v4331 = vmul.f32 %v4267, %v4267
  %v4332 = vmul.f32 %v4268, %v4268
  %v4333 = vmul.f32 %v4269, %v4269
  %v4334 = vmul.f32 %v4270, %v4270
  %v4335 = vmul.f32 %v4271, %v4271
  %v4336 = vmul.f32 %v4272, %v4272
  %v4337 = vmul.f32 %v4273, %v4273
  %v4338 = vmul.f32 %v4274, %v4274
  %v4339 = vmul.f32 %v4275, %v4275
  %v4340 = vmul.f32 %v4276, %v4276
  %v4341 = vmul.f32 %v4277, %v4277
  %v4342 = vmul.f32 %v4278, %v4278
  %v4343 = vmul.f32 %v4279, %v4279
  %v4344 = vsel %vm4080, %v4280, 0.0
  %v4345 = vsel %vm4080, %v4281, 0.0
  %v4346 = vadd.f32 %v4344, %v4345
  %v4347 = vsel %vm4080, %v4282, 0.0
  %v4348 = vadd.f32 %v4346, %v4347
  %v4349 = vsel %vm4080, %v4283, 0.0
  %v4350 = vadd.f32 %v4348, %v4349
  %v4351 = vsel %vm4080, %v4284, 0.0
  %v4352 = vadd.f32 %v4350, %v4351
  %v4353 = vsel %vm4080, %v4285, 0.0
  %v4354 = vadd.f32 %v4352, %v4353
  %v4355 = vsel %vm4080, %v4286, 0.0
  %v4356 = vadd.f32 %v4354, %v4355
  %v4357 = vsel %vm4080, %v4287, 0.0
  %v4358 = vadd.f32 %v4356, %v4357
  %v4359 = vsel %vm4080, %v4288, 0.0
  %v4360 = vadd.f32 %v4358, %v4359
  %v4361 = vsel %vm4080, %v4289, 0.0
  %v4362 = vadd.f32 %v4360, %v4361
  %v4363 = vsel %vm4080, %v4290, 0.0
  %v4364 = vadd.f32 %v4362, %v4363
  %v4365 = vsel %vm4080, %v4291, 0.0
  %v4366 = vadd.f32 %v4364, %v4365
  %v4367 = vsel %vm4080, %v4292, 0.0
  %v4368 = vadd.f32 %v4366, %v4367
  %v4369 = vsel %vm4080, %v4293, 0.0
  %v4370 = vadd.f32 %v4368, %v4369
  %v4371 = vsel %vm4080, %v4294, 0.0
  %v4372 = vadd.f32 %v4370, %v4371
  %v4373 = vsel %vm4080, %v4295, 0.0
  %v4374 = vadd.f32 %v4372, %v4373
  %v4375 = vsel %vm4080, %v4296, 0.0
  %v4376 = vadd.f32 %v4374, %v4375
  %v4377 = vsel %vm4080, %v4297, 0.0
  %v4378 = vadd.f32 %v4376, %v4377
  %v4379 = vsel %vm4080, %v4298, 0.0
  %v4380 = vadd.f32 %v4378, %v4379
  %v4381 = vsel %vm4080, %v4299, 0.0
  %v4382 = vadd.f32 %v4380, %v4381
  %v4383 = vsel %vm4080, %v4300, 0.0
  %v4384 = vadd.f32 %v4382, %v4383
  %v4385 = vsel %vm4080, %v4301, 0.0
  %v4386 = vadd.f32 %v4384, %v4385
  %v4387 = vsel %vm4080, %v4302, 0.0
  %v4388 = vadd.f32 %v4386, %v4387
  %v4389 = vsel %vm4080, %v4303, 0.0
  %v4390 = vadd.f32 %v4388, %v4389
  %v4391 = vsel %vm4080, %v4304, 0.0
  %v4392 = vadd.f32 %v4390, %v4391
  %v4393 = vsel %vm4080, %v4305, 0.0
  %v4394 = vadd.f32 %v4392, %v4393
  %v4395 = vsel %vm4080, %v4306, 0.0
  %v4396 = vadd.f32 %v4394, %v4395
  %v4397 = vsel %vm4080, %v4307, 0.0
  %v4398 = vadd.f32 %v4396, %v4397
  %v4399 = vsel %vm4080, %v4308, 0.0
  %v4400 = vadd.f32 %v4398, %v4399
  %v4401 = vsel %vm4080, %v4309, 0.0
  %v4402 = vadd.f32 %v4400, %v4401
  %v4403 = vsel %vm4080, %v4310, 0.0
  %v4404 = vadd.f32 %v4402, %v4403
  %v4405 = vsel %vm4080, %v4311, 0.0
  %v4406 = vadd.f32 %v4404, %v4405
  %v4407 = vsel %vm4080, %v4312, 0.0
  %v4408 = vadd.f32 %v4406, %v4407
  %v4409 = vsel %vm4080, %v4313, 0.0
  %v4410 = vadd.f32 %v4408, %v4409
  %v4411 = vsel %vm4080, %v4314, 0.0
  %v4412 = vadd.f32 %v4410, %v4411
  %v4413 = vsel %vm4080, %v4315, 0.0
  %v4414 = vadd.f32 %v4412, %v4413
  %v4415 = vsel %vm4080, %v4316, 0.0
  %v4416 = vadd.f32 %v4414, %v4415
  %v4417 = vsel %vm4080, %v4317, 0.0
  %v4418 = vadd.f32 %v4416, %v4417
  %v4419 = vsel %vm4080, %v4318, 0.0
  %v4420 = vadd.f32 %v4418, %v4419
  %v4421 = vsel %vm4080, %v4319, 0.0
  %v4422 = vadd.f32 %v4420, %v4421
  %v4423 = vsel %vm4080, %v4320, 0.0
  %v4424 = vadd.f32 %v4422, %v4423
  %v4425 = vsel %vm4080, %v4321, 0.0
  %v4426 = vadd.f32 %v4424, %v4425
  %v4427 = vsel %vm4080, %v4322, 0.0
  %v4428 = vadd.f32 %v4426, %v4427
  %v4429 = vsel %vm4080, %v4323, 0.0
  %v4430 = vadd.f32 %v4428, %v4429
  %v4431 = vsel %vm4080, %v4324, 0.0
  %v4432 = vadd.f32 %v4430, %v4431
  %v4433 = vsel %vm4080, %v4325, 0.0
  %v4434 = vadd.f32 %v4432, %v4433
  %v4435 = vsel %vm4080, %v4326, 0.0
  %v4436 = vadd.f32 %v4434, %v4435
  %v4437 = vsel %vm4080, %v4327, 0.0
  %v4438 = vadd.f32 %v4436, %v4437
  %v4439 = vsel %vm4080, %v4328, 0.0
  %v4440 = vadd.f32 %v4438, %v4439
  %v4441 = vsel %vm4080, %v4329, 0.0
  %v4442 = vadd.f32 %v4440, %v4441
  %v4443 = vsel %vm4080, %v4330, 0.0
  %v4444 = vadd.f32 %v4442, %v4443
  %v4445 = vsel %vm4080, %v4331, 0.0
  %v4446 = vadd.f32 %v4444, %v4445
  %v4447 = vsel %vm4080, %v4332, 0.0
  %v4448 = vadd.f32 %v4446, %v4447
  %v4449 = vsel %vm4080, %v4333, 0.0
  %v4450 = vadd.f32 %v4448, %v4449
  %v4451 = vsel %vm4080, %v4334, 0.0
  %v4452 = vadd.f32 %v4450, %v4451
  %v4453 = vsel %vm4080, %v4335, 0.0
  %v4454 = vadd.f32 %v4452, %v4453
  %v4455 = vsel %vm4080, %v4336, 0.0
  %v4456 = vadd.f32 %v4454, %v4455
  %v4457 = vsel %vm4080, %v4337, 0.0
  %v4458 = vadd.f32 %v4456, %v4457
  %v4459 = vsel %vm4080, %v4338, 0.0
  %v4460 = vadd.f32 %v4458, %v4459
  %v4461 = vsel %vm4080, %v4339, 0.0
  %v4462 = vadd.f32 %v4460, %v4461
  %v4463 = vsel %vm4080, %v4340, 0.0
  %v4464 = vadd.f32 %v4462, %v4463
  %v4465 = vsel %vm4080, %v4341, 0.0
  %v4466 = vadd.f32 %v4464, %v4465
  %v4467 = vsel %vm4080, %v4342, 0.0
  %v4468 = vadd.f32 %v4466, %v4467
  %v4469 = vsel %vm4080, %v4343, 0.0
  %v4470 = vadd.f32 %v4468, %v4469
  %v4471 = vrot.slane %v4470, 4
  %v4472 = vadd.f32 %v4470, %v4471
  %v4473 = vrot.slane %v4472, 2
  %v4474 = vadd.f32 %v4472, %v4473
  %v4475 = vrot.slane %v4474, 1
  %v4476 = vadd.f32 %v4474, %v4475
  %v4477 = vmul.f32 %v4476, %v4214
  %v4478 = vadd.f32 %v4477, 1e-05
  %v4479 = vrsqrt.pop %v4478
  %v4480 = vmul.f32 %v4216, %v4479
  %v4481 = vmul.f32 %v4217, %v4479
  %v4482 = vmul.f32 %v4218, %v4479
  %v4483 = vmul.f32 %v4219, %v4479
  %v4484 = vmul.f32 %v4220, %v4479
  %v4485 = vmul.f32 %v4221, %v4479
  %v4486 = vmul.f32 %v4222, %v4479
  %v4487 = vmul.f32 %v4223, %v4479
  %v4488 = vmul.f32 %v4224, %v4479
  %v4489 = vmul.f32 %v4225, %v4479
  %v4490 = vmul.f32 %v4226, %v4479
  %v4491 = vmul.f32 %v4227, %v4479
  %v4492 = vmul.f32 %v4228, %v4479
  %v4493 = vmul.f32 %v4229, %v4479
  %v4494 = vmul.f32 %v4230, %v4479
  %v4495 = vmul.f32 %v4231, %v4479
  %v4496 = vmul.f32 %v4232, %v4479
  %v4497 = vmul.f32 %v4233, %v4479
  %v4498 = vmul.f32 %v4234, %v4479
  %v4499 = vmul.f32 %v4235, %v4479
  %v4500 = vmul.f32 %v4236, %v4479
  %v4501 = vmul.f32 %v4237, %v4479
  %v4502 = vmul.f32 %v4238, %v4479
  %v4503 = vmul.f32 %v4239, %v4479
  %v4504 = vmul.f32 %v4240, %v4479
  %v4505 = vmul.f32 %v4241, %v4479
  %v4506 = vmul.f32 %v4242, %v4479
  %v4507 = vmul.f32 %v4243, %v4479
  %v4508 = vmul.f32 %v4244, %v4479
  %v4509 = vmul.f32 %v4245, %v4479
  %v4510 = vmul.f32 %v4246, %v4479
  %v4511 = vmul.f32 %v4247, %v4479
  %v4512 = vmul.f32 %v4248, %v4479
  %v4513 = vmul.f32 %v4249, %v4479
  %v4514 = vmul.f32 %v4250, %v4479
  %v4515 = vmul.f32 %v4251, %v4479
  %v4516 = vmul.f32 %v4252, %v4479
  %v4517 = vmul.f32 %v4253, %v4479
  %v4518 = vmul.f32 %v4254, %v4479
  %v4519 = vmul.f32 %v4255, %v4479
  %v4520 = vmul.f32 %v4256, %v4479
  %v4521 = vmul.f32 %v4257, %v4479
  %v4522 = vmul.f32 %v4258, %v4479
  %v4523 = vmul.f32 %v4259, %v4479
  %v4524 = vmul.f32 %v4260, %v4479
  %v4525 = vmul.f32 %v4261, %v4479
  %v4526 = vmul.f32 %v4262, %v4479
  %v4527 = vmul.f32 %v4263, %v4479
  %v4528 = vmul.f32 %v4264, %v4479
  %v4529 = vmul.f32 %v4265, %v4479
  %v4530 = vmul.f32 %v4266, %v4479
  %v4531 = vmul.f32 %v4267, %v4479
  %v4532 = vmul.f32 %v4268, %v4479
  %v4533 = vmul.f32 %v4269, %v4479
  %v4534 = vmul.f32 %v4270, %v4479
  %v4535 = vmul.f32 %v4271, %v4479
  %v4536 = vmul.f32 %v4272, %v4479
  %v4537 = vmul.f32 %v4273, %v4479
  %v4538 = vmul.f32 %v4274, %v4479
  %v4539 = vmul.f32 %v4275, %v4479
  %v4540 = vmul.f32 %v4276, %v4479
  %v4541 = vmul.f32 %v4277, %v4479
  %v4542 = vmul.f32 %v4278, %v4479
  %v4543 = vmul.f32 %v4279, %v4479
  %v4544 = vld [vmem:[%s3] sm:$0x1]
  %v4546 = vlaneseq
  %v4547 = vshrl.u32 %v4546, 7
  %v4548 = vsub.s32 0, %v4547
  %v4549 = vrot.slane %v4544, %v4548
  %v4551 = vmul.f32 %v4480, %v4549
  %v4552 = vmul.f32 %v4481, %v4549
  %v4553 = vmul.f32 %v4482, %v4549
  %v4554 = vmul.f32 %v4483, %v4549
  %v4555 = vmul.f32 %v4484, %v4549
  %v4556 = vmul.f32 %v4485, %v4549
  %v4557 = vmul.f32 %v4486, %v4549
  %v4558 = vmul.f32 %v4487, %v4549
  %v4559 = vmul.f32 %v4488, %v4549
  %v4560 = vmul.f32 %v4489, %v4549
  %v4561 = vmul.f32 %v4490, %v4549
  %v4562 = vmul.f32 %v4491, %v4549
  %v4563 = vmul.f32 %v4492, %v4549
  %v4564 = vmul.f32 %v4493, %v4549
  %v4565 = vmul.f32 %v4494, %v4549
  %v4566 = vmul.f32 %v4495, %v4549
  %v4567 = vmul.f32 %v4496, %v4549
  %v4568 = vmul.f32 %v4497, %v4549
  %v4569 = vmul.f32 %v4498, %v4549
  %v4570 = vmul.f32 %v4499, %v4549
  %v4571 = vmul.f32 %v4500, %v4549
  %v4572 = vmul.f32 %v4501, %v4549
  %v4573 = vmul.f32 %v4502, %v4549
  %v4574 = vmul.f32 %v4503, %v4549
  %v4575 = vmul.f32 %v4504, %v4549
  %v4576 = vmul.f32 %v4505, %v4549
  %v4577 = vmul.f32 %v4506, %v4549
  %v4578 = vmul.f32 %v4507, %v4549
  %v4579 = vmul.f32 %v4508, %v4549
  %v4580 = vmul.f32 %v4509, %v4549
  %v4581 = vmul.f32 %v4510, %v4549
  %v4582 = vmul.f32 %v4511, %v4549
  %v4583 = vmul.f32 %v4512, %v4549
  %v4584 = vmul.f32 %v4513, %v4549
  %v4585 = vmul.f32 %v4514, %v4549
  %v4586 = vmul.f32 %v4515, %v4549
  %v4587 = vmul.f32 %v4516, %v4549
  %v4588 = vmul.f32 %v4517, %v4549
  %v4589 = vmul.f32 %v4518, %v4549
  %v4590 = vmul.f32 %v4519, %v4549
  %v4591 = vmul.f32 %v4520, %v4549
  %v4592 = vmul.f32 %v4521, %v4549
  %v4593 = vmul.f32 %v4522, %v4549
  %v4594 = vmul.f32 %v4523, %v4549
  %v4595 = vmul.f32 %v4524, %v4549
  %v4596 = vmul.f32 %v4525, %v4549
  %v4597 = vmul.f32 %v4526, %v4549
  %v4598 = vmul.f32 %v4527, %v4549
  %v4599 = vmul.f32 %v4528, %v4549
  %v4600 = vmul.f32 %v4529, %v4549
  %v4601 = vmul.f32 %v4530, %v4549
  %v4602 = vmul.f32 %v4531, %v4549
  %v4603 = vmul.f32 %v4532, %v4549
  %v4604 = vmul.f32 %v4533, %v4549
  %v4605 = vmul.f32 %v4534, %v4549
  %v4606 = vmul.f32 %v4535, %v4549
  %v4607 = vmul.f32 %v4536, %v4549
  %v4608 = vmul.f32 %v4537, %v4549
  %v4609 = vmul.f32 %v4538, %v4549
  %v4610 = vmul.f32 %v4539, %v4549
  %v4611 = vmul.f32 %v4540, %v4549
  %v4612 = vmul.f32 %v4541, %v4549
  %v4613 = vmul.f32 %v4542, %v4549
  %v4614 = vmul.f32 %v4543, %v4549
  %v4615 = vld [vmem:[%s4] sm:$0x1]
  %v4617 = vlaneseq
  %v4618 = vshrl.u32 %v4617, 7
  %v4619 = vsub.s32 0, %v4618
  %v4620 = vrot.slane %v4615, %v4619
  %v4622 = vadd.f32 %v4551, %v4620
  %v4623 = vadd.f32 %v4552, %v4620
  %v4624 = vadd.f32 %v4553, %v4620
  %v4625 = vadd.f32 %v4554, %v4620
  %v4626 = vadd.f32 %v4555, %v4620
  %v4627 = vadd.f32 %v4556, %v4620
  %v4628 = vadd.f32 %v4557, %v4620
  %v4629 = vadd.f32 %v4558, %v4620
  %v4630 = vadd.f32 %v4559, %v4620
  %v4631 = vadd.f32 %v4560, %v4620
  %v4632 = vadd.f32 %v4561, %v4620
  %v4633 = vadd.f32 %v4562, %v4620
  %v4634 = vadd.f32 %v4563, %v4620
  %v4635 = vadd.f32 %v4564, %v4620
  %v4636 = vadd.f32 %v4565, %v4620
  %v4637 = vadd.f32 %v4566, %v4620
  %v4638 = vadd.f32 %v4567, %v4620
  %v4639 = vadd.f32 %v4568, %v4620
  %v4640 = vadd.f32 %v4569, %v4620
  %v4641 = vadd.f32 %v4570, %v4620
  %v4642 = vadd.f32 %v4571, %v4620
  %v4643 = vadd.f32 %v4572, %v4620
  %v4644 = vadd.f32 %v4573, %v4620
  %v4645 = vadd.f32 %v4574, %v4620
  %v4646 = vadd.f32 %v4575, %v4620
  %v4647 = vadd.f32 %v4576, %v4620
  %v4648 = vadd.f32 %v4577, %v4620
  %v4649 = vadd.f32 %v4578, %v4620
  %v4650 = vadd.f32 %v4579, %v4620
  %v4651 = vadd.f32 %v4580, %v4620
  %v4652 = vadd.f32 %v4581, %v4620
  %v4653 = vadd.f32 %v4582, %v4620
  %v4654 = vadd.f32 %v4583, %v4620
  %v4655 = vadd.f32 %v4584, %v4620
  %v4656 = vadd.f32 %v4585, %v4620
  %v4657 = vadd.f32 %v4586, %v4620
  %v4658 = vadd.f32 %v4587, %v4620
  %v4659 = vadd.f32 %v4588, %v4620
  %v4660 = vadd.f32 %v4589, %v4620
  %v4661 = vadd.f32 %v4590, %v4620
  %v4662 = vadd.f32 %v4591, %v4620
  %v4663 = vadd.f32 %v4592, %v4620
  %v4664 = vadd.f32 %v4593, %v4620
  %v4665 = vadd.f32 %v4594, %v4620
  %v4666 = vadd.f32 %v4595, %v4620
  %v4667 = vadd.f32 %v4596, %v4620
  %v4668 = vadd.f32 %v4597, %v4620
  %v4669 = vadd.f32 %v4598, %v4620
  %v4670 = vadd.f32 %v4599, %v4620
  %v4671 = vadd.f32 %v4600, %v4620
  %v4672 = vadd.f32 %v4601, %v4620
  %v4673 = vadd.f32 %v4602, %v4620
  %v4674 = vadd.f32 %v4603, %v4620
  %v4675 = vadd.f32 %v4604, %v4620
  %v4676 = vadd.f32 %v4605, %v4620
  %v4677 = vadd.f32 %v4606, %v4620
  %v4678 = vadd.f32 %v4607, %v4620
  %v4679 = vadd.f32 %v4608, %v4620
  %v4680 = vadd.f32 %v4609, %v4620
  %v4681 = vadd.f32 %v4610, %v4620
  %v4682 = vadd.f32 %v4611, %v4620
  %v4683 = vadd.f32 %v4612, %v4620
  %v4684 = vadd.f32 %v4613, %v4620
  %v4685 = vadd.f32 %v4614, %v4620
  %v4686 = vmax.f32 %v4622, 0.0
  %v4687 = vmax.f32 %v4623, 0.0
  %v4688 = vmax.f32 %v4624, 0.0
  %v4689 = vmax.f32 %v4625, 0.0
  %v4690 = vmax.f32 %v4626, 0.0
  %v4691 = vmax.f32 %v4627, 0.0
  %v4692 = vmax.f32 %v4628, 0.0
  %v4693 = vmax.f32 %v4629, 0.0
  %v4694 = vmax.f32 %v4630, 0.0
  %v4695 = vmax.f32 %v4631, 0.0
  %v4696 = vmax.f32 %v4632, 0.0
  %v4697 = vmax.f32 %v4633, 0.0
  %v4698 = vmax.f32 %v4634, 0.0
  %v4699 = vmax.f32 %v4635, 0.0
  %v4700 = vmax.f32 %v4636, 0.0
  %v4701 = vmax.f32 %v4637, 0.0
  %v4702 = vmax.f32 %v4638, 0.0
  %v4703 = vmax.f32 %v4639, 0.0
  %v4704 = vmax.f32 %v4640, 0.0
  %v4705 = vmax.f32 %v4641, 0.0
  %v4706 = vmax.f32 %v4642, 0.0
  %v4707 = vmax.f32 %v4643, 0.0
  %v4708 = vmax.f32 %v4644, 0.0
  %v4709 = vmax.f32 %v4645, 0.0
  %v4710 = vmax.f32 %v4646, 0.0
  %v4711 = vmax.f32 %v4647, 0.0
  %v4712 = vmax.f32 %v4648, 0.0
  %v4713 = vmax.f32 %v4649, 0.0
  %v4714 = vmax.f32 %v4650, 0.0
  %v4715 = vmax.f32 %v4651, 0.0
  %v4716 = vmax.f32 %v4652, 0.0
  %v4717 = vmax.f32 %v4653, 0.0
  %v4718 = vmax.f32 %v4654, 0.0
  %v4719 = vmax.f32 %v4655, 0.0
  %v4720 = vmax.f32 %v4656, 0.0
  %v4721 = vmax.f32 %v4657, 0.0
  %v4722 = vmax.f32 %v4658, 0.0
  %v4723 = vmax.f32 %v4659, 0.0
  %v4724 = vmax.f32 %v4660, 0.0
  %v4725 = vmax.f32 %v4661, 0.0
  %v4726 = vmax.f32 %v4662, 0.0
  %v4727 = vmax.f32 %v4663, 0.0
  %v4728 = vmax.f32 %v4664, 0.0
  %v4729 = vmax.f32 %v4665, 0.0
  %v4730 = vmax.f32 %v4666, 0.0
  %v4731 = vmax.f32 %v4667, 0.0
  %v4732 = vmax.f32 %v4668, 0.0
  %v4733 = vmax.f32 %v4669, 0.0
  %v4734 = vmax.f32 %v4670, 0.0
  %v4735 = vmax.f32 %v4671, 0.0
  %v4736 = vmax.f32 %v4672, 0.0
  %v4737 = vmax.f32 %v4673, 0.0
  %v4738 = vmax.f32 %v4674, 0.0
  %v4739 = vmax.f32 %v4675, 0.0
  %v4740 = vmax.f32 %v4676, 0.0
  %v4741 = vmax.f32 %v4677, 0.0
  %v4742 = vmax.f32 %v4678, 0.0
  %v4743 = vmax.f32 %v4679, 0.0
  %v4744 = vmax.f32 %v4680, 0.0
  %v4745 = vmax.f32 %v4681, 0.0
  %v4746 = vmax.f32 %v4682, 0.0
  %v4747 = vmax.f32 %v4683, 0.0
  %v4748 = vmax.f32 %v4684, 0.0
  %v4749 = vmax.f32 %v4685, 0.0
  %4750 = vst.msk [vmem:[#allocation3] sm:$0xff] %vm4080, 0.0
  %4751 = vst.msk [vmem:[#allocation3 + $0x8] sm:$0xff] %vm4080, 0.0
  %vm4752 = vcmask 58368
  %4753 = vst.msk [vmem:[#allocation3 + $0x10] sm:$0x3] %vm4752, 0.0
  %4754 = vst.msk [vmem:[#allocation3 + $0x18] sm:$0xff] %vm4080, 0.0
  %4755 = vst.msk [vmem:[#allocation3 + $0x20] sm:$0xff] %vm4080, 0.0
  %4756 = vst.msk [vmem:[#allocation3 + $0x28] sm:$0x3] %vm4752, 0.0
  %4757 = vst.msk [vmem:[#allocation3 + $0x30] sm:$0xff] %vm4080, 0.0
  %4758 = vst.msk [vmem:[#allocation3 + $0x38] sm:$0xff] %vm4080, 0.0
  %4759 = vst.msk [vmem:[#allocation3 + $0x40] sm:$0x3] %vm4752, 0.0
  %4760 = vst.msk [vmem:[#allocation3 + $0x48] sm:$0xff] %vm4080, 0.0
  %4761 = vst.msk [vmem:[#allocation3 + $0x50] sm:$0xff] %vm4080, 0.0
  %4762 = vst.msk [vmem:[#allocation3 + $0x58] sm:$0x3] %vm4752, 0.0
  %4763 = vst.msk [vmem:[#allocation3 + $0x60] sm:$0xff] %vm4080, 0.0
  %4764 = vst.msk [vmem:[#allocation3 + $0x68] sm:$0xff] %vm4080, 0.0
  %4765 = vst.msk [vmem:[#allocation3 + $0x70] sm:$0x3] %vm4752, 0.0
  %4766 = vst.msk [vmem:[#allocation3 + $0x78] sm:$0xff] %vm4080, 0.0
  %4767 = vst.msk [vmem:[#allocation3 + $0x80] sm:$0xff] %vm4080, 0.0
  %4768 = vst.msk [vmem:[#allocation3 + $0x88] sm:$0x3] %vm4752, 0.0
  %4769 = vst.msk [vmem:[#allocation3 + $0x90] sm:$0xff] %vm4080, 0.0
  %4770 = vst.msk [vmem:[#allocation3 + $0x98] sm:$0xff] %vm4080, 0.0
  %4771 = vst.msk [vmem:[#allocation3 + $0xa0] sm:$0x3] %vm4752, 0.0
  %4772 = vst.msk [vmem:[#allocation3 + $0xa8] sm:$0xff] %vm4080, 0.0
  %4773 = vst.msk [vmem:[#allocation3 + $0xb0] sm:$0xff] %vm4080, 0.0
  %4774 = vst.msk [vmem:[#allocation3 + $0xb8] sm:$0x3] %vm4752, 0.0
  %4775 = vst.msk [vmem:[#allocation3 + $0xc0] sm:$0xff] %vm4080, 0.0
  %4776 = vst.msk [vmem:[#allocation3 + $0xc8] sm:$0xff] %vm4080, 0.0
  %4777 = vst.msk [vmem:[#allocation3 + $0xd0] sm:$0x3] %vm4752, 0.0
  %4778 = vst.msk [vmem:[#allocation3 + $0xd8] sm:$0xff] %vm4080, 0.0
  %4779 = vst.msk [vmem:[#allocation3 + $0xe0] sm:$0xff] %vm4080, 0.0
  %4780 = vst.msk [vmem:[#allocation3 + $0xe8] sm:$0x3] %vm4752, 0.0
  %4781 = vst.msk [vmem:[#allocation3 + $0xf0] sm:$0xff] %vm4080, 0.0
  %4782 = vst.msk [vmem:[#allocation3 + $0xf8] sm:$0xff] %vm4080, 0.0
  %4783 = vst.msk [vmem:[#allocation3 + $0x100] sm:$0x3] %vm4752, 0.0
  %4784 = vst.msk [vmem:[#allocation3 + $0x108] sm:$0xff] %vm4080, 0.0
  %4785 = vst.msk [vmem:[#allocation3 + $0x110] sm:$0xff] %vm4080, 0.0
  %4786 = vst.msk [vmem:[#allocation3 + $0x118] sm:$0x3] %vm4752, 0.0
  %4787 = vst.msk [vmem:[#allocation3 + $0x120] sm:$0xff] %vm4080, 0.0
  %4788 = vst.msk [vmem:[#allocation3 + $0x128] sm:$0xff] %vm4080, 0.0
  %4789 = vst.msk [vmem:[#allocation3 + $0x130] sm:$0x3] %vm4752, 0.0
  %4790 = vst.msk [vmem:[#allocation3 + $0x138] sm:$0xff] %vm4080, 0.0
  %4791 = vst.msk [vmem:[#allocation3 + $0x140] sm:$0xff] %vm4080, 0.0
  %4792 = vst.msk [vmem:[#allocation3 + $0x148] sm:$0x3] %vm4752, 0.0
  %4793 = vst.msk [vmem:[#allocation3 + $0x150] sm:$0xff] %vm4080, 0.0
  %4794 = vst.msk [vmem:[#allocation3 + $0x158] sm:$0xff] %vm4080, 0.0
  %4795 = vst.msk [vmem:[#allocation3 + $0x160] sm:$0x3] %vm4752, 0.0
  %4796 = vst.msk [vmem:[#allocation3 + $0x168] sm:$0xff] %vm4080, 0.0
  %4797 = vst.msk [vmem:[#allocation3 + $0x170] sm:$0xff] %vm4080, 0.0
  %4798 = vst.msk [vmem:[#allocation3 + $0x178] sm:$0x3] %vm4752, 0.0
  %4799 = vst.msk [vmem:[#allocation3 + $0x180] sm:$0xff] %vm4080, 0.0
  %4800 = vst.msk [vmem:[#allocation3 + $0x188] sm:$0xff] %vm4080, 0.0
  %4801 = vst.msk [vmem:[#allocation3 + $0x190] sm:$0x3] %vm4752, 0.0
  %4802 = vst.msk [vmem:[#allocation3 + $0x198] sm:$0xff] %vm4080, 0.0
  %4803 = vst.msk [vmem:[#allocation3 + $0x1a0] sm:$0xff] %vm4080, 0.0
  %4804 = vst.msk [vmem:[#allocation3 + $0x1a8] sm:$0x3] %vm4752, 0.0
  %4805 = vst.msk [vmem:[#allocation3 + $0x1b0] sm:$0xff] %vm4080, 0.0
  %4806 = vst.msk [vmem:[#allocation3 + $0x1b8] sm:$0xff] %vm4080, 0.0
  %4807 = vst.msk [vmem:[#allocation3 + $0x1c0] sm:$0x3] %vm4752, 0.0
  %4808 = vst.msk [vmem:[#allocation3 + $0x1c8] sm:$0xff] %vm4080, 0.0
  %4809 = vst.msk [vmem:[#allocation3 + $0x1d0] sm:$0xff] %vm4080, 0.0
  %4810 = vst.msk [vmem:[#allocation3 + $0x1d8] sm:$0x3] %vm4752, 0.0
  %4811 = vst.msk [vmem:[#allocation3 + $0x1e0] sm:$0xff] %vm4080, 0.0
  %4812 = vst.msk [vmem:[#allocation3 + $0x1e8] sm:$0xff] %vm4080, 0.0
  %4813 = vst.msk [vmem:[#allocation3 + $0x1f0] sm:$0x3] %vm4752, 0.0
  %4814 = vst.msk [vmem:[#allocation3 + $0x1f8] sm:$0xff] %vm4080, 0.0
  %4815 = vst.msk [vmem:[#allocation3 + $0x200] sm:$0xff] %vm4080, 0.0
  %4816 = vst.msk [vmem:[#allocation3 + $0x208] sm:$0x3] %vm4752, 0.0
  %4817 = vst.msk [vmem:[#allocation3 + $0x210] sm:$0xff] %vm4080, 0.0
  %4818 = vst.msk [vmem:[#allocation3 + $0x218] sm:$0xff] %vm4080, 0.0
  %4819 = vst.msk [vmem:[#allocation3 + $0x220] sm:$0x3] %vm4752, 0.0
  %4820 = vst.msk [vmem:[#allocation3 + $0x228] sm:$0xff] %vm4080, 0.0
  %4821 = vst.msk [vmem:[#allocation3 + $0x230] sm:$0xff] %vm4080, 0.0
  %4822 = vst.msk [vmem:[#allocation3 + $0x238] sm:$0x3] %vm4752, 0.0
  %4823 = vst.msk [vmem:[#allocation3 + $0x240] sm:$0xff] %vm4080, 0.0
  %4824 = vst.msk [vmem:[#allocation3 + $0x248] sm:$0xff] %vm4080, 0.0
  %4825 = vst.msk [vmem:[#allocation3 + $0x250] sm:$0x3] %vm4752, 0.0
  %4826 = vst.msk [vmem:[#allocation3 + $0x258] sm:$0xff] %vm4080, 0.0
  %4827 = vst.msk [vmem:[#allocation3 + $0x260] sm:$0xff] %vm4080, 0.0
  %4828 = vst.msk [vmem:[#allocation3 + $0x268] sm:$0x3] %vm4752, 0.0
  %4829 = vst.msk [vmem:[#allocation3 + $0x270] sm:$0xff] %vm4080, 0.0
  %4830 = vst.msk [vmem:[#allocation3 + $0x278] sm:$0xff] %vm4080, 0.0
  %4831 = vst.msk [vmem:[#allocation3 + $0x280] sm:$0x3] %vm4752, 0.0
  %4832 = vst.msk [vmem:[#allocation3 + $0x288] sm:$0xff] %vm4080, 0.0
  %4833 = vst.msk [vmem:[#allocation3 + $0x290] sm:$0xff] %vm4080, 0.0
  %4834 = vst.msk [vmem:[#allocation3 + $0x298] sm:$0x3] %vm4752, 0.0
  %4835 = vst.msk [vmem:[#allocation3 + $0x2a0] sm:$0xff] %vm4080, 0.0
  %4836 = vst.msk [vmem:[#allocation3 + $0x2a8] sm:$0xff] %vm4080, 0.0
  %4837 = vst.msk [vmem:[#allocation3 + $0x2b0] sm:$0x3] %vm4752, 0.0
  %4838 = vst.msk [vmem:[#allocation3 + $0x2b8] sm:$0xff] %vm4080, 0.0
  %4839 = vst.msk [vmem:[#allocation3 + $0x2c0] sm:$0xff] %vm4080, 0.0
  %4840 = vst.msk [vmem:[#allocation3 + $0x2c8] sm:$0x3] %vm4752, 0.0
  %4841 = vst.msk [vmem:[#allocation3 + $0x2d0] sm:$0xff] %vm4080, 0.0
  %4842 = vst.msk [vmem:[#allocation3 + $0x2d8] sm:$0xff] %vm4080, 0.0
  %4843 = vst.msk [vmem:[#allocation3 + $0x2e0] sm:$0x3] %vm4752, 0.0
  %4844 = vst.msk [vmem:[#allocation3 + $0x2e8] sm:$0xff] %vm4080, 0.0
  %4845 = vst.msk [vmem:[#allocation3 + $0x2f0] sm:$0xff] %vm4080, 0.0
  %4846 = vst.msk [vmem:[#allocation3 + $0x2f8] sm:$0x3] %vm4752, 0.0
  %4847 = vst.msk [vmem:[#allocation3 + $0x300] sm:$0xff] %vm4080, 0.0
  %4848 = vst.msk [vmem:[#allocation3 + $0x308] sm:$0xff] %vm4080, 0.0
  %4849 = vst.msk [vmem:[#allocation3 + $0x310] sm:$0x3] %vm4752, 0.0
  %4850 = vst.msk [vmem:[#allocation3 + $0x318] sm:$0xff] %vm4080, 0.0
  %4851 = vst.msk [vmem:[#allocation3 + $0x320] sm:$0xff] %vm4080, 0.0
  %4852 = vst.msk [vmem:[#allocation3 + $0x328] sm:$0x3] %vm4752, 0.0
  %4853 = vst.msk [vmem:[#allocation3 + $0x330] sm:$0xff] %vm4080, 0.0
  %4854 = vst.msk [vmem:[#allocation3 + $0x338] sm:$0xff] %vm4080, 0.0
  %4855 = vst.msk [vmem:[#allocation3 + $0x340] sm:$0x3] %vm4752, 0.0
  %4856 = vst.msk [vmem:[#allocation3 + $0x348] sm:$0xff] %vm4080, 0.0
  %4857 = vst.msk [vmem:[#allocation3 + $0x350] sm:$0xff] %vm4080, 0.0
  %4858 = vst.msk [vmem:[#allocation3 + $0x358] sm:$0x3] %vm4752, 0.0
  %s4859 = scalar_lea.vmem [#allocation3], 24
  %4860 = vst.msk [vmem:[%s4859 + $0x1] sm:$0xff] %vm4080, %v4686
  %4861 = vst.msk [vmem:[%s4859 + $0x9] sm:$0xff] %vm4080, %v4687
  %4862 = vst.msk [vmem:[%s4859 + $0x19] sm:$0xff] %vm4080, %v4688
  %4863 = vst.msk [vmem:[%s4859 + $0x21] sm:$0xff] %vm4080, %v4689
  %4864 = vst.msk [vmem:[%s4859 + $0x31] sm:$0xff] %vm4080, %v4690
  %4865 = vst.msk [vmem:[%s4859 + $0x39] sm:$0xff] %vm4080, %v4691
  %4866 = vst.msk [vmem:[%s4859 + $0x49] sm:$0xff] %vm4080, %v4692
  %4867 = vst.msk [vmem:[%s4859 + $0x51] sm:$0xff] %vm4080, %v4693
  %4868 = vst.msk [vmem:[%s4859 + $0x61] sm:$0xff] %vm4080, %v4694
  %4869 = vst.msk [vmem:[%s4859 + $0x69] sm:$0xff] %vm4080, %v4695
  %4870 = vst.msk [vmem:[%s4859 + $0x79] sm:$0xff] %vm4080, %v4696
  %4871 = vst.msk [vmem:[%s4859 + $0x81] sm:$0xff] %vm4080, %v4697
  %4872 = vst.msk [vmem:[%s4859 + $0x91] sm:$0xff] %vm4080, %v4698
  %4873 = vst.msk [vmem:[%s4859 + $0x99] sm:$0xff] %vm4080, %v4699
  %4874 = vst.msk [vmem:[%s4859 + $0xa9] sm:$0xff] %vm4080, %v4700
  %4875 = vst.msk [vmem:[%s4859 + $0xb1] sm:$0xff] %vm4080, %v4701
  %4876 = vst.msk [vmem:[%s4859 + $0xc1] sm:$0xff] %vm4080, %v4702
  %4877 = vst.msk [vmem:[%s4859 + $0xc9] sm:$0xff] %vm4080, %v4703
  %4878 = vst.msk [vmem:[%s4859 + $0xd9] sm:$0xff] %vm4080, %v4704
  %4879 = vst.msk [vmem:[%s4859 + $0xe1] sm:$0xff] %vm4080, %v4705
  %4880 = vst.msk [vmem:[%s4859 + $0xf1] sm:$0xff] %vm4080, %v4706
  %4881 = vst.msk [vmem:[%s4859 + $0xf9] sm:$0xff] %vm4080, %v4707
  %4882 = vst.msk [vmem:[%s4859 + $0x109] sm:$0xff] %vm4080, %v4708
  %4883 = vst.msk [vmem:[%s4859 + $0x111] sm:$0xff] %vm4080, %v4709
  %4884 = vst.msk [vmem:[%s4859 + $0x121] sm:$0xff] %vm4080, %v4710
  %4885 = vst.msk [vmem:[%s4859 + $0x129] sm:$0xff] %vm4080, %v4711
  %4886 = vst.msk [vmem:[%s4859 + $0x139] sm:$0xff] %vm4080, %v4712
  %4887 = vst.msk [vmem:[%s4859 + $0x141] sm:$0xff] %vm4080, %v4713
  %4888 = vst.msk [vmem:[%s4859 + $0x151] sm:$0xff] %vm4080, %v4714
  %4889 = vst.msk [vmem:[%s4859 + $0x159] sm:$0xff] %vm4080, %v4715
  %4890 = vst.msk [vmem:[%s4859 + $0x169] sm:$0xff] %vm4080, %v4716
  %4891 = vst.msk [vmem:[%s4859 + $0x171] sm:$0xff] %vm4080, %v4717
  %4892 = vst.msk [vmem:[%s4859 + $0x1b1] sm:$0xff] %vm4080, %v4718
  %4893 = vst.msk [vmem:[%s4859 + $0x1b9] sm:$0xff] %vm4080, %v4719
  %4894 = vst.msk [vmem:[%s4859 + $0x1c9] sm:$0xff] %vm4080, %v4720
  %4895 = vst.msk [vmem:[%s4859 + $0x1d1] sm:$0xff] %vm4080, %v4721
  %4896 = vst.msk [vmem:[%s4859 + $0x1e1] sm:$0xff] %vm4080, %v4722
  %4897 = vst.msk [vmem:[%s4859 + $0x1e9] sm:$0xff] %vm4080, %v4723
  %4898 = vst.msk [vmem:[%s4859 + $0x1f9] sm:$0xff] %vm4080, %v4724
  %4899 = vst.msk [vmem:[%s4859 + $0x201] sm:$0xff] %vm4080, %v4725
  %4900 = vst.msk [vmem:[%s4859 + $0x211] sm:$0xff] %vm4080, %v4726
  %4901 = vst.msk [vmem:[%s4859 + $0x219] sm:$0xff] %vm4080, %v4727
  %4902 = vst.msk [vmem:[%s4859 + $0x229] sm:$0xff] %vm4080, %v4728
  %4903 = vst.msk [vmem:[%s4859 + $0x231] sm:$0xff] %vm4080, %v4729
  %4904 = vst.msk [vmem:[%s4859 + $0x241] sm:$0xff] %vm4080, %v4730
  %4905 = vst.msk [vmem:[%s4859 + $0x249] sm:$0xff] %vm4080, %v4731
  %4906 = vst.msk [vmem:[%s4859 + $0x259] sm:$0xff] %vm4080, %v4732
  %4907 = vst.msk [vmem:[%s4859 + $0x261] sm:$0xff] %vm4080, %v4733
  %4908 = vst.msk [vmem:[%s4859 + $0x271] sm:$0xff] %vm4080, %v4734
  %4909 = vst.msk [vmem:[%s4859 + $0x279] sm:$0xff] %vm4080, %v4735
  %4910 = vst.msk [vmem:[%s4859 + $0x289] sm:$0xff] %vm4080, %v4736
  %4911 = vst.msk [vmem:[%s4859 + $0x291] sm:$0xff] %vm4080, %v4737
  %4912 = vst.msk [vmem:[%s4859 + $0x2a1] sm:$0xff] %vm4080, %v4738
  %4913 = vst.msk [vmem:[%s4859 + $0x2a9] sm:$0xff] %vm4080, %v4739
  %4914 = vst.msk [vmem:[%s4859 + $0x2b9] sm:$0xff] %vm4080, %v4740
  %4915 = vst.msk [vmem:[%s4859 + $0x2c1] sm:$0xff] %vm4080, %v4741
  %4916 = vst.msk [vmem:[%s4859 + $0x2d1] sm:$0xff] %vm4080, %v4742
  %4917 = vst.msk [vmem:[%s4859 + $0x2d9] sm:$0xff] %vm4080, %v4743
  %4918 = vst.msk [vmem:[%s4859 + $0x2e9] sm:$0xff] %vm4080, %v4744
  %4919 = vst.msk [vmem:[%s4859 + $0x2f1] sm:$0xff] %vm4080, %v4745
  %4920 = vst.msk [vmem:[%s4859 + $0x301] sm:$0xff] %vm4080, %v4746
  %4921 = vst.msk [vmem:[%s4859 + $0x309] sm:$0xff] %vm4080, %v4747
  %4922 = vst.msk [vmem:[%s4859 + $0x319] sm:$0xff] %vm4080, %v4748
  %4923 = vst.msk [vmem:[%s4859 + $0x321] sm:$0xff] %vm4080, %v4749
  %v4924 = vld [vmem:[#allocation3] sm:$0xff]
  %v4925 = vld [vmem:[#allocation3 + $0x8] sm:$0xff]
  %v4926 = vld [vmem:[#allocation3 + $0x18] sm:$0xff]
  %v4927 = vld [vmem:[#allocation3 + $0x20] sm:$0xff]
  %v4928 = vld [vmem:[#allocation3 + $0x30] sm:$0xff]
  %v4929 = vld [vmem:[#allocation3 + $0x38] sm:$0xff]
  %v4930 = vld [vmem:[#allocation3 + $0x48] sm:$0xff]
  %v4931 = vld [vmem:[#allocation3 + $0x50] sm:$0xff]
  %v4932 = vld [vmem:[#allocation3 + $0x60] sm:$0xff]
  %v4933 = vld [vmem:[#allocation3 + $0x68] sm:$0xff]
  %v4934 = vld [vmem:[#allocation3 + $0x78] sm:$0xff]
  %v4935 = vld [vmem:[#allocation3 + $0x80] sm:$0xff]
  %v4936 = vld [vmem:[#allocation3 + $0x90] sm:$0xff]
  %v4937 = vld [vmem:[#allocation3 + $0x98] sm:$0xff]
  %v4938 = vld [vmem:[#allocation3 + $0xa8] sm:$0xff]
  %v4939 = vld [vmem:[#allocation3 + $0xb0] sm:$0xff]
  %v4940 = vld [vmem:[#allocation3 + $0xc0] sm:$0xff]
  %v4941 = vld [vmem:[#allocation3 + $0xc8] sm:$0xff]
  %v4942 = vld [vmem:[#allocation3 + $0xd8] sm:$0xff]
  %v4943 = vld [vmem:[#allocation3 + $0xe0] sm:$0xff]
  %v4944 = vld [vmem:[#allocation3 + $0xf0] sm:$0xff]
  %v4945 = vld [vmem:[#allocation3 + $0xf8] sm:$0xff]
  %v4946 = vld [vmem:[#allocation3 + $0x108] sm:$0xff]
  %v4947 = vld [vmem:[#allocation3 + $0x110] sm:$0xff]
  %v4948 = vld [vmem:[#allocation3 + $0x120] sm:$0xff]
  %v4949 = vld [vmem:[#allocation3 + $0x128] sm:$0xff]
  %v4950 = vld [vmem:[#allocation3 + $0x138] sm:$0xff]
  %v4951 = vld [vmem:[#allocation3 + $0x140] sm:$0xff]
  %v4952 = vld [vmem:[#allocation3 + $0x150] sm:$0xff]
  %v4953 = vld [vmem:[#allocation3 + $0x158] sm:$0xff]
  %v4954 = vld [vmem:[#allocation3 + $0x168] sm:$0xff]
  %v4955 = vld [vmem:[#allocation3 + $0x170] sm:$0xff]
  %v4956 = vld [vmem:[#allocation3 + $0x1b0] sm:$0xff]
  %v4957 = vld [vmem:[#allocation3 + $0x1b8] sm:$0xff]
  %v4958 = vld [vmem:[#allocation3 + $0x1c8] sm:$0xff]
  %v4959 = vld [vmem:[#allocation3 + $0x1d0] sm:$0xff]
  %v4960 = vld [vmem:[#allocation3 + $0x1e0] sm:$0xff]
  %v4961 = vld [vmem:[#allocation3 + $0x1e8] sm:$0xff]
  %v4962 = vld [vmem:[#allocation3 + $0x1f8] sm:$0xff]
  %v4963 = vld [vmem:[#allocation3 + $0x200] sm:$0xff]
  %v4964 = vld [vmem:[#allocation3 + $0x210] sm:$0xff]
  %v4965 = vld [vmem:[#allocation3 + $0x218] sm:$0xff]
  %v4966 = vld [vmem:[#allocation3 + $0x228] sm:$0xff]
  %v4967 = vld [vmem:[#allocation3 + $0x230] sm:$0xff]
  %v4968 = vld [vmem:[#allocation3 + $0x240] sm:$0xff]
  %v4969 = vld [vmem:[#allocation3 + $0x248] sm:$0xff]
  %v4970 = vld [vmem:[#allocation3 + $0x258] sm:$0xff]
  %v4971 = vld [vmem:[#allocation3 + $0x260] sm:$0xff]
  %v4972 = vld [vmem:[#allocation3 + $0x270] sm:$0xff]
  %v4973 = vld [vmem:[#allocation3 + $0x278] sm:$0xff]
  %v4974 = vld [vmem:[#allocation3 + $0x288] sm:$0xff]
  %v4975 = vld [vmem:[#allocation3 + $0x290] sm:$0xff]
  %v4976 = vld [vmem:[#allocation3 + $0x2a0] sm:$0xff]
  %v4977 = vld [vmem:[#allocation3 + $0x2a8] sm:$0xff]
  %v4978 = vld [vmem:[#allocation3 + $0x2b8] sm:$0xff]
  %v4979 = vld [vmem:[#allocation3 + $0x2c0] sm:$0xff]
  %v4980 = vld [vmem:[#allocation3 + $0x2d0] sm:$0xff]
  %v4981 = vld [vmem:[#allocation3 + $0x2d8] sm:$0xff]
  %v4982 = vld [vmem:[#allocation3 + $0x2e8] sm:$0xff]
  %v4983 = vld [vmem:[#allocation3 + $0x2f0] sm:$0xff]
  %v4984 = vld [vmem:[#allocation3 + $0x300] sm:$0xff]
  %v4985 = vld [vmem:[#allocation3 + $0x308] sm:$0xff]
  %v4986 = vld [vmem:[#allocation3 + $0x318] sm:$0xff]
  %v4987 = vld [vmem:[#allocation3 + $0x320] sm:$0xff]
  %4988 = vst.msk [vmem:[#allocation4] sm:$0xff] %vm4080, %v4924
  %4989 = vst.msk [vmem:[#allocation4 + $0x8] sm:$0xff] %vm4080, %v4925
  %4990 = vst.msk [vmem:[#allocation4 + $0x10] sm:$0xff] %vm4080, %v4926
  %4991 = vst.msk [vmem:[#allocation4 + $0x18] sm:$0xff] %vm4080, %v4927
  %4992 = vst.msk [vmem:[#allocation4 + $0x20] sm:$0xff] %vm4080, %v4928
  %4993 = vst.msk [vmem:[#allocation4 + $0x28] sm:$0xff] %vm4080, %v4929
  %4994 = vst.msk [vmem:[#allocation4 + $0x30] sm:$0xff] %vm4080, %v4930
  %4995 = vst.msk [vmem:[#allocation4 + $0x38] sm:$0xff] %vm4080, %v4931
  %4996 = vst.msk [vmem:[#allocation4 + $0x40] sm:$0xff] %vm4080, %v4932
  %4997 = vst.msk [vmem:[#allocation4 + $0x48] sm:$0xff] %vm4080, %v4933
  %4998 = vst.msk [vmem:[#allocation4 + $0x50] sm:$0xff] %vm4080, %v4934
  %4999 = vst.msk [vmem:[#allocation4 + $0x58] sm:$0xff] %vm4080, %v4935
  %5000 = vst.msk [vmem:[#allocation4 + $0x60] sm:$0xff] %vm4080, %v4936
  %5001 = vst.msk [vmem:[#allocation4 + $0x68] sm:$0xff] %vm4080, %v4937
  %5002 = vst.msk [vmem:[#allocation4 + $0x70] sm:$0xff] %vm4080, %v4938
  %5003 = vst.msk [vmem:[#allocation4 + $0x78] sm:$0xff] %vm4080, %v4939
  %5004 = vst.msk [vmem:[#allocation4 + $0x80] sm:$0xff] %vm4080, %v4940
  %5005 = vst.msk [vmem:[#allocation4 + $0x88] sm:$0xff] %vm4080, %v4941
  %5006 = vst.msk [vmem:[#allocation4 + $0x90] sm:$0xff] %vm4080, %v4942
  %5007 = vst.msk [vmem:[#allocation4 + $0x98] sm:$0xff] %vm4080, %v4943
  %5008 = vst.msk [vmem:[#allocation4 + $0xa0] sm:$0xff] %vm4080, %v4944
  %5009 = vst.msk [vmem:[#allocation4 + $0xa8] sm:$0xff] %vm4080, %v4945
  %5010 = vst.msk [vmem:[#allocation4 + $0xb0] sm:$0xff] %vm4080, %v4946
  %5011 = vst.msk [vmem:[#allocation4 + $0xb8] sm:$0xff] %vm4080, %v4947
  %5012 = vst.msk [vmem:[#allocation4 + $0xc0] sm:$0xff] %vm4080, %v4948
  %5013 = vst.msk [vmem:[#allocation4 + $0xc8] sm:$0xff] %vm4080, %v4949
  %5014 = vst.msk [vmem:[#allocation4 + $0xd0] sm:$0xff] %vm4080, %v4950
  %5015 = vst.msk [vmem:[#allocation4 + $0xd8] sm:$0xff] %vm4080, %v4951
  %5016 = vst.msk [vmem:[#allocation4 + $0xe0] sm:$0xff] %vm4080, %v4952
  %5017 = vst.msk [vmem:[#allocation4 + $0xe8] sm:$0xff] %vm4080, %v4953
  %5018 = vst.msk [vmem:[#allocation4 + $0xf0] sm:$0xff] %vm4080, %v4954
  %5019 = vst.msk [vmem:[#allocation4 + $0xf8] sm:$0xff] %vm4080, %v4955
  %5020 = vst.msk [vmem:[#allocation4 + $0x100] sm:$0xff] %vm4080, %v4956
  %5021 = vst.msk [vmem:[#allocation4 + $0x108] sm:$0xff] %vm4080, %v4957
  %5022 = vst.msk [vmem:[#allocation4 + $0x110] sm:$0xff] %vm4080, %v4958
  %5023 = vst.msk [vmem:[#allocation4 + $0x118] sm:$0xff] %vm4080, %v4959
  %5024 = vst.msk [vmem:[#allocation4 + $0x120] sm:$0xff] %vm4080, %v4960
  %5025 = vst.msk [vmem:[#allocation4 + $0x128] sm:$0xff] %vm4080, %v4961
  %5026 = vst.msk [vmem:[#allocation4 + $0x130] sm:$0xff] %vm4080, %v4962
  %5027 = vst.msk [vmem:[#allocation4 + $0x138] sm:$0xff] %vm4080, %v4963
  %5028 = vst.msk [vmem:[#allocation4 + $0x140] sm:$0xff] %vm4080, %v4964
  %5029 = vst.msk [vmem:[#allocation4 + $0x148] sm:$0xff] %vm4080, %v4965
  %5030 = vst.msk [vmem:[#allocation4 + $0x150] sm:$0xff] %vm4080, %v4966
  %5031 = vst.msk [vmem:[#allocation4 + $0x158] sm:$0xff] %vm4080, %v4967
  %5032 = vst.msk [vmem:[#allocation4 + $0x160] sm:$0xff] %vm4080, %v4968
  %5033 = vst.msk [vmem:[#allocation4 + $0x168] sm:$0xff] %vm4080, %v4969
  %5034 = vst.msk [vmem:[#allocation4 + $0x170] sm:$0xff] %vm4080, %v4970
  %5035 = vst.msk [vmem:[#allocation4 + $0x178] sm:$0xff] %vm4080, %v4971
  %5036 = vst.msk [vmem:[#allocation4 + $0x180] sm:$0xff] %vm4080, %v4972
  %5037 = vst.msk [vmem:[#allocation4 + $0x188] sm:$0xff] %vm4080, %v4973
  %5038 = vst.msk [vmem:[#allocation4 + $0x190] sm:$0xff] %vm4080, %v4974
  %5039 = vst.msk [vmem:[#allocation4 + $0x198] sm:$0xff] %vm4080, %v4975
  %5040 = vst.msk [vmem:[#allocation4 + $0x1a0] sm:$0xff] %vm4080, %v4976
  %5041 = vst.msk [vmem:[#allocation4 + $0x1a8] sm:$0xff] %vm4080, %v4977
  %5042 = vst.msk [vmem:[#allocation4 + $0x1b0] sm:$0xff] %vm4080, %v4978
  %5043 = vst.msk [vmem:[#allocation4 + $0x1b8] sm:$0xff] %vm4080, %v4979
  %5044 = vst.msk [vmem:[#allocation4 + $0x1c0] sm:$0xff] %vm4080, %v4980
  %5045 = vst.msk [vmem:[#allocation4 + $0x1c8] sm:$0xff] %vm4080, %v4981
  %5046 = vst.msk [vmem:[#allocation4 + $0x1d0] sm:$0xff] %vm4080, %v4982
  %5047 = vst.msk [vmem:[#allocation4 + $0x1d8] sm:$0xff] %vm4080, %v4983
  %5048 = vst.msk [vmem:[#allocation4 + $0x1e0] sm:$0xff] %vm4080, %v4984
  %5049 = vst.msk [vmem:[#allocation4 + $0x1e8] sm:$0xff] %vm4080, %v4985
  %5050 = vst.msk [vmem:[#allocation4 + $0x1f0] sm:$0xff] %vm4080, %v4986
  %5051 = vst.msk [vmem:[#allocation4 + $0x1f8] sm:$0xff] %vm4080, %v4987
  %v5052 = vld [vmem:[#allocation3 + $0x1] sm:$0xff]
  %v5053 = vld [vmem:[#allocation3 + $0x9] sm:$0xff]
  %v5054 = vld [vmem:[#allocation3 + $0x19] sm:$0xff]
  %v5055 = vld [vmem:[#allocation3 + $0x21] sm:$0xff]
  %v5056 = vld [vmem:[#allocation3 + $0x31] sm:$0xff]
  %v5057 = vld [vmem:[#allocation3 + $0x39] sm:$0xff]
  %v5058 = vld [vmem:[#allocation3 + $0x49] sm:$0xff]
  %v5059 = vld [vmem:[#allocation3 + $0x51] sm:$0xff]
  %v5060 = vld [vmem:[#allocation3 + $0x61] sm:$0xff]
  %v5061 = vld [vmem:[#allocation3 + $0x69] sm:$0xff]
  %v5062 = vld [vmem:[#allocation3 + $0x79] sm:$0xff]
  %v5063 = vld [vmem:[#allocation3 + $0x81] sm:$0xff]
  %v5064 = vld [vmem:[#allocation3 + $0x91] sm:$0xff]
  %v5065 = vld [vmem:[#allocation3 + $0x99] sm:$0xff]
  %v5066 = vld [vmem:[#allocation3 + $0xa9] sm:$0xff]
  %v5067 = vld [vmem:[#allocation3 + $0xb1] sm:$0xff]
  %v5068 = vld [vmem:[#allocation3 + $0xc1] sm:$0xff]
  %v5069 = vld [vmem:[#allocation3 + $0xc9] sm:$0xff]
  %v5070 = vld [vmem:[#allocation3 + $0xd9] sm:$0xff]
  %v5071 = vld [vmem:[#allocation3 + $0xe1] sm:$0xff]
  %v5072 = vld [vmem:[#allocation3 + $0xf1] sm:$0xff]
  %v5073 = vld [vmem:[#allocation3 + $0xf9] sm:$0xff]
  %v5074 = vld [vmem:[#allocation3 + $0x109] sm:$0xff]
  %v5075 = vld [vmem:[#allocation3 + $0x111] sm:$0xff]
  %v5076 = vld [vmem:[#allocation3 + $0x121] sm:$0xff]
  %v5077 = vld [vmem:[#allocation3 + $0x129] sm:$0xff]
  %v5078 = vld [vmem:[#allocation3 + $0x139] sm:$0xff]
  %v5079 = vld [vmem:[#allocation3 + $0x141] sm:$0xff]
  %v5080 = vld [vmem:[#allocation3 + $0x151] sm:$0xff]
  %v5081 = vld [vmem:[#allocation3 + $0x159] sm:$0xff]
  %v5082 = vld [vmem:[#allocation3 + $0x169] sm:$0xff]
  %v5083 = vld [vmem:[#allocation3 + $0x171] sm:$0xff]
  %v5084 = vld [vmem:[#allocation3 + $0x1b1] sm:$0xff]
  %v5085 = vld [vmem:[#allocation3 + $0x1b9] sm:$0xff]
  %v5086 = vld [vmem:[#allocation3 + $0x1c9] sm:$0xff]
  %v5087 = vld [vmem:[#allocation3 + $0x1d1] sm:$0xff]
  %v5088 = vld [vmem:[#allocation3 + $0x1e1] sm:$0xff]
  %v5089 = vld [vmem:[#allocation3 + $0x1e9] sm:$0xff]
  %v5090 = vld [vmem:[#allocation3 + $0x1f9] sm:$0xff]
  %v5091 = vld [vmem:[#allocation3 + $0x201] sm:$0xff]
  %v5092 = vld [vmem:[#allocation3 + $0x211] sm:$0xff]
  %v5093 = vld [vmem:[#allocation3 + $0x219] sm:$0xff]
  %v5094 = vld [vmem:[#allocation3 + $0x229] sm:$0xff]
  %v5095 = vld [vmem:[#allocation3 + $0x231] sm:$0xff]
  %v5096 = vld [vmem:[#allocation3 + $0x241] sm:$0xff]
  %v5097 = vld [vmem:[#allocation3 + $0x249] sm:$0xff]
  %v5098 = vld [vmem:[#allocation3 + $0x259] sm:$0xff]
  %v5099 = vld [vmem:[#allocation3 + $0x261] sm:$0xff]
  %v5100 = vld [vmem:[#allocation3 + $0x271] sm:$0xff]
  %v5101 = vld [vmem:[#allocation3 + $0x279] sm:$0xff]
  %v5102 = vld [vmem:[#allocation3 + $0x289] sm:$0xff]
  %v5103 = vld [vmem:[#allocation3 + $0x291] sm:$0xff]
  %v5104 = vld [vmem:[#allocation3 + $0x2a1] sm:$0xff]
  %v5105 = vld [vmem:[#allocation3 + $0x2a9] sm:$0xff]
  %v5106 = vld [vmem:[#allocation3 + $0x2b9] sm:$0xff]
  %v5107 = vld [vmem:[#allocation3 + $0x2c1] sm:$0xff]
  %v5108 = vld [vmem:[#allocation3 + $0x2d1] sm:$0xff]
  %v5109 = vld [vmem:[#allocation3 + $0x2d9] sm:$0xff]
  %v5110 = vld [vmem:[#allocation3 + $0x2e9] sm:$0xff]
  %v5111 = vld [vmem:[#allocation3 + $0x2f1] sm:$0xff]
  %v5112 = vld [vmem:[#allocation3 + $0x301] sm:$0xff]
  %v5113 = vld [vmem:[#allocation3 + $0x309] sm:$0xff]
  %v5114 = vld [vmem:[#allocation3 + $0x319] sm:$0xff]
  %v5115 = vld [vmem:[#allocation3 + $0x321] sm:$0xff]
  %5180 = vrot.lane.b32.xlu0 %v5052, 8
  %v5181 = vpop.permute.xlu0 %5180
  %5182 = vrot.lane.b32.xlu0 %v5053, 8
  %v5183 = vpop.permute.xlu0 %5182
  %5184 = vrot.lane.b32.xlu0 %v5054, 8
  %v5185 = vpop.permute.xlu0 %5184
  %5186 = vrot.lane.b32.xlu0 %v5055, 8
  %v5187 = vpop.permute.xlu0 %5186
  %5188 = vrot.lane.b32.xlu0 %v5056, 8
  %v5189 = vpop.permute.xlu0 %5188
  %5190 = vrot.lane.b32.xlu0 %v5057, 8
  %v5191 = vpop.permute.xlu0 %5190
  %5192 = vrot.lane.b32.xlu0 %v5058, 8
  %v5193 = vpop.permute.xlu0 %5192
  %5194 = vrot.lane.b32.xlu0 %v5059, 8
  %v5195 = vpop.permute.xlu0 %5194
  %5196 = vrot.lane.b32.xlu0 %v5060, 8
  %v5197 = vpop.permute.xlu0 %5196
  %5198 = vrot.lane.b32.xlu0 %v5061, 8
  %v5199 = vpop.permute.xlu0 %5198
  %5200 = vrot.lane.b32.xlu0 %v5062, 8
  %v5201 = vpop.permute.xlu0 %5200
  %5202 = vrot.lane.b32.xlu0 %v5063, 8
  %v5203 = vpop.permute.xlu0 %5202
  %5204 = vrot.lane.b32.xlu0 %v5064, 8
  %v5205 = vpop.permute.xlu0 %5204
  %5206 = vrot.lane.b32.xlu0 %v5065, 8
  %v5207 = vpop.permute.xlu0 %5206
  %5208 = vrot.lane.b32.xlu0 %v5066, 8
  %v5209 = vpop.permute.xlu0 %5208
  %5210 = vrot.lane.b32.xlu0 %v5067, 8
  %v5211 = vpop.permute.xlu0 %5210
  %5212 = vrot.lane.b32.xlu0 %v5068, 8
  %v5213 = vpop.permute.xlu0 %5212
  %5214 = vrot.lane.b32.xlu0 %v5069, 8
  %v5215 = vpop.permute.xlu0 %5214
  %5216 = vrot.lane.b32.xlu0 %v5070, 8
  %v5217 = vpop.permute.xlu0 %5216
  %5218 = vrot.lane.b32.xlu0 %v5071, 8
  %v5219 = vpop.permute.xlu0 %5218
  %5220 = vrot.lane.b32.xlu0 %v5072, 8
  %v5221 = vpop.permute.xlu0 %5220
  %5222 = vrot.lane.b32.xlu0 %v5073, 8
  %v5223 = vpop.permute.xlu0 %5222
  %5224 = vrot.lane.b32.xlu0 %v5074, 8
  %v5225 = vpop.permute.xlu0 %5224
  %5226 = vrot.lane.b32.xlu0 %v5075, 8
  %v5227 = vpop.permute.xlu0 %5226
  %5228 = vrot.lane.b32.xlu0 %v5076, 8
  %v5229 = vpop.permute.xlu0 %5228
  %5230 = vrot.lane.b32.xlu0 %v5077, 8
  %v5231 = vpop.permute.xlu0 %5230
  %5232 = vrot.lane.b32.xlu0 %v5078, 8
  %v5233 = vpop.permute.xlu0 %5232
  %5234 = vrot.lane.b32.xlu0 %v5079, 8
  %v5235 = vpop.permute.xlu0 %5234
  %5236 = vrot.lane.b32.xlu0 %v5080, 8
  %v5237 = vpop.permute.xlu0 %5236
  %5238 = vrot.lane.b32.xlu0 %v5081, 8
  %v5239 = vpop.permute.xlu0 %5238
  %5240 = vrot.lane.b32.xlu0 %v5082, 8
  %v5241 = vpop.permute.xlu0 %5240
  %5242 = vrot.lane.b32.xlu0 %v5083, 8
  %v5243 = vpop.permute.xlu0 %5242
  %5244 = vrot.lane.b32.xlu0 %v5084, 8
  %v5245 = vpop.permute.xlu0 %5244
  %5246 = vrot.lane.b32.xlu0 %v5085, 8
  %v5247 = vpop.permute.xlu0 %5246
  %5248 = vrot.lane.b32.xlu0 %v5086, 8
  %v5249 = vpop.permute.xlu0 %5248
  %5250 = vrot.lane.b32.xlu0 %v5087, 8
  %v5251 = vpop.permute.xlu0 %5250
  %5252 = vrot.lane.b32.xlu0 %v5088, 8
  %v5253 = vpop.permute.xlu0 %5252
  %5254 = vrot.lane.b32.xlu0 %v5089, 8
  %v5255 = vpop.permute.xlu0 %5254
  %5256 = vrot.lane.b32.xlu0 %v5090, 8
  %v5257 = vpop.permute.xlu0 %5256
  %5258 = vrot.lane.b32.xlu0 %v5091, 8
  %v5259 = vpop.permute.xlu0 %5258
  %5260 = vrot.lane.b32.xlu0 %v5092, 8
  %v5261 = vpop.permute.xlu0 %5260
  %5262 = vrot.lane.b32.xlu0 %v5093, 8
  %v5263 = vpop.permute.xlu0 %5262
  %5264 = vrot.lane.b32.xlu0 %v5094, 8
  %v5265 = vpop.permute.xlu0 %5264
  %5266 = vrot.lane.b32.xlu0 %v5095, 8
  %v5267 = vpop.permute.xlu0 %5266
  %5268 = vrot.lane.b32.xlu0 %v5096, 8
  %v5269 = vpop.permute.xlu0 %5268
  %5270 = vrot.lane.b32.xlu0 %v5097, 8
  %v5271 = vpop.permute.xlu0 %5270
  %5272 = vrot.lane.b32.xlu0 %v5098, 8
  %v5273 = vpop.permute.xlu0 %5272
  %5274 = vrot.lane.b32.xlu0 %v5099, 8
  %v5275 = vpop.permute.xlu0 %5274
  %5276 = vrot.lane.b32.xlu0 %v5100, 8
  %v5277 = vpop.permute.xlu0 %5276
  %5278 = vrot.lane.b32.xlu0 %v5101, 8
  %v5279 = vpop.permute.xlu0 %5278
  %5280 = vrot.lane.b32.xlu0 %v5102, 8
  %v5281 = vpop.permute.xlu0 %5280
  %5282 = vrot.lane.b32.xlu0 %v5103, 8
  %v5283 = vpop.permute.xlu0 %5282
  %5284 = vrot.lane.b32.xlu0 %v5104, 8
  %v5285 = vpop.permute.xlu0 %5284
  %5286 = vrot.lane.b32.xlu0 %v5105, 8
  %v5287 = vpop.permute.xlu0 %5286
  %5288 = vrot.lane.b32.xlu0 %v5106, 8
  %v5289 = vpop.permute.xlu0 %5288
  %5290 = vrot.lane.b32.xlu0 %v5107, 8
  %v5291 = vpop.permute.xlu0 %5290
  %5292 = vrot.lane.b32.xlu0 %v5108, 8
  %v5293 = vpop.permute.xlu0 %5292
  %5294 = vrot.lane.b32.xlu0 %v5109, 8
  %v5295 = vpop.permute.xlu0 %5294
  %5296 = vrot.lane.b32.xlu0 %v5110, 8
  %v5297 = vpop.permute.xlu0 %5296
  %5298 = vrot.lane.b32.xlu0 %v5111, 8
  %v5299 = vpop.permute.xlu0 %5298
  %5300 = vrot.lane.b32.xlu0 %v5112, 8
  %v5301 = vpop.permute.xlu0 %5300
  %5302 = vrot.lane.b32.xlu0 %v5113, 8
  %v5303 = vpop.permute.xlu0 %5302
  %5304 = vrot.lane.b32.xlu0 %v5114, 8
  %v5305 = vpop.permute.xlu0 %5304
  %5306 = vrot.lane.b32.xlu0 %v5115, 8
  %v5307 = vpop.permute.xlu0 %5306
  %vm5372 = vcmask 130112
  %5373 = vst.msk [vmem:[#allocation4] sm:$0xff] %vm5372, %v5181
  %5374 = vst.msk [vmem:[#allocation4 + $0x8] sm:$0xff] %vm5372, %v5183
  %5375 = vst.msk [vmem:[#allocation4 + $0x10] sm:$0xff] %vm5372, %v5185
  %5376 = vst.msk [vmem:[#allocation4 + $0x18] sm:$0xff] %vm5372, %v5187
  %5377 = vst.msk [vmem:[#allocation4 + $0x20] sm:$0xff] %vm5372, %v5189
  %5378 = vst.msk [vmem:[#allocation4 + $0x28] sm:$0xff] %vm5372, %v5191
  %5379 = vst.msk [vmem:[#allocation4 + $0x30] sm:$0xff] %vm5372, %v5193
  %5380 = vst.msk [vmem:[#allocation4 + $0x38] sm:$0xff] %vm5372, %v5195
  %5381 = vst.msk [vmem:[#allocation4 + $0x40] sm:$0xff] %vm5372, %v5197
  %5382 = vst.msk [vmem:[#allocation4 + $0x48] sm:$0xff] %vm5372, %v5199
  %5383 = vst.msk [vmem:[#allocation4 + $0x50] sm:$0xff] %vm5372, %v5201
  %5384 = vst.msk [vmem:[#allocation4 + $0x58] sm:$0xff] %vm5372, %v5203
  %5385 = vst.msk [vmem:[#allocation4 + $0x60] sm:$0xff] %vm5372, %v5205
  %5386 = vst.msk [vmem:[#allocation4 + $0x68] sm:$0xff] %vm5372, %v5207
  %5387 = vst.msk [vmem:[#allocation4 + $0x70] sm:$0xff] %vm5372, %v5209
  %5388 = vst.msk [vmem:[#allocation4 + $0x78] sm:$0xff] %vm5372, %v5211
  %5389 = vst.msk [vmem:[#allocation4 + $0x80] sm:$0xff] %vm5372, %v5213
  %5390 = vst.msk [vmem:[#allocation4 + $0x88] sm:$0xff] %vm5372, %v5215
  %5391 = vst.msk [vmem:[#allocation4 + $0x90] sm:$0xff] %vm5372, %v5217
  %5392 = vst.msk [vmem:[#allocation4 + $0x98] sm:$0xff] %vm5372, %v5219
  %5393 = vst.msk [vmem:[#allocation4 + $0xa0] sm:$0xff] %vm5372, %v5221
  %5394 = vst.msk [vmem:[#allocation4 + $0xa8] sm:$0xff] %vm5372, %v5223
  %5395 = vst.msk [vmem:[#allocation4 + $0xb0] sm:$0xff] %vm5372, %v5225
  %5396 = vst.msk [vmem:[#allocation4 + $0xb8] sm:$0xff] %vm5372, %v5227
  %5397 = vst.msk [vmem:[#allocation4 + $0xc0] sm:$0xff] %vm5372, %v5229
  %5398 = vst.msk [vmem:[#allocation4 + $0xc8] sm:$0xff] %vm5372, %v5231
  %5399 = vst.msk [vmem:[#allocation4 + $0xd0] sm:$0xff] %vm5372, %v5233
  %5400 = vst.msk [vmem:[#allocation4 + $0xd8] sm:$0xff] %vm5372, %v5235
  %5401 = vst.msk [vmem:[#allocation4 + $0xe0] sm:$0xff] %vm5372, %v5237
  %5402 = vst.msk [vmem:[#allocation4 + $0xe8] sm:$0xff] %vm5372, %v5239
  %5403 = vst.msk [vmem:[#allocation4 + $0xf0] sm:$0xff] %vm5372, %v5241
  %5404 = vst.msk [vmem:[#allocation4 + $0xf8] sm:$0xff] %vm5372, %v5243
  %5405 = vst.msk [vmem:[#allocation4 + $0x100] sm:$0xff] %vm5372, %v5245
  %5406 = vst.msk [vmem:[#allocation4 + $0x108] sm:$0xff] %vm5372, %v5247
  %5407 = vst.msk [vmem:[#allocation4 + $0x110] sm:$0xff] %vm5372, %v5249
  %5408 = vst.msk [vmem:[#allocation4 + $0x118] sm:$0xff] %vm5372, %v5251
  %5409 = vst.msk [vmem:[#allocation4 + $0x120] sm:$0xff] %vm5372, %v5253
  %5410 = vst.msk [vmem:[#allocation4 + $0x128] sm:$0xff] %vm5372, %v5255
  %5411 = vst.msk [vmem:[#allocation4 + $0x130] sm:$0xff] %vm5372, %v5257
  %5412 = vst.msk [vmem:[#allocation4 + $0x138] sm:$0xff] %vm5372, %v5259
  %5413 = vst.msk [vmem:[#allocation4 + $0x140] sm:$0xff] %vm5372, %v5261
  %5414 = vst.msk [vmem:[#allocation4 + $0x148] sm:$0xff] %vm5372, %v5263
  %5415 = vst.msk [vmem:[#allocation4 + $0x150] sm:$0xff] %vm5372, %v5265
  %5416 = vst.msk [vmem:[#allocation4 + $0x158] sm:$0xff] %vm5372, %v5267
  %5417 = vst.msk [vmem:[#allocation4 + $0x160] sm:$0xff] %vm5372, %v5269
  %5418 = vst.msk [vmem:[#allocation4 + $0x168] sm:$0xff] %vm5372, %v5271
  %5419 = vst.msk [vmem:[#allocation4 + $0x170] sm:$0xff] %vm5372, %v5273
  %5420 = vst.msk [vmem:[#allocation4 + $0x178] sm:$0xff] %vm5372, %v5275
  %5421 = vst.msk [vmem:[#allocation4 + $0x180] sm:$0xff] %vm5372, %v5277
  %5422 = vst.msk [vmem:[#allocation4 + $0x188] sm:$0xff] %vm5372, %v5279
  %5423 = vst.msk [vmem:[#allocation4 + $0x190] sm:$0xff] %vm5372, %v5281
  %5424 = vst.msk [vmem:[#allocation4 + $0x198] sm:$0xff] %vm5372, %v5283
  %5425 = vst.msk [vmem:[#allocation4 + $0x1a0] sm:$0xff] %vm5372, %v5285
  %5426 = vst.msk [vmem:[#allocation4 + $0x1a8] sm:$0xff] %vm5372, %v5287
  %5427 = vst.msk [vmem:[#allocation4 + $0x1b0] sm:$0xff] %vm5372, %v5289
  %5428 = vst.msk [vmem:[#allocation4 + $0x1b8] sm:$0xff] %vm5372, %v5291
  %5429 = vst.msk [vmem:[#allocation4 + $0x1c0] sm:$0xff] %vm5372, %v5293
  %5430 = vst.msk [vmem:[#allocation4 + $0x1c8] sm:$0xff] %vm5372, %v5295
  %5431 = vst.msk [vmem:[#allocation4 + $0x1d0] sm:$0xff] %vm5372, %v5297
  %5432 = vst.msk [vmem:[#allocation4 + $0x1d8] sm:$0xff] %vm5372, %v5299
  %5433 = vst.msk [vmem:[#allocation4 + $0x1e0] sm:$0xff] %vm5372, %v5301
  %5434 = vst.msk [vmem:[#allocation4 + $0x1e8] sm:$0xff] %vm5372, %v5303
  %5435 = vst.msk [vmem:[#allocation4 + $0x1f0] sm:$0xff] %vm5372, %v5305
  %5436 = vst.msk [vmem:[#allocation4 + $0x1f8] sm:$0xff] %vm5372, %v5307
  %v5437 = vld [vmem:[#allocation3 + $0x2] sm:$0xff]
  %v5438 = vld [vmem:[#allocation3 + $0xa] sm:$0xff]
  %v5439 = vld [vmem:[#allocation3 + $0x1a] sm:$0xff]
  %v5440 = vld [vmem:[#allocation3 + $0x22] sm:$0xff]
  %v5441 = vld [vmem:[#allocation3 + $0x32] sm:$0xff]
  %v5442 = vld [vmem:[#allocation3 + $0x3a] sm:$0xff]
  %v5443 = vld [vmem:[#allocation3 + $0x4a] sm:$0xff]
  %v5444 = vld [vmem:[#allocation3 + $0x52] sm:$0xff]
  %v5445 = vld [vmem:[#allocation3 + $0x62] sm:$0xff]
  %v5446 = vld [vmem:[#allocation3 + $0x6a] sm:$0xff]
  %v5447 = vld [vmem:[#allocation3 + $0x7a] sm:$0xff]
  %v5448 = vld [vmem:[#allocation3 + $0x82] sm:$0xff]
  %v5449 = vld [vmem:[#allocation3 + $0x92] sm:$0xff]
  %v5450 = vld [vmem:[#allocation3 + $0x9a] sm:$0xff]
  %v5451 = vld [vmem:[#allocation3 + $0xaa] sm:$0xff]
  %v5452 = vld [vmem:[#allocation3 + $0xb2] sm:$0xff]
  %v5453 = vld [vmem:[#allocation3 + $0xc2] sm:$0xff]
  %v5454 = vld [vmem:[#allocation3 + $0xca] sm:$0xff]
  %v5455 = vld [vmem:[#allocation3 + $0xda] sm:$0xff]
  %v5456 = vld [vmem:[#allocation3 + $0xe2] sm:$0xff]
  %v5457 = vld [vmem:[#allocation3 + $0xf2] sm:$0xff]
  %v5458 = vld [vmem:[#allocation3 + $0xfa] sm:$0xff]
  %v5459 = vld [vmem:[#allocation3 + $0x10a] sm:$0xff]
  %v5460 = vld [vmem:[#allocation3 + $0x112] sm:$0xff]
  %v5461 = vld [vmem:[#allocation3 + $0x122] sm:$0xff]
  %v5462 = vld [vmem:[#allocation3 + $0x12a] sm:$0xff]
  %v5463 = vld [vmem:[#allocation3 + $0x13a] sm:$0xff]
  %v5464 = vld [vmem:[#allocation3 + $0x142] sm:$0xff]
  %v5465 = vld [vmem:[#allocation3 + $0x152] sm:$0xff]
  %v5466 = vld [vmem:[#allocation3 + $0x15a] sm:$0xff]
  %v5467 = vld [vmem:[#allocation3 + $0x16a] sm:$0xff]
  %v5468 = vld [vmem:[#allocation3 + $0x172] sm:$0xff]
  %v5469 = vld [vmem:[#allocation3 + $0x1b2] sm:$0xff]
  %v5470 = vld [vmem:[#allocation3 + $0x1ba] sm:$0xff]
  %v5471 = vld [vmem:[#allocation3 + $0x1ca] sm:$0xff]
  %v5472 = vld [vmem:[#allocation3 + $0x1d2] sm:$0xff]
  %v5473 = vld [vmem:[#allocation3 + $0x1e2] sm:$0xff]
  %v5474 = vld [vmem:[#allocation3 + $0x1ea] sm:$0xff]
  %v5475 = vld [vmem:[#allocation3 + $0x1fa] sm:$0xff]
  %v5476 = vld [vmem:[#allocation3 + $0x202] sm:$0xff]
  %v5477 = vld [vmem:[#allocation3 + $0x212] sm:$0xff]
  %v5478 = vld [vmem:[#allocation3 + $0x21a] sm:$0xff]
  %v5479 = vld [vmem:[#allocation3 + $0x22a] sm:$0xff]
  %v5480 = vld [vmem:[#allocation3 + $0x232] sm:$0xff]
  %v5481 = vld [vmem:[#allocation3 + $0x242] sm:$0xff]
  %v5482 = vld [vmem:[#allocation3 + $0x24a] sm:$0xff]
  %v5483 = vld [vmem:[#allocation3 + $0x25a] sm:$0xff]
  %v5484 = vld [vmem:[#allocation3 + $0x262] sm:$0xff]
  %v5485 = vld [vmem:[#allocation3 + $0x272] sm:$0xff]
  %v5486 = vld [vmem:[#allocation3 + $0x27a] sm:$0xff]
  %v5487 = vld [vmem:[#allocation3 + $0x28a] sm:$0xff]
  %v5488 = vld [vmem:[#allocation3 + $0x292] sm:$0xff]
  %v5489 = vld [vmem:[#allocation3 + $0x2a2] sm:$0xff]
  %v5490 = vld [vmem:[#allocation3 + $0x2aa] sm:$0xff]
  %v5491 = vld [vmem:[#allocation3 + $0x2ba] sm:$0xff]
  %v5492 = vld [vmem:[#allocation3 + $0x2c2] sm:$0xff]
  %v5493 = vld [vmem:[#allocation3 + $0x2d2] sm:$0xff]
  %v5494 = vld [vmem:[#allocation3 + $0x2da] sm:$0xff]
  %v5495 = vld [vmem:[#allocation3 + $0x2ea] sm:$0xff]
  %v5496 = vld [vmem:[#allocation3 + $0x2f2] sm:$0xff]
  %v5497 = vld [vmem:[#allocation3 + $0x302] sm:$0xff]
  %v5498 = vld [vmem:[#allocation3 + $0x30a] sm:$0xff]
  %v5499 = vld [vmem:[#allocation3 + $0x31a] sm:$0xff]
  %v5500 = vld [vmem:[#allocation3 + $0x322] sm:$0xff]
  %5565 = vrot.lane.b32.xlu0 %v5437, 16
  %v5566 = vpop.permute.xlu0 %5565
  %5567 = vrot.lane.b32.xlu0 %v5438, 16
  %v5568 = vpop.permute.xlu0 %5567
  %5569 = vrot.lane.b32.xlu0 %v5439, 16
  %v5570 = vpop.permute.xlu0 %5569
  %5571 = vrot.lane.b32.xlu0 %v5440, 16
  %v5572 = vpop.permute.xlu0 %5571
  %5573 = vrot.lane.b32.xlu0 %v5441, 16
  %v5574 = vpop.permute.xlu0 %5573
  %5575 = vrot.lane.b32.xlu0 %v5442, 16
  %v5576 = vpop.permute.xlu0 %5575
  %5577 = vrot.lane.b32.xlu0 %v5443, 16
  %v5578 = vpop.permute.xlu0 %5577
  %5579 = vrot.lane.b32.xlu0 %v5444, 16
  %v5580 = vpop.permute.xlu0 %5579
  %5581 = vrot.lane.b32.xlu0 %v5445, 16
  %v5582 = vpop.permute.xlu0 %5581
  %5583 = vrot.lane.b32.xlu0 %v5446, 16
  %v5584 = vpop.permute.xlu0 %5583
  %5585 = vrot.lane.b32.xlu0 %v5447, 16
  %v5586 = vpop.permute.xlu0 %5585
  %5587 = vrot.lane.b32.xlu0 %v5448, 16
  %v5588 = vpop.permute.xlu0 %5587
  %5589 = vrot.lane.b32.xlu0 %v5449, 16
  %v5590 = vpop.permute.xlu0 %5589
  %5591 = vrot.lane.b32.xlu0 %v5450, 16
  %v5592 = vpop.permute.xlu0 %5591
  %5593 = vrot.lane.b32.xlu0 %v5451, 16
  %v5594 = vpop.permute.xlu0 %5593
  %5595 = vrot.lane.b32.xlu0 %v5452, 16
  %v5596 = vpop.permute.xlu0 %5595
  %5597 = vrot.lane.b32.xlu0 %v5453, 16
  %v5598 = vpop.permute.xlu0 %5597
  %5599 = vrot.lane.b32.xlu0 %v5454, 16
  %v5600 = vpop.permute.xlu0 %5599
  %5601 = vrot.lane.b32.xlu0 %v5455, 16
  %v5602 = vpop.permute.xlu0 %5601
  %5603 = vrot.lane.b32.xlu0 %v5456, 16
  %v5604 = vpop.permute.xlu0 %5603
  %5605 = vrot.lane.b32.xlu0 %v5457, 16
  %v5606 = vpop.permute.xlu0 %5605
  %5607 = vrot.lane.b32.xlu0 %v5458, 16
  %v5608 = vpop.permute.xlu0 %5607
  %5609 = vrot.lane.b32.xlu0 %v5459, 16
  %v5610 = vpop.permute.xlu0 %5609
  %5611 = vrot.lane.b32.xlu0 %v5460, 16
  %v5612 = vpop.permute.xlu0 %5611
  %5613 = vrot.lane.b32.xlu0 %v5461, 16
  %v5614 = vpop.permute.xlu0 %5613
  %5615 = vrot.lane.b32.xlu0 %v5462, 16
  %v5616 = vpop.permute.xlu0 %5615
  %5617 = vrot.lane.b32.xlu0 %v5463, 16
  %v5618 = vpop.permute.xlu0 %5617
  %5619 = vrot.lane.b32.xlu0 %v5464, 16
  %v5620 = vpop.permute.xlu0 %5619
  %5621 = vrot.lane.b32.xlu0 %v5465, 16
  %v5622 = vpop.permute.xlu0 %5621
  %5623 = vrot.lane.b32.xlu0 %v5466, 16
  %v5624 = vpop.permute.xlu0 %5623
  %5625 = vrot.lane.b32.xlu0 %v5467, 16
  %v5626 = vpop.permute.xlu0 %5625
  %5627 = vrot.lane.b32.xlu0 %v5468, 16
  %v5628 = vpop.permute.xlu0 %5627
  %5629 = vrot.lane.b32.xlu0 %v5469, 16
  %v5630 = vpop.permute.xlu0 %5629
  %5631 = vrot.lane.b32.xlu0 %v5470, 16
  %v5632 = vpop.permute.xlu0 %5631
  %5633 = vrot.lane.b32.xlu0 %v5471, 16
  %v5634 = vpop.permute.xlu0 %5633
  %5635 = vrot.lane.b32.xlu0 %v5472, 16
  %v5636 = vpop.permute.xlu0 %5635
  %5637 = vrot.lane.b32.xlu0 %v5473, 16
  %v5638 = vpop.permute.xlu0 %5637
  %5639 = vrot.lane.b32.xlu0 %v5474, 16
  %v5640 = vpop.permute.xlu0 %5639
  %5641 = vrot.lane.b32.xlu0 %v5475, 16
  %v5642 = vpop.permute.xlu0 %5641
  %5643 = vrot.lane.b32.xlu0 %v5476, 16
  %v5644 = vpop.permute.xlu0 %5643
  %5645 = vrot.lane.b32.xlu0 %v5477, 16
  %v5646 = vpop.permute.xlu0 %5645
  %5647 = vrot.lane.b32.xlu0 %v5478, 16
  %v5648 = vpop.permute.xlu0 %5647
  %5649 = vrot.lane.b32.xlu0 %v5479, 16
  %v5650 = vpop.permute.xlu0 %5649
  %5651 = vrot.lane.b32.xlu0 %v5480, 16
  %v5652 = vpop.permute.xlu0 %5651
  %5653 = vrot.lane.b32.xlu0 %v5481, 16
  %v5654 = vpop.permute.xlu0 %5653
  %5655 = vrot.lane.b32.xlu0 %v5482, 16
  %v5656 = vpop.permute.xlu0 %5655
  %5657 = vrot.lane.b32.xlu0 %v5483, 16
  %v5658 = vpop.permute.xlu0 %5657
  %5659 = vrot.lane.b32.xlu0 %v5484, 16
  %v5660 = vpop.permute.xlu0 %5659
  %5661 = vrot.lane.b32.xlu0 %v5485, 16
  %v5662 = vpop.permute.xlu0 %5661
  %5663 = vrot.lane.b32.xlu0 %v5486, 16
  %v5664 = vpop.permute.xlu0 %5663
  %5665 = vrot.lane.b32.xlu0 %v5487, 16
  %v5666 = vpop.permute.xlu0 %5665
  %5667 = vrot.lane.b32.xlu0 %v5488, 16
  %v5668 = vpop.permute.xlu0 %5667
  %5669 = vrot.lane.b32.xlu0 %v5489, 16
  %v5670 = vpop.permute.xlu0 %5669
  %5671 = vrot.lane.b32.xlu0 %v5490, 16
  %v5672 = vpop.permute.xlu0 %5671
  %5673 = vrot.lane.b32.xlu0 %v5491, 16
  %v5674 = vpop.permute.xlu0 %5673
  %5675 = vrot.lane.b32.xlu0 %v5492, 16
  %v5676 = vpop.permute.xlu0 %5675
  %5677 = vrot.lane.b32.xlu0 %v5493, 16
  %v5678 = vpop.permute.xlu0 %5677
  %5679 = vrot.lane.b32.xlu0 %v5494, 16
  %v5680 = vpop.permute.xlu0 %5679
  %5681 = vrot.lane.b32.xlu0 %v5495, 16
  %v5682 = vpop.permute.xlu0 %5681
  %5683 = vrot.lane.b32.xlu0 %v5496, 16
  %v5684 = vpop.permute.xlu0 %5683
  %5685 = vrot.lane.b32.xlu0 %v5497, 16
  %v5686 = vpop.permute.xlu0 %5685
  %5687 = vrot.lane.b32.xlu0 %v5498, 16
  %v5688 = vpop.permute.xlu0 %5687
  %5689 = vrot.lane.b32.xlu0 %v5499, 16
  %v5690 = vpop.permute.xlu0 %5689
  %5691 = vrot.lane.b32.xlu0 %v5500, 16
  %v5692 = vpop.permute.xlu0 %5691
  %vm5757 = vcmask 195712
  %5758 = vst.msk [vmem:[#allocation4] sm:$0xff] %vm5757, %v5566
  %5759 = vst.msk [vmem:[#allocation4 + $0x8] sm:$0xff] %vm5757, %v5568
  %5760 = vst.msk [vmem:[#allocation4 + $0x10] sm:$0xff] %vm5757, %v5570
  %5761 = vst.msk [vmem:[#allocation4 + $0x18] sm:$0xff] %vm5757, %v5572
  %5762 = vst.msk [vmem:[#allocation4 + $0x20] sm:$0xff] %vm5757, %v5574
  %5763 = vst.msk [vmem:[#allocation4 + $0x28] sm:$0xff] %vm5757, %v5576
  %5764 = vst.msk [vmem:[#allocation4 + $0x30] sm:$0xff] %vm5757, %v5578
  %5765 = vst.msk [vmem:[#allocation4 + $0x38] sm:$0xff] %vm5757, %v5580
  %5766 = vst.msk [vmem:[#allocation4 + $0x40] sm:$0xff] %vm5757, %v5582
  %5767 = vst.msk [vmem:[#allocation4 + $0x48] sm:$0xff] %vm5757, %v5584
  %5768 = vst.msk [vmem:[#allocation4 + $0x50] sm:$0xff] %vm5757, %v5586
  %5769 = vst.msk [vmem:[#allocation4 + $0x58] sm:$0xff] %vm5757, %v5588
  %5770 = vst.msk [vmem:[#allocation4 + $0x60] sm:$0xff] %vm5757, %v5590
  %5771 = vst.msk [vmem:[#allocation4 + $0x68] sm:$0xff] %vm5757, %v5592
  %5772 = vst.msk [vmem:[#allocation4 + $0x70] sm:$0xff] %vm5757, %v5594
  %5773 = vst.msk [vmem:[#allocation4 + $0x78] sm:$0xff] %vm5757, %v5596
  %5774 = vst.msk [vmem:[#allocation4 + $0x80] sm:$0xff] %vm5757, %v5598
  %5775 = vst.msk [vmem:[#allocation4 + $0x88] sm:$0xff] %vm5757, %v5600
  %5776 = vst.msk [vmem:[#allocation4 + $0x90] sm:$0xff] %vm5757, %v5602
  %5777 = vst.msk [vmem:[#allocation4 + $0x98] sm:$0xff] %vm5757, %v5604
  %5778 = vst.msk [vmem:[#allocation4 + $0xa0] sm:$0xff] %vm5757, %v5606
  %5779 = vst.msk [vmem:[#allocation4 + $0xa8] sm:$0xff] %vm5757, %v5608
  %5780 = vst.msk [vmem:[#allocation4 + $0xb0] sm:$0xff] %vm5757, %v5610
  %5781 = vst.msk [vmem:[#allocation4 + $0xb8] sm:$0xff] %vm5757, %v5612
  %5782 = vst.msk [vmem:[#allocation4 + $0xc0] sm:$0xff] %vm5757, %v5614
  %5783 = vst.msk [vmem:[#allocation4 + $0xc8] sm:$0xff] %vm5757, %v5616
  %5784 = vst.msk [vmem:[#allocation4 + $0xd0] sm:$0xff] %vm5757, %v5618
  %5785 = vst.msk [vmem:[#allocation4 + $0xd8] sm:$0xff] %vm5757, %v5620
  %5786 = vst.msk [vmem:[#allocation4 + $0xe0] sm:$0xff] %vm5757, %v5622
  %5787 = vst.msk [vmem:[#allocation4 + $0xe8] sm:$0xff] %vm5757, %v5624
  %5788 = vst.msk [vmem:[#allocation4 + $0xf0] sm:$0xff] %vm5757, %v5626
  %5789 = vst.msk [vmem:[#allocation4 + $0xf8] sm:$0xff] %vm5757, %v5628
  %5790 = vst.msk [vmem:[#allocation4 + $0x100] sm:$0xff] %vm5757, %v5630
  %5791 = vst.msk [vmem:[#allocation4 + $0x108] sm:$0xff] %vm5757, %v5632
  %5792 = vst.msk [vmem:[#allocation4 + $0x110] sm:$0xff] %vm5757, %v5634
  %5793 = vst.msk [vmem:[#allocation4 + $0x118] sm:$0xff] %vm5757, %v5636
  %5794 = vst.msk [vmem:[#allocation4 + $0x120] sm:$0xff] %vm5757, %v5638
  %5795 = vst.msk [vmem:[#allocation4 + $0x128] sm:$0xff] %vm5757, %v5640
  %5796 = vst.msk [vmem:[#allocation4 + $0x130] sm:$0xff] %vm5757, %v5642
  %5797 = vst.msk [vmem:[#allocation4 + $0x138] sm:$0xff] %vm5757, %v5644
  %5798 = vst.msk [vmem:[#allocation4 + $0x140] sm:$0xff] %vm5757, %v5646
  %5799 = vst.msk [vmem:[#allocation4 + $0x148] sm:$0xff] %vm5757, %v5648
  %5800 = vst.msk [vmem:[#allocation4 + $0x150] sm:$0xff] %vm5757, %v5650
  %5801 = vst.msk [vmem:[#allocation4 + $0x158] sm:$0xff] %vm5757, %v5652
  %5802 = vst.msk [vmem:[#allocation4 + $0x160] sm:$0xff] %vm5757, %v5654
  %5803 = vst.msk [vmem:[#allocation4 + $0x168] sm:$0xff] %vm5757, %v5656
  %5804 = vst.msk [vmem:[#allocation4 + $0x170] sm:$0xff] %vm5757, %v5658
  %5805 = vst.msk [vmem:[#allocation4 + $0x178] sm:$0xff] %vm5757, %v5660
  %5806 = vst.msk [vmem:[#allocation4 + $0x180] sm:$0xff] %vm5757, %v5662
  %5807 = vst.msk [vmem:[#allocation4 + $0x188] sm:$0xff] %vm5757, %v5664
  %5808 = vst.msk [vmem:[#allocation4 + $0x190] sm:$0xff] %vm5757, %v5666
  %5809 = vst.msk [vmem:[#allocation4 + $0x198] sm:$0xff] %vm5757, %v5668
  %5810 = vst.msk [vmem:[#allocation4 + $0x1a0] sm:$0xff] %vm5757, %v5670
  %5811 = vst.msk [vmem:[#allocation4 + $0x1a8] sm:$0xff] %vm5757, %v5672
  %5812 = vst.msk [vmem:[#allocation4 + $0x1b0] sm:$0xff] %vm5757, %v5674
  %5813 = vst.msk [vmem:[#allocation4 + $0x1b8] sm:$0xff] %vm5757, %v5676
  %5814 = vst.msk [vmem:[#allocation4 + $0x1c0] sm:$0xff] %vm5757, %v5678
  %5815 = vst.msk [vmem:[#allocation4 + $0x1c8] sm:$0xff] %vm5757, %v5680
  %5816 = vst.msk [vmem:[#allocation4 + $0x1d0] sm:$0xff] %vm5757, %v5682
  %5817 = vst.msk [vmem:[#allocation4 + $0x1d8] sm:$0xff] %vm5757, %v5684
  %5818 = vst.msk [vmem:[#allocation4 + $0x1e0] sm:$0xff] %vm5757, %v5686
  %5819 = vst.msk [vmem:[#allocation4 + $0x1e8] sm:$0xff] %vm5757, %v5688
  %5820 = vst.msk [vmem:[#allocation4 + $0x1f0] sm:$0xff] %vm5757, %v5690
  %5821 = vst.msk [vmem:[#allocation4 + $0x1f8] sm:$0xff] %vm5757, %v5692
  %v5822 = vld [vmem:[%s4859] sm:$0xff]
  %v5823 = vld [vmem:[%s4859 + $0x8] sm:$0xff]
  %v5824 = vld [vmem:[%s4859 + $0x18] sm:$0xff]
  %v5825 = vld [vmem:[%s4859 + $0x20] sm:$0xff]
  %v5826 = vld [vmem:[%s4859 + $0x30] sm:$0xff]
  %v5827 = vld [vmem:[%s4859 + $0x38] sm:$0xff]
  %v5828 = vld [vmem:[%s4859 + $0x48] sm:$0xff]
  %v5829 = vld [vmem:[%s4859 + $0x50] sm:$0xff]
  %v5830 = vld [vmem:[%s4859 + $0x60] sm:$0xff]
  %v5831 = vld [vmem:[%s4859 + $0x68] sm:$0xff]
  %v5832 = vld [vmem:[%s4859 + $0x78] sm:$0xff]
  %v5833 = vld [vmem:[%s4859 + $0x80] sm:$0xff]
  %v5834 = vld [vmem:[%s4859 + $0x90] sm:$0xff]
  %v5835 = vld [vmem:[%s4859 + $0x98] sm:$0xff]
  %v5836 = vld [vmem:[%s4859 + $0xa8] sm:$0xff]
  %v5837 = vld [vmem:[%s4859 + $0xb0] sm:$0xff]
  %v5838 = vld [vmem:[%s4859 + $0xc0] sm:$0xff]
  %v5839 = vld [vmem:[%s4859 + $0xc8] sm:$0xff]
  %v5840 = vld [vmem:[%s4859 + $0xd8] sm:$0xff]
  %v5841 = vld [vmem:[%s4859 + $0xe0] sm:$0xff]
  %v5842 = vld [vmem:[%s4859 + $0xf0] sm:$0xff]
  %v5843 = vld [vmem:[%s4859 + $0xf8] sm:$0xff]
  %v5844 = vld [vmem:[%s4859 + $0x108] sm:$0xff]
  %v5845 = vld [vmem:[%s4859 + $0x110] sm:$0xff]
  %v5846 = vld [vmem:[%s4859 + $0x120] sm:$0xff]
  %v5847 = vld [vmem:[%s4859 + $0x128] sm:$0xff]
  %v5848 = vld [vmem:[%s4859 + $0x138] sm:$0xff]
  %v5849 = vld [vmem:[%s4859 + $0x140] sm:$0xff]
  %v5850 = vld [vmem:[%s4859 + $0x150] sm:$0xff]
  %v5851 = vld [vmem:[%s4859 + $0x158] sm:$0xff]
  %v5852 = vld [vmem:[%s4859 + $0x168] sm:$0xff]
  %v5853 = vld [vmem:[%s4859 + $0x170] sm:$0xff]
  %v5854 = vld [vmem:[%s4859 + $0x1b0] sm:$0xff]
  %v5855 = vld [vmem:[%s4859 + $0x1b8] sm:$0xff]
  %v5856 = vld [vmem:[%s4859 + $0x1c8] sm:$0xff]
  %v5857 = vld [vmem:[%s4859 + $0x1d0] sm:$0xff]
  %v5858 = vld [vmem:[%s4859 + $0x1e0] sm:$0xff]
  %v5859 = vld [vmem:[%s4859 + $0x1e8] sm:$0xff]
  %v5860 = vld [vmem:[%s4859 + $0x1f8] sm:$0xff]
  %v5861 = vld [vmem:[%s4859 + $0x200] sm:$0xff]
  %v5862 = vld [vmem:[%s4859 + $0x210] sm:$0xff]
  %v5863 = vld [vmem:[%s4859 + $0x218] sm:$0xff]
  %v5864 = vld [vmem:[%s4859 + $0x228] sm:$0xff]
  %v5865 = vld [vmem:[%s4859 + $0x230] sm:$0xff]
  %v5866 = vld [vmem:[%s4859 + $0x240] sm:$0xff]
  %v5867 = vld [vmem:[%s4859 + $0x248] sm:$0xff]
  %v5868 = vld [vmem:[%s4859 + $0x258] sm:$0xff]
  %v5869 = vld [vmem:[%s4859 + $0x260] sm:$0xff]
  %v5870 = vld [vmem:[%s4859 + $0x270] sm:$0xff]
  %v5871 = vld [vmem:[%s4859 + $0x278] sm:$0xff]
  %v5872 = vld [vmem:[%s4859 + $0x288] sm:$0xff]
  %v5873 = vld [vmem:[%s4859 + $0x290] sm:$0xff]
  %v5874 = vld [vmem:[%s4859 + $0x2a0] sm:$0xff]
  %v5875 = vld [vmem:[%s4859 + $0x2a8] sm:$0xff]
  %v5876 = vld [vmem:[%s4859 + $0x2b8] sm:$0xff]
  %v5877 = vld [vmem:[%s4859 + $0x2c0] sm:$0xff]
  %v5878 = vld [vmem:[%s4859 + $0x2d0] sm:$0xff]
  %v5879 = vld [vmem:[%s4859 + $0x2d8] sm:$0xff]
  %v5880 = vld [vmem:[%s4859 + $0x2e8] sm:$0xff]
  %v5881 = vld [vmem:[%s4859 + $0x2f0] sm:$0xff]
  %v5882 = vld [vmem:[%s4859 + $0x300] sm:$0xff]
  %v5883 = vld [vmem:[%s4859 + $0x308] sm:$0xff]
  %v5884 = vld [vmem:[%s4859 + $0x318] sm:$0xff]
  %v5885 = vld [vmem:[%s4859 + $0x320] sm:$0xff]
  %5950 = vrot.lane.b32.xlu0 %v5822, 24
  %v5951 = vpop.permute.xlu0 %5950
  %5952 = vrot.lane.b32.xlu0 %v5823, 24
  %v5953 = vpop.permute.xlu0 %5952
  %5954 = vrot.lane.b32.xlu0 %v5824, 24
  %v5955 = vpop.permute.xlu0 %5954
  %5956 = vrot.lane.b32.xlu0 %v5825, 24
  %v5957 = vpop.permute.xlu0 %5956
  %5958 = vrot.lane.b32.xlu0 %v5826, 24
  %v5959 = vpop.permute.xlu0 %5958
  %5960 = vrot.lane.b32.xlu0 %v5827, 24
  %v5961 = vpop.permute.xlu0 %5960
  %5962 = vrot.lane.b32.xlu0 %v5828, 24
  %v5963 = vpop.permute.xlu0 %5962
  %5964 = vrot.lane.b32.xlu0 %v5829, 24
  %v5965 = vpop.permute.xlu0 %5964
  %5966 = vrot.lane.b32.xlu0 %v5830, 24
  %v5967 = vpop.permute.xlu0 %5966
  %5968 = vrot.lane.b32.xlu0 %v5831, 24
  %v5969 = vpop.permute.xlu0 %5968
  %5970 = vrot.lane.b32.xlu0 %v5832, 24
  %v5971 = vpop.permute.xlu0 %5970
  %5972 = vrot.lane.b32.xlu0 %v5833, 24
  %v5973 = vpop.permute.xlu0 %5972
  %5974 = vrot.lane.b32.xlu0 %v5834, 24
  %v5975 = vpop.permute.xlu0 %5974
  %5976 = vrot.lane.b32.xlu0 %v5835, 24
  %v5977 = vpop.permute.xlu0 %5976
  %5978 = vrot.lane.b32.xlu0 %v5836, 24
  %v5979 = vpop.permute.xlu0 %5978
  %5980 = vrot.lane.b32.xlu0 %v5837, 24
  %v5981 = vpop.permute.xlu0 %5980
  %5982 = vrot.lane.b32.xlu0 %v5838, 24
  %v5983 = vpop.permute.xlu0 %5982
  %5984 = vrot.lane.b32.xlu0 %v5839, 24
  %v5985 = vpop.permute.xlu0 %5984
  %5986 = vrot.lane.b32.xlu0 %v5840, 24
  %v5987 = vpop.permute.xlu0 %5986
  %5988 = vrot.lane.b32.xlu0 %v5841, 24
  %v5989 = vpop.permute.xlu0 %5988
  %5990 = vrot.lane.b32.xlu0 %v5842, 24
  %v5991 = vpop.permute.xlu0 %5990
  %5992 = vrot.lane.b32.xlu0 %v5843, 24
  %v5993 = vpop.permute.xlu0 %5992
  %5994 = vrot.lane.b32.xlu0 %v5844, 24
  %v5995 = vpop.permute.xlu0 %5994
  %5996 = vrot.lane.b32.xlu0 %v5845, 24
  %v5997 = vpop.permute.xlu0 %5996
  %5998 = vrot.lane.b32.xlu0 %v5846, 24
  %v5999 = vpop.permute.xlu0 %5998
  %6000 = vrot.lane.b32.xlu0 %v5847, 24
  %v6001 = vpop.permute.xlu0 %6000
  %6002 = vrot.lane.b32.xlu0 %v5848, 24
  %v6003 = vpop.permute.xlu0 %6002
  %6004 = vrot.lane.b32.xlu0 %v5849, 24
  %v6005 = vpop.permute.xlu0 %6004
  %6006 = vrot.lane.b32.xlu0 %v5850, 24
  %v6007 = vpop.permute.xlu0 %6006
  %6008 = vrot.lane.b32.xlu0 %v5851, 24
  %v6009 = vpop.permute.xlu0 %6008
  %6010 = vrot.lane.b32.xlu0 %v5852, 24
  %v6011 = vpop.permute.xlu0 %6010
  %6012 = vrot.lane.b32.xlu0 %v5853, 24
  %v6013 = vpop.permute.xlu0 %6012
  %6014 = vrot.lane.b32.xlu0 %v5854, 24
  %v6015 = vpop.permute.xlu0 %6014
  %6016 = vrot.lane.b32.xlu0 %v5855, 24
  %v6017 = vpop.permute.xlu0 %6016
  %6018 = vrot.lane.b32.xlu0 %v5856, 24
  %v6019 = vpop.permute.xlu0 %6018
  %6020 = vrot.lane.b32.xlu0 %v5857, 24
  %v6021 = vpop.permute.xlu0 %6020
  %6022 = vrot.lane.b32.xlu0 %v5858, 24
  %v6023 = vpop.permute.xlu0 %6022
  %6024 = vrot.lane.b32.xlu0 %v5859, 24
  %v6025 = vpop.permute.xlu0 %6024
  %6026 = vrot.lane.b32.xlu0 %v5860, 24
  %v6027 = vpop.permute.xlu0 %6026
  %6028 = vrot.lane.b32.xlu0 %v5861, 24
  %v6029 = vpop.permute.xlu0 %6028
  %6030 = vrot.lane.b32.xlu0 %v5862, 24
  %v6031 = vpop.permute.xlu0 %6030
  %6032 = vrot.lane.b32.xlu0 %v5863, 24
  %v6033 = vpop.permute.xlu0 %6032
  %6034 = vrot.lane.b32.xlu0 %v5864, 24
  %v6035 = vpop.permute.xlu0 %6034
  %6036 = vrot.lane.b32.xlu0 %v5865, 24
  %v6037 = vpop.permute.xlu0 %6036
  %6038 = vrot.lane.b32.xlu0 %v5866, 24
  %v6039 = vpop.permute.xlu0 %6038
  %6040 = vrot.lane.b32.xlu0 %v5867, 24
  %v6041 = vpop.permute.xlu0 %6040
  %6042 = vrot.lane.b32.xlu0 %v5868, 24
  %v6043 = vpop.permute.xlu0 %6042
  %6044 = vrot.lane.b32.xlu0 %v5869, 24
  %v6045 = vpop.permute.xlu0 %6044
  %6046 = vrot.lane.b32.xlu0 %v5870, 24
  %v6047 = vpop.permute.xlu0 %6046
  %6048 = vrot.lane.b32.xlu0 %v5871, 24
  %v6049 = vpop.permute.xlu0 %6048
  %6050 = vrot.lane.b32.xlu0 %v5872, 24
  %v6051 = vpop.permute.xlu0 %6050
  %6052 = vrot.lane.b32.xlu0 %v5873, 24
  %v6053 = vpop.permute.xlu0 %6052
  %6054 = vrot.lane.b32.xlu0 %v5874, 24
  %v6055 = vpop.permute.xlu0 %6054
  %6056 = vrot.lane.b32.xlu0 %v5875, 24
  %v6057 = vpop.permute.xlu0 %6056
  %6058 = vrot.lane.b32.xlu0 %v5876, 24
  %v6059 = vpop.permute.xlu0 %6058
  %6060 = vrot.lane.b32.xlu0 %v5877, 24
  %v6061 = vpop.permute.xlu0 %6060
  %6062 = vrot.lane.b32.xlu0 %v5878, 24
  %v6063 = vpop.permute.xlu0 %6062
  %6064 = vrot.lane.b32.xlu0 %v5879, 24
  %v6065 = vpop.permute.xlu0 %6064
  %6066 = vrot.lane.b32.xlu0 %v5880, 24
  %v6067 = vpop.permute.xlu0 %6066
  %6068 = vrot.lane.b32.xlu0 %v5881, 24
  %v6069 = vpop.permute.xlu0 %6068
  %6070 = vrot.lane.b32.xlu0 %v5882, 24
  %v6071 = vpop.permute.xlu0 %6070
  %6072 = vrot.lane.b32.xlu0 %v5883, 24
  %v6073 = vpop.permute.xlu0 %6072
  %6074 = vrot.lane.b32.xlu0 %v5884, 24
  %v6075 = vpop.permute.xlu0 %6074
  %6076 = vrot.lane.b32.xlu0 %v5885, 24
  %v6077 = vpop.permute.xlu0 %6076
  %vm6142 = vcmask 261312
  %6143 = vst.msk [vmem:[#allocation4] sm:$0xff] %vm6142, %v5951
  %6144 = vst.msk [vmem:[#allocation4 + $0x8] sm:$0xff] %vm6142, %v5953
  %6145 = vst.msk [vmem:[#allocation4 + $0x10] sm:$0xff] %vm6142, %v5955
  %6146 = vst.msk [vmem:[#allocation4 + $0x18] sm:$0xff] %vm6142, %v5957
  %6147 = vst.msk [vmem:[#allocation4 + $0x20] sm:$0xff] %vm6142, %v5959
  %6148 = vst.msk [vmem:[#allocation4 + $0x28] sm:$0xff] %vm6142, %v5961
  %6149 = vst.msk [vmem:[#allocation4 + $0x30] sm:$0xff] %vm6142, %v5963
  %6150 = vst.msk [vmem:[#allocation4 + $0x38] sm:$0xff] %vm6142, %v5965
  %6151 = vst.msk [vmem:[#allocation4 + $0x40] sm:$0xff] %vm6142, %v5967
  %6152 = vst.msk [vmem:[#allocation4 + $0x48] sm:$0xff] %vm6142, %v5969
  %6153 = vst.msk [vmem:[#allocation4 + $0x50] sm:$0xff] %vm6142, %v5971
  %6154 = vst.msk [vmem:[#allocation4 + $0x58] sm:$0xff] %vm6142, %v5973
  %6155 = vst.msk [vmem:[#allocation4 + $0x60] sm:$0xff] %vm6142, %v5975
  %6156 = vst.msk [vmem:[#allocation4 + $0x68] sm:$0xff] %vm6142, %v5977
  %6157 = vst.msk [vmem:[#allocation4 + $0x70] sm:$0xff] %vm6142, %v5979
  %6158 = vst.msk [vmem:[#allocation4 + $0x78] sm:$0xff] %vm6142, %v5981
  %6159 = vst.msk [vmem:[#allocation4 + $0x80] sm:$0xff] %vm6142, %v5983
  %6160 = vst.msk [vmem:[#allocation4 + $0x88] sm:$0xff] %vm6142, %v5985
  %6161 = vst.msk [vmem:[#allocation4 + $0x90] sm:$0xff] %vm6142, %v5987
  %6162 = vst.msk [vmem:[#allocation4 + $0x98] sm:$0xff] %vm6142, %v5989
  %6163 = vst.msk [vmem:[#allocation4 + $0xa0] sm:$0xff] %vm6142, %v5991
  %6164 = vst.msk [vmem:[#allocation4 + $0xa8] sm:$0xff] %vm6142, %v5993
  %6165 = vst.msk [vmem:[#allocation4 + $0xb0] sm:$0xff] %vm6142, %v5995
  %6166 = vst.msk [vmem:[#allocation4 + $0xb8] sm:$0xff] %vm6142, %v5997
  %6167 = vst.msk [vmem:[#allocation4 + $0xc0] sm:$0xff] %vm6142, %v5999
  %6168 = vst.msk [vmem:[#allocation4 + $0xc8] sm:$0xff] %vm6142, %v6001
  %6169 = vst.msk [vmem:[#allocation4 + $0xd0] sm:$0xff] %vm6142, %v6003
  %6170 = vst.msk [vmem:[#allocation4 + $0xd8] sm:$0xff] %vm6142, %v6005
  %6171 = vst.msk [vmem:[#allocation4 + $0xe0] sm:$0xff] %vm6142, %v6007
  %6172 = vst.msk [vmem:[#allocation4 + $0xe8] sm:$0xff] %vm6142, %v6009
  %6173 = vst.msk [vmem:[#allocation4 + $0xf0] sm:$0xff] %vm6142, %v6011
  %6174 = vst.msk [vmem:[#allocation4 + $0xf8] sm:$0xff] %vm6142, %v6013
  %6175 = vst.msk [vmem:[#allocation4 + $0x100] sm:$0xff] %vm6142, %v6015
  %6176 = vst.msk [vmem:[#allocation4 + $0x108] sm:$0xff] %vm6142, %v6017
  %6177 = vst.msk [vmem:[#allocation4 + $0x110] sm:$0xff] %vm6142, %v6019
  %6178 = vst.msk [vmem:[#allocation4 + $0x118] sm:$0xff] %vm6142, %v6021
  %6179 = vst.msk [vmem:[#allocation4 + $0x120] sm:$0xff] %vm6142, %v6023
  %6180 = vst.msk [vmem:[#allocation4 + $0x128] sm:$0xff] %vm6142, %v6025
  %6181 = vst.msk [vmem:[#allocation4 + $0x130] sm:$0xff] %vm6142, %v6027
  %6182 = vst.msk [vmem:[#allocation4 + $0x138] sm:$0xff] %vm6142, %v6029
  %6183 = vst.msk [vmem:[#allocation4 + $0x140] sm:$0xff] %vm6142, %v6031
  %6184 = vst.msk [vmem:[#allocation4 + $0x148] sm:$0xff] %vm6142, %v6033
  %6185 = vst.msk [vmem:[#allocation4 + $0x150] sm:$0xff] %vm6142, %v6035
  %6186 = vst.msk [vmem:[#allocation4 + $0x158] sm:$0xff] %vm6142, %v6037
  %6187 = vst.msk [vmem:[#allocation4 + $0x160] sm:$0xff] %vm6142, %v6039
  %6188 = vst.msk [vmem:[#allocation4 + $0x168] sm:$0xff] %vm6142, %v6041
  %6189 = vst.msk [vmem:[#allocation4 + $0x170] sm:$0xff] %vm6142, %v6043
  %6190 = vst.msk [vmem:[#allocation4 + $0x178] sm:$0xff] %vm6142, %v6045
  %6191 = vst.msk [vmem:[#allocation4 + $0x180] sm:$0xff] %vm6142, %v6047
  %6192 = vst.msk [vmem:[#allocation4 + $0x188] sm:$0xff] %vm6142, %v6049
  %6193 = vst.msk [vmem:[#allocation4 + $0x190] sm:$0xff] %vm6142, %v6051
  %6194 = vst.msk [vmem:[#allocation4 + $0x198] sm:$0xff] %vm6142, %v6053
  %6195 = vst.msk [vmem:[#allocation4 + $0x1a0] sm:$0xff] %vm6142, %v6055
  %6196 = vst.msk [vmem:[#allocation4 + $0x1a8] sm:$0xff] %vm6142, %v6057
  %6197 = vst.msk [vmem:[#allocation4 + $0x1b0] sm:$0xff] %vm6142, %v6059
  %6198 = vst.msk [vmem:[#allocation4 + $0x1b8] sm:$0xff] %vm6142, %v6061
  %6199 = vst.msk [vmem:[#allocation4 + $0x1c0] sm:$0xff] %vm6142, %v6063
  %6200 = vst.msk [vmem:[#allocation4 + $0x1c8] sm:$0xff] %vm6142, %v6065
  %6201 = vst.msk [vmem:[#allocation4 + $0x1d0] sm:$0xff] %vm6142, %v6067
  %6202 = vst.msk [vmem:[#allocation4 + $0x1d8] sm:$0xff] %vm6142, %v6069
  %6203 = vst.msk [vmem:[#allocation4 + $0x1e0] sm:$0xff] %vm6142, %v6071
  %6204 = vst.msk [vmem:[#allocation4 + $0x1e8] sm:$0xff] %vm6142, %v6073
  %6205 = vst.msk [vmem:[#allocation4 + $0x1f0] sm:$0xff] %vm6142, %v6075
  %6206 = vst.msk [vmem:[#allocation4 + $0x1f8] sm:$0xff] %vm6142, %v6077
  %v6207 = vld [vmem:[%s4859 + $0x1] sm:$0xff]
  %v6208 = vld [vmem:[%s4859 + $0x9] sm:$0xff]
  %v6209 = vld [vmem:[%s4859 + $0x19] sm:$0xff]
  %v6210 = vld [vmem:[%s4859 + $0x21] sm:$0xff]
  %v6211 = vld [vmem:[%s4859 + $0x31] sm:$0xff]
  %v6212 = vld [vmem:[%s4859 + $0x39] sm:$0xff]
  %v6213 = vld [vmem:[%s4859 + $0x49] sm:$0xff]
  %v6214 = vld [vmem:[%s4859 + $0x51] sm:$0xff]
  %v6215 = vld [vmem:[%s4859 + $0x61] sm:$0xff]
  %v6216 = vld [vmem:[%s4859 + $0x69] sm:$0xff]
  %v6217 = vld [vmem:[%s4859 + $0x79] sm:$0xff]
  %v6218 = vld [vmem:[%s4859 + $0x81] sm:$0xff]
  %v6219 = vld [vmem:[%s4859 + $0x91] sm:$0xff]
  %v6220 = vld [vmem:[%s4859 + $0x99] sm:$0xff]
  %v6221 = vld [vmem:[%s4859 + $0xa9] sm:$0xff]
  %v6222 = vld [vmem:[%s4859 + $0xb1] sm:$0xff]
  %v6223 = vld [vmem:[%s4859 + $0xc1] sm:$0xff]
  %v6224 = vld [vmem:[%s4859 + $0xc9] sm:$0xff]
  %v6225 = vld [vmem:[%s4859 + $0xd9] sm:$0xff]
  %v6226 = vld [vmem:[%s4859 + $0xe1] sm:$0xff]
  %v6227 = vld [vmem:[%s4859 + $0xf1] sm:$0xff]
  %v6228 = vld [vmem:[%s4859 + $0xf9] sm:$0xff]
  %v6229 = vld [vmem:[%s4859 + $0x109] sm:$0xff]
  %v6230 = vld [vmem:[%s4859 + $0x111] sm:$0xff]
  %v6231 = vld [vmem:[%s4859 + $0x121] sm:$0xff]
  %v6232 = vld [vmem:[%s4859 + $0x129] sm:$0xff]
  %v6233 = vld [vmem:[%s4859 + $0x139] sm:$0xff]
  %v6234 = vld [vmem:[%s4859 + $0x141] sm:$0xff]
  %v6235 = vld [vmem:[%s4859 + $0x151] sm:$0xff]
  %v6236 = vld [vmem:[%s4859 + $0x159] sm:$0xff]
  %v6237 = vld [vmem:[%s4859 + $0x169] sm:$0xff]
  %v6238 = vld [vmem:[%s4859 + $0x171] sm:$0xff]
  %v6239 = vld [vmem:[%s4859 + $0x1b1] sm:$0xff]
  %v6240 = vld [vmem:[%s4859 + $0x1b9] sm:$0xff]
  %v6241 = vld [vmem:[%s4859 + $0x1c9] sm:$0xff]
  %v6242 = vld [vmem:[%s4859 + $0x1d1] sm:$0xff]
  %v6243 = vld [vmem:[%s4859 + $0x1e1] sm:$0xff]
  %v6244 = vld [vmem:[%s4859 + $0x1e9] sm:$0xff]
  %v6245 = vld [vmem:[%s4859 + $0x1f9] sm:$0xff]
  %v6246 = vld [vmem:[%s4859 + $0x201] sm:$0xff]
  %v6247 = vld [vmem:[%s4859 + $0x211] sm:$0xff]
  %v6248 = vld [vmem:[%s4859 + $0x219] sm:$0xff]
  %v6249 = vld [vmem:[%s4859 + $0x229] sm:$0xff]
  %v6250 = vld [vmem:[%s4859 + $0x231] sm:$0xff]
  %v6251 = vld [vmem:[%s4859 + $0x241] sm:$0xff]
  %v6252 = vld [vmem:[%s4859 + $0x249] sm:$0xff]
  %v6253 = vld [vmem:[%s4859 + $0x259] sm:$0xff]
  %v6254 = vld [vmem:[%s4859 + $0x261] sm:$0xff]
  %v6255 = vld [vmem:[%s4859 + $0x271] sm:$0xff]
  %v6256 = vld [vmem:[%s4859 + $0x279] sm:$0xff]
  %v6257 = vld [vmem:[%s4859 + $0x289] sm:$0xff]
  %v6258 = vld [vmem:[%s4859 + $0x291] sm:$0xff]
  %v6259 = vld [vmem:[%s4859 + $0x2a1] sm:$0xff]
  %v6260 = vld [vmem:[%s4859 + $0x2a9] sm:$0xff]
  %v6261 = vld [vmem:[%s4859 + $0x2b9] sm:$0xff]
  %v6262 = vld [vmem:[%s4859 + $0x2c1] sm:$0xff]
  %v6263 = vld [vmem:[%s4859 + $0x2d1] sm:$0xff]
  %v6264 = vld [vmem:[%s4859 + $0x2d9] sm:$0xff]
  %v6265 = vld [vmem:[%s4859 + $0x2e9] sm:$0xff]
  %v6266 = vld [vmem:[%s4859 + $0x2f1] sm:$0xff]
  %v6267 = vld [vmem:[%s4859 + $0x301] sm:$0xff]
  %v6268 = vld [vmem:[%s4859 + $0x309] sm:$0xff]
  %v6269 = vld [vmem:[%s4859 + $0x319] sm:$0xff]
  %v6270 = vld [vmem:[%s4859 + $0x321] sm:$0xff]
  %6335 = vrot.lane.b32.xlu0 %v6207, 32
  %v6336 = vpop.permute.xlu0 %6335
  %6337 = vrot.lane.b32.xlu0 %v6208, 32
  %v6338 = vpop.permute.xlu0 %6337
  %6339 = vrot.lane.b32.xlu0 %v6209, 32
  %v6340 = vpop.permute.xlu0 %6339
  %6341 = vrot.lane.b32.xlu0 %v6210, 32
  %v6342 = vpop.permute.xlu0 %6341
  %6343 = vrot.lane.b32.xlu0 %v6211, 32
  %v6344 = vpop.permute.xlu0 %6343
  %6345 = vrot.lane.b32.xlu0 %v6212, 32
  %v6346 = vpop.permute.xlu0 %6345
  %6347 = vrot.lane.b32.xlu0 %v6213, 32
  %v6348 = vpop.permute.xlu0 %6347
  %6349 = vrot.lane.b32.xlu0 %v6214, 32
  %v6350 = vpop.permute.xlu0 %6349
  %6351 = vrot.lane.b32.xlu0 %v6215, 32
  %v6352 = vpop.permute.xlu0 %6351
  %6353 = vrot.lane.b32.xlu0 %v6216, 32
  %v6354 = vpop.permute.xlu0 %6353
  %6355 = vrot.lane.b32.xlu0 %v6217, 32
  %v6356 = vpop.permute.xlu0 %6355
  %6357 = vrot.lane.b32.xlu0 %v6218, 32
  %v6358 = vpop.permute.xlu0 %6357
  %6359 = vrot.lane.b32.xlu0 %v6219, 32
  %v6360 = vpop.permute.xlu0 %6359
  %6361 = vrot.lane.b32.xlu0 %v6220, 32
  %v6362 = vpop.permute.xlu0 %6361
  %6363 = vrot.lane.b32.xlu0 %v6221, 32
  %v6364 = vpop.permute.xlu0 %6363
  %6365 = vrot.lane.b32.xlu0 %v6222, 32
  %v6366 = vpop.permute.xlu0 %6365
  %6367 = vrot.lane.b32.xlu0 %v6223, 32
  %v6368 = vpop.permute.xlu0 %6367
  %6369 = vrot.lane.b32.xlu0 %v6224, 32
  %v6370 = vpop.permute.xlu0 %6369
  %6371 = vrot.lane.b32.xlu0 %v6225, 32
  %v6372 = vpop.permute.xlu0 %6371
  %6373 = vrot.lane.b32.xlu0 %v6226, 32
  %v6374 = vpop.permute.xlu0 %6373
  %6375 = vrot.lane.b32.xlu0 %v6227, 32
  %v6376 = vpop.permute.xlu0 %6375
  %6377 = vrot.lane.b32.xlu0 %v6228, 32
  %v6378 = vpop.permute.xlu0 %6377
  %6379 = vrot.lane.b32.xlu0 %v6229, 32
  %v6380 = vpop.permute.xlu0 %6379
  %6381 = vrot.lane.b32.xlu0 %v6230, 32
  %v6382 = vpop.permute.xlu0 %6381
  %6383 = vrot.lane.b32.xlu0 %v6231, 32
  %v6384 = vpop.permute.xlu0 %6383
  %6385 = vrot.lane.b32.xlu0 %v6232, 32
  %v6386 = vpop.permute.xlu0 %6385
  %6387 = vrot.lane.b32.xlu0 %v6233, 32
  %v6388 = vpop.permute.xlu0 %6387
  %6389 = vrot.lane.b32.xlu0 %v6234, 32
  %v6390 = vpop.permute.xlu0 %6389
  %6391 = vrot.lane.b32.xlu0 %v6235, 32
  %v6392 = vpop.permute.xlu0 %6391
  %6393 = vrot.lane.b32.xlu0 %v6236, 32
  %v6394 = vpop.permute.xlu0 %6393
  %6395 = vrot.lane.b32.xlu0 %v6237, 32
  %v6396 = vpop.permute.xlu0 %6395
  %6397 = vrot.lane.b32.xlu0 %v6238, 32
  %v6398 = vpop.permute.xlu0 %6397
  %6399 = vrot.lane.b32.xlu0 %v6239, 32
  %v6400 = vpop.permute.xlu0 %6399
  %6401 = vrot.lane.b32.xlu0 %v6240, 32
  %v6402 = vpop.permute.xlu0 %6401
  %6403 = vrot.lane.b32.xlu0 %v6241, 32
  %v6404 = vpop.permute.xlu0 %6403
  %6405 = vrot.lane.b32.xlu0 %v6242, 32
  %v6406 = vpop.permute.xlu0 %6405
  %6407 = vrot.lane.b32.xlu0 %v6243, 32
  %v6408 = vpop.permute.xlu0 %6407
  %6409 = vrot.lane.b32.xlu0 %v6244, 32
  %v6410 = vpop.permute.xlu0 %6409
  %6411 = vrot.lane.b32.xlu0 %v6245, 32
  %v6412 = vpop.permute.xlu0 %6411
  %6413 = vrot.lane.b32.xlu0 %v6246, 32
  %v6414 = vpop.permute.xlu0 %6413
  %6415 = vrot.lane.b32.xlu0 %v6247, 32
  %v6416 = vpop.permute.xlu0 %6415
  %6417 = vrot.lane.b32.xlu0 %v6248, 32
  %v6418 = vpop.permute.xlu0 %6417
  %6419 = vrot.lane.b32.xlu0 %v6249, 32
  %v6420 = vpop.permute.xlu0 %6419
  %6421 = vrot.lane.b32.xlu0 %v6250, 32
  %v6422 = vpop.permute.xlu0 %6421
  %6423 = vrot.lane.b32.xlu0 %v6251, 32
  %v6424 = vpop.permute.xlu0 %6423
  %6425 = vrot.lane.b32.xlu0 %v6252, 32
  %v6426 = vpop.permute.xlu0 %6425
  %6427 = vrot.lane.b32.xlu0 %v6253, 32
  %v6428 = vpop.permute.xlu0 %6427
  %6429 = vrot.lane.b32.xlu0 %v6254, 32
  %v6430 = vpop.permute.xlu0 %6429
  %6431 = vrot.lane.b32.xlu0 %v6255, 32
  %v6432 = vpop.permute.xlu0 %6431
  %6433 = vrot.lane.b32.xlu0 %v6256, 32
  %v6434 = vpop.permute.xlu0 %6433
  %6435 = vrot.lane.b32.xlu0 %v6257, 32
  %v6436 = vpop.permute.xlu0 %6435
  %6437 = vrot.lane.b32.xlu0 %v6258, 32
  %v6438 = vpop.permute.xlu0 %6437
  %6439 = vrot.lane.b32.xlu0 %v6259, 32
  %v6440 = vpop.permute.xlu0 %6439
  %6441 = vrot.lane.b32.xlu0 %v6260, 32
  %v6442 = vpop.permute.xlu0 %6441
  %6443 = vrot.lane.b32.xlu0 %v6261, 32
  %v6444 = vpop.permute.xlu0 %6443
  %6445 = vrot.lane.b32.xlu0 %v6262, 32
  %v6446 = vpop.permute.xlu0 %6445
  %6447 = vrot.lane.b32.xlu0 %v6263, 32
  %v6448 = vpop.permute.xlu0 %6447
  %6449 = vrot.lane.b32.xlu0 %v6264, 32
  %v6450 = vpop.permute.xlu0 %6449
  %6451 = vrot.lane.b32.xlu0 %v6265, 32
  %v6452 = vpop.permute.xlu0 %6451
  %6453 = vrot.lane.b32.xlu0 %v6266, 32
  %v6454 = vpop.permute.xlu0 %6453
  %6455 = vrot.lane.b32.xlu0 %v6267, 32
  %v6456 = vpop.permute.xlu0 %6455
  %6457 = vrot.lane.b32.xlu0 %v6268, 32
  %v6458 = vpop.permute.xlu0 %6457
  %6459 = vrot.lane.b32.xlu0 %v6269, 32
  %v6460 = vpop.permute.xlu0 %6459
  %6461 = vrot.lane.b32.xlu0 %v6270, 32
  %v6462 = vpop.permute.xlu0 %6461
  %vm6527 = vcmask 326912
  %6528 = vst.msk [vmem:[#allocation4] sm:$0xff] %vm6527, %v6336
  %6529 = vst.msk [vmem:[#allocation4 + $0x8] sm:$0xff] %vm6527, %v6338
  %6530 = vst.msk [vmem:[#allocation4 + $0x10] sm:$0xff] %vm6527, %v6340
  %6531 = vst.msk [vmem:[#allocation4 + $0x18] sm:$0xff] %vm6527, %v6342
  %6532 = vst.msk [vmem:[#allocation4 + $0x20] sm:$0xff] %vm6527, %v6344
  %6533 = vst.msk [vmem:[#allocation4 + $0x28] sm:$0xff] %vm6527, %v6346
  %6534 = vst.msk [vmem:[#allocation4 + $0x30] sm:$0xff] %vm6527, %v6348
  %6535 = vst.msk [vmem:[#allocation4 + $0x38] sm:$0xff] %vm6527, %v6350
  %6536 = vst.msk [vmem:[#allocation4 + $0x40] sm:$0xff] %vm6527, %v6352
  %6537 = vst.msk [vmem:[#allocation4 + $0x48] sm:$0xff] %vm6527, %v6354
  %6538 = vst.msk [vmem:[#allocation4 + $0x50] sm:$0xff] %vm6527, %v6356
  %6539 = vst.msk [vmem:[#allocation4 + $0x58] sm:$0xff] %vm6527, %v6358
  %6540 = vst.msk [vmem:[#allocation4 + $0x60] sm:$0xff] %vm6527, %v6360
  %6541 = vst.msk [vmem:[#allocation4 + $0x68] sm:$0xff] %vm6527, %v6362
  %6542 = vst.msk [vmem:[#allocation4 + $0x70] sm:$0xff] %vm6527, %v6364
  %6543 = vst.msk [vmem:[#allocation4 + $0x78] sm:$0xff] %vm6527, %v6366
  %6544 = vst.msk [vmem:[#allocation4 + $0x80] sm:$0xff] %vm6527, %v6368
  %6545 = vst.msk [vmem:[#allocation4 + $0x88] sm:$0xff] %vm6527, %v6370
  %6546 = vst.msk [vmem:[#allocation4 + $0x90] sm:$0xff] %vm6527, %v6372
  %6547 = vst.msk [vmem:[#allocation4 + $0x98] sm:$0xff] %vm6527, %v6374
  %6548 = vst.msk [vmem:[#allocation4 + $0xa0] sm:$0xff] %vm6527, %v6376
  %6549 = vst.msk [vmem:[#allocation4 + $0xa8] sm:$0xff] %vm6527, %v6378
  %6550 = vst.msk [vmem:[#allocation4 + $0xb0] sm:$0xff] %vm6527, %v6380
  %6551 = vst.msk [vmem:[#allocation4 + $0xb8] sm:$0xff] %vm6527, %v6382
  %6552 = vst.msk [vmem:[#allocation4 + $0xc0] sm:$0xff] %vm6527, %v6384
  %6553 = vst.msk [vmem:[#allocation4 + $0xc8] sm:$0xff] %vm6527, %v6386
  %6554 = vst.msk [vmem:[#allocation4 + $0xd0] sm:$0xff] %vm6527, %v6388
  %6555 = vst.msk [vmem:[#allocation4 + $0xd8] sm:$0xff] %vm6527, %v6390
  %6556 = vst.msk [vmem:[#allocation4 + $0xe0] sm:$0xff] %vm6527, %v6392
  %6557 = vst.msk [vmem:[#allocation4 + $0xe8] sm:$0xff] %vm6527, %v6394
  %6558 = vst.msk [vmem:[#allocation4 + $0xf0] sm:$0xff] %vm6527, %v6396
  %6559 = vst.msk [vmem:[#allocation4 + $0xf8] sm:$0xff] %vm6527, %v6398
  %6560 = vst.msk [vmem:[#allocation4 + $0x100] sm:$0xff] %vm6527, %v6400
  %6561 = vst.msk [vmem:[#allocation4 + $0x108] sm:$0xff] %vm6527, %v6402
  %6562 = vst.msk [vmem:[#allocation4 + $0x110] sm:$0xff] %vm6527, %v6404
  %6563 = vst.msk [vmem:[#allocation4 + $0x118] sm:$0xff] %vm6527, %v6406
  %6564 = vst.msk [vmem:[#allocation4 + $0x120] sm:$0xff] %vm6527, %v6408
  %6565 = vst.msk [vmem:[#allocation4 + $0x128] sm:$0xff] %vm6527, %v6410
  %6566 = vst.msk [vmem:[#allocation4 + $0x130] sm:$0xff] %vm6527, %v6412
  %6567 = vst.msk [vmem:[#allocation4 + $0x138] sm:$0xff] %vm6527, %v6414
  %6568 = vst.msk [vmem:[#allocation4 + $0x140] sm:$0xff] %vm6527, %v6416
  %6569 = vst.msk [vmem:[#allocation4 + $0x148] sm:$0xff] %vm6527, %v6418
  %6570 = vst.msk [vmem:[#allocation4 + $0x150] sm:$0xff] %vm6527, %v6420
  %6571 = vst.msk [vmem:[#allocation4 + $0x158] sm:$0xff] %vm6527, %v6422
  %6572 = vst.msk [vmem:[#allocation4 + $0x160] sm:$0xff] %vm6527, %v6424
  %6573 = vst.msk [vmem:[#allocation4 + $0x168] sm:$0xff] %vm6527, %v6426
  %6574 = vst.msk [vmem:[#allocation4 + $0x170] sm:$0xff] %vm6527, %v6428
  %6575 = vst.msk [vmem:[#allocation4 + $0x178] sm:$0xff] %vm6527, %v6430
  %6576 = vst.msk [vmem:[#allocation4 + $0x180] sm:$0xff] %vm6527, %v6432
  %6577 = vst.msk [vmem:[#allocation4 + $0x188] sm:$0xff] %vm6527, %v6434
  %6578 = vst.msk [vmem:[#allocation4 + $0x190] sm:$0xff] %vm6527, %v6436
  %6579 = vst.msk [vmem:[#allocation4 + $0x198] sm:$0xff] %vm6527, %v6438
  %6580 = vst.msk [vmem:[#allocation4 + $0x1a0] sm:$0xff] %vm6527, %v6440
  %6581 = vst.msk [vmem:[#allocation4 + $0x1a8] sm:$0xff] %vm6527, %v6442
  %6582 = vst.msk [vmem:[#allocation4 + $0x1b0] sm:$0xff] %vm6527, %v6444
  %6583 = vst.msk [vmem:[#allocation4 + $0x1b8] sm:$0xff] %vm6527, %v6446
  %6584 = vst.msk [vmem:[#allocation4 + $0x1c0] sm:$0xff] %vm6527, %v6448
  %6585 = vst.msk [vmem:[#allocation4 + $0x1c8] sm:$0xff] %vm6527, %v6450
  %6586 = vst.msk [vmem:[#allocation4 + $0x1d0] sm:$0xff] %vm6527, %v6452
  %6587 = vst.msk [vmem:[#allocation4 + $0x1d8] sm:$0xff] %vm6527, %v6454
  %6588 = vst.msk [vmem:[#allocation4 + $0x1e0] sm:$0xff] %vm6527, %v6456
  %6589 = vst.msk [vmem:[#allocation4 + $0x1e8] sm:$0xff] %vm6527, %v6458
  %6590 = vst.msk [vmem:[#allocation4 + $0x1f0] sm:$0xff] %vm6527, %v6460
  %6591 = vst.msk [vmem:[#allocation4 + $0x1f8] sm:$0xff] %vm6527, %v6462
  %v6592 = vld [vmem:[%s4859 + $0x2] sm:$0xff]
  %v6593 = vld [vmem:[%s4859 + $0xa] sm:$0xff]
  %v6594 = vld [vmem:[%s4859 + $0x1a] sm:$0xff]
  %v6595 = vld [vmem:[%s4859 + $0x22] sm:$0xff]
  %v6596 = vld [vmem:[%s4859 + $0x32] sm:$0xff]
  %v6597 = vld [vmem:[%s4859 + $0x3a] sm:$0xff]
  %v6598 = vld [vmem:[%s4859 + $0x4a] sm:$0xff]
  %v6599 = vld [vmem:[%s4859 + $0x52] sm:$0xff]
  %v6600 = vld [vmem:[%s4859 + $0x62] sm:$0xff]
  %v6601 = vld [vmem:[%s4859 + $0x6a] sm:$0xff]
  %v6602 = vld [vmem:[%s4859 + $0x7a] sm:$0xff]
  %v6603 = vld [vmem:[%s4859 + $0x82] sm:$0xff]
  %v6604 = vld [vmem:[%s4859 + $0x92] sm:$0xff]
  %v6605 = vld [vmem:[%s4859 + $0x9a] sm:$0xff]
  %v6606 = vld [vmem:[%s4859 + $0xaa] sm:$0xff]
  %v6607 = vld [vmem:[%s4859 + $0xb2] sm:$0xff]
  %v6608 = vld [vmem:[%s4859 + $0xc2] sm:$0xff]
  %v6609 = vld [vmem:[%s4859 + $0xca] sm:$0xff]
  %v6610 = vld [vmem:[%s4859 + $0xda] sm:$0xff]
  %v6611 = vld [vmem:[%s4859 + $0xe2] sm:$0xff]
  %v6612 = vld [vmem:[%s4859 + $0xf2] sm:$0xff]
  %v6613 = vld [vmem:[%s4859 + $0xfa] sm:$0xff]
  %v6614 = vld [vmem:[%s4859 + $0x10a] sm:$0xff]
  %v6615 = vld [vmem:[%s4859 + $0x112] sm:$0xff]
  %v6616 = vld [vmem:[%s4859 + $0x122] sm:$0xff]
  %v6617 = vld [vmem:[%s4859 + $0x12a] sm:$0xff]
  %v6618 = vld [vmem:[%s4859 + $0x13a] sm:$0xff]
  %v6619 = vld [vmem:[%s4859 + $0x142] sm:$0xff]
  %v6620 = vld [vmem:[%s4859 + $0x152] sm:$0xff]
  %v6621 = vld [vmem:[%s4859 + $0x15a] sm:$0xff]
  %v6622 = vld [vmem:[%s4859 + $0x16a] sm:$0xff]
  %v6623 = vld [vmem:[%s4859 + $0x172] sm:$0xff]
  %v6624 = vld [vmem:[%s4859 + $0x1b2] sm:$0xff]
  %v6625 = vld [vmem:[%s4859 + $0x1ba] sm:$0xff]
  %v6626 = vld [vmem:[%s4859 + $0x1ca] sm:$0xff]
  %v6627 = vld [vmem:[%s4859 + $0x1d2] sm:$0xff]
  %v6628 = vld [vmem:[%s4859 + $0x1e2] sm:$0xff]
  %v6629 = vld [vmem:[%s4859 + $0x1ea] sm:$0xff]
  %v6630 = vld [vmem:[%s4859 + $0x1fa] sm:$0xff]
  %v6631 = vld [vmem:[%s4859 + $0x202] sm:$0xff]
  %v6632 = vld [vmem:[%s4859 + $0x212] sm:$0xff]
  %v6633 = vld [vmem:[%s4859 + $0x21a] sm:$0xff]
  %v6634 = vld [vmem:[%s4859 + $0x22a] sm:$0xff]
  %v6635 = vld [vmem:[%s4859 + $0x232] sm:$0xff]
  %v6636 = vld [vmem:[%s4859 + $0x242] sm:$0xff]
  %v6637 = vld [vmem:[%s4859 + $0x24a] sm:$0xff]
  %v6638 = vld [vmem:[%s4859 + $0x25a] sm:$0xff]
  %v6639 = vld [vmem:[%s4859 + $0x262] sm:$0xff]
  %v6640 = vld [vmem:[%s4859 + $0x272] sm:$0xff]
  %v6641 = vld [vmem:[%s4859 + $0x27a] sm:$0xff]
  %v6642 = vld [vmem:[%s4859 + $0x28a] sm:$0xff]
  %v6643 = vld [vmem:[%s4859 + $0x292] sm:$0xff]
  %v6644 = vld [vmem:[%s4859 + $0x2a2] sm:$0xff]
  %v6645 = vld [vmem:[%s4859 + $0x2aa] sm:$0xff]
  %v6646 = vld [vmem:[%s4859 + $0x2ba] sm:$0xff]
  %v6647 = vld [vmem:[%s4859 + $0x2c2] sm:$0xff]
  %v6648 = vld [vmem:[%s4859 + $0x2d2] sm:$0xff]
  %v6649 = vld [vmem:[%s4859 + $0x2da] sm:$0xff]
  %v6650 = vld [vmem:[%s4859 + $0x2ea] sm:$0xff]
  %v6651 = vld [vmem:[%s4859 + $0x2f2] sm:$0xff]
  %v6652 = vld [vmem:[%s4859 + $0x302] sm:$0xff]
  %v6653 = vld [vmem:[%s4859 + $0x30a] sm:$0xff]
  %v6654 = vld [vmem:[%s4859 + $0x31a] sm:$0xff]
  %v6655 = vld [vmem:[%s4859 + $0x322] sm:$0xff]
  %6720 = vrot.lane.b32.xlu0 %v6592, 40
  %v6721 = vpop.permute.xlu0 %6720
  %6722 = vrot.lane.b32.xlu0 %v6593, 40
  %v6723 = vpop.permute.xlu0 %6722
  %6724 = vrot.lane.b32.xlu0 %v6594, 40
  %v6725 = vpop.permute.xlu0 %6724
  %6726 = vrot.lane.b32.xlu0 %v6595, 40
  %v6727 = vpop.permute.xlu0 %6726
  %6728 = vrot.lane.b32.xlu0 %v6596, 40
  %v6729 = vpop.permute.xlu0 %6728
  %6730 = vrot.lane.b32.xlu0 %v6597, 40
  %v6731 = vpop.permute.xlu0 %6730
  %6732 = vrot.lane.b32.xlu0 %v6598, 40
  %v6733 = vpop.permute.xlu0 %6732
  %6734 = vrot.lane.b32.xlu0 %v6599, 40
  %v6735 = vpop.permute.xlu0 %6734
  %6736 = vrot.lane.b32.xlu0 %v6600, 40
  %v6737 = vpop.permute.xlu0 %6736
  %6738 = vrot.lane.b32.xlu0 %v6601, 40
  %v6739 = vpop.permute.xlu0 %6738
  %6740 = vrot.lane.b32.xlu0 %v6602, 40
  %v6741 = vpop.permute.xlu0 %6740
  %6742 = vrot.lane.b32.xlu0 %v6603, 40
  %v6743 = vpop.permute.xlu0 %6742
  %6744 = vrot.lane.b32.xlu0 %v6604, 40
  %v6745 = vpop.permute.xlu0 %6744
  %6746 = vrot.lane.b32.xlu0 %v6605, 40
  %v6747 = vpop.permute.xlu0 %6746
  %6748 = vrot.lane.b32.xlu0 %v6606, 40
  %v6749 = vpop.permute.xlu0 %6748
  %6750 = vrot.lane.b32.xlu0 %v6607, 40
  %v6751 = vpop.permute.xlu0 %6750
  %6752 = vrot.lane.b32.xlu0 %v6608, 40
  %v6753 = vpop.permute.xlu0 %6752
  %6754 = vrot.lane.b32.xlu0 %v6609, 40
  %v6755 = vpop.permute.xlu0 %6754
  %6756 = vrot.lane.b32.xlu0 %v6610, 40
  %v6757 = vpop.permute.xlu0 %6756
  %6758 = vrot.lane.b32.xlu0 %v6611, 40
  %v6759 = vpop.permute.xlu0 %6758
  %6760 = vrot.lane.b32.xlu0 %v6612, 40
  %v6761 = vpop.permute.xlu0 %6760
  %6762 = vrot.lane.b32.xlu0 %v6613, 40
  %v6763 = vpop.permute.xlu0 %6762
  %6764 = vrot.lane.b32.xlu0 %v6614, 40
  %v6765 = vpop.permute.xlu0 %6764
  %6766 = vrot.lane.b32.xlu0 %v6615, 40
  %v6767 = vpop.permute.xlu0 %6766
  %6768 = vrot.lane.b32.xlu0 %v6616, 40
  %v6769 = vpop.permute.xlu0 %6768
  %6770 = vrot.lane.b32.xlu0 %v6617, 40
  %v6771 = vpop.permute.xlu0 %6770
  %6772 = vrot.lane.b32.xlu0 %v6618, 40
  %v6773 = vpop.permute.xlu0 %6772
  %6774 = vrot.lane.b32.xlu0 %v6619, 40
  %v6775 = vpop.permute.xlu0 %6774
  %6776 = vrot.lane.b32.xlu0 %v6620, 40
  %v6777 = vpop.permute.xlu0 %6776
  %6778 = vrot.lane.b32.xlu0 %v6621, 40
  %v6779 = vpop.permute.xlu0 %6778
  %6780 = vrot.lane.b32.xlu0 %v6622, 40
  %v6781 = vpop.permute.xlu0 %6780
  %6782 = vrot.lane.b32.xlu0 %v6623, 40
  %v6783 = vpop.permute.xlu0 %6782
  %6784 = vrot.lane.b32.xlu0 %v6624, 40
  %v6785 = vpop.permute.xlu0 %6784
  %6786 = vrot.lane.b32.xlu0 %v6625, 40
  %v6787 = vpop.permute.xlu0 %6786
  %6788 = vrot.lane.b32.xlu0 %v6626, 40
  %v6789 = vpop.permute.xlu0 %6788
  %6790 = vrot.lane.b32.xlu0 %v6627, 40
  %v6791 = vpop.permute.xlu0 %6790
  %6792 = vrot.lane.b32.xlu0 %v6628, 40
  %v6793 = vpop.permute.xlu0 %6792
  %6794 = vrot.lane.b32.xlu0 %v6629, 40
  %v6795 = vpop.permute.xlu0 %6794
  %6796 = vrot.lane.b32.xlu0 %v6630, 40
  %v6797 = vpop.permute.xlu0 %6796
  %6798 = vrot.lane.b32.xlu0 %v6631, 40
  %v6799 = vpop.permute.xlu0 %6798
  %6800 = vrot.lane.b32.xlu0 %v6632, 40
  %v6801 = vpop.permute.xlu0 %6800
  %6802 = vrot.lane.b32.xlu0 %v6633, 40
  %v6803 = vpop.permute.xlu0 %6802
  %6804 = vrot.lane.b32.xlu0 %v6634, 40
  %v6805 = vpop.permute.xlu0 %6804
  %6806 = vrot.lane.b32.xlu0 %v6635, 40
  %v6807 = vpop.permute.xlu0 %6806
  %6808 = vrot.lane.b32.xlu0 %v6636, 40
  %v6809 = vpop.permute.xlu0 %6808
  %6810 = vrot.lane.b32.xlu0 %v6637, 40
  %v6811 = vpop.permute.xlu0 %6810
  %6812 = vrot.lane.b32.xlu0 %v6638, 40
  %v6813 = vpop.permute.xlu0 %6812
  %6814 = vrot.lane.b32.xlu0 %v6639, 40
  %v6815 = vpop.permute.xlu0 %6814
  %6816 = vrot.lane.b32.xlu0 %v6640, 40
  %v6817 = vpop.permute.xlu0 %6816
  %6818 = vrot.lane.b32.xlu0 %v6641, 40
  %v6819 = vpop.permute.xlu0 %6818
  %6820 = vrot.lane.b32.xlu0 %v6642, 40
  %v6821 = vpop.permute.xlu0 %6820
  %6822 = vrot.lane.b32.xlu0 %v6643, 40
  %v6823 = vpop.permute.xlu0 %6822
  %6824 = vrot.lane.b32.xlu0 %v6644, 40
  %v6825 = vpop.permute.xlu0 %6824
  %6826 = vrot.lane.b32.xlu0 %v6645, 40
  %v6827 = vpop.permute.xlu0 %6826
  %6828 = vrot.lane.b32.xlu0 %v6646, 40
  %v6829 = vpop.permute.xlu0 %6828
  %6830 = vrot.lane.b32.xlu0 %v6647, 40
  %v6831 = vpop.permute.xlu0 %6830
  %6832 = vrot.lane.b32.xlu0 %v6648, 40
  %v6833 = vpop.permute.xlu0 %6832
  %6834 = vrot.lane.b32.xlu0 %v6649, 40
  %v6835 = vpop.permute.xlu0 %6834
  %6836 = vrot.lane.b32.xlu0 %v6650, 40
  %v6837 = vpop.permute.xlu0 %6836
  %6838 = vrot.lane.b32.xlu0 %v6651, 40
  %v6839 = vpop.permute.xlu0 %6838
  %6840 = vrot.lane.b32.xlu0 %v6652, 40
  %v6841 = vpop.permute.xlu0 %6840
  %6842 = vrot.lane.b32.xlu0 %v6653, 40
  %v6843 = vpop.permute.xlu0 %6842
  %6844 = vrot.lane.b32.xlu0 %v6654, 40
  %v6845 = vpop.permute.xlu0 %6844
  %6846 = vrot.lane.b32.xlu0 %v6655, 40
  %v6847 = vpop.permute.xlu0 %6846
  %vm6912 = vcmask 392512
  %6913 = vst.msk [vmem:[#allocation4] sm:$0xff] %vm6912, %v6721
  %6914 = vst.msk [vmem:[#allocation4 + $0x8] sm:$0xff] %vm6912, %v6723
  %6915 = vst.msk [vmem:[#allocation4 + $0x10] sm:$0xff] %vm6912, %v6725
  %6916 = vst.msk [vmem:[#allocation4 + $0x18] sm:$0xff] %vm6912, %v6727
  %6917 = vst.msk [vmem:[#allocation4 + $0x20] sm:$0xff] %vm6912, %v6729
  %6918 = vst.msk [vmem:[#allocation4 + $0x28] sm:$0xff] %vm6912, %v6731
  %6919 = vst.msk [vmem:[#allocation4 + $0x30] sm:$0xff] %vm6912, %v6733
  %6920 = vst.msk [vmem:[#allocation4 + $0x38] sm:$0xff] %vm6912, %v6735
  %6921 = vst.msk [vmem:[#allocation4 + $0x40] sm:$0xff] %vm6912, %v6737
  %6922 = vst.msk [vmem:[#allocation4 + $0x48] sm:$0xff] %vm6912, %v6739
  %6923 = vst.msk [vmem:[#allocation4 + $0x50] sm:$0xff] %vm6912, %v6741
  %6924 = vst.msk [vmem:[#allocation4 + $0x58] sm:$0xff] %vm6912, %v6743
  %6925 = vst.msk [vmem:[#allocation4 + $0x60] sm:$0xff] %vm6912, %v6745
  %6926 = vst.msk [vmem:[#allocation4 + $0x68] sm:$0xff] %vm6912, %v6747
  %6927 = vst.msk [vmem:[#allocation4 + $0x70] sm:$0xff] %vm6912, %v6749
  %6928 = vst.msk [vmem:[#allocation4 + $0x78] sm:$0xff] %vm6912, %v6751
  %6929 = vst.msk [vmem:[#allocation4 + $0x80] sm:$0xff] %vm6912, %v6753
  %6930 = vst.msk [vmem:[#allocation4 + $0x88] sm:$0xff] %vm6912, %v6755
  %6931 = vst.msk [vmem:[#allocation4 + $0x90] sm:$0xff] %vm6912, %v6757
  %6932 = vst.msk [vmem:[#allocation4 + $0x98] sm:$0xff] %vm6912, %v6759
  %6933 = vst.msk [vmem:[#allocation4 + $0xa0] sm:$0xff] %vm6912, %v6761
  %6934 = vst.msk [vmem:[#allocation4 + $0xa8] sm:$0xff] %vm6912, %v6763
  %6935 = vst.msk [vmem:[#allocation4 + $0xb0] sm:$0xff] %vm6912, %v6765
  %6936 = vst.msk [vmem:[#allocation4 + $0xb8] sm:$0xff] %vm6912, %v6767
  %6937 = vst.msk [vmem:[#allocation4 + $0xc0] sm:$0xff] %vm6912, %v6769
  %6938 = vst.msk [vmem:[#allocation4 + $0xc8] sm:$0xff] %vm6912, %v6771
  %6939 = vst.msk [vmem:[#allocation4 + $0xd0] sm:$0xff] %vm6912, %v6773
  %6940 = vst.msk [vmem:[#allocation4 + $0xd8] sm:$0xff] %vm6912, %v6775
  %6941 = vst.msk [vmem:[#allocation4 + $0xe0] sm:$0xff] %vm6912, %v6777
  %6942 = vst.msk [vmem:[#allocation4 + $0xe8] sm:$0xff] %vm6912, %v6779
  %6943 = vst.msk [vmem:[#allocation4 + $0xf0] sm:$0xff] %vm6912, %v6781
  %6944 = vst.msk [vmem:[#allocation4 + $0xf8] sm:$0xff] %vm6912, %v6783
  %6945 = vst.msk [vmem:[#allocation4 + $0x100] sm:$0xff] %vm6912, %v6785
  %6946 = vst.msk [vmem:[#allocation4 + $0x108] sm:$0xff] %vm6912, %v6787
  %6947 = vst.msk [vmem:[#allocation4 + $0x110] sm:$0xff] %vm6912, %v6789
  %6948 = vst.msk [vmem:[#allocation4 + $0x118] sm:$0xff] %vm6912, %v6791
  %6949 = vst.msk [vmem:[#allocation4 + $0x120] sm:$0xff] %vm6912, %v6793
  %6950 = vst.msk [vmem:[#allocation4 + $0x128] sm:$0xff] %vm6912, %v6795
  %6951 = vst.msk [vmem:[#allocation4 + $0x130] sm:$0xff] %vm6912, %v6797
  %6952 = vst.msk [vmem:[#allocation4 + $0x138] sm:$0xff] %vm6912, %v6799
  %6953 = vst.msk [vmem:[#allocation4 + $0x140] sm:$0xff] %vm6912, %v6801
  %6954 = vst.msk [vmem:[#allocation4 + $0x148] sm:$0xff] %vm6912, %v6803
  %6955 = vst.msk [vmem:[#allocation4 + $0x150] sm:$0xff] %vm6912, %v6805
  %6956 = vst.msk [vmem:[#allocation4 + $0x158] sm:$0xff] %vm6912, %v6807
  %6957 = vst.msk [vmem:[#allocation4 + $0x160] sm:$0xff] %vm6912, %v6809
  %6958 = vst.msk [vmem:[#allocation4 + $0x168] sm:$0xff] %vm6912, %v6811
  %6959 = vst.msk [vmem:[#allocation4 + $0x170] sm:$0xff] %vm6912, %v6813
  %6960 = vst.msk [vmem:[#allocation4 + $0x178] sm:$0xff] %vm6912, %v6815
  %6961 = vst.msk [vmem:[#allocation4 + $0x180] sm:$0xff] %vm6912, %v6817
  %6962 = vst.msk [vmem:[#allocation4 + $0x188] sm:$0xff] %vm6912, %v6819
  %6963 = vst.msk [vmem:[#allocation4 + $0x190] sm:$0xff] %vm6912, %v6821
  %6964 = vst.msk [vmem:[#allocation4 + $0x198] sm:$0xff] %vm6912, %v6823
  %6965 = vst.msk [vmem:[#allocation4 + $0x1a0] sm:$0xff] %vm6912, %v6825
  %6966 = vst.msk [vmem:[#allocation4 + $0x1a8] sm:$0xff] %vm6912, %v6827
  %6967 = vst.msk [vmem:[#allocation4 + $0x1b0] sm:$0xff] %vm6912, %v6829
  %6968 = vst.msk [vmem:[#allocation4 + $0x1b8] sm:$0xff] %vm6912, %v6831
  %6969 = vst.msk [vmem:[#allocation4 + $0x1c0] sm:$0xff] %vm6912, %v6833
  %6970 = vst.msk [vmem:[#allocation4 + $0x1c8] sm:$0xff] %vm6912, %v6835
  %6971 = vst.msk [vmem:[#allocation4 + $0x1d0] sm:$0xff] %vm6912, %v6837
  %6972 = vst.msk [vmem:[#allocation4 + $0x1d8] sm:$0xff] %vm6912, %v6839
  %6973 = vst.msk [vmem:[#allocation4 + $0x1e0] sm:$0xff] %vm6912, %v6841
  %6974 = vst.msk [vmem:[#allocation4 + $0x1e8] sm:$0xff] %vm6912, %v6843
  %6975 = vst.msk [vmem:[#allocation4 + $0x1f0] sm:$0xff] %vm6912, %v6845
  %6976 = vst.msk [vmem:[#allocation4 + $0x1f8] sm:$0xff] %vm6912, %v6847
  %s6977 = scalar_lea.vmem [#allocation3], 48
  %v6978 = vld [vmem:[%s6977] sm:$0xff]
  %v6979 = vld [vmem:[%s6977 + $0x8] sm:$0xff]
  %v6980 = vld [vmem:[%s6977 + $0x18] sm:$0xff]
  %v6981 = vld [vmem:[%s6977 + $0x20] sm:$0xff]
  %v6982 = vld [vmem:[%s6977 + $0x30] sm:$0xff]
  %v6983 = vld [vmem:[%s6977 + $0x38] sm:$0xff]
  %v6984 = vld [vmem:[%s6977 + $0x48] sm:$0xff]
  %v6985 = vld [vmem:[%s6977 + $0x50] sm:$0xff]
  %v6986 = vld [vmem:[%s6977 + $0x60] sm:$0xff]
  %v6987 = vld [vmem:[%s6977 + $0x68] sm:$0xff]
  %v6988 = vld [vmem:[%s6977 + $0x78] sm:$0xff]
  %v6989 = vld [vmem:[%s6977 + $0x80] sm:$0xff]
  %v6990 = vld [vmem:[%s6977 + $0x90] sm:$0xff]
  %v6991 = vld [vmem:[%s6977 + $0x98] sm:$0xff]
  %v6992 = vld [vmem:[%s6977 + $0xa8] sm:$0xff]
  %v6993 = vld [vmem:[%s6977 + $0xb0] sm:$0xff]
  %v6994 = vld [vmem:[%s6977 + $0xc0] sm:$0xff]
  %v6995 = vld [vmem:[%s6977 + $0xc8] sm:$0xff]
  %v6996 = vld [vmem:[%s6977 + $0xd8] sm:$0xff]
  %v6997 = vld [vmem:[%s6977 + $0xe0] sm:$0xff]
  %v6998 = vld [vmem:[%s6977 + $0xf0] sm:$0xff]
  %v6999 = vld [vmem:[%s6977 + $0xf8] sm:$0xff]
  %v7000 = vld [vmem:[%s6977 + $0x108] sm:$0xff]
  %v7001 = vld [vmem:[%s6977 + $0x110] sm:$0xff]
  %v7002 = vld [vmem:[%s6977 + $0x120] sm:$0xff]
  %v7003 = vld [vmem:[%s6977 + $0x128] sm:$0xff]
  %v7004 = vld [vmem:[%s6977 + $0x138] sm:$0xff]
  %v7005 = vld [vmem:[%s6977 + $0x140] sm:$0xff]
  %v7006 = vld [vmem:[%s6977 + $0x150] sm:$0xff]
  %v7007 = vld [vmem:[%s6977 + $0x158] sm:$0xff]
  %v7008 = vld [vmem:[%s6977 + $0x168] sm:$0xff]
  %v7009 = vld [vmem:[%s6977 + $0x170] sm:$0xff]
  %v7010 = vld [vmem:[%s6977 + $0x1b0] sm:$0xff]
  %v7011 = vld [vmem:[%s6977 + $0x1b8] sm:$0xff]
  %v7012 = vld [vmem:[%s6977 + $0x1c8] sm:$0xff]
  %v7013 = vld [vmem:[%s6977 + $0x1d0] sm:$0xff]
  %v7014 = vld [vmem:[%s6977 + $0x1e0] sm:$0xff]
  %v7015 = vld [vmem:[%s6977 + $0x1e8] sm:$0xff]
  %v7016 = vld [vmem:[%s6977 + $0x1f8] sm:$0xff]
  %v7017 = vld [vmem:[%s6977 + $0x200] sm:$0xff]
  %v7018 = vld [vmem:[%s6977 + $0x210] sm:$0xff]
  %v7019 = vld [vmem:[%s6977 + $0x218] sm:$0xff]
  %v7020 = vld [vmem:[%s6977 + $0x228] sm:$0xff]
  %v7021 = vld [vmem:[%s6977 + $0x230] sm:$0xff]
  %v7022 = vld [vmem:[%s6977 + $0x240] sm:$0xff]
  %v7023 = vld [vmem:[%s6977 + $0x248] sm:$0xff]
  %v7024 = vld [vmem:[%s6977 + $0x258] sm:$0xff]
  %v7025 = vld [vmem:[%s6977 + $0x260] sm:$0xff]
  %v7026 = vld [vmem:[%s6977 + $0x270] sm:$0xff]
  %v7027 = vld [vmem:[%s6977 + $0x278] sm:$0xff]
  %v7028 = vld [vmem:[%s6977 + $0x288] sm:$0xff]
  %v7029 = vld [vmem:[%s6977 + $0x290] sm:$0xff]
  %v7030 = vld [vmem:[%s6977 + $0x2a0] sm:$0xff]
  %v7031 = vld [vmem:[%s6977 + $0x2a8] sm:$0xff]
  %v7032 = vld [vmem:[%s6977 + $0x2b8] sm:$0xff]
  %v7033 = vld [vmem:[%s6977 + $0x2c0] sm:$0xff]
  %v7034 = vld [vmem:[%s6977 + $0x2d0] sm:$0xff]
  %v7035 = vld [vmem:[%s6977 + $0x2d8] sm:$0xff]
  %v7036 = vld [vmem:[%s6977 + $0x2e8] sm:$0xff]
  %v7037 = vld [vmem:[%s6977 + $0x2f0] sm:$0xff]
  %v7038 = vld [vmem:[%s6977 + $0x300] sm:$0xff]
  %v7039 = vld [vmem:[%s6977 + $0x308] sm:$0xff]
  %v7040 = vld [vmem:[%s6977 + $0x318] sm:$0xff]
  %v7041 = vld [vmem:[%s6977 + $0x320] sm:$0xff]
  %7106 = vrot.lane.b32.xlu0 %v6978, 48
  %v7107 = vpop.permute.xlu0 %7106
  %7108 = vrot.lane.b32.xlu0 %v6979, 48
  %v7109 = vpop.permute.xlu0 %7108
  %7110 = vrot.lane.b32.xlu0 %v6980, 48
  %v7111 = vpop.permute.xlu0 %7110
  %7112 = vrot.lane.b32.xlu0 %v6981, 48
  %v7113 = vpop.permute.xlu0 %7112
  %7114 = vrot.lane.b32.xlu0 %v6982, 48
  %v7115 = vpop.permute.xlu0 %7114
  %7116 = vrot.lane.b32.xlu0 %v6983, 48
  %v7117 = vpop.permute.xlu0 %7116
  %7118 = vrot.lane.b32.xlu0 %v6984, 48
  %v7119 = vpop.permute.xlu0 %7118
  %7120 = vrot.lane.b32.xlu0 %v6985, 48
  %v7121 = vpop.permute.xlu0 %7120
  %7122 = vrot.lane.b32.xlu0 %v6986, 48
  %v7123 = vpop.permute.xlu0 %7122
  %7124 = vrot.lane.b32.xlu0 %v6987, 48
  %v7125 = vpop.permute.xlu0 %7124
  %7126 = vrot.lane.b32.xlu0 %v6988, 48
  %v7127 = vpop.permute.xlu0 %7126
  %7128 = vrot.lane.b32.xlu0 %v6989, 48
  %v7129 = vpop.permute.xlu0 %7128
  %7130 = vrot.lane.b32.xlu0 %v6990, 48
  %v7131 = vpop.permute.xlu0 %7130
  %7132 = vrot.lane.b32.xlu0 %v6991, 48
  %v7133 = vpop.permute.xlu0 %7132
  %7134 = vrot.lane.b32.xlu0 %v6992, 48
  %v7135 = vpop.permute.xlu0 %7134
  %7136 = vrot.lane.b32.xlu0 %v6993, 48
  %v7137 = vpop.permute.xlu0 %7136
  %7138 = vrot.lane.b32.xlu0 %v6994, 48
  %v7139 = vpop.permute.xlu0 %7138
  %7140 = vrot.lane.b32.xlu0 %v6995, 48
  %v7141 = vpop.permute.xlu0 %7140
  %7142 = vrot.lane.b32.xlu0 %v6996, 48
  %v7143 = vpop.permute.xlu0 %7142
  %7144 = vrot.lane.b32.xlu0 %v6997, 48
  %v7145 = vpop.permute.xlu0 %7144
  %7146 = vrot.lane.b32.xlu0 %v6998, 48
  %v7147 = vpop.permute.xlu0 %7146
  %7148 = vrot.lane.b32.xlu0 %v6999, 48
  %v7149 = vpop.permute.xlu0 %7148
  %7150 = vrot.lane.b32.xlu0 %v7000, 48
  %v7151 = vpop.permute.xlu0 %7150
  %7152 = vrot.lane.b32.xlu0 %v7001, 48
  %v7153 = vpop.permute.xlu0 %7152
  %7154 = vrot.lane.b32.xlu0 %v7002, 48
  %v7155 = vpop.permute.xlu0 %7154
  %7156 = vrot.lane.b32.xlu0 %v7003, 48
  %v7157 = vpop.permute.xlu0 %7156
  %7158 = vrot.lane.b32.xlu0 %v7004, 48
  %v7159 = vpop.permute.xlu0 %7158
  %7160 = vrot.lane.b32.xlu0 %v7005, 48
  %v7161 = vpop.permute.xlu0 %7160
  %7162 = vrot.lane.b32.xlu0 %v7006, 48
  %v7163 = vpop.permute.xlu0 %7162
  %7164 = vrot.lane.b32.xlu0 %v7007, 48
  %v7165 = vpop.permute.xlu0 %7164
  %7166 = vrot.lane.b32.xlu0 %v7008, 48
  %v7167 = vpop.permute.xlu0 %7166
  %7168 = vrot.lane.b32.xlu0 %v7009, 48
  %v7169 = vpop.permute.xlu0 %7168
  %7170 = vrot.lane.b32.xlu0 %v7010, 48
  %v7171 = vpop.permute.xlu0 %7170
  %7172 = vrot.lane.b32.xlu0 %v7011, 48
  %v7173 = vpop.permute.xlu0 %7172
  %7174 = vrot.lane.b32.xlu0 %v7012, 48
  %v7175 = vpop.permute.xlu0 %7174
  %7176 = vrot.lane.b32.xlu0 %v7013, 48
  %v7177 = vpop.permute.xlu0 %7176
  %7178 = vrot.lane.b32.xlu0 %v7014, 48
  %v7179 = vpop.permute.xlu0 %7178
  %7180 = vrot.lane.b32.xlu0 %v7015, 48
  %v7181 = vpop.permute.xlu0 %7180
  %7182 = vrot.lane.b32.xlu0 %v7016, 48
  %v7183 = vpop.permute.xlu0 %7182
  %7184 = vrot.lane.b32.xlu0 %v7017, 48
  %v7185 = vpop.permute.xlu0 %7184
  %7186 = vrot.lane.b32.xlu0 %v7018, 48
  %v7187 = vpop.permute.xlu0 %7186
  %7188 = vrot.lane.b32.xlu0 %v7019, 48
  %v7189 = vpop.permute.xlu0 %7188
  %7190 = vrot.lane.b32.xlu0 %v7020, 48
  %v7191 = vpop.permute.xlu0 %7190
  %7192 = vrot.lane.b32.xlu0 %v7021, 48
  %v7193 = vpop.permute.xlu0 %7192
  %7194 = vrot.lane.b32.xlu0 %v7022, 48
  %v7195 = vpop.permute.xlu0 %7194
  %7196 = vrot.lane.b32.xlu0 %v7023, 48
  %v7197 = vpop.permute.xlu0 %7196
  %7198 = vrot.lane.b32.xlu0 %v7024, 48
  %v7199 = vpop.permute.xlu0 %7198
  %7200 = vrot.lane.b32.xlu0 %v7025, 48
  %v7201 = vpop.permute.xlu0 %7200
  %7202 = vrot.lane.b32.xlu0 %v7026, 48
  %v7203 = vpop.permute.xlu0 %7202
  %7204 = vrot.lane.b32.xlu0 %v7027, 48
  %v7205 = vpop.permute.xlu0 %7204
  %7206 = vrot.lane.b32.xlu0 %v7028, 48
  %v7207 = vpop.permute.xlu0 %7206
  %7208 = vrot.lane.b32.xlu0 %v7029, 48
  %v7209 = vpop.permute.xlu0 %7208
  %7210 = vrot.lane.b32.xlu0 %v7030, 48
  %v7211 = vpop.permute.xlu0 %7210
  %7212 = vrot.lane.b32.xlu0 %v7031, 48
  %v7213 = vpop.permute.xlu0 %7212
  %7214 = vrot.lane.b32.xlu0 %v7032, 48
  %v7215 = vpop.permute.xlu0 %7214
  %7216 = vrot.lane.b32.xlu0 %v7033, 48
  %v7217 = vpop.permute.xlu0 %7216
  %7218 = vrot.lane.b32.xlu0 %v7034, 48
  %v7219 = vpop.permute.xlu0 %7218
  %7220 = vrot.lane.b32.xlu0 %v7035, 48
  %v7221 = vpop.permute.xlu0 %7220
  %7222 = vrot.lane.b32.xlu0 %v7036, 48
  %v7223 = vpop.permute.xlu0 %7222
  %7224 = vrot.lane.b32.xlu0 %v7037, 48
  %v7225 = vpop.permute.xlu0 %7224
  %7226 = vrot.lane.b32.xlu0 %v7038, 48
  %v7227 = vpop.permute.xlu0 %7226
  %7228 = vrot.lane.b32.xlu0 %v7039, 48
  %v7229 = vpop.permute.xlu0 %7228
  %7230 = vrot.lane.b32.xlu0 %v7040, 48
  %v7231 = vpop.permute.xlu0 %7230
  %7232 = vrot.lane.b32.xlu0 %v7041, 48
  %v7233 = vpop.permute.xlu0 %7232
  %vm7298 = vcmask 458112
  %7299 = vst.msk [vmem:[#allocation4] sm:$0xff] %vm7298, %v7107
  %7300 = vst.msk [vmem:[#allocation4 + $0x8] sm:$0xff] %vm7298, %v7109
  %7301 = vst.msk [vmem:[#allocation4 + $0x10] sm:$0xff] %vm7298, %v7111
  %7302 = vst.msk [vmem:[#allocation4 + $0x18] sm:$0xff] %vm7298, %v7113
  %7303 = vst.msk [vmem:[#allocation4 + $0x20] sm:$0xff] %vm7298, %v7115
  %7304 = vst.msk [vmem:[#allocation4 + $0x28] sm:$0xff] %vm7298, %v7117
  %7305 = vst.msk [vmem:[#allocation4 + $0x30] sm:$0xff] %vm7298, %v7119
  %7306 = vst.msk [vmem:[#allocation4 + $0x38] sm:$0xff] %vm7298, %v7121
  %7307 = vst.msk [vmem:[#allocation4 + $0x40] sm:$0xff] %vm7298, %v7123
  %7308 = vst.msk [vmem:[#allocation4 + $0x48] sm:$0xff] %vm7298, %v7125
  %7309 = vst.msk [vmem:[#allocation4 + $0x50] sm:$0xff] %vm7298, %v7127
  %7310 = vst.msk [vmem:[#allocation4 + $0x58] sm:$0xff] %vm7298, %v7129
  %7311 = vst.msk [vmem:[#allocation4 + $0x60] sm:$0xff] %vm7298, %v7131
  %7312 = vst.msk [vmem:[#allocation4 + $0x68] sm:$0xff] %vm7298, %v7133
  %7313 = vst.msk [vmem:[#allocation4 + $0x70] sm:$0xff] %vm7298, %v7135
  %7314 = vst.msk [vmem:[#allocation4 + $0x78] sm:$0xff] %vm7298, %v7137
  %7315 = vst.msk [vmem:[#allocation4 + $0x80] sm:$0xff] %vm7298, %v7139
  %7316 = vst.msk [vmem:[#allocation4 + $0x88] sm:$0xff] %vm7298, %v7141
  %7317 = vst.msk [vmem:[#allocation4 + $0x90] sm:$0xff] %vm7298, %v7143
  %7318 = vst.msk [vmem:[#allocation4 + $0x98] sm:$0xff] %vm7298, %v7145
  %7319 = vst.msk [vmem:[#allocation4 + $0xa0] sm:$0xff] %vm7298, %v7147
  %7320 = vst.msk [vmem:[#allocation4 + $0xa8] sm:$0xff] %vm7298, %v7149
  %7321 = vst.msk [vmem:[#allocation4 + $0xb0] sm:$0xff] %vm7298, %v7151
  %7322 = vst.msk [vmem:[#allocation4 + $0xb8] sm:$0xff] %vm7298, %v7153
  %7323 = vst.msk [vmem:[#allocation4 + $0xc0] sm:$0xff] %vm7298, %v7155
  %7324 = vst.msk [vmem:[#allocation4 + $0xc8] sm:$0xff] %vm7298, %v7157
  %7325 = vst.msk [vmem:[#allocation4 + $0xd0] sm:$0xff] %vm7298, %v7159
  %7326 = vst.msk [vmem:[#allocation4 + $0xd8] sm:$0xff] %vm7298, %v7161
  %7327 = vst.msk [vmem:[#allocation4 + $0xe0] sm:$0xff] %vm7298, %v7163
  %7328 = vst.msk [vmem:[#allocation4 + $0xe8] sm:$0xff] %vm7298, %v7165
  %7329 = vst.msk [vmem:[#allocation4 + $0xf0] sm:$0xff] %vm7298, %v7167
  %7330 = vst.msk [vmem:[#allocation4 + $0xf8] sm:$0xff] %vm7298, %v7169
  %7331 = vst.msk [vmem:[#allocation4 + $0x100] sm:$0xff] %vm7298, %v7171
  %7332 = vst.msk [vmem:[#allocation4 + $0x108] sm:$0xff] %vm7298, %v7173
  %7333 = vst.msk [vmem:[#allocation4 + $0x110] sm:$0xff] %vm7298, %v7175
  %7334 = vst.msk [vmem:[#allocation4 + $0x118] sm:$0xff] %vm7298, %v7177
  %7335 = vst.msk [vmem:[#allocation4 + $0x120] sm:$0xff] %vm7298, %v7179
  %7336 = vst.msk [vmem:[#allocation4 + $0x128] sm:$0xff] %vm7298, %v7181
  %7337 = vst.msk [vmem:[#allocation4 + $0x130] sm:$0xff] %vm7298, %v7183
  %7338 = vst.msk [vmem:[#allocation4 + $0x138] sm:$0xff] %vm7298, %v7185
  %7339 = vst.msk [vmem:[#allocation4 + $0x140] sm:$0xff] %vm7298, %v7187
  %7340 = vst.msk [vmem:[#allocation4 + $0x148] sm:$0xff] %vm7298, %v7189
  %7341 = vst.msk [vmem:[#allocation4 + $0x150] sm:$0xff] %vm7298, %v7191
  %7342 = vst.msk [vmem:[#allocation4 + $0x158] sm:$0xff] %vm7298, %v7193
  %7343 = vst.msk [vmem:[#allocation4 + $0x160] sm:$0xff] %vm7298, %v7195
  %7344 = vst.msk [vmem:[#allocation4 + $0x168] sm:$0xff] %vm7298, %v7197
  %7345 = vst.msk [vmem:[#allocation4 + $0x170] sm:$0xff] %vm7298, %v7199
  %7346 = vst.msk [vmem:[#allocation4 + $0x178] sm:$0xff] %vm7298, %v7201
  %7347 = vst.msk [vmem:[#allocation4 + $0x180] sm:$0xff] %vm7298, %v7203
  %7348 = vst.msk [vmem:[#allocation4 + $0x188] sm:$0xff] %vm7298, %v7205
  %7349 = vst.msk [vmem:[#allocation4 + $0x190] sm:$0xff] %vm7298, %v7207
  %7350 = vst.msk [vmem:[#allocation4 + $0x198] sm:$0xff] %vm7298, %v7209
  %7351 = vst.msk [vmem:[#allocation4 + $0x1a0] sm:$0xff] %vm7298, %v7211
  %7352 = vst.msk [vmem:[#allocation4 + $0x1a8] sm:$0xff] %vm7298, %v7213
  %7353 = vst.msk [vmem:[#allocation4 + $0x1b0] sm:$0xff] %vm7298, %v7215
  %7354 = vst.msk [vmem:[#allocation4 + $0x1b8] sm:$0xff] %vm7298, %v7217
  %7355 = vst.msk [vmem:[#allocation4 + $0x1c0] sm:$0xff] %vm7298, %v7219
  %7356 = vst.msk [vmem:[#allocation4 + $0x1c8] sm:$0xff] %vm7298, %v7221
  %7357 = vst.msk [vmem:[#allocation4 + $0x1d0] sm:$0xff] %vm7298, %v7223
  %7358 = vst.msk [vmem:[#allocation4 + $0x1d8] sm:$0xff] %vm7298, %v7225
  %7359 = vst.msk [vmem:[#allocation4 + $0x1e0] sm:$0xff] %vm7298, %v7227
  %7360 = vst.msk [vmem:[#allocation4 + $0x1e8] sm:$0xff] %vm7298, %v7229
  %7361 = vst.msk [vmem:[#allocation4 + $0x1f0] sm:$0xff] %vm7298, %v7231
  %7362 = vst.msk [vmem:[#allocation4 + $0x1f8] sm:$0xff] %vm7298, %v7233
  %v7363 = vld [vmem:[%s6977 + $0x1] sm:$0xff]
  %v7364 = vld [vmem:[%s6977 + $0x9] sm:$0xff]
  %v7365 = vld [vmem:[%s6977 + $0x19] sm:$0xff]
  %v7366 = vld [vmem:[%s6977 + $0x21] sm:$0xff]
  %v7367 = vld [vmem:[%s6977 + $0x31] sm:$0xff]
  %v7368 = vld [vmem:[%s6977 + $0x39] sm:$0xff]
  %v7369 = vld [vmem:[%s6977 + $0x49] sm:$0xff]
  %v7370 = vld [vmem:[%s6977 + $0x51] sm:$0xff]
  %v7371 = vld [vmem:[%s6977 + $0x61] sm:$0xff]
  %v7372 = vld [vmem:[%s6977 + $0x69] sm:$0xff]
  %v7373 = vld [vmem:[%s6977 + $0x79] sm:$0xff]
  %v7374 = vld [vmem:[%s6977 + $0x81] sm:$0xff]
  %v7375 = vld [vmem:[%s6977 + $0x91] sm:$0xff]
  %v7376 = vld [vmem:[%s6977 + $0x99] sm:$0xff]
  %v7377 = vld [vmem:[%s6977 + $0xa9] sm:$0xff]
  %v7378 = vld [vmem:[%s6977 + $0xb1] sm:$0xff]
  %v7379 = vld [vmem:[%s6977 + $0xc1] sm:$0xff]
  %v7380 = vld [vmem:[%s6977 + $0xc9] sm:$0xff]
  %v7381 = vld [vmem:[%s6977 + $0xd9] sm:$0xff]
  %v7382 = vld [vmem:[%s6977 + $0xe1] sm:$0xff]
  %v7383 = vld [vmem:[%s6977 + $0xf1] sm:$0xff]
  %v7384 = vld [vmem:[%s6977 + $0xf9] sm:$0xff]
  %v7385 = vld [vmem:[%s6977 + $0x109] sm:$0xff]
  %v7386 = vld [vmem:[%s6977 + $0x111] sm:$0xff]
  %v7387 = vld [vmem:[%s6977 + $0x121] sm:$0xff]
  %v7388 = vld [vmem:[%s6977 + $0x129] sm:$0xff]
  %v7389 = vld [vmem:[%s6977 + $0x139] sm:$0xff]
  %v7390 = vld [vmem:[%s6977 + $0x141] sm:$0xff]
  %v7391 = vld [vmem:[%s6977 + $0x151] sm:$0xff]
  %v7392 = vld [vmem:[%s6977 + $0x159] sm:$0xff]
  %v7393 = vld [vmem:[%s6977 + $0x169] sm:$0xff]
  %v7394 = vld [vmem:[%s6977 + $0x171] sm:$0xff]
  %v7395 = vld [vmem:[%s6977 + $0x1b1] sm:$0xff]
  %v7396 = vld [vmem:[%s6977 + $0x1b9] sm:$0xff]
  %v7397 = vld [vmem:[%s6977 + $0x1c9] sm:$0xff]
  %v7398 = vld [vmem:[%s6977 + $0x1d1] sm:$0xff]
  %v7399 = vld [vmem:[%s6977 + $0x1e1] sm:$0xff]
  %v7400 = vld [vmem:[%s6977 + $0x1e9] sm:$0xff]
  %v7401 = vld [vmem:[%s6977 + $0x1f9] sm:$0xff]
  %v7402 = vld [vmem:[%s6977 + $0x201] sm:$0xff]
  %v7403 = vld [vmem:[%s6977 + $0x211] sm:$0xff]
  %v7404 = vld [vmem:[%s6977 + $0x219] sm:$0xff]
  %v7405 = vld [vmem:[%s6977 + $0x229] sm:$0xff]
  %v7406 = vld [vmem:[%s6977 + $0x231] sm:$0xff]
  %v7407 = vld [vmem:[%s6977 + $0x241] sm:$0xff]
  %v7408 = vld [vmem:[%s6977 + $0x249] sm:$0xff]
  %v7409 = vld [vmem:[%s6977 + $0x259] sm:$0xff]
  %v7410 = vld [vmem:[%s6977 + $0x261] sm:$0xff]
  %v7411 = vld [vmem:[%s6977 + $0x271] sm:$0xff]
  %v7412 = vld [vmem:[%s6977 + $0x279] sm:$0xff]
  %v7413 = vld [vmem:[%s6977 + $0x289] sm:$0xff]
  %v7414 = vld [vmem:[%s6977 + $0x291] sm:$0xff]
  %v7415 = vld [vmem:[%s6977 + $0x2a1] sm:$0xff]
  %v7416 = vld [vmem:[%s6977 + $0x2a9] sm:$0xff]
  %v7417 = vld [vmem:[%s6977 + $0x2b9] sm:$0xff]
  %v7418 = vld [vmem:[%s6977 + $0x2c1] sm:$0xff]
  %v7419 = vld [vmem:[%s6977 + $0x2d1] sm:$0xff]
  %v7420 = vld [vmem:[%s6977 + $0x2d9] sm:$0xff]
  %v7421 = vld [vmem:[%s6977 + $0x2e9] sm:$0xff]
  %v7422 = vld [vmem:[%s6977 + $0x2f1] sm:$0xff]
  %v7423 = vld [vmem:[%s6977 + $0x301] sm:$0xff]
  %v7424 = vld [vmem:[%s6977 + $0x309] sm:$0xff]
  %v7425 = vld [vmem:[%s6977 + $0x319] sm:$0xff]
  %v7426 = vld [vmem:[%s6977 + $0x321] sm:$0xff]
  %7491 = vrot.lane.b32.xlu0 %v7363, 56
  %v7492 = vpop.permute.xlu0 %7491
  %7493 = vrot.lane.b32.xlu0 %v7364, 56
  %v7494 = vpop.permute.xlu0 %7493
  %7495 = vrot.lane.b32.xlu0 %v7365, 56
  %v7496 = vpop.permute.xlu0 %7495
  %7497 = vrot.lane.b32.xlu0 %v7366, 56
  %v7498 = vpop.permute.xlu0 %7497
  %7499 = vrot.lane.b32.xlu0 %v7367, 56
  %v7500 = vpop.permute.xlu0 %7499
  %7501 = vrot.lane.b32.xlu0 %v7368, 56
  %v7502 = vpop.permute.xlu0 %7501
  %7503 = vrot.lane.b32.xlu0 %v7369, 56
  %v7504 = vpop.permute.xlu0 %7503
  %7505 = vrot.lane.b32.xlu0 %v7370, 56
  %v7506 = vpop.permute.xlu0 %7505
  %7507 = vrot.lane.b32.xlu0 %v7371, 56
  %v7508 = vpop.permute.xlu0 %7507
  %7509 = vrot.lane.b32.xlu0 %v7372, 56
  %v7510 = vpop.permute.xlu0 %7509
  %7511 = vrot.lane.b32.xlu0 %v7373, 56
  %v7512 = vpop.permute.xlu0 %7511
  %7513 = vrot.lane.b32.xlu0 %v7374, 56
  %v7514 = vpop.permute.xlu0 %7513
  %7515 = vrot.lane.b32.xlu0 %v7375, 56
  %v7516 = vpop.permute.xlu0 %7515
  %7517 = vrot.lane.b32.xlu0 %v7376, 56
  %v7518 = vpop.permute.xlu0 %7517
  %7519 = vrot.lane.b32.xlu0 %v7377, 56
  %v7520 = vpop.permute.xlu0 %7519
  %7521 = vrot.lane.b32.xlu0 %v7378, 56
  %v7522 = vpop.permute.xlu0 %7521
  %7523 = vrot.lane.b32.xlu0 %v7379, 56
  %v7524 = vpop.permute.xlu0 %7523
  %7525 = vrot.lane.b32.xlu0 %v7380, 56
  %v7526 = vpop.permute.xlu0 %7525
  %7527 = vrot.lane.b32.xlu0 %v7381, 56
  %v7528 = vpop.permute.xlu0 %7527
  %7529 = vrot.lane.b32.xlu0 %v7382, 56
  %v7530 = vpop.permute.xlu0 %7529
  %7531 = vrot.lane.b32.xlu0 %v7383, 56
  %v7532 = vpop.permute.xlu0 %7531
  %7533 = vrot.lane.b32.xlu0 %v7384, 56
  %v7534 = vpop.permute.xlu0 %7533
  %7535 = vrot.lane.b32.xlu0 %v7385, 56
  %v7536 = vpop.permute.xlu0 %7535
  %7537 = vrot.lane.b32.xlu0 %v7386, 56
  %v7538 = vpop.permute.xlu0 %7537
  %7539 = vrot.lane.b32.xlu0 %v7387, 56
  %v7540 = vpop.permute.xlu0 %7539
  %7541 = vrot.lane.b32.xlu0 %v7388, 56
  %v7542 = vpop.permute.xlu0 %7541
  %7543 = vrot.lane.b32.xlu0 %v7389, 56
  %v7544 = vpop.permute.xlu0 %7543
  %7545 = vrot.lane.b32.xlu0 %v7390, 56
  %v7546 = vpop.permute.xlu0 %7545
  %7547 = vrot.lane.b32.xlu0 %v7391, 56
  %v7548 = vpop.permute.xlu0 %7547
  %7549 = vrot.lane.b32.xlu0 %v7392, 56
  %v7550 = vpop.permute.xlu0 %7549
  %7551 = vrot.lane.b32.xlu0 %v7393, 56
  %v7552 = vpop.permute.xlu0 %7551
  %7553 = vrot.lane.b32.xlu0 %v7394, 56
  %v7554 = vpop.permute.xlu0 %7553
  %7555 = vrot.lane.b32.xlu0 %v7395, 56
  %v7556 = vpop.permute.xlu0 %7555
  %7557 = vrot.lane.b32.xlu0 %v7396, 56
  %v7558 = vpop.permute.xlu0 %7557
  %7559 = vrot.lane.b32.xlu0 %v7397, 56
  %v7560 = vpop.permute.xlu0 %7559
  %7561 = vrot.lane.b32.xlu0 %v7398, 56
  %v7562 = vpop.permute.xlu0 %7561
  %7563 = vrot.lane.b32.xlu0 %v7399, 56
  %v7564 = vpop.permute.xlu0 %7563
  %7565 = vrot.lane.b32.xlu0 %v7400, 56
  %v7566 = vpop.permute.xlu0 %7565
  %7567 = vrot.lane.b32.xlu0 %v7401, 56
  %v7568 = vpop.permute.xlu0 %7567
  %7569 = vrot.lane.b32.xlu0 %v7402, 56
  %v7570 = vpop.permute.xlu0 %7569
  %7571 = vrot.lane.b32.xlu0 %v7403, 56
  %v7572 = vpop.permute.xlu0 %7571
  %7573 = vrot.lane.b32.xlu0 %v7404, 56
  %v7574 = vpop.permute.xlu0 %7573
  %7575 = vrot.lane.b32.xlu0 %v7405, 56
  %v7576 = vpop.permute.xlu0 %7575
  %7577 = vrot.lane.b32.xlu0 %v7406, 56
  %v7578 = vpop.permute.xlu0 %7577
  %7579 = vrot.lane.b32.xlu0 %v7407, 56
  %v7580 = vpop.permute.xlu0 %7579
  %7581 = vrot.lane.b32.xlu0 %v7408, 56
  %v7582 = vpop.permute.xlu0 %7581
  %7583 = vrot.lane.b32.xlu0 %v7409, 56
  %v7584 = vpop.permute.xlu0 %7583
  %7585 = vrot.lane.b32.xlu0 %v7410, 56
  %v7586 = vpop.permute.xlu0 %7585
  %7587 = vrot.lane.b32.xlu0 %v7411, 56
  %v7588 = vpop.permute.xlu0 %7587
  %7589 = vrot.lane.b32.xlu0 %v7412, 56
  %v7590 = vpop.permute.xlu0 %7589
  %7591 = vrot.lane.b32.xlu0 %v7413, 56
  %v7592 = vpop.permute.xlu0 %7591
  %7593 = vrot.lane.b32.xlu0 %v7414, 56
  %v7594 = vpop.permute.xlu0 %7593
  %7595 = vrot.lane.b32.xlu0 %v7415, 56
  %v7596 = vpop.permute.xlu0 %7595
  %7597 = vrot.lane.b32.xlu0 %v7416, 56
  %v7598 = vpop.permute.xlu0 %7597
  %7599 = vrot.lane.b32.xlu0 %v7417, 56
  %v7600 = vpop.permute.xlu0 %7599
  %7601 = vrot.lane.b32.xlu0 %v7418, 56
  %v7602 = vpop.permute.xlu0 %7601
  %7603 = vrot.lane.b32.xlu0 %v7419, 56
  %v7604 = vpop.permute.xlu0 %7603
  %7605 = vrot.lane.b32.xlu0 %v7420, 56
  %v7606 = vpop.permute.xlu0 %7605
  %7607 = vrot.lane.b32.xlu0 %v7421, 56
  %v7608 = vpop.permute.xlu0 %7607
  %7609 = vrot.lane.b32.xlu0 %v7422, 56
  %v7610 = vpop.permute.xlu0 %7609
  %7611 = vrot.lane.b32.xlu0 %v7423, 56
  %v7612 = vpop.permute.xlu0 %7611
  %7613 = vrot.lane.b32.xlu0 %v7424, 56
  %v7614 = vpop.permute.xlu0 %7613
  %7615 = vrot.lane.b32.xlu0 %v7425, 56
  %v7616 = vpop.permute.xlu0 %7615
  %7617 = vrot.lane.b32.xlu0 %v7426, 56
  %v7618 = vpop.permute.xlu0 %7617
  %vm7683 = vcmask 523712
  %7684 = vst.msk [vmem:[#allocation4] sm:$0xff] %vm7683, %v7492
  %7685 = vst.msk [vmem:[#allocation4 + $0x8] sm:$0xff] %vm7683, %v7494
  %7686 = vst.msk [vmem:[#allocation4 + $0x10] sm:$0xff] %vm7683, %v7496
  %7687 = vst.msk [vmem:[#allocation4 + $0x18] sm:$0xff] %vm7683, %v7498
  %7688 = vst.msk [vmem:[#allocation4 + $0x20] sm:$0xff] %vm7683, %v7500
  %7689 = vst.msk [vmem:[#allocation4 + $0x28] sm:$0xff] %vm7683, %v7502
  %7690 = vst.msk [vmem:[#allocation4 + $0x30] sm:$0xff] %vm7683, %v7504
  %7691 = vst.msk [vmem:[#allocation4 + $0x38] sm:$0xff] %vm7683, %v7506
  %7692 = vst.msk [vmem:[#allocation4 + $0x40] sm:$0xff] %vm7683, %v7508
  %7693 = vst.msk [vmem:[#allocation4 + $0x48] sm:$0xff] %vm7683, %v7510
  %7694 = vst.msk [vmem:[#allocation4 + $0x50] sm:$0xff] %vm7683, %v7512
  %7695 = vst.msk [vmem:[#allocation4 + $0x58] sm:$0xff] %vm7683, %v7514
  %7696 = vst.msk [vmem:[#allocation4 + $0x60] sm:$0xff] %vm7683, %v7516
  %7697 = vst.msk [vmem:[#allocation4 + $0x68] sm:$0xff] %vm7683, %v7518
  %7698 = vst.msk [vmem:[#allocation4 + $0x70] sm:$0xff] %vm7683, %v7520
  %7699 = vst.msk [vmem:[#allocation4 + $0x78] sm:$0xff] %vm7683, %v7522
  %7700 = vst.msk [vmem:[#allocation4 + $0x80] sm:$0xff] %vm7683, %v7524
  %7701 = vst.msk [vmem:[#allocation4 + $0x88] sm:$0xff] %vm7683, %v7526
  %7702 = vst.msk [vmem:[#allocation4 + $0x90] sm:$0xff] %vm7683, %v7528
  %7703 = vst.msk [vmem:[#allocation4 + $0x98] sm:$0xff] %vm7683, %v7530
  %7704 = vst.msk [vmem:[#allocation4 + $0xa0] sm:$0xff] %vm7683, %v7532
  %7705 = vst.msk [vmem:[#allocation4 + $0xa8] sm:$0xff] %vm7683, %v7534
  %7706 = vst.msk [vmem:[#allocation4 + $0xb0] sm:$0xff] %vm7683, %v7536
  %7707 = vst.msk [vmem:[#allocation4 + $0xb8] sm:$0xff] %vm7683, %v7538
  %7708 = vst.msk [vmem:[#allocation4 + $0xc0] sm:$0xff] %vm7683, %v7540
  %7709 = vst.msk [vmem:[#allocation4 + $0xc8] sm:$0xff] %vm7683, %v7542
  %7710 = vst.msk [vmem:[#allocation4 + $0xd0] sm:$0xff] %vm7683, %v7544
  %7711 = vst.msk [vmem:[#allocation4 + $0xd8] sm:$0xff] %vm7683, %v7546
  %7712 = vst.msk [vmem:[#allocation4 + $0xe0] sm:$0xff] %vm7683, %v7548
  %7713 = vst.msk [vmem:[#allocation4 + $0xe8] sm:$0xff] %vm7683, %v7550
  %7714 = vst.msk [vmem:[#allocation4 + $0xf0] sm:$0xff] %vm7683, %v7552
  %7715 = vst.msk [vmem:[#allocation4 + $0xf8] sm:$0xff] %vm7683, %v7554
  %7716 = vst.msk [vmem:[#allocation4 + $0x100] sm:$0xff] %vm7683, %v7556
  %7717 = vst.msk [vmem:[#allocation4 + $0x108] sm:$0xff] %vm7683, %v7558
  %7718 = vst.msk [vmem:[#allocation4 + $0x110] sm:$0xff] %vm7683, %v7560
  %7719 = vst.msk [vmem:[#allocation4 + $0x118] sm:$0xff] %vm7683, %v7562
  %7720 = vst.msk [vmem:[#allocation4 + $0x120] sm:$0xff] %vm7683, %v7564
  %7721 = vst.msk [vmem:[#allocation4 + $0x128] sm:$0xff] %vm7683, %v7566
  %7722 = vst.msk [vmem:[#allocation4 + $0x130] sm:$0xff] %vm7683, %v7568
  %7723 = vst.msk [vmem:[#allocation4 + $0x138] sm:$0xff] %vm7683, %v7570
  %7724 = vst.msk [vmem:[#allocation4 + $0x140] sm:$0xff] %vm7683, %v7572
  %7725 = vst.msk [vmem:[#allocation4 + $0x148] sm:$0xff] %vm7683, %v7574
  %7726 = vst.msk [vmem:[#allocation4 + $0x150] sm:$0xff] %vm7683, %v7576
  %7727 = vst.msk [vmem:[#allocation4 + $0x158] sm:$0xff] %vm7683, %v7578
  %7728 = vst.msk [vmem:[#allocation4 + $0x160] sm:$0xff] %vm7683, %v7580
  %7729 = vst.msk [vmem:[#allocation4 + $0x168] sm:$0xff] %vm7683, %v7582
  %7730 = vst.msk [vmem:[#allocation4 + $0x170] sm:$0xff] %vm7683, %v7584
  %7731 = vst.msk [vmem:[#allocation4 + $0x178] sm:$0xff] %vm7683, %v7586
  %7732 = vst.msk [vmem:[#allocation4 + $0x180] sm:$0xff] %vm7683, %v7588
  %7733 = vst.msk [vmem:[#allocation4 + $0x188] sm:$0xff] %vm7683, %v7590
  %7734 = vst.msk [vmem:[#allocation4 + $0x190] sm:$0xff] %vm7683, %v7592
  %7735 = vst.msk [vmem:[#allocation4 + $0x198] sm:$0xff] %vm7683, %v7594
  %7736 = vst.msk [vmem:[#allocation4 + $0x1a0] sm:$0xff] %vm7683, %v7596
  %7737 = vst.msk [vmem:[#allocation4 + $0x1a8] sm:$0xff] %vm7683, %v7598
  %7738 = vst.msk [vmem:[#allocation4 + $0x1b0] sm:$0xff] %vm7683, %v7600
  %7739 = vst.msk [vmem:[#allocation4 + $0x1b8] sm:$0xff] %vm7683, %v7602
  %7740 = vst.msk [vmem:[#allocation4 + $0x1c0] sm:$0xff] %vm7683, %v7604
  %7741 = vst.msk [vmem:[#allocation4 + $0x1c8] sm:$0xff] %vm7683, %v7606
  %7742 = vst.msk [vmem:[#allocation4 + $0x1d0] sm:$0xff] %vm7683, %v7608
  %7743 = vst.msk [vmem:[#allocation4 + $0x1d8] sm:$0xff] %vm7683, %v7610
  %7744 = vst.msk [vmem:[#allocation4 + $0x1e0] sm:$0xff] %vm7683, %v7612
  %7745 = vst.msk [vmem:[#allocation4 + $0x1e8] sm:$0xff] %vm7683, %v7614
  %7746 = vst.msk [vmem:[#allocation4 + $0x1f0] sm:$0xff] %vm7683, %v7616
  %7747 = vst.msk [vmem:[#allocation4 + $0x1f8] sm:$0xff] %vm7683, %v7618
  %v7748 = vld [vmem:[%s6977 + $0x2] sm:$0xff]
  %v7749 = vld [vmem:[%s6977 + $0xa] sm:$0xff]
  %v7750 = vld [vmem:[%s6977 + $0x1a] sm:$0xff]
  %v7751 = vld [vmem:[%s6977 + $0x22] sm:$0xff]
  %v7752 = vld [vmem:[%s6977 + $0x32] sm:$0xff]
  %v7753 = vld [vmem:[%s6977 + $0x3a] sm:$0xff]
  %v7754 = vld [vmem:[%s6977 + $0x4a] sm:$0xff]
  %v7755 = vld [vmem:[%s6977 + $0x52] sm:$0xff]
  %v7756 = vld [vmem:[%s6977 + $0x62] sm:$0xff]
  %v7757 = vld [vmem:[%s6977 + $0x6a] sm:$0xff]
  %v7758 = vld [vmem:[%s6977 + $0x7a] sm:$0xff]
  %v7759 = vld [vmem:[%s6977 + $0x82] sm:$0xff]
  %v7760 = vld [vmem:[%s6977 + $0x92] sm:$0xff]
  %v7761 = vld [vmem:[%s6977 + $0x9a] sm:$0xff]
  %v7762 = vld [vmem:[%s6977 + $0xaa] sm:$0xff]
  %v7763 = vld [vmem:[%s6977 + $0xb2] sm:$0xff]
  %v7764 = vld [vmem:[%s6977 + $0xc2] sm:$0xff]
  %v7765 = vld [vmem:[%s6977 + $0xca] sm:$0xff]
  %v7766 = vld [vmem:[%s6977 + $0xda] sm:$0xff]
  %v7767 = vld [vmem:[%s6977 + $0xe2] sm:$0xff]
  %v7768 = vld [vmem:[%s6977 + $0xf2] sm:$0xff]
  %v7769 = vld [vmem:[%s6977 + $0xfa] sm:$0xff]
  %v7770 = vld [vmem:[%s6977 + $0x10a] sm:$0xff]
  %v7771 = vld [vmem:[%s6977 + $0x112] sm:$0xff]
  %v7772 = vld [vmem:[%s6977 + $0x122] sm:$0xff]
  %v7773 = vld [vmem:[%s6977 + $0x12a] sm:$0xff]
  %v7774 = vld [vmem:[%s6977 + $0x13a] sm:$0xff]
  %v7775 = vld [vmem:[%s6977 + $0x142] sm:$0xff]
  %v7776 = vld [vmem:[%s6977 + $0x152] sm:$0xff]
  %v7777 = vld [vmem:[%s6977 + $0x15a] sm:$0xff]
  %v7778 = vld [vmem:[%s6977 + $0x16a] sm:$0xff]
  %v7779 = vld [vmem:[%s6977 + $0x172] sm:$0xff]
  %v7780 = vld [vmem:[%s6977 + $0x1b2] sm:$0xff]
  %v7781 = vld [vmem:[%s6977 + $0x1ba] sm:$0xff]
  %v7782 = vld [vmem:[%s6977 + $0x1ca] sm:$0xff]
  %v7783 = vld [vmem:[%s6977 + $0x1d2] sm:$0xff]
  %v7784 = vld [vmem:[%s6977 + $0x1e2] sm:$0xff]
  %v7785 = vld [vmem:[%s6977 + $0x1ea] sm:$0xff]
  %v7786 = vld [vmem:[%s6977 + $0x1fa] sm:$0xff]
  %v7787 = vld [vmem:[%s6977 + $0x202] sm:$0xff]
  %v7788 = vld [vmem:[%s6977 + $0x212] sm:$0xff]
  %v7789 = vld [vmem:[%s6977 + $0x21a] sm:$0xff]
  %v7790 = vld [vmem:[%s6977 + $0x22a] sm:$0xff]
  %v7791 = vld [vmem:[%s6977 + $0x232] sm:$0xff]
  %v7792 = vld [vmem:[%s6977 + $0x242] sm:$0xff]
  %v7793 = vld [vmem:[%s6977 + $0x24a] sm:$0xff]
  %v7794 = vld [vmem:[%s6977 + $0x25a] sm:$0xff]
  %v7795 = vld [vmem:[%s6977 + $0x262] sm:$0xff]
  %v7796 = vld [vmem:[%s6977 + $0x272] sm:$0xff]
  %v7797 = vld [vmem:[%s6977 + $0x27a] sm:$0xff]
  %v7798 = vld [vmem:[%s6977 + $0x28a] sm:$0xff]
  %v7799 = vld [vmem:[%s6977 + $0x292] sm:$0xff]
  %v7800 = vld [vmem:[%s6977 + $0x2a2] sm:$0xff]
  %v7801 = vld [vmem:[%s6977 + $0x2aa] sm:$0xff]
  %v7802 = vld [vmem:[%s6977 + $0x2ba] sm:$0xff]
  %v7803 = vld [vmem:[%s6977 + $0x2c2] sm:$0xff]
  %v7804 = vld [vmem:[%s6977 + $0x2d2] sm:$0xff]
  %v7805 = vld [vmem:[%s6977 + $0x2da] sm:$0xff]
  %v7806 = vld [vmem:[%s6977 + $0x2ea] sm:$0xff]
  %v7807 = vld [vmem:[%s6977 + $0x2f2] sm:$0xff]
  %v7808 = vld [vmem:[%s6977 + $0x302] sm:$0xff]
  %v7809 = vld [vmem:[%s6977 + $0x30a] sm:$0xff]
  %v7810 = vld [vmem:[%s6977 + $0x31a] sm:$0xff]
  %v7811 = vld [vmem:[%s6977 + $0x322] sm:$0xff]
  %7876 = vrot.lane.b32.xlu0 %v7748, 64
  %v7877 = vpop.permute.xlu0 %7876
  %7878 = vrot.lane.b32.xlu0 %v7749, 64
  %v7879 = vpop.permute.xlu0 %7878
  %7880 = vrot.lane.b32.xlu0 %v7750, 64
  %v7881 = vpop.permute.xlu0 %7880
  %7882 = vrot.lane.b32.xlu0 %v7751, 64
  %v7883 = vpop.permute.xlu0 %7882
  %7884 = vrot.lane.b32.xlu0 %v7752, 64
  %v7885 = vpop.permute.xlu0 %7884
  %7886 = vrot.lane.b32.xlu0 %v7753, 64
  %v7887 = vpop.permute.xlu0 %7886
  %7888 = vrot.lane.b32.xlu0 %v7754, 64
  %v7889 = vpop.permute.xlu0 %7888
  %7890 = vrot.lane.b32.xlu0 %v7755, 64
  %v7891 = vpop.permute.xlu0 %7890
  %7892 = vrot.lane.b32.xlu0 %v7756, 64
  %v7893 = vpop.permute.xlu0 %7892
  %7894 = vrot.lane.b32.xlu0 %v7757, 64
  %v7895 = vpop.permute.xlu0 %7894
  %7896 = vrot.lane.b32.xlu0 %v7758, 64
  %v7897 = vpop.permute.xlu0 %7896
  %7898 = vrot.lane.b32.xlu0 %v7759, 64
  %v7899 = vpop.permute.xlu0 %7898
  %7900 = vrot.lane.b32.xlu0 %v7760, 64
  %v7901 = vpop.permute.xlu0 %7900
  %7902 = vrot.lane.b32.xlu0 %v7761, 64
  %v7903 = vpop.permute.xlu0 %7902
  %7904 = vrot.lane.b32.xlu0 %v7762, 64
  %v7905 = vpop.permute.xlu0 %7904
  %7906 = vrot.lane.b32.xlu0 %v7763, 64
  %v7907 = vpop.permute.xlu0 %7906
  %7908 = vrot.lane.b32.xlu0 %v7764, 64
  %v7909 = vpop.permute.xlu0 %7908
  %7910 = vrot.lane.b32.xlu0 %v7765, 64
  %v7911 = vpop.permute.xlu0 %7910
  %7912 = vrot.lane.b32.xlu0 %v7766, 64
  %v7913 = vpop.permute.xlu0 %7912
  %7914 = vrot.lane.b32.xlu0 %v7767, 64
  %v7915 = vpop.permute.xlu0 %7914
  %7916 = vrot.lane.b32.xlu0 %v7768, 64
  %v7917 = vpop.permute.xlu0 %7916
  %7918 = vrot.lane.b32.xlu0 %v7769, 64
  %v7919 = vpop.permute.xlu0 %7918
  %7920 = vrot.lane.b32.xlu0 %v7770, 64
  %v7921 = vpop.permute.xlu0 %7920
  %7922 = vrot.lane.b32.xlu0 %v7771, 64
  %v7923 = vpop.permute.xlu0 %7922
  %7924 = vrot.lane.b32.xlu0 %v7772, 64
  %v7925 = vpop.permute.xlu0 %7924
  %7926 = vrot.lane.b32.xlu0 %v7773, 64
  %v7927 = vpop.permute.xlu0 %7926
  %7928 = vrot.lane.b32.xlu0 %v7774, 64
  %v7929 = vpop.permute.xlu0 %7928
  %7930 = vrot.lane.b32.xlu0 %v7775, 64
  %v7931 = vpop.permute.xlu0 %7930
  %7932 = vrot.lane.b32.xlu0 %v7776, 64
  %v7933 = vpop.permute.xlu0 %7932
  %7934 = vrot.lane.b32.xlu0 %v7777, 64
  %v7935 = vpop.permute.xlu0 %7934
  %7936 = vrot.lane.b32.xlu0 %v7778, 64
  %v7937 = vpop.permute.xlu0 %7936
  %7938 = vrot.lane.b32.xlu0 %v7779, 64
  %v7939 = vpop.permute.xlu0 %7938
  %7940 = vrot.lane.b32.xlu0 %v7780, 64
  %v7941 = vpop.permute.xlu0 %7940
  %7942 = vrot.lane.b32.xlu0 %v7781, 64
  %v7943 = vpop.permute.xlu0 %7942
  %7944 = vrot.lane.b32.xlu0 %v7782, 64
  %v7945 = vpop.permute.xlu0 %7944
  %7946 = vrot.lane.b32.xlu0 %v7783, 64
  %v7947 = vpop.permute.xlu0 %7946
  %7948 = vrot.lane.b32.xlu0 %v7784, 64
  %v7949 = vpop.permute.xlu0 %7948
  %7950 = vrot.lane.b32.xlu0 %v7785, 64
  %v7951 = vpop.permute.xlu0 %7950
  %7952 = vrot.lane.b32.xlu0 %v7786, 64
  %v7953 = vpop.permute.xlu0 %7952
  %7954 = vrot.lane.b32.xlu0 %v7787, 64
  %v7955 = vpop.permute.xlu0 %7954
  %7956 = vrot.lane.b32.xlu0 %v7788, 64
  %v7957 = vpop.permute.xlu0 %7956
  %7958 = vrot.lane.b32.xlu0 %v7789, 64
  %v7959 = vpop.permute.xlu0 %7958
  %7960 = vrot.lane.b32.xlu0 %v7790, 64
  %v7961 = vpop.permute.xlu0 %7960
  %7962 = vrot.lane.b32.xlu0 %v7791, 64
  %v7963 = vpop.permute.xlu0 %7962
  %7964 = vrot.lane.b32.xlu0 %v7792, 64
  %v7965 = vpop.permute.xlu0 %7964
  %7966 = vrot.lane.b32.xlu0 %v7793, 64
  %v7967 = vpop.permute.xlu0 %7966
  %7968 = vrot.lane.b32.xlu0 %v7794, 64
  %v7969 = vpop.permute.xlu0 %7968
  %7970 = vrot.lane.b32.xlu0 %v7795, 64
  %v7971 = vpop.permute.xlu0 %7970
  %7972 = vrot.lane.b32.xlu0 %v7796, 64
  %v7973 = vpop.permute.xlu0 %7972
  %7974 = vrot.lane.b32.xlu0 %v7797, 64
  %v7975 = vpop.permute.xlu0 %7974
  %7976 = vrot.lane.b32.xlu0 %v7798, 64
  %v7977 = vpop.permute.xlu0 %7976
  %7978 = vrot.lane.b32.xlu0 %v7799, 64
  %v7979 = vpop.permute.xlu0 %7978
  %7980 = vrot.lane.b32.xlu0 %v7800, 64
  %v7981 = vpop.permute.xlu0 %7980
  %7982 = vrot.lane.b32.xlu0 %v7801, 64
  %v7983 = vpop.permute.xlu0 %7982
  %7984 = vrot.lane.b32.xlu0 %v7802, 64
  %v7985 = vpop.permute.xlu0 %7984
  %7986 = vrot.lane.b32.xlu0 %v7803, 64
  %v7987 = vpop.permute.xlu0 %7986
  %7988 = vrot.lane.b32.xlu0 %v7804, 64
  %v7989 = vpop.permute.xlu0 %7988
  %7990 = vrot.lane.b32.xlu0 %v7805, 64
  %v7991 = vpop.permute.xlu0 %7990
  %7992 = vrot.lane.b32.xlu0 %v7806, 64
  %v7993 = vpop.permute.xlu0 %7992
  %7994 = vrot.lane.b32.xlu0 %v7807, 64
  %v7995 = vpop.permute.xlu0 %7994
  %7996 = vrot.lane.b32.xlu0 %v7808, 64
  %v7997 = vpop.permute.xlu0 %7996
  %7998 = vrot.lane.b32.xlu0 %v7809, 64
  %v7999 = vpop.permute.xlu0 %7998
  %8000 = vrot.lane.b32.xlu0 %v7810, 64
  %v8001 = vpop.permute.xlu0 %8000
  %8002 = vrot.lane.b32.xlu0 %v7811, 64
  %v8003 = vpop.permute.xlu0 %8002
  %vm8068 = vcmask 589312
  %8069 = vst.msk [vmem:[#allocation4] sm:$0xff] %vm8068, %v7877
  %8070 = vst.msk [vmem:[#allocation4 + $0x8] sm:$0xff] %vm8068, %v7879
  %8071 = vst.msk [vmem:[#allocation4 + $0x10] sm:$0xff] %vm8068, %v7881
  %8072 = vst.msk [vmem:[#allocation4 + $0x18] sm:$0xff] %vm8068, %v7883
  %8073 = vst.msk [vmem:[#allocation4 + $0x20] sm:$0xff] %vm8068, %v7885
  %8074 = vst.msk [vmem:[#allocation4 + $0x28] sm:$0xff] %vm8068, %v7887
  %8075 = vst.msk [vmem:[#allocation4 + $0x30] sm:$0xff] %vm8068, %v7889
  %8076 = vst.msk [vmem:[#allocation4 + $0x38] sm:$0xff] %vm8068, %v7891
  %8077 = vst.msk [vmem:[#allocation4 + $0x40] sm:$0xff] %vm8068, %v7893
  %8078 = vst.msk [vmem:[#allocation4 + $0x48] sm:$0xff] %vm8068, %v7895
  %8079 = vst.msk [vmem:[#allocation4 + $0x50] sm:$0xff] %vm8068, %v7897
  %8080 = vst.msk [vmem:[#allocation4 + $0x58] sm:$0xff] %vm8068, %v7899
  %8081 = vst.msk [vmem:[#allocation4 + $0x60] sm:$0xff] %vm8068, %v7901
  %8082 = vst.msk [vmem:[#allocation4 + $0x68] sm:$0xff] %vm8068, %v7903
  %8083 = vst.msk [vmem:[#allocation4 + $0x70] sm:$0xff] %vm8068, %v7905
  %8084 = vst.msk [vmem:[#allocation4 + $0x78] sm:$0xff] %vm8068, %v7907
  %8085 = vst.msk [vmem:[#allocation4 + $0x80] sm:$0xff] %vm8068, %v7909
  %8086 = vst.msk [vmem:[#allocation4 + $0x88] sm:$0xff] %vm8068, %v7911
  %8087 = vst.msk [vmem:[#allocation4 + $0x90] sm:$0xff] %vm8068, %v7913
  %8088 = vst.msk [vmem:[#allocation4 + $0x98] sm:$0xff] %vm8068, %v7915
  %8089 = vst.msk [vmem:[#allocation4 + $0xa0] sm:$0xff] %vm8068, %v7917
  %8090 = vst.msk [vmem:[#allocation4 + $0xa8] sm:$0xff] %vm8068, %v7919
  %8091 = vst.msk [vmem:[#allocation4 + $0xb0] sm:$0xff] %vm8068, %v7921
  %8092 = vst.msk [vmem:[#allocation4 + $0xb8] sm:$0xff] %vm8068, %v7923
  %8093 = vst.msk [vmem:[#allocation4 + $0xc0] sm:$0xff] %vm8068, %v7925
  %8094 = vst.msk [vmem:[#allocation4 + $0xc8] sm:$0xff] %vm8068, %v7927
  %8095 = vst.msk [vmem:[#allocation4 + $0xd0] sm:$0xff] %vm8068, %v7929
  %8096 = vst.msk [vmem:[#allocation4 + $0xd8] sm:$0xff] %vm8068, %v7931
  %8097 = vst.msk [vmem:[#allocation4 + $0xe0] sm:$0xff] %vm8068, %v7933
  %8098 = vst.msk [vmem:[#allocation4 + $0xe8] sm:$0xff] %vm8068, %v7935
  %8099 = vst.msk [vmem:[#allocation4 + $0xf0] sm:$0xff] %vm8068, %v7937
  %8100 = vst.msk [vmem:[#allocation4 + $0xf8] sm:$0xff] %vm8068, %v7939
  %8101 = vst.msk [vmem:[#allocation4 + $0x100] sm:$0xff] %vm8068, %v7941
  %8102 = vst.msk [vmem:[#allocation4 + $0x108] sm:$0xff] %vm8068, %v7943
  %8103 = vst.msk [vmem:[#allocation4 + $0x110] sm:$0xff] %vm8068, %v7945
  %8104 = vst.msk [vmem:[#allocation4 + $0x118] sm:$0xff] %vm8068, %v7947
  %8105 = vst.msk [vmem:[#allocation4 + $0x120] sm:$0xff] %vm8068, %v7949
  %8106 = vst.msk [vmem:[#allocation4 + $0x128] sm:$0xff] %vm8068, %v7951
  %8107 = vst.msk [vmem:[#allocation4 + $0x130] sm:$0xff] %vm8068, %v7953
  %8108 = vst.msk [vmem:[#allocation4 + $0x138] sm:$0xff] %vm8068, %v7955
  %8109 = vst.msk [vmem:[#allocation4 + $0x140] sm:$0xff] %vm8068, %v7957
  %8110 = vst.msk [vmem:[#allocation4 + $0x148] sm:$0xff] %vm8068, %v7959
  %8111 = vst.msk [vmem:[#allocation4 + $0x150] sm:$0xff] %vm8068, %v7961
  %8112 = vst.msk [vmem:[#allocation4 + $0x158] sm:$0xff] %vm8068, %v7963
  %8113 = vst.msk [vmem:[#allocation4 + $0x160] sm:$0xff] %vm8068, %v7965
  %8114 = vst.msk [vmem:[#allocation4 + $0x168] sm:$0xff] %vm8068, %v7967
  %8115 = vst.msk [vmem:[#allocation4 + $0x170] sm:$0xff] %vm8068, %v7969
  %8116 = vst.msk [vmem:[#allocation4 + $0x178] sm:$0xff] %vm8068, %v7971
  %8117 = vst.msk [vmem:[#allocation4 + $0x180] sm:$0xff] %vm8068, %v7973
  %8118 = vst.msk [vmem:[#allocation4 + $0x188] sm:$0xff] %vm8068, %v7975
  %8119 = vst.msk [vmem:[#allocation4 + $0x190] sm:$0xff] %vm8068, %v7977
  %8120 = vst.msk [vmem:[#allocation4 + $0x198] sm:$0xff] %vm8068, %v7979
  %8121 = vst.msk [vmem:[#allocation4 + $0x1a0] sm:$0xff] %vm8068, %v7981
  %8122 = vst.msk [vmem:[#allocation4 + $0x1a8] sm:$0xff] %vm8068, %v7983
  %8123 = vst.msk [vmem:[#allocation4 + $0x1b0] sm:$0xff] %vm8068, %v7985
  %8124 = vst.msk [vmem:[#allocation4 + $0x1b8] sm:$0xff] %vm8068, %v7987
  %8125 = vst.msk [vmem:[#allocation4 + $0x1c0] sm:$0xff] %vm8068, %v7989
  %8126 = vst.msk [vmem:[#allocation4 + $0x1c8] sm:$0xff] %vm8068, %v7991
  %8127 = vst.msk [vmem:[#allocation4 + $0x1d0] sm:$0xff] %vm8068, %v7993
  %8128 = vst.msk [vmem:[#allocation4 + $0x1d8] sm:$0xff] %vm8068, %v7995
  %8129 = vst.msk [vmem:[#allocation4 + $0x1e0] sm:$0xff] %vm8068, %v7997
  %8130 = vst.msk [vmem:[#allocation4 + $0x1e8] sm:$0xff] %vm8068, %v7999
  %8131 = vst.msk [vmem:[#allocation4 + $0x1f0] sm:$0xff] %vm8068, %v8001
  %8132 = vst.msk [vmem:[#allocation4 + $0x1f8] sm:$0xff] %vm8068, %v8003
  %v8133 = vld [vmem:[#allocation4] sm:$0xff]
  %v8134 = vld [vmem:[#allocation4 + $0x8] sm:$0xff]
  %v8135 = vld [vmem:[#allocation4 + $0x10] sm:$0xff]
  %v8136 = vld [vmem:[#allocation4 + $0x18] sm:$0xff]
  %v8137 = vld [vmem:[#allocation4 + $0x20] sm:$0xff]
  %v8138 = vld [vmem:[#allocation4 + $0x28] sm:$0xff]
  %v8139 = vld [vmem:[#allocation4 + $0x30] sm:$0xff]
  %v8140 = vld [vmem:[#allocation4 + $0x38] sm:$0xff]
  %v8141 = vld [vmem:[#allocation4 + $0x40] sm:$0xff]
  %v8142 = vld [vmem:[#allocation4 + $0x48] sm:$0xff]
  %v8143 = vld [vmem:[#allocation4 + $0x50] sm:$0xff]
  %v8144 = vld [vmem:[#allocation4 + $0x58] sm:$0xff]
  %v8145 = vld [vmem:[#allocation4 + $0x60] sm:$0xff]
  %v8146 = vld [vmem:[#allocation4 + $0x68] sm:$0xff]
  %v8147 = vld [vmem:[#allocation4 + $0x70] sm:$0xff]
  %v8148 = vld [vmem:[#allocation4 + $0x78] sm:$0xff]
  %v8149 = vld [vmem:[#allocation4 + $0x80] sm:$0xff]
  %v8150 = vld [vmem:[#allocation4 + $0x88] sm:$0xff]
  %v8151 = vld [vmem:[#allocation4 + $0x90] sm:$0xff]
  %v8152 = vld [vmem:[#allocation4 + $0x98] sm:$0xff]
  %v8153 = vld [vmem:[#allocation4 + $0xa0] sm:$0xff]
  %v8154 = vld [vmem:[#allocation4 + $0xa8] sm:$0xff]
  %v8155 = vld [vmem:[#allocation4 + $0xb0] sm:$0xff]
  %v8156 = vld [vmem:[#allocation4 + $0xb8] sm:$0xff]
  %v8157 = vld [vmem:[#allocation4 + $0xc0] sm:$0xff]
  %v8158 = vld [vmem:[#allocation4 + $0xc8] sm:$0xff]
  %v8159 = vld [vmem:[#allocation4 + $0xd0] sm:$0xff]
  %v8160 = vld [vmem:[#allocation4 + $0xd8] sm:$0xff]
  %v8161 = vld [vmem:[#allocation4 + $0xe0] sm:$0xff]
  %v8162 = vld [vmem:[#allocation4 + $0xe8] sm:$0xff]
  %v8163 = vld [vmem:[#allocation4 + $0xf0] sm:$0xff]
  %v8164 = vld [vmem:[#allocation4 + $0xf8] sm:$0xff]
  %v8165 = vld [vmem:[#allocation4 + $0x100] sm:$0xff]
  %v8166 = vld [vmem:[#allocation4 + $0x108] sm:$0xff]
  %v8167 = vld [vmem:[#allocation4 + $0x110] sm:$0xff]
  %v8168 = vld [vmem:[#allocation4 + $0x118] sm:$0xff]
  %v8169 = vld [vmem:[#allocation4 + $0x120] sm:$0xff]
  %v8170 = vld [vmem:[#allocation4 + $0x128] sm:$0xff]
  %v8171 = vld [vmem:[#allocation4 + $0x130] sm:$0xff]
  %v8172 = vld [vmem:[#allocation4 + $0x138] sm:$0xff]
  %v8173 = vld [vmem:[#allocation4 + $0x140] sm:$0xff]
  %v8174 = vld [vmem:[#allocation4 + $0x148] sm:$0xff]
  %v8175 = vld [vmem:[#allocation4 + $0x150] sm:$0xff]
  %v8176 = vld [vmem:[#allocation4 + $0x158] sm:$0xff]
  %v8177 = vld [vmem:[#allocation4 + $0x160] sm:$0xff]
  %v8178 = vld [vmem:[#allocation4 + $0x168] sm:$0xff]
  %v8179 = vld [vmem:[#allocation4 + $0x170] sm:$0xff]
  %v8180 = vld [vmem:[#allocation4 + $0x178] sm:$0xff]
  %v8181 = vld [vmem:[#allocation4 + $0x180] sm:$0xff]
  %v8182 = vld [vmem:[#allocation4 + $0x188] sm:$0xff]
  %v8183 = vld [vmem:[#allocation4 + $0x190] sm:$0xff]
  %v8184 = vld [vmem:[#allocation4 + $0x198] sm:$0xff]
  %v8185 = vld [vmem:[#allocation4 + $0x1a0] sm:$0xff]
  %v8186 = vld [vmem:[#allocation4 + $0x1a8] sm:$0xff]
  %v8187 = vld [vmem:[#allocation4 + $0x1b0] sm:$0xff]
  %v8188 = vld [vmem:[#allocation4 + $0x1b8] sm:$0xff]
  %v8189 = vld [vmem:[#allocation4 + $0x1c0] sm:$0xff]
  %v8190 = vld [vmem:[#allocation4 + $0x1c8] sm:$0xff]
  %v8191 = vld [vmem:[#allocation4 + $0x1d0] sm:$0xff]
  %v8192 = vld [vmem:[#allocation4 + $0x1d8] sm:$0xff]
  %v8193 = vld [vmem:[#allocation4 + $0x1e0] sm:$0xff]
  %v8194 = vld [vmem:[#allocation4 + $0x1e8] sm:$0xff]
  %v8195 = vld [vmem:[#allocation4 + $0x1f0] sm:$0xff]
  %v8196 = vld [vmem:[#allocation4 + $0x1f8] sm:$0xff]
  %v8197 = vld [vmem:[%s5] sm:$0xff]
  %v8198 = vld [vmem:[%s5 + $0x8] sm:$0xff]
  %v8199 = vld [vmem:[%s5 + $0x10] sm:$0xff]
  %v8200 = vld [vmem:[%s5 + $0x18] sm:$0xff]
  %v8201 = vld [vmem:[%s5 + $0x20] sm:$0xff]
  %v8202 = vld [vmem:[%s5 + $0x28] sm:$0xff]
  %v8203 = vld [vmem:[%s5 + $0x30] sm:$0xff]
  %v8204 = vld [vmem:[%s5 + $0x38] sm:$0xff]
  %v8205 = vld [vmem:[%s5 + $0x40] sm:$0xff]
  %v8206 = vld [vmem:[%s5 + $0x48] sm:$0xff]
  %v8207 = vld [vmem:[%s5 + $0x50] sm:$0xff]
  %v8208 = vld [vmem:[%s5 + $0x58] sm:$0xff]
  %v8209 = vld [vmem:[%s5 + $0x60] sm:$0xff]
  %v8210 = vld [vmem:[%s5 + $0x68] sm:$0xff]
  %v8211 = vld [vmem:[%s5 + $0x70] sm:$0xff]
  %v8212 = vld [vmem:[%s5 + $0x78] sm:$0xff]
  %8213 = vmatprep.subr.mxu0 0.0
  %8214 = vmatpush1.msra.mxu0 %v8212
  %8215 = vmatprep.subr.mxu0 0.0
  %8216 = vmatpush1.msra.mxu0 %v8211
  %8217 = vmatprep.subr.mxu0 0.0
  %8218 = vmatpush1.msra.mxu0 %v8210
  %8219 = vmatprep.subr.mxu0 0.0
  %8220 = vmatpush1.msra.mxu0 %v8209
  %8221 = vmatprep.subr.mxu0 0.0
  %8222 = vmatpush1.msra.mxu0 %v8208
  %8223 = vmatprep.subr.mxu0 0.0
  %8224 = vmatpush1.msra.mxu0 %v8207
  %8225 = vmatprep.subr.mxu0 0.0
  %8226 = vmatpush1.msra.mxu0 %v8206
  %8227 = vmatprep.subr.mxu0 0.0
  %8228 = vmatpush1.msra.mxu0 %v8205
  %8229 = vmatprep.subr.mxu0 0.0
  %8230 = vmatpush1.msra.mxu0 %v8204
  %8231 = vmatprep.subr.mxu0 0.0
  %8232 = vmatpush1.msra.mxu0 %v8203
  %8233 = vmatprep.subr.mxu0 0.0
  %8234 = vmatpush1.msra.mxu0 %v8202
  %8235 = vmatprep.subr.mxu0 0.0
  %8236 = vmatpush1.msra.mxu0 %v8201
  %8237 = vmatprep.subr.mxu0 0.0
  %8238 = vmatpush1.msra.mxu0 %v8200
  %8239 = vmatprep.subr.mxu0 0.0
  %8240 = vmatpush1.msra.mxu0 %v8199
  %8241 = vmatprep.subr.mxu0 0.0
  %8242 = vmatpush1.msra.mxu0 %v8198
  %8243 = vmatprep.subr.mxu0 0.0
  %8244 = vmatpush1.msra.mxu0 %v8197
  %8245 = vmatprep.subr.mxu0 0.0
  %8246 = vmatpush2.msra.mxu0 0.0
  %8247 = vmatprep.subr.mxu0 0.0
  %8248 = vmatpush2.msra.mxu0 0.0
  %8249 = vmatprep.subr.mxu0 0.0
  %8250 = vmatpush2.msra.mxu0 0.0
  %8251 = vmatprep.subr.mxu0 0.0
  %8252 = vmatpush2.msra.mxu0 0.0
  %8253 = vmatprep.subr.mxu0 0.0
  %8254 = vmatpush2.msra.mxu0 0.0
  %8255 = vmatprep.subr.mxu0 0.0
  %8256 = vmatpush2.msra.mxu0 0.0
  %8257 = vmatprep.subr.mxu0 0.0
  %8258 = vmatpush2.msra.mxu0 0.0
  %8259 = vmatprep.subr.mxu0 0.0
  %8260 = vmatpush2.msra.mxu0 0.0
  %8261 = vmatprep.subr.mxu0 0.0
  %8262 = vmatpush2.msra.mxu0 0.0
  %8263 = vmatprep.subr.mxu0 0.0
  %8264 = vmatpush2.msra.mxu0 0.0
  %8265 = vmatprep.subr.mxu0 0.0
  %8266 = vmatpush2.msra.mxu0 0.0
  %8267 = vmatprep.subr.mxu0 0.0
  %8268 = vmatpush2.msra.mxu0 0.0
  %8269 = vmatprep.subr.mxu0 0.0
  %8270 = vmatpush2.msra.mxu0 0.0
  %8271 = vmatprep.subr.mxu0 0.0
  %8272 = vmatpush2.msra.mxu0 0.0
  %8273 = vmatprep.subr.mxu0 0.0
  %8274 = vmatpush2.msra.mxu0 0.0
  %8275 = vmatprep.subr.mxu0 0.0
  %8276 = vmatpush2.msra.mxu0 0.0
  %8277 = vmatprep.mubr.f32.mxu0 0.0
  %8278 = vmatmul.mubr.f32.gmra.mxu0 %v8133
  %v8279 = vpop.f32.mrf.mxu0
  %v8280 = vadd.f32 0.0, %v8279
  %v8281 = vpop.f32.mrf.mxu0
  %8282 = vmatprep.mubr.f32.mxu0 0.0
  %8283 = vmatmul.mubr.f32.gmra.mxu0 %v8134
  %v8284 = vpop.f32.mrf.mxu0
  %v8285 = vadd.f32 0.0, %v8284
  %v8286 = vpop.f32.mrf.mxu0
  %8287 = vmatprep.mubr.f32.mxu0 0.0
  %8288 = vmatmul.mubr.f32.gmra.mxu0 %v8135
  %v8289 = vpop.f32.mrf.mxu0
  %v8290 = vadd.f32 0.0, %v8289
  %v8291 = vpop.f32.mrf.mxu0
  %8292 = vmatprep.mubr.f32.mxu0 0.0
  %8293 = vmatmul.mubr.f32.gmra.mxu0 %v8136
  %v8294 = vpop.f32.mrf.mxu0
  %v8295 = vadd.f32 0.0, %v8294
  %v8296 = vpop.f32.mrf.mxu0
  %8297 = vmatprep.mubr.f32.mxu0 0.0
  %8298 = vmatmul.mubr.f32.gmra.mxu0 %v8137
  %v8299 = vpop.f32.mrf.mxu0
  %v8300 = vadd.f32 0.0, %v8299
  %v8301 = vpop.f32.mrf.mxu0
  %8302 = vmatprep.mubr.f32.mxu0 0.0
  %8303 = vmatmul.mubr.f32.gmra.mxu0 %v8138
  %v8304 = vpop.f32.mrf.mxu0
  %v8305 = vadd.f32 0.0, %v8304
  %v8306 = vpop.f32.mrf.mxu0
  %8307 = vmatprep.mubr.f32.mxu0 0.0
  %8308 = vmatmul.mubr.f32.gmra.mxu0 %v8139
  %v8309 = vpop.f32.mrf.mxu0
  %v8310 = vadd.f32 0.0, %v8309
  %v8311 = vpop.f32.mrf.mxu0
  %8312 = vmatprep.mubr.f32.mxu0 0.0
  %8313 = vmatmul.mubr.f32.gmra.mxu0 %v8140
  %v8314 = vpop.f32.mrf.mxu0
  %v8315 = vadd.f32 0.0, %v8314
  %v8316 = vpop.f32.mrf.mxu0
  %8317 = vmatprep.mubr.f32.mxu0 0.0
  %8318 = vmatmul.mubr.f32.gmra.mxu0 %v8141
  %v8319 = vpop.f32.mrf.mxu0
  %v8320 = vadd.f32 0.0, %v8319
  %v8321 = vpop.f32.mrf.mxu0
  %8322 = vmatprep.mubr.f32.mxu0 0.0
  %8323 = vmatmul.mubr.f32.gmra.mxu0 %v8142
  %v8324 = vpop.f32.mrf.mxu0
  %v8325 = vadd.f32 0.0, %v8324
  %v8326 = vpop.f32.mrf.mxu0
  %8327 = vmatprep.mubr.f32.mxu0 0.0
  %8328 = vmatmul.mubr.f32.gmra.mxu0 %v8143
  %v8329 = vpop.f32.mrf.mxu0
  %v8330 = vadd.f32 0.0, %v8329
  %v8331 = vpop.f32.mrf.mxu0
  %8332 = vmatprep.mubr.f32.mxu0 0.0
  %8333 = vmatmul.mubr.f32.gmra.mxu0 %v8144
  %v8334 = vpop.f32.mrf.mxu0
  %v8335 = vadd.f32 0.0, %v8334
  %v8336 = vpop.f32.mrf.mxu0
  %8337 = vmatprep.mubr.f32.mxu0 0.0
  %8338 = vmatmul.mubr.f32.gmra.mxu0 %v8145
  %v8339 = vpop.f32.mrf.mxu0
  %v8340 = vadd.f32 0.0, %v8339
  %v8341 = vpop.f32.mrf.mxu0
  %8342 = vmatprep.mubr.f32.mxu0 0.0
  %8343 = vmatmul.mubr.f32.gmra.mxu0 %v8146
  %v8344 = vpop.f32.mrf.mxu0
  %v8345 = vadd.f32 0.0, %v8344
  %v8346 = vpop.f32.mrf.mxu0
  %8347 = vmatprep.mubr.f32.mxu0 0.0
  %8348 = vmatmul.mubr.f32.gmra.mxu0 %v8147
  %v8349 = vpop.f32.mrf.mxu0
  %v8350 = vadd.f32 0.0, %v8349
  %v8351 = vpop.f32.mrf.mxu0
  %8352 = vmatprep.mubr.f32.mxu0 0.0
  %8353 = vmatmul.mubr.f32.gmra.mxu0 %v8148
  %v8354 = vpop.f32.mrf.mxu0
  %v8355 = vadd.f32 0.0, %v8354
  %v8356 = vpop.f32.mrf.mxu0
  %8357 = vmatprep.mubr.f32.mxu0 0.0
  %8358 = vmatmul.mubr.f32.gmra.mxu0 %v8149
  %v8359 = vpop.f32.mrf.mxu0
  %v8360 = vadd.f32 0.0, %v8359
  %v8361 = vpop.f32.mrf.mxu0
  %8362 = vmatprep.mubr.f32.mxu0 0.0
  %8363 = vmatmul.mubr.f32.gmra.mxu0 %v8150
  %v8364 = vpop.f32.mrf.mxu0
  %v8365 = vadd.f32 0.0, %v8364
  %v8366 = vpop.f32.mrf.mxu0
  %8367 = vmatprep.mubr.f32.mxu0 0.0
  %8368 = vmatmul.mubr.f32.gmra.mxu0 %v8151
  %v8369 = vpop.f32.mrf.mxu0
  %v8370 = vadd.f32 0.0, %v8369
  %v8371 = vpop.f32.mrf.mxu0
  %8372 = vmatprep.mubr.f32.mxu0 0.0
  %8373 = vmatmul.mubr.f32.gmra.mxu0 %v8152
  %v8374 = vpop.f32.mrf.mxu0
  %v8375 = vadd.f32 0.0, %v8374
  %v8376 = vpop.f32.mrf.mxu0
  %8377 = vmatprep.mubr.f32.mxu0 0.0
  %8378 = vmatmul.mubr.f32.gmra.mxu0 %v8153
  %v8379 = vpop.f32.mrf.mxu0
  %v8380 = vadd.f32 0.0, %v8379
  %v8381 = vpop.f32.mrf.mxu0
  %8382 = vmatprep.mubr.f32.mxu0 0.0
  %8383 = vmatmul.mubr.f32.gmra.mxu0 %v8154
  %v8384 = vpop.f32.mrf.mxu0
  %v8385 = vadd.f32 0.0, %v8384
  %v8386 = vpop.f32.mrf.mxu0
  %8387 = vmatprep.mubr.f32.mxu0 0.0
  %8388 = vmatmul.mubr.f32.gmra.mxu0 %v8155
  %v8389 = vpop.f32.mrf.mxu0
  %v8390 = vadd.f32 0.0, %v8389
  %v8391 = vpop.f32.mrf.mxu0
  %8392 = vmatprep.mubr.f32.mxu0 0.0
  %8393 = vmatmul.mubr.f32.gmra.mxu0 %v8156
  %v8394 = vpop.f32.mrf.mxu0
  %v8395 = vadd.f32 0.0, %v8394
  %v8396 = vpop.f32.mrf.mxu0
  %8397 = vmatprep.mubr.f32.mxu0 0.0
  %8398 = vmatmul.mubr.f32.gmra.mxu0 %v8157
  %v8399 = vpop.f32.mrf.mxu0
  %v8400 = vadd.f32 0.0, %v8399
  %v8401 = vpop.f32.mrf.mxu0
  %8402 = vmatprep.mubr.f32.mxu0 0.0
  %8403 = vmatmul.mubr.f32.gmra.mxu0 %v8158
  %v8404 = vpop.f32.mrf.mxu0
  %v8405 = vadd.f32 0.0, %v8404
  %v8406 = vpop.f32.mrf.mxu0
  %8407 = vmatprep.mubr.f32.mxu0 0.0
  %8408 = vmatmul.mubr.f32.gmra.mxu0 %v8159
  %v8409 = vpop.f32.mrf.mxu0
  %v8410 = vadd.f32 0.0, %v8409
  %v8411 = vpop.f32.mrf.mxu0
  %8412 = vmatprep.mubr.f32.mxu0 0.0
  %8413 = vmatmul.mubr.f32.gmra.mxu0 %v8160
  %v8414 = vpop.f32.mrf.mxu0
  %v8415 = vadd.f32 0.0, %v8414
  %v8416 = vpop.f32.mrf.mxu0
  %8417 = vmatprep.mubr.f32.mxu0 0.0
  %8418 = vmatmul.mubr.f32.gmra.mxu0 %v8161
  %v8419 = vpop.f32.mrf.mxu0
  %v8420 = vadd.f32 0.0, %v8419
  %v8421 = vpop.f32.mrf.mxu0
  %8422 = vmatprep.mubr.f32.mxu0 0.0
  %8423 = vmatmul.mubr.f32.gmra.mxu0 %v8162
  %v8424 = vpop.f32.mrf.mxu0
  %v8425 = vadd.f32 0.0, %v8424
  %v8426 = vpop.f32.mrf.mxu0
  %8427 = vmatprep.mubr.f32.mxu0 0.0
  %8428 = vmatmul.mubr.f32.gmra.mxu0 %v8163
  %v8429 = vpop.f32.mrf.mxu0
  %v8430 = vadd.f32 0.0, %v8429
  %v8431 = vpop.f32.mrf.mxu0
  %8432 = vmatprep.mubr.f32.mxu0 0.0
  %8433 = vmatmul.mubr.f32.gmra.mxu0 %v8164
  %v8434 = vpop.f32.mrf.mxu0
  %v8435 = vadd.f32 0.0, %v8434
  %v8436 = vpop.f32.mrf.mxu0
  %8437 = vmatprep.mubr.f32.mxu0 0.0
  %8438 = vmatmul.mubr.f32.gmra.mxu0 %v8165
  %v8439 = vpop.f32.mrf.mxu0
  %v8440 = vadd.f32 0.0, %v8439
  %v8441 = vpop.f32.mrf.mxu0
  %8442 = vmatprep.mubr.f32.mxu0 0.0
  %8443 = vmatmul.mubr.f32.gmra.mxu0 %v8166
  %v8444 = vpop.f32.mrf.mxu0
  %v8445 = vadd.f32 0.0, %v8444
  %v8446 = vpop.f32.mrf.mxu0
  %8447 = vmatprep.mubr.f32.mxu0 0.0
  %8448 = vmatmul.mubr.f32.gmra.mxu0 %v8167
  %v8449 = vpop.f32.mrf.mxu0
  %v8450 = vadd.f32 0.0, %v8449
  %v8451 = vpop.f32.mrf.mxu0
  %8452 = vmatprep.mubr.f32.mxu0 0.0
  %8453 = vmatmul.mubr.f32.gmra.mxu0 %v8168
  %v8454 = vpop.f32.mrf.mxu0
  %v8455 = vadd.f32 0.0, %v8454
  %v8456 = vpop.f32.mrf.mxu0
  %8457 = vmatprep.mubr.f32.mxu0 0.0
  %8458 = vmatmul.mubr.f32.gmra.mxu0 %v8169
  %v8459 = vpop.f32.mrf.mxu0
  %v8460 = vadd.f32 0.0, %v8459
  %v8461 = vpop.f32.mrf.mxu0
  %8462 = vmatprep.mubr.f32.mxu0 0.0
  %8463 = vmatmul.mubr.f32.gmra.mxu0 %v8170
  %v8464 = vpop.f32.mrf.mxu0
  %v8465 = vadd.f32 0.0, %v8464
  %v8466 = vpop.f32.mrf.mxu0
  %8467 = vmatprep.mubr.f32.mxu0 0.0
  %8468 = vmatmul.mubr.f32.gmra.mxu0 %v8171
  %v8469 = vpop.f32.mrf.mxu0
  %v8470 = vadd.f32 0.0, %v8469
  %v8471 = vpop.f32.mrf.mxu0
  %8472 = vmatprep.mubr.f32.mxu0 0.0
  %8473 = vmatmul.mubr.f32.gmra.mxu0 %v8172
  %v8474 = vpop.f32.mrf.mxu0
  %v8475 = vadd.f32 0.0, %v8474
  %v8476 = vpop.f32.mrf.mxu0
  %8477 = vmatprep.mubr.f32.mxu0 0.0
  %8478 = vmatmul.mubr.f32.gmra.mxu0 %v8173
  %v8479 = vpop.f32.mrf.mxu0
  %v8480 = vadd.f32 0.0, %v8479
  %v8481 = vpop.f32.mrf.mxu0
  %8482 = vmatprep.mubr.f32.mxu0 0.0
  %8483 = vmatmul.mubr.f32.gmra.mxu0 %v8174
  %v8484 = vpop.f32.mrf.mxu0
  %v8485 = vadd.f32 0.0, %v8484
  %v8486 = vpop.f32.mrf.mxu0
  %8487 = vmatprep.mubr.f32.mxu0 0.0
  %8488 = vmatmul.mubr.f32.gmra.mxu0 %v8175
  %v8489 = vpop.f32.mrf.mxu0
  %v8490 = vadd.f32 0.0, %v8489
  %v8491 = vpop.f32.mrf.mxu0
  %8492 = vmatprep.mubr.f32.mxu0 0.0
  %8493 = vmatmul.mubr.f32.gmra.mxu0 %v8176
  %v8494 = vpop.f32.mrf.mxu0
  %v8495 = vadd.f32 0.0, %v8494
  %v8496 = vpop.f32.mrf.mxu0
  %8497 = vmatprep.mubr.f32.mxu0 0.0
  %8498 = vmatmul.mubr.f32.gmra.mxu0 %v8177
  %v8499 = vpop.f32.mrf.mxu0
  %v8500 = vadd.f32 0.0, %v8499
  %v8501 = vpop.f32.mrf.mxu0
  %8502 = vmatprep.mubr.f32.mxu0 0.0
  %8503 = vmatmul.mubr.f32.gmra.mxu0 %v8178
  %v8504 = vpop.f32.mrf.mxu0
  %v8505 = vadd.f32 0.0, %v8504
  %v8506 = vpop.f32.mrf.mxu0
  %8507 = vmatprep.mubr.f32.mxu0 0.0
  %8508 = vmatmul.mubr.f32.gmra.mxu0 %v8179
  %v8509 = vpop.f32.mrf.mxu0
  %v8510 = vadd.f32 0.0, %v8509
  %v8511 = vpop.f32.mrf.mxu0
  %8512 = vmatprep.mubr.f32.mxu0 0.0
  %8513 = vmatmul.mubr.f32.gmra.mxu0 %v8180
  %v8514 = vpop.f32.mrf.mxu0
  %v8515 = vadd.f32 0.0, %v8514
  %v8516 = vpop.f32.mrf.mxu0
  %8517 = vmatprep.mubr.f32.mxu0 0.0
  %8518 = vmatmul.mubr.f32.gmra.mxu0 %v8181
  %v8519 = vpop.f32.mrf.mxu0
  %v8520 = vadd.f32 0.0, %v8519
  %v8521 = vpop.f32.mrf.mxu0
  %8522 = vmatprep.mubr.f32.mxu0 0.0
  %8523 = vmatmul.mubr.f32.gmra.mxu0 %v8182
  %v8524 = vpop.f32.mrf.mxu0
  %v8525 = vadd.f32 0.0, %v8524
  %v8526 = vpop.f32.mrf.mxu0
  %8527 = vmatprep.mubr.f32.mxu0 0.0
  %8528 = vmatmul.mubr.f32.gmra.mxu0 %v8183
  %v8529 = vpop.f32.mrf.mxu0
  %v8530 = vadd.f32 0.0, %v8529
  %v8531 = vpop.f32.mrf.mxu0
  %8532 = vmatprep.mubr.f32.mxu0 0.0
  %8533 = vmatmul.mubr.f32.gmra.mxu0 %v8184
  %v8534 = vpop.f32.mrf.mxu0
  %v8535 = vadd.f32 0.0, %v8534
  %v8536 = vpop.f32.mrf.mxu0
  %8537 = vmatprep.mubr.f32.mxu0 0.0
  %8538 = vmatmul.mubr.f32.gmra.mxu0 %v8185
  %v8539 = vpop.f32.mrf.mxu0
  %v8540 = vadd.f32 0.0, %v8539
  %v8541 = vpop.f32.mrf.mxu0
  %8542 = vmatprep.mubr.f32.mxu0 0.0
  %8543 = vmatmul.mubr.f32.gmra.mxu0 %v8186
  %v8544 = vpop.f32.mrf.mxu0
  %v8545 = vadd.f32 0.0, %v8544
  %v8546 = vpop.f32.mrf.mxu0
  %8547 = vmatprep.mubr.f32.mxu0 0.0
  %8548 = vmatmul.mubr.f32.gmra.mxu0 %v8187
  %v8549 = vpop.f32.mrf.mxu0
  %v8550 = vadd.f32 0.0, %v8549
  %v8551 = vpop.f32.mrf.mxu0
  %8552 = vmatprep.mubr.f32.mxu0 0.0
  %8553 = vmatmul.mubr.f32.gmra.mxu0 %v8188
  %v8554 = vpop.f32.mrf.mxu0
  %v8555 = vadd.f32 0.0, %v8554
  %v8556 = vpop.f32.mrf.mxu0
  %8557 = vmatprep.mubr.f32.mxu0 0.0
  %8558 = vmatmul.mubr.f32.gmra.mxu0 %v8189
  %v8559 = vpop.f32.mrf.mxu0
  %v8560 = vadd.f32 0.0, %v8559
  %v8561 = vpop.f32.mrf.mxu0
  %8562 = vmatprep.mubr.f32.mxu0 0.0
  %8563 = vmatmul.mubr.f32.gmra.mxu0 %v8190
  %v8564 = vpop.f32.mrf.mxu0
  %v8565 = vadd.f32 0.0, %v8564
  %v8566 = vpop.f32.mrf.mxu0
  %8567 = vmatprep.mubr.f32.mxu0 0.0
  %8568 = vmatmul.mubr.f32.gmra.mxu0 %v8191
  %v8569 = vpop.f32.mrf.mxu0
  %v8570 = vadd.f32 0.0, %v8569
  %v8571 = vpop.f32.mrf.mxu0
  %8572 = vmatprep.mubr.f32.mxu0 0.0
  %8573 = vmatmul.mubr.f32.gmra.mxu0 %v8192
  %v8574 = vpop.f32.mrf.mxu0
  %v8575 = vadd.f32 0.0, %v8574
  %v8576 = vpop.f32.mrf.mxu0
  %8577 = vmatprep.mubr.f32.mxu0 0.0
  %8578 = vmatmul.mubr.f32.gmra.mxu0 %v8193
  %v8579 = vpop.f32.mrf.mxu0
  %v8580 = vadd.f32 0.0, %v8579
  %v8581 = vpop.f32.mrf.mxu0
  %8582 = vmatprep.mubr.f32.mxu0 0.0
  %8583 = vmatmul.mubr.f32.gmra.mxu0 %v8194
  %v8584 = vpop.f32.mrf.mxu0
  %v8585 = vadd.f32 0.0, %v8584
  %v8586 = vpop.f32.mrf.mxu0
  %8587 = vmatprep.mubr.f32.mxu0 0.0
  %8588 = vmatmul.mubr.f32.gmra.mxu0 %v8195
  %v8589 = vpop.f32.mrf.mxu0
  %v8590 = vadd.f32 0.0, %v8589
  %v8591 = vpop.f32.mrf.mxu0
  %8592 = vmatprep.mubr.f32.mxu0 0.0
  %8593 = vmatmul.mubr.f32.gmra.mxu0 %v8196
  %v8594 = vpop.f32.mrf.mxu0
  %v8595 = vadd.f32 0.0, %v8594
  %v8596 = vpop.f32.mrf.mxu0
  %8597 = vdwg.mxu0
  %v8598 = vld [vmem:[%s6] sm:$0x1]
  %v8600 = vlaneseq
  %v8601 = vshrl.u32 %v8600, 7
  %v8602 = vsub.s32 0, %v8601
  %v8603 = vrot.slane %v8598, %v8602
  %v8605 = vadd.f32 %v8280, %v8603
  %v8606 = vadd.f32 %v8285, %v8603
  %v8607 = vadd.f32 %v8290, %v8603
  %v8608 = vadd.f32 %v8295, %v8603
  %v8609 = vadd.f32 %v8300, %v8603
  %v8610 = vadd.f32 %v8305, %v8603
  %v8611 = vadd.f32 %v8310, %v8603
  %v8612 = vadd.f32 %v8315, %v8603
  %v8613 = vadd.f32 %v8320, %v8603
  %v8614 = vadd.f32 %v8325, %v8603
  %v8615 = vadd.f32 %v8330, %v8603
  %v8616 = vadd.f32 %v8335, %v8603
  %v8617 = vadd.f32 %v8340, %v8603
  %v8618 = vadd.f32 %v8345, %v8603
  %v8619 = vadd.f32 %v8350, %v8603
  %v8620 = vadd.f32 %v8355, %v8603
  %v8621 = vadd.f32 %v8360, %v8603
  %v8622 = vadd.f32 %v8365, %v8603
  %v8623 = vadd.f32 %v8370, %v8603
  %v8624 = vadd.f32 %v8375, %v8603
  %v8625 = vadd.f32 %v8380, %v8603
  %v8626 = vadd.f32 %v8385, %v8603
  %v8627 = vadd.f32 %v8390, %v8603
  %v8628 = vadd.f32 %v8395, %v8603
  %v8629 = vadd.f32 %v8400, %v8603
  %v8630 = vadd.f32 %v8405, %v8603
  %v8631 = vadd.f32 %v8410, %v8603
  %v8632 = vadd.f32 %v8415, %v8603
  %v8633 = vadd.f32 %v8420, %v8603
  %v8634 = vadd.f32 %v8425, %v8603
  %v8635 = vadd.f32 %v8430, %v8603
  %v8636 = vadd.f32 %v8435, %v8603
  %v8637 = vadd.f32 %v8440, %v8603
  %v8638 = vadd.f32 %v8445, %v8603
  %v8639 = vadd.f32 %v8450, %v8603
  %v8640 = vadd.f32 %v8455, %v8603
  %v8641 = vadd.f32 %v8460, %v8603
  %v8642 = vadd.f32 %v8465, %v8603
  %v8643 = vadd.f32 %v8470, %v8603
  %v8644 = vadd.f32 %v8475, %v8603
  %v8645 = vadd.f32 %v8480, %v8603
  %v8646 = vadd.f32 %v8485, %v8603
  %v8647 = vadd.f32 %v8490, %v8603
  %v8648 = vadd.f32 %v8495, %v8603
  %v8649 = vadd.f32 %v8500, %v8603
  %v8650 = vadd.f32 %v8505, %v8603
  %v8651 = vadd.f32 %v8510, %v8603
  %v8652 = vadd.f32 %v8515, %v8603
  %v8653 = vadd.f32 %v8520, %v8603
  %v8654 = vadd.f32 %v8525, %v8603
  %v8655 = vadd.f32 %v8530, %v8603
  %v8656 = vadd.f32 %v8535, %v8603
  %v8657 = vadd.f32 %v8540, %v8603
  %v8658 = vadd.f32 %v8545, %v8603
  %v8659 = vadd.f32 %v8550, %v8603
  %v8660 = vadd.f32 %v8555, %v8603
  %v8661 = vadd.f32 %v8560, %v8603
  %v8662 = vadd.f32 %v8565, %v8603
  %v8663 = vadd.f32 %v8570, %v8603
  %v8664 = vadd.f32 %v8575, %v8603
  %v8665 = vadd.f32 %v8580, %v8603
  %v8666 = vadd.f32 %v8585, %v8603
  %v8667 = vadd.f32 %v8590, %v8603
  %v8668 = vadd.f32 %v8595, %v8603
  %v8669 = vsel %vm160, %v8605, 0.0
  %v8670 = vsel %vm160, %v8606, 0.0
  %v8671 = vadd.f32 %v8669, %v8670
  %v8672 = vsel %vm160, %v8607, 0.0
  %v8673 = vadd.f32 %v8671, %v8672
  %v8674 = vsel %vm160, %v8608, 0.0
  %v8675 = vadd.f32 %v8673, %v8674
  %v8676 = vsel %vm160, %v8609, 0.0
  %v8677 = vadd.f32 %v8675, %v8676
  %v8678 = vsel %vm160, %v8610, 0.0
  %v8679 = vadd.f32 %v8677, %v8678
  %v8680 = vsel %vm160, %v8611, 0.0
  %v8681 = vadd.f32 %v8679, %v8680
  %v8682 = vsel %vm160, %v8612, 0.0
  %v8683 = vadd.f32 %v8681, %v8682
  %v8684 = vsel %vm160, %v8613, 0.0
  %v8685 = vadd.f32 %v8683, %v8684
  %v8686 = vsel %vm160, %v8614, 0.0
  %v8687 = vadd.f32 %v8685, %v8686
  %v8688 = vsel %vm160, %v8615, 0.0
  %v8689 = vadd.f32 %v8687, %v8688
  %v8690 = vsel %vm160, %v8616, 0.0
  %v8691 = vadd.f32 %v8689, %v8690
  %v8692 = vsel %vm160, %v8617, 0.0
  %v8693 = vadd.f32 %v8691, %v8692
  %v8694 = vsel %vm160, %v8618, 0.0
  %v8695 = vadd.f32 %v8693, %v8694
  %v8696 = vsel %vm160, %v8619, 0.0
  %v8697 = vadd.f32 %v8695, %v8696
  %v8698 = vsel %vm160, %v8620, 0.0
  %v8699 = vadd.f32 %v8697, %v8698
  %v8700 = vsel %vm160, %v8621, 0.0
  %v8701 = vadd.f32 %v8699, %v8700
  %v8702 = vsel %vm160, %v8622, 0.0
  %v8703 = vadd.f32 %v8701, %v8702
  %v8704 = vsel %vm160, %v8623, 0.0
  %v8705 = vadd.f32 %v8703, %v8704
  %v8706 = vsel %vm160, %v8624, 0.0
  %v8707 = vadd.f32 %v8705, %v8706
  %v8708 = vsel %vm160, %v8625, 0.0
  %v8709 = vadd.f32 %v8707, %v8708
  %v8710 = vsel %vm160, %v8626, 0.0
  %v8711 = vadd.f32 %v8709, %v8710
  %v8712 = vsel %vm160, %v8627, 0.0
  %v8713 = vadd.f32 %v8711, %v8712
  %v8714 = vsel %vm160, %v8628, 0.0
  %v8715 = vadd.f32 %v8713, %v8714
  %v8716 = vsel %vm160, %v8629, 0.0
  %v8717 = vadd.f32 %v8715, %v8716
  %v8718 = vsel %vm160, %v8630, 0.0
  %v8719 = vadd.f32 %v8717, %v8718
  %v8720 = vsel %vm160, %v8631, 0.0
  %v8721 = vadd.f32 %v8719, %v8720
  %v8722 = vsel %vm160, %v8632, 0.0
  %v8723 = vadd.f32 %v8721, %v8722
  %v8724 = vsel %vm160, %v8633, 0.0
  %v8725 = vadd.f32 %v8723, %v8724
  %v8726 = vsel %vm160, %v8634, 0.0
  %v8727 = vadd.f32 %v8725, %v8726
  %v8728 = vsel %vm160, %v8635, 0.0
  %v8729 = vadd.f32 %v8727, %v8728
  %v8730 = vsel %vm160, %v8636, 0.0
  %v8731 = vadd.f32 %v8729, %v8730
  %v8732 = vsel %vm160, %v8637, 0.0
  %v8733 = vadd.f32 %v8731, %v8732
  %v8734 = vsel %vm160, %v8638, 0.0
  %v8735 = vadd.f32 %v8733, %v8734
  %v8736 = vsel %vm160, %v8639, 0.0
  %v8737 = vadd.f32 %v8735, %v8736
  %v8738 = vsel %vm160, %v8640, 0.0
  %v8739 = vadd.f32 %v8737, %v8738
  %v8740 = vsel %vm160, %v8641, 0.0
  %v8741 = vadd.f32 %v8739, %v8740
  %v8742 = vsel %vm160, %v8642, 0.0
  %v8743 = vadd.f32 %v8741, %v8742
  %v8744 = vsel %vm160, %v8643, 0.0
  %v8745 = vadd.f32 %v8743, %v8744
  %v8746 = vsel %vm160, %v8644, 0.0
  %v8747 = vadd.f32 %v8745, %v8746
  %v8748 = vsel %vm160, %v8645, 0.0
  %v8749 = vadd.f32 %v8747, %v8748
  %v8750 = vsel %vm160, %v8646, 0.0
  %v8751 = vadd.f32 %v8749, %v8750
  %v8752 = vsel %vm160, %v8647, 0.0
  %v8753 = vadd.f32 %v8751, %v8752
  %v8754 = vsel %vm160, %v8648, 0.0
  %v8755 = vadd.f32 %v8753, %v8754
  %v8756 = vsel %vm160, %v8649, 0.0
  %v8757 = vadd.f32 %v8755, %v8756
  %v8758 = vsel %vm160, %v8650, 0.0
  %v8759 = vadd.f32 %v8757, %v8758
  %v8760 = vsel %vm160, %v8651, 0.0
  %v8761 = vadd.f32 %v8759, %v8760
  %v8762 = vsel %vm160, %v8652, 0.0
  %v8763 = vadd.f32 %v8761, %v8762
  %v8764 = vsel %vm160, %v8653, 0.0
  %v8765 = vadd.f32 %v8763, %v8764
  %v8766 = vsel %vm160, %v8654, 0.0
  %v8767 = vadd.f32 %v8765, %v8766
  %v8768 = vsel %vm160, %v8655, 0.0
  %v8769 = vadd.f32 %v8767, %v8768
  %v8770 = vsel %vm160, %v8656, 0.0
  %v8771 = vadd.f32 %v8769, %v8770
  %v8772 = vsel %vm160, %v8657, 0.0
  %v8773 = vadd.f32 %v8771, %v8772
  %v8774 = vsel %vm160, %v8658, 0.0
  %v8775 = vadd.f32 %v8773, %v8774
  %v8776 = vsel %vm160, %v8659, 0.0
  %v8777 = vadd.f32 %v8775, %v8776
  %v8778 = vsel %vm160, %v8660, 0.0
  %v8779 = vadd.f32 %v8777, %v8778
  %v8780 = vsel %vm160, %v8661, 0.0
  %v8781 = vadd.f32 %v8779, %v8780
  %v8782 = vsel %vm160, %v8662, 0.0
  %v8783 = vadd.f32 %v8781, %v8782
  %v8784 = vsel %vm160, %v8663, 0.0
  %v8785 = vadd.f32 %v8783, %v8784
  %v8786 = vsel %vm160, %v8664, 0.0
  %v8787 = vadd.f32 %v8785, %v8786
  %v8788 = vsel %vm160, %v8665, 0.0
  %v8789 = vadd.f32 %v8787, %v8788
  %v8790 = vsel %vm160, %v8666, 0.0
  %v8791 = vadd.f32 %v8789, %v8790
  %v8792 = vsel %vm160, %v8667, 0.0
  %v8793 = vadd.f32 %v8791, %v8792
  %v8794 = vsel %vm160, %v8668, 0.0
  %v8795 = vadd.f32 %v8793, %v8794
  %v8796 = vrot.slane %v8795, 4
  %v8797 = vadd.f32 %v8795, %v8796
  %v8798 = vrot.slane %v8797, 2
  %v8799 = vadd.f32 %v8797, %v8798
  %v8800 = vrot.slane %v8799, 1
  %v8801 = vadd.f32 %v8799, %v8800
  %v8802 = vmul.f32 %v8801, %v4214
  %v8803 = vsub.f32 %v8605, %v8802
  %v8804 = vsub.f32 %v8606, %v8802
  %v8805 = vsub.f32 %v8607, %v8802
  %v8806 = vsub.f32 %v8608, %v8802
  %v8807 = vsub.f32 %v8609, %v8802
  %v8808 = vsub.f32 %v8610, %v8802
  %v8809 = vsub.f32 %v8611, %v8802
  %v8810 = vsub.f32 %v8612, %v8802
  %v8811 = vsub.f32 %v8613, %v8802
  %v8812 = vsub.f32 %v8614, %v8802
  %v8813 = vsub.f32 %v8615, %v8802
  %v8814 = vsub.f32 %v8616, %v8802
  %v8815 = vsub.f32 %v8617, %v8802
  %v8816 = vsub.f32 %v8618, %v8802
  %v8817 = vsub.f32 %v8619, %v8802
  %v8818 = vsub.f32 %v8620, %v8802
  %v8819 = vsub.f32 %v8621, %v8802
  %v8820 = vsub.f32 %v8622, %v8802
  %v8821 = vsub.f32 %v8623, %v8802
  %v8822 = vsub.f32 %v8624, %v8802
  %v8823 = vsub.f32 %v8625, %v8802
  %v8824 = vsub.f32 %v8626, %v8802
  %v8825 = vsub.f32 %v8627, %v8802
  %v8826 = vsub.f32 %v8628, %v8802
  %v8827 = vsub.f32 %v8629, %v8802
  %v8828 = vsub.f32 %v8630, %v8802
  %v8829 = vsub.f32 %v8631, %v8802
  %v8830 = vsub.f32 %v8632, %v8802
  %v8831 = vsub.f32 %v8633, %v8802
  %v8832 = vsub.f32 %v8634, %v8802
  %v8833 = vsub.f32 %v8635, %v8802
  %v8834 = vsub.f32 %v8636, %v8802
  %v8835 = vsub.f32 %v8637, %v8802
  %v8836 = vsub.f32 %v8638, %v8802
  %v8837 = vsub.f32 %v8639, %v8802
  %v8838 = vsub.f32 %v8640, %v8802
  %v8839 = vsub.f32 %v8641, %v8802
  %v8840 = vsub.f32 %v8642, %v8802
  %v8841 = vsub.f32 %v8643, %v8802
  %v8842 = vsub.f32 %v8644, %v8802
  %v8843 = vsub.f32 %v8645, %v8802
  %v8844 = vsub.f32 %v8646, %v8802
  %v8845 = vsub.f32 %v8647, %v8802
  %v8846 = vsub.f32 %v8648, %v8802
  %v8847 = vsub.f32 %v8649, %v8802
  %v8848 = vsub.f32 %v8650, %v8802
  %v8849 = vsub.f32 %v8651, %v8802
  %v8850 = vsub.f32 %v8652, %v8802
  %v8851 = vsub.f32 %v8653, %v8802
  %v8852 = vsub.f32 %v8654, %v8802
  %v8853 = vsub.f32 %v8655, %v8802
  %v8854 = vsub.f32 %v8656, %v8802
  %v8855 = vsub.f32 %v8657, %v8802
  %v8856 = vsub.f32 %v8658, %v8802
  %v8857 = vsub.f32 %v8659, %v8802
  %v8858 = vsub.f32 %v8660, %v8802
  %v8859 = vsub.f32 %v8661, %v8802
  %v8860 = vsub.f32 %v8662, %v8802
  %v8861 = vsub.f32 %v8663, %v8802
  %v8862 = vsub.f32 %v8664, %v8802
  %v8863 = vsub.f32 %v8665, %v8802
  %v8864 = vsub.f32 %v8666, %v8802
  %v8865 = vsub.f32 %v8667, %v8802
  %v8866 = vsub.f32 %v8668, %v8802
  %v8867 = vmul.f32 %v8803, %v8803
  %v8868 = vmul.f32 %v8804, %v8804
  %v8869 = vmul.f32 %v8805, %v8805
  %v8870 = vmul.f32 %v8806, %v8806
  %v8871 = vmul.f32 %v8807, %v8807
  %v8872 = vmul.f32 %v8808, %v8808
  %v8873 = vmul.f32 %v8809, %v8809
  %v8874 = vmul.f32 %v8810, %v8810
  %v8875 = vmul.f32 %v8811, %v8811
  %v8876 = vmul.f32 %v8812, %v8812
  %v8877 = vmul.f32 %v8813, %v8813
  %v8878 = vmul.f32 %v8814, %v8814
  %v8879 = vmul.f32 %v8815, %v8815
  %v8880 = vmul.f32 %v8816, %v8816
  %v8881 = vmul.f32 %v8817, %v8817
  %v8882 = vmul.f32 %v8818, %v8818
  %v8883 = vmul.f32 %v8819, %v8819
  %v8884 = vmul.f32 %v8820, %v8820
  %v8885 = vmul.f32 %v8821, %v8821
  %v8886 = vmul.f32 %v8822, %v8822
  %v8887 = vmul.f32 %v8823, %v8823
  %v8888 = vmul.f32 %v8824, %v8824
  %v8889 = vmul.f32 %v8825, %v8825
  %v8890 = vmul.f32 %v8826, %v8826
  %v8891 = vmul.f32 %v8827, %v8827
  %v8892 = vmul.f32 %v8828, %v8828
  %v8893 = vmul.f32 %v8829, %v8829
  %v8894 = vmul.f32 %v8830, %v8830
  %v8895 = vmul.f32 %v8831, %v8831
  %v8896 = vmul.f32 %v8832, %v8832
  %v8897 = vmul.f32 %v8833, %v8833
  %v8898 = vmul.f32 %v8834, %v8834
  %v8899 = vmul.f32 %v8835, %v8835
  %v8900 = vmul.f32 %v8836, %v8836
  %v8901 = vmul.f32 %v8837, %v8837
  %v8902 = vmul.f32 %v8838, %v8838
  %v8903 = vmul.f32 %v8839, %v8839
  %v8904 = vmul.f32 %v8840, %v8840
  %v8905 = vmul.f32 %v8841, %v8841
  %v8906 = vmul.f32 %v8842, %v8842
  %v8907 = vmul.f32 %v8843, %v8843
  %v8908 = vmul.f32 %v8844, %v8844
  %v8909 = vmul.f32 %v8845, %v8845
  %v8910 = vmul.f32 %v8846, %v8846
  %v8911 = vmul.f32 %v8847, %v8847
  %v8912 = vmul.f32 %v8848, %v8848
  %v8913 = vmul.f32 %v8849, %v8849
  %v8914 = vmul.f32 %v8850, %v8850
  %v8915 = vmul.f32 %v8851, %v8851
  %v8916 = vmul.f32 %v8852, %v8852
  %v8917 = vmul.f32 %v8853, %v8853
  %v8918 = vmul.f32 %v8854, %v8854
  %v8919 = vmul.f32 %v8855, %v8855
  %v8920 = vmul.f32 %v8856, %v8856
  %v8921 = vmul.f32 %v8857, %v8857
  %v8922 = vmul.f32 %v8858, %v8858
  %v8923 = vmul.f32 %v8859, %v8859
  %v8924 = vmul.f32 %v8860, %v8860
  %v8925 = vmul.f32 %v8861, %v8861
  %v8926 = vmul.f32 %v8862, %v8862
  %v8927 = vmul.f32 %v8863, %v8863
  %v8928 = vmul.f32 %v8864, %v8864
  %v8929 = vmul.f32 %v8865, %v8865
  %v8930 = vmul.f32 %v8866, %v8866
  %v8931 = vsel %vm160, %v8867, 0.0
  %v8932 = vsel %vm160, %v8868, 0.0
  %v8933 = vadd.f32 %v8931, %v8932
  %v8934 = vsel %vm160, %v8869, 0.0
  %v8935 = vadd.f32 %v8933, %v8934
  %v8936 = vsel %vm160, %v8870, 0.0
  %v8937 = vadd.f32 %v8935, %v8936
  %v8938 = vsel %vm160, %v8871, 0.0
  %v8939 = vadd.f32 %v8937, %v8938
  %v8940 = vsel %vm160, %v8872, 0.0
  %v8941 = vadd.f32 %v8939, %v8940
  %v8942 = vsel %vm160, %v8873, 0.0
  %v8943 = vadd.f32 %v8941, %v8942
  %v8944 = vsel %vm160, %v8874, 0.0
  %v8945 = vadd.f32 %v8943, %v8944
  %v8946 = vsel %vm160, %v8875, 0.0
  %v8947 = vadd.f32 %v8945, %v8946
  %v8948 = vsel %vm160, %v8876, 0.0
  %v8949 = vadd.f32 %v8947, %v8948
  %v8950 = vsel %vm160, %v8877, 0.0
  %v8951 = vadd.f32 %v8949, %v8950
  %v8952 = vsel %vm160, %v8878, 0.0
  %v8953 = vadd.f32 %v8951, %v8952
  %v8954 = vsel %vm160, %v8879, 0.0
  %v8955 = vadd.f32 %v8953, %v8954
  %v8956 = vsel %vm160, %v8880, 0.0
  %v8957 = vadd.f32 %v8955, %v8956
  %v8958 = vsel %vm160, %v8881, 0.0
  %v8959 = vadd.f32 %v8957, %v8958
  %v8960 = vsel %vm160, %v8882, 0.0
  %v8961 = vadd.f32 %v8959, %v8960
  %v8962 = vsel %vm160, %v8883, 0.0
  %v8963 = vadd.f32 %v8961, %v8962
  %v8964 = vsel %vm160, %v8884, 0.0
  %v8965 = vadd.f32 %v8963, %v8964
  %v8966 = vsel %vm160, %v8885, 0.0
  %v8967 = vadd.f32 %v8965, %v8966
  %v8968 = vsel %vm160, %v8886, 0.0
  %v8969 = vadd.f32 %v8967, %v8968
  %v8970 = vsel %vm160, %v8887, 0.0
  %v8971 = vadd.f32 %v8969, %v8970
  %v8972 = vsel %vm160, %v8888, 0.0
  %v8973 = vadd.f32 %v8971, %v8972
  %v8974 = vsel %vm160, %v8889, 0.0
  %v8975 = vadd.f32 %v8973, %v8974
  %v8976 = vsel %vm160, %v8890, 0.0
  %v8977 = vadd.f32 %v8975, %v8976
  %v8978 = vsel %vm160, %v8891, 0.0
  %v8979 = vadd.f32 %v8977, %v8978
  %v8980 = vsel %vm160, %v8892, 0.0
  %v8981 = vadd.f32 %v8979, %v8980
  %v8982 = vsel %vm160, %v8893, 0.0
  %v8983 = vadd.f32 %v8981, %v8982
  %v8984 = vsel %vm160, %v8894, 0.0
  %v8985 = vadd.f32 %v8983, %v8984
  %v8986 = vsel %vm160, %v8895, 0.0
  %v8987 = vadd.f32 %v8985, %v8986
  %v8988 = vsel %vm160, %v8896, 0.0
  %v8989 = vadd.f32 %v8987, %v8988
  %v8990 = vsel %vm160, %v8897, 0.0
  %v8991 = vadd.f32 %v8989, %v8990
  %v8992 = vsel %vm160, %v8898, 0.0
  %v8993 = vadd.f32 %v8991, %v8992
  %v8994 = vsel %vm160, %v8899, 0.0
  %v8995 = vadd.f32 %v8993, %v8994
  %v8996 = vsel %vm160, %v8900, 0.0
  %v8997 = vadd.f32 %v8995, %v8996
  %v8998 = vsel %vm160, %v8901, 0.0
  %v8999 = vadd.f32 %v8997, %v8998
  %v9000 = vsel %vm160, %v8902, 0.0
  %v9001 = vadd.f32 %v8999, %v9000
  %v9002 = vsel %vm160, %v8903, 0.0
  %v9003 = vadd.f32 %v9001, %v9002
  %v9004 = vsel %vm160, %v8904, 0.0
  %v9005 = vadd.f32 %v9003, %v9004
  %v9006 = vsel %vm160, %v8905, 0.0
  %v9007 = vadd.f32 %v9005, %v9006
  %v9008 = vsel %vm160, %v8906, 0.0
  %v9009 = vadd.f32 %v9007, %v9008
  %v9010 = vsel %vm160, %v8907, 0.0
  %v9011 = vadd.f32 %v9009, %v9010
  %v9012 = vsel %vm160, %v8908, 0.0
  %v9013 = vadd.f32 %v9011, %v9012
  %v9014 = vsel %vm160, %v8909, 0.0
  %v9015 = vadd.f32 %v9013, %v9014
  %v9016 = vsel %vm160, %v8910, 0.0
  %v9017 = vadd.f32 %v9015, %v9016
  %v9018 = vsel %vm160, %v8911, 0.0
  %v9019 = vadd.f32 %v9017, %v9018
  %v9020 = vsel %vm160, %v8912, 0.0
  %v9021 = vadd.f32 %v9019, %v9020
  %v9022 = vsel %vm160, %v8913, 0.0
  %v9023 = vadd.f32 %v9021, %v9022
  %v9024 = vsel %vm160, %v8914, 0.0
  %v9025 = vadd.f32 %v9023, %v9024
  %v9026 = vsel %vm160, %v8915, 0.0
  %v9027 = vadd.f32 %v9025, %v9026
  %v9028 = vsel %vm160, %v8916, 0.0
  %v9029 = vadd.f32 %v9027, %v9028
  %v9030 = vsel %vm160, %v8917, 0.0
  %v9031 = vadd.f32 %v9029, %v9030
  %v9032 = vsel %vm160, %v8918, 0.0
  %v9033 = vadd.f32 %v9031, %v9032
  %v9034 = vsel %vm160, %v8919, 0.0
  %v9035 = vadd.f32 %v9033, %v9034
  %v9036 = vsel %vm160, %v8920, 0.0
  %v9037 = vadd.f32 %v9035, %v9036
  %v9038 = vsel %vm160, %v8921, 0.0
  %v9039 = vadd.f32 %v9037, %v9038
  %v9040 = vsel %vm160, %v8922, 0.0
  %v9041 = vadd.f32 %v9039, %v9040
  %v9042 = vsel %vm160, %v8923, 0.0
  %v9043 = vadd.f32 %v9041, %v9042
  %v9044 = vsel %vm160, %v8924, 0.0
  %v9045 = vadd.f32 %v9043, %v9044
  %v9046 = vsel %vm160, %v8925, 0.0
  %v9047 = vadd.f32 %v9045, %v9046
  %v9048 = vsel %vm160, %v8926, 0.0
  %v9049 = vadd.f32 %v9047, %v9048
  %v9050 = vsel %vm160, %v8927, 0.0
  %v9051 = vadd.f32 %v9049, %v9050
  %v9052 = vsel %vm160, %v8928, 0.0
  %v9053 = vadd.f32 %v9051, %v9052
  %v9054 = vsel %vm160, %v8929, 0.0
  %v9055 = vadd.f32 %v9053, %v9054
  %v9056 = vsel %vm160, %v8930, 0.0
  %v9057 = vadd.f32 %v9055, %v9056
  %v9058 = vrot.slane %v9057, 4
  %v9059 = vadd.f32 %v9057, %v9058
  %v9060 = vrot.slane %v9059, 2
  %v9061 = vadd.f32 %v9059, %v9060
  %v9062 = vrot.slane %v9061, 1
  %v9063 = vadd.f32 %v9061, %v9062
  %v9064 = vmul.f32 %v9063, %v4214
  %v9065 = vadd.f32 %v9064, 1e-05
  %v9066 = vrsqrt.pop %v9065
  %v9067 = vmul.f32 %v8803, %v9066
  %v9068 = vmul.f32 %v8804, %v9066
  %v9069 = vmul.f32 %v8805, %v9066
  %v9070 = vmul.f32 %v8806, %v9066
  %v9071 = vmul.f32 %v8807, %v9066
  %v9072 = vmul.f32 %v8808, %v9066
  %v9073 = vmul.f32 %v8809, %v9066
  %v9074 = vmul.f32 %v8810, %v9066
  %v9075 = vmul.f32 %v8811, %v9066
  %v9076 = vmul.f32 %v8812, %v9066
  %v9077 = vmul.f32 %v8813, %v9066
  %v9078 = vmul.f32 %v8814, %v9066
  %v9079 = vmul.f32 %v8815, %v9066
  %v9080 = vmul.f32 %v8816, %v9066
  %v9081 = vmul.f32 %v8817, %v9066
  %v9082 = vmul.f32 %v8818, %v9066
  %v9083 = vmul.f32 %v8819, %v9066
  %v9084 = vmul.f32 %v8820, %v9066
  %v9085 = vmul.f32 %v8821, %v9066
  %v9086 = vmul.f32 %v8822, %v9066
  %v9087 = vmul.f32 %v8823, %v9066
  %v9088 = vmul.f32 %v8824, %v9066
  %v9089 = vmul.f32 %v8825, %v9066
  %v9090 = vmul.f32 %v8826, %v9066
  %v9091 = vmul.f32 %v8827, %v9066
  %v9092 = vmul.f32 %v8828, %v9066
  %v9093 = vmul.f32 %v8829, %v9066
  %v9094 = vmul.f32 %v8830, %v9066
  %v9095 = vmul.f32 %v8831, %v9066
  %v9096 = vmul.f32 %v8832, %v9066
  %v9097 = vmul.f32 %v8833, %v9066
  %v9098 = vmul.f32 %v8834, %v9066
  %v9099 = vmul.f32 %v8835, %v9066
  %v9100 = vmul.f32 %v8836, %v9066
  %v9101 = vmul.f32 %v8837, %v9066
  %v9102 = vmul.f32 %v8838, %v9066
  %v9103 = vmul.f32 %v8839, %v9066
  %v9104 = vmul.f32 %v8840, %v9066
  %v9105 = vmul.f32 %v8841, %v9066
  %v9106 = vmul.f32 %v8842, %v9066
  %v9107 = vmul.f32 %v8843, %v9066
  %v9108 = vmul.f32 %v8844, %v9066
  %v9109 = vmul.f32 %v8845, %v9066
  %v9110 = vmul.f32 %v8846, %v9066
  %v9111 = vmul.f32 %v8847, %v9066
  %v9112 = vmul.f32 %v8848, %v9066
  %v9113 = vmul.f32 %v8849, %v9066
  %v9114 = vmul.f32 %v8850, %v9066
  %v9115 = vmul.f32 %v8851, %v9066
  %v9116 = vmul.f32 %v8852, %v9066
  %v9117 = vmul.f32 %v8853, %v9066
  %v9118 = vmul.f32 %v8854, %v9066
  %v9119 = vmul.f32 %v8855, %v9066
  %v9120 = vmul.f32 %v8856, %v9066
  %v9121 = vmul.f32 %v8857, %v9066
  %v9122 = vmul.f32 %v8858, %v9066
  %v9123 = vmul.f32 %v8859, %v9066
  %v9124 = vmul.f32 %v8860, %v9066
  %v9125 = vmul.f32 %v8861, %v9066
  %v9126 = vmul.f32 %v8862, %v9066
  %v9127 = vmul.f32 %v8863, %v9066
  %v9128 = vmul.f32 %v8864, %v9066
  %v9129 = vmul.f32 %v8865, %v9066
  %v9130 = vmul.f32 %v8866, %v9066
  %v9131 = vld [vmem:[%s7] sm:$0x1]
  %v9133 = vlaneseq
  %v9134 = vshrl.u32 %v9133, 7
  %v9135 = vsub.s32 0, %v9134
  %v9136 = vrot.slane %v9131, %v9135
  %v9138 = vmul.f32 %v9067, %v9136
  %v9139 = vmul.f32 %v9068, %v9136
  %v9140 = vmul.f32 %v9069, %v9136
  %v9141 = vmul.f32 %v9070, %v9136
  %v9142 = vmul.f32 %v9071, %v9136
  %v9143 = vmul.f32 %v9072, %v9136
  %v9144 = vmul.f32 %v9073, %v9136
  %v9145 = vmul.f32 %v9074, %v9136
  %v9146 = vmul.f32 %v9075, %v9136
  %v9147 = vmul.f32 %v9076, %v9136
  %v9148 = vmul.f32 %v9077, %v9136
  %v9149 = vmul.f32 %v9078, %v9136
  %v9150 = vmul.f32 %v9079, %v9136
  %v9151 = vmul.f32 %v9080, %v9136
  %v9152 = vmul.f32 %v9081, %v9136
  %v9153 = vmul.f32 %v9082, %v9136
  %v9154 = vmul.f32 %v9083, %v9136
  %v9155 = vmul.f32 %v9084, %v9136
  %v9156 = vmul.f32 %v9085, %v9136
  %v9157 = vmul.f32 %v9086, %v9136
  %v9158 = vmul.f32 %v9087, %v9136
  %v9159 = vmul.f32 %v9088, %v9136
  %v9160 = vmul.f32 %v9089, %v9136
  %v9161 = vmul.f32 %v9090, %v9136
  %v9162 = vmul.f32 %v9091, %v9136
  %v9163 = vmul.f32 %v9092, %v9136
  %v9164 = vmul.f32 %v9093, %v9136
  %v9165 = vmul.f32 %v9094, %v9136
  %v9166 = vmul.f32 %v9095, %v9136
  %v9167 = vmul.f32 %v9096, %v9136
  %v9168 = vmul.f32 %v9097, %v9136
  %v9169 = vmul.f32 %v9098, %v9136
  %v9170 = vmul.f32 %v9099, %v9136
  %v9171 = vmul.f32 %v9100, %v9136
  %v9172 = vmul.f32 %v9101, %v9136
  %v9173 = vmul.f32 %v9102, %v9136
  %v9174 = vmul.f32 %v9103, %v9136
  %v9175 = vmul.f32 %v9104, %v9136
  %v9176 = vmul.f32 %v9105, %v9136
  %v9177 = vmul.f32 %v9106, %v9136
  %v9178 = vmul.f32 %v9107, %v9136
  %v9179 = vmul.f32 %v9108, %v9136
  %v9180 = vmul.f32 %v9109, %v9136
  %v9181 = vmul.f32 %v9110, %v9136
  %v9182 = vmul.f32 %v9111, %v9136
  %v9183 = vmul.f32 %v9112, %v9136
  %v9184 = vmul.f32 %v9113, %v9136
  %v9185 = vmul.f32 %v9114, %v9136
  %v9186 = vmul.f32 %v9115, %v9136
  %v9187 = vmul.f32 %v9116, %v9136
  %v9188 = vmul.f32 %v9117, %v9136
  %v9189 = vmul.f32 %v9118, %v9136
  %v9190 = vmul.f32 %v9119, %v9136
  %v9191 = vmul.f32 %v9120, %v9136
  %v9192 = vmul.f32 %v9121, %v9136
  %v9193 = vmul.f32 %v9122, %v9136
  %v9194 = vmul.f32 %v9123, %v9136
  %v9195 = vmul.f32 %v9124, %v9136
  %v9196 = vmul.f32 %v9125, %v9136
  %v9197 = vmul.f32 %v9126, %v9136
  %v9198 = vmul.f32 %v9127, %v9136
  %v9199 = vmul.f32 %v9128, %v9136
  %v9200 = vmul.f32 %v9129, %v9136
  %v9201 = vmul.f32 %v9130, %v9136
  %v9202 = vld [vmem:[%s8] sm:$0x1]
  %v9204 = vlaneseq
  %v9205 = vshrl.u32 %v9204, 7
  %v9206 = vsub.s32 0, %v9205
  %v9207 = vrot.slane %v9202, %v9206
  %v9209 = vadd.f32 %v9138, %v9207
  %v9210 = vadd.f32 %v9139, %v9207
  %v9211 = vadd.f32 %v9140, %v9207
  %v9212 = vadd.f32 %v9141, %v9207
  %v9213 = vadd.f32 %v9142, %v9207
  %v9214 = vadd.f32 %v9143, %v9207
  %v9215 = vadd.f32 %v9144, %v9207
  %v9216 = vadd.f32 %v9145, %v9207
  %v9217 = vadd.f32 %v9146, %v9207
  %v9218 = vadd.f32 %v9147, %v9207
  %v9219 = vadd.f32 %v9148, %v9207
  %v9220 = vadd.f32 %v9149, %v9207
  %v9221 = vadd.f32 %v9150, %v9207
  %v9222 = vadd.f32 %v9151, %v9207
  %v9223 = vadd.f32 %v9152, %v9207
  %v9224 = vadd.f32 %v9153, %v9207
  %v9225 = vadd.f32 %v9154, %v9207
  %v9226 = vadd.f32 %v9155, %v9207
  %v9227 = vadd.f32 %v9156, %v9207
  %v9228 = vadd.f32 %v9157, %v9207
  %v9229 = vadd.f32 %v9158, %v9207
  %v9230 = vadd.f32 %v9159, %v9207
  %v9231 = vadd.f32 %v9160, %v9207
  %v9232 = vadd.f32 %v9161, %v9207
  %v9233 = vadd.f32 %v9162, %v9207
  %v9234 = vadd.f32 %v9163, %v9207
  %v9235 = vadd.f32 %v9164, %v9207
  %v9236 = vadd.f32 %v9165, %v9207
  %v9237 = vadd.f32 %v9166, %v9207
  %v9238 = vadd.f32 %v9167, %v9207
  %v9239 = vadd.f32 %v9168, %v9207
  %v9240 = vadd.f32 %v9169, %v9207
  %v9241 = vadd.f32 %v9170, %v9207
  %v9242 = vadd.f32 %v9171, %v9207
  %v9243 = vadd.f32 %v9172, %v9207
  %v9244 = vadd.f32 %v9173, %v9207
  %v9245 = vadd.f32 %v9174, %v9207
  %v9246 = vadd.f32 %v9175, %v9207
  %v9247 = vadd.f32 %v9176, %v9207
  %v9248 = vadd.f32 %v9177, %v9207
  %v9249 = vadd.f32 %v9178, %v9207
  %v9250 = vadd.f32 %v9179, %v9207
  %v9251 = vadd.f32 %v9180, %v9207
  %v9252 = vadd.f32 %v9181, %v9207
  %v9253 = vadd.f32 %v9182, %v9207
  %v9254 = vadd.f32 %v9183, %v9207
  %v9255 = vadd.f32 %v9184, %v9207
  %v9256 = vadd.f32 %v9185, %v9207
  %v9257 = vadd.f32 %v9186, %v9207
  %v9258 = vadd.f32 %v9187, %v9207
  %v9259 = vadd.f32 %v9188, %v9207
  %v9260 = vadd.f32 %v9189, %v9207
  %v9261 = vadd.f32 %v9190, %v9207
  %v9262 = vadd.f32 %v9191, %v9207
  %v9263 = vadd.f32 %v9192, %v9207
  %v9264 = vadd.f32 %v9193, %v9207
  %v9265 = vadd.f32 %v9194, %v9207
  %v9266 = vadd.f32 %v9195, %v9207
  %v9267 = vadd.f32 %v9196, %v9207
  %v9268 = vadd.f32 %v9197, %v9207
  %v9269 = vadd.f32 %v9198, %v9207
  %v9270 = vadd.f32 %v9199, %v9207
  %v9271 = vadd.f32 %v9200, %v9207
  %v9272 = vadd.f32 %v9201, %v9207
  %v9273 = vmax.f32 %v9209, 0.0
  %v9274 = vmax.f32 %v9210, 0.0
  %v9275 = vmax.f32 %v9211, 0.0
  %v9276 = vmax.f32 %v9212, 0.0
  %v9277 = vmax.f32 %v9213, 0.0
  %v9278 = vmax.f32 %v9214, 0.0
  %v9279 = vmax.f32 %v9215, 0.0
  %v9280 = vmax.f32 %v9216, 0.0
  %v9281 = vmax.f32 %v9217, 0.0
  %v9282 = vmax.f32 %v9218, 0.0
  %v9283 = vmax.f32 %v9219, 0.0
  %v9284 = vmax.f32 %v9220, 0.0
  %v9285 = vmax.f32 %v9221, 0.0
  %v9286 = vmax.f32 %v9222, 0.0
  %v9287 = vmax.f32 %v9223, 0.0
  %v9288 = vmax.f32 %v9224, 0.0
  %v9289 = vmax.f32 %v9225, 0.0
  %v9290 = vmax.f32 %v9226, 0.0
  %v9291 = vmax.f32 %v9227, 0.0
  %v9292 = vmax.f32 %v9228, 0.0
  %v9293 = vmax.f32 %v9229, 0.0
  %v9294 = vmax.f32 %v9230, 0.0
  %v9295 = vmax.f32 %v9231, 0.0
  %v9296 = vmax.f32 %v9232, 0.0
  %v9297 = vmax.f32 %v9233, 0.0
  %v9298 = vmax.f32 %v9234, 0.0
  %v9299 = vmax.f32 %v9235, 0.0
  %v9300 = vmax.f32 %v9236, 0.0
  %v9301 = vmax.f32 %v9237, 0.0
  %v9302 = vmax.f32 %v9238, 0.0
  %v9303 = vmax.f32 %v9239, 0.0
  %v9304 = vmax.f32 %v9240, 0.0
  %v9305 = vmax.f32 %v9241, 0.0
  %v9306 = vmax.f32 %v9242, 0.0
  %v9307 = vmax.f32 %v9243, 0.0
  %v9308 = vmax.f32 %v9244, 0.0
  %v9309 = vmax.f32 %v9245, 0.0
  %v9310 = vmax.f32 %v9246, 0.0
  %v9311 = vmax.f32 %v9247, 0.0
  %v9312 = vmax.f32 %v9248, 0.0
  %v9313 = vmax.f32 %v9249, 0.0
  %v9314 = vmax.f32 %v9250, 0.0
  %v9315 = vmax.f32 %v9251, 0.0
  %v9316 = vmax.f32 %v9252, 0.0
  %v9317 = vmax.f32 %v9253, 0.0
  %v9318 = vmax.f32 %v9254, 0.0
  %v9319 = vmax.f32 %v9255, 0.0
  %v9320 = vmax.f32 %v9256, 0.0
  %v9321 = vmax.f32 %v9257, 0.0
  %v9322 = vmax.f32 %v9258, 0.0
  %v9323 = vmax.f32 %v9259, 0.0
  %v9324 = vmax.f32 %v9260, 0.0
  %v9325 = vmax.f32 %v9261, 0.0
  %v9326 = vmax.f32 %v9262, 0.0
  %v9327 = vmax.f32 %v9263, 0.0
  %v9328 = vmax.f32 %v9264, 0.0
  %v9329 = vmax.f32 %v9265, 0.0
  %v9330 = vmax.f32 %v9266, 0.0
  %v9331 = vmax.f32 %v9267, 0.0
  %v9332 = vmax.f32 %v9268, 0.0
  %v9333 = vmax.f32 %v9269, 0.0
  %v9334 = vmax.f32 %v9270, 0.0
  %v9335 = vmax.f32 %v9271, 0.0
  %v9336 = vmax.f32 %v9272, 0.0
  %9337 = vst.msk [vmem:[%s9] sm:$0xff] %vm160, %v9273
  %9338 = vst.msk [vmem:[%s9 + $0x8] sm:$0xff] %vm160, %v9274
  %9339 = vst.msk [vmem:[%s9 + $0x10] sm:$0xff] %vm160, %v9275
  %9340 = vst.msk [vmem:[%s9 + $0x18] sm:$0xff] %vm160, %v9276
  %9341 = vst.msk [vmem:[%s9 + $0x20] sm:$0xff] %vm160, %v9277
  %9342 = vst.msk [vmem:[%s9 + $0x28] sm:$0xff] %vm160, %v9278
  %9343 = vst.msk [vmem:[%s9 + $0x30] sm:$0xff] %vm160, %v9279
  %9344 = vst.msk [vmem:[%s9 + $0x38] sm:$0xff] %vm160, %v9280
  %9345 = vst.msk [vmem:[%s9 + $0x40] sm:$0xff] %vm160, %v9281
  %9346 = vst.msk [vmem:[%s9 + $0x48] sm:$0xff] %vm160, %v9282
  %9347 = vst.msk [vmem:[%s9 + $0x50] sm:$0xff] %vm160, %v9283
  %9348 = vst.msk [vmem:[%s9 + $0x58] sm:$0xff] %vm160, %v9284
  %9349 = vst.msk [vmem:[%s9 + $0x60] sm:$0xff] %vm160, %v9285
  %9350 = vst.msk [vmem:[%s9 + $0x68] sm:$0xff] %vm160, %v9286
  %9351 = vst.msk [vmem:[%s9 + $0x70] sm:$0xff] %vm160, %v9287
  %9352 = vst.msk [vmem:[%s9 + $0x78] sm:$0xff] %vm160, %v9288
  %9353 = vst.msk [vmem:[%s9 + $0x80] sm:$0xff] %vm160, %v9289
  %9354 = vst.msk [vmem:[%s9 + $0x88] sm:$0xff] %vm160, %v9290
  %9355 = vst.msk [vmem:[%s9 + $0x90] sm:$0xff] %vm160, %v9291
  %9356 = vst.msk [vmem:[%s9 + $0x98] sm:$0xff] %vm160, %v9292
  %9357 = vst.msk [vmem:[%s9 + $0xa0] sm:$0xff] %vm160, %v9293
  %9358 = vst.msk [vmem:[%s9 + $0xa8] sm:$0xff] %vm160, %v9294
  %9359 = vst.msk [vmem:[%s9 + $0xb0] sm:$0xff] %vm160, %v9295
  %9360 = vst.msk [vmem:[%s9 + $0xb8] sm:$0xff] %vm160, %v9296
  %9361 = vst.msk [vmem:[%s9 + $0xc0] sm:$0xff] %vm160, %v9297
  %9362 = vst.msk [vmem:[%s9 + $0xc8] sm:$0xff] %vm160, %v9298
  %9363 = vst.msk [vmem:[%s9 + $0xd0] sm:$0xff] %vm160, %v9299
  %9364 = vst.msk [vmem:[%s9 + $0xd8] sm:$0xff] %vm160, %v9300
  %9365 = vst.msk [vmem:[%s9 + $0xe0] sm:$0xff] %vm160, %v9301
  %9366 = vst.msk [vmem:[%s9 + $0xe8] sm:$0xff] %vm160, %v9302
  %9367 = vst.msk [vmem:[%s9 + $0xf0] sm:$0xff] %vm160, %v9303
  %9368 = vst.msk [vmem:[%s9 + $0xf8] sm:$0xff] %vm160, %v9304
  %9369 = vst.msk [vmem:[%s9 + $0x100] sm:$0xff] %vm160, %v9305
  %9370 = vst.msk [vmem:[%s9 + $0x108] sm:$0xff] %vm160, %v9306
  %9371 = vst.msk [vmem:[%s9 + $0x110] sm:$0xff] %vm160, %v9307
  %9372 = vst.msk [vmem:[%s9 + $0x118] sm:$0xff] %vm160, %v9308
  %9373 = vst.msk [vmem:[%s9 + $0x120] sm:$0xff] %vm160, %v9309
  %9374 = vst.msk [vmem:[%s9 + $0x128] sm:$0xff] %vm160, %v9310
  %9375 = vst.msk [vmem:[%s9 + $0x130] sm:$0xff] %vm160, %v9311
  %9376 = vst.msk [vmem:[%s9 + $0x138] sm:$0xff] %vm160, %v9312
  %9377 = vst.msk [vmem:[%s9 + $0x140] sm:$0xff] %vm160, %v9313
  %9378 = vst.msk [vmem:[%s9 + $0x148] sm:$0xff] %vm160, %v9314
  %9379 = vst.msk [vmem:[%s9 + $0x150] sm:$0xff] %vm160, %v9315
  %9380 = vst.msk [vmem:[%s9 + $0x158] sm:$0xff] %vm160, %v9316
  %9381 = vst.msk [vmem:[%s9 + $0x160] sm:$0xff] %vm160, %v9317
  %9382 = vst.msk [vmem:[%s9 + $0x168] sm:$0xff] %vm160, %v9318
  %9383 = vst.msk [vmem:[%s9 + $0x170] sm:$0xff] %vm160, %v9319
  %9384 = vst.msk [vmem:[%s9 + $0x178] sm:$0xff] %vm160, %v9320
  %9385 = vst.msk [vmem:[%s9 + $0x180] sm:$0xff] %vm160, %v9321
  %9386 = vst.msk [vmem:[%s9 + $0x188] sm:$0xff] %vm160, %v9322
  %9387 = vst.msk [vmem:[%s9 + $0x190] sm:$0xff] %vm160, %v9323
  %9388 = vst.msk [vmem:[%s9 + $0x198] sm:$0xff] %vm160, %v9324
  %9389 = vst.msk [vmem:[%s9 + $0x1a0] sm:$0xff] %vm160, %v9325
  %9390 = vst.msk [vmem:[%s9 + $0x1a8] sm:$0xff] %vm160, %v9326
  %9391 = vst.msk [vmem:[%s9 + $0x1b0] sm:$0xff] %vm160, %v9327
  %9392 = vst.msk [vmem:[%s9 + $0x1b8] sm:$0xff] %vm160, %v9328
  %9393 = vst.msk [vmem:[%s9 + $0x1c0] sm:$0xff] %vm160, %v9329
  %9394 = vst.msk [vmem:[%s9 + $0x1c8] sm:$0xff] %vm160, %v9330
  %9395 = vst.msk [vmem:[%s9 + $0x1d0] sm:$0xff] %vm160, %v9331
  %9396 = vst.msk [vmem:[%s9 + $0x1d8] sm:$0xff] %vm160, %v9332
  %9397 = vst.msk [vmem:[%s9 + $0x1e0] sm:$0xff] %vm160, %v9333
  %9398 = vst.msk [vmem:[%s9 + $0x1e8] sm:$0xff] %vm160, %v9334
  %9399 = vst.msk [vmem:[%s9 + $0x1f0] sm:$0xff] %vm160, %v9335
  %9400 = vst.msk [vmem:[%s9 + $0x1f8] sm:$0xff] %vm160, %v9336
  // Predicated region
  $region38: #{tpu_custom_call.1} parent=0 // pred_check
    _
  $region39: #{tpu_custom_call.1} parent=0 // pred_check_branch
    %9402 = sbr.rel (0) target = $region41
  $region40: #{tpu_custom_call.1} parent=0 // pred_region
    _
  $region41: #{tpu_custom_call.1} parent=0 // pred_fallthru
    _
  // Predicated region
  $region42: #{tpu_custom_call.1} parent=0 // pred_check
    _
  $region43: #{tpu_custom_call.1} parent=0 // pred_check_branch
    %9404 = sbr.rel (0) target = $region45
  $region44: #{tpu_custom_call.1} parent=0 // pred_region
    _
  $region45: #{tpu_custom_call.1} parent=0 // pred_fallthru
    _

</llo_original>
